<compile_context>
chip_gen: v7x
topology: tpu7x:2x2x1
jax: 0.10.0
libtpu: 0.0.40
codegen_flags: <defaults>
</compile_context>

<pallas_src>
import numpy as np
import jax
import jax.numpy as jnp
from jax.experimental import pallas as pl
from jax.experimental.pallas import tpu as pltpu


# ----------------------------------------------------------------------------
# Static 0/1 structure matrices (built once at preparation time, numpy)
# ----------------------------------------------------------------------------
def _rows_shift(B, H, kh):
    """S_kh (B*Hp, B*Hp): (S_kh @ x)[b, hp] = x[b, hp-1+kh] for interior rows."""
    Hp = H + 2
    S = np.zeros((B * Hp, B * Hp), np.float32)
    for b in range(B):
        for hp in range(1, Hp - 1):
            S[b * Hp + hp, b * Hp + hp - 1 + kh] = 1.0
    return S


def _tap_cols(Wp, kw):
    """D_kw (Wp, Wp): D[u, wp] = 1 iff wp interior and u == wp-1+kw."""
    D = np.zeros((Wp, Wp), np.float32)
    for wp in range(1, Wp - 1):
        D[wp - 1 + kw, wp] = 1.0
    return D


def _id_cols(Wp):
    D = np.zeros((Wp, Wp), np.float32)
    for wp in range(1, Wp - 1):
        D[wp, wp] = 1.0
    return D


def _rows_up(B, Hc, Hf, factor, phase=None):
    """L (B*Hpf, B*Hpc): nearest / deconv-phase row placement (interior only)."""
    Hpc, Hpf = Hc + 2, Hf + 2
    L = np.zeros((B * Hpf, B * Hpc), np.float32)
    for b in range(B):
        for hpf in range(1, Hpf - 1):
            hf = hpf - 1
            if phase is not None and hf % factor != phase:
                continue
            L[b * Hpf + hpf, b * Hpc + hf // factor + 1] = 1.0
    return L


def _cols_up(Wc, Wf, factor, phase=None):
    """U (Wpc, Wpf): nearest / deconv-phase column placement (interior only)."""
    Wpc, Wpf = Wc + 2, Wf + 2
    U = np.zeros((Wpc, Wpf), np.float32)
    for wpf in range(1, Wpf - 1):
        wf = wpf - 1
        if phase is not None and wf % factor != phase:
            continue
        U[wf // factor + 1, wpf] = 1.0
    return U


def _row_interior(B, H):
    Hp = H + 2
    r = np.zeros((B * Hp,), np.float32)
    for b in range(B):
        r[b * Hp + 1:b * Hp + 1 + H] = 1.0
    return r


def _col_interior(W):
    Wp = W + 2
    c = np.zeros((Wp,), np.float32)
    c[1:1 + W] = 1.0
    return c


# names shared by prepare_decoder() and the kernel
def _skey(H, kh):
    return f"S{kh}_h{H}"


def _lupkey(Hc, Hf):
    return f"Lup_{Hc}to{Hf}"


def _ldkey(Hc, Hf, dh):
    return f"Ld{dh}_{Hc}to{Hf}"


def _rflowkey(Wc, Wf, scale):
    return f"Rflow_{Wc}to{Wf}_s{scale}"


# ----------------------------------------------------------------------------
# One-time weight preparation: arrange all parameters / constants into the
# matrices the fused kernel consumes (kron of channel-mixing x placement).
# ----------------------------------------------------------------------------
def prepare_decoder(params, config, in_shape):
    B, C, H0, W0 = in_shape
    OC = params["outc"][0]["w"].shape[1]
    scale_list = config["downsample_scale"]
    scale_num = len(scale_list)

    idx, arrays = {}, []

    def add(name, arr):
        if name in idx:
            return
        idx[name] = len(arrays)
        arrays.append(jnp.asarray(arr, jnp.float32))

    def bias2d(b, H, W):
        # per-channel bias placed only on interior pixels (keeps borders zero)
        return jnp.outer(jnp.asarray(_row_interior(B, H)),
                         jnp.kron(b, jnp.asarray(_col_interior(W))))

    def add_conv3(name, w, b, H, W):
        # w: (3, 3, Cin, Cout); stride 1, padding 1
        Wp = W + 2
        for kh in range(3):
            m = 0.0
            for kw in range(3):
                m = m + jnp.kron(w[kh, kw], jnp.asarray(_tap_cols(Wp, kw)))
            add(f"{name}_k{kh}", m)
        add(f"{name}_b", bias2d(b, H, W))
        add(_skey(H, 0), _rows_shift(B, H, 0))
        add(_skey(H, 2), _rows_shift(B, H, 2))

    def add_conv1(name, w, b, H, W):
        # w: (Cin, Cout); 1x1 conv evaluated at resolution (H, W)
        add(f"{name}_w", jnp.kron(w, jnp.asarray(_id_cols(W + 2))))
        add(f"{name}_b", bias2d(b, H, W))

    def add_flow(Hc, Wc, Hf, Wf, scale):
        # nearest upsample + per-channel flow scaling folded into one matrix
        add(_lupkey(Hc, Hf), _rows_up(B, Hc, Hf, Hf // Hc))
        svec = np.where(np.arange(OC) % 3 < 2, float(scale), 1.0).astype(np.float32)
        add(_rflowkey(Wc, Wf, scale),
            jnp.kron(jnp.asarray(np.diag(svec)),
                     jnp.asarray(_cols_up(Wc, Wf, Wf // Wc))))

    def add_rbup(name, p, Hc, Wc):
        Hf2, Wf2 = 2 * Hc, 2 * Wc
        # ConvTranspose2d(k=2, s=2); weight p["w1"] laid out (Cin, kh, kw, Cout)
        for dh in range(2):
            m = 0.0
            for dw in range(2):
                m = m + jnp.kron(p["w1"][:, dh, dw, :],
                                 jnp.asarray(_cols_up(Wc, Wf2, 2, phase=dw)))
            add(f"{name}_d{dh}", m)
            add(_ldkey(Hc, Hf2, dh), _rows_up(B, Hc, Hf2, 2, phase=dh))
        add(f"{name}_db", bias2d(p["b1"], Hf2, Wf2))
        # shortcut: (eval-mode BN folded) 1x1 conv commuted BEFORE the nearest
        # 2x upsample (exact), upsample folded into the placement matrices.
        add(f"{name}_scw", jnp.kron(p["ws"], jnp.asarray(_cols_up(Wc, Wf2, 2))))
        add(f"{name}_scb", bias2d(p["bs"], Hf2, Wf2))
        add(_lupkey(Hc, Hf2), _rows_up(B, Hc, Hf2, 2))
        add_conv3(f"{name}_c2", p["w2"], p["b2"], Hf2, Wf2)

    # ---- walk the decoder exactly like the forward pass does ---------------
    H, W = H0, W0
    logres = []
    i = scale_num - 1
    for i in range(scale_num - 1, -1, -1):
        add_conv1(f"outc{i}_at{H}", params["outc"][i]["w"],
                  params["outc"][i]["b"], H, W)
        if i < scale_num - 1:
            pH, pW = logres[-1]
            add_flow(pH, pW, H, W, scale_list[i - 1])
        logres.append((H, W))
        bp = params["blocks"][i]
        add_conv3(f"blk{i}_rb0_c1", bp["rb0"]["w1"], bp["rb0"]["b1"], H, W)
        add_conv3(f"blk{i}_rb0_c2", bp["rb0"]["w2"], bp["rb0"]["b2"], H, W)
        add_conv3(f"blk{i}_rb1_c1", bp["rb1"]["w1"], bp["rb1"]["b1"], H, W)
        add_conv3(f"blk{i}_rb1_c2", bp["rb1"]["w2"], bp["rb1"]["b2"], H, W)
        add_rbup(f"blk{i}_rb2", bp["rb2"], H, W)
        H, W = 2 * H, 2 * W
    add_conv1(f"outc{scale_num - 1}_at{H}", params["outc"][-1]["w"],
              params["outc"][-1]["b"], H, W)
    pH, pW = logres[-1]
    # NOTE: scale_list[i-1] with i == 0 wraps to scale_list[-1] on purpose,
    # replicating the PyTorch reference exactly.
    add_flow(pH, pW, H, W, scale_list[i - 1])
    logres.append((H, W))
    for (lH, lW) in logres[:-1]:
        add_flow(lH, lW, H, W, H // lH)

    meta = dict(B=B, C=C, OC=OC, H0=H0, W0=W0)
    return idx, arrays, meta


# ----------------------------------------------------------------------------
# Fused forward pass (single pallas_call)
# ----------------------------------------------------------------------------
def motion_decoder_forward(in_feat, prepared, config):
    idx, arrays, meta = prepared
    B, C, OC = meta["B"], meta["C"], meta["OC"]
    H0, W0 = meta["H0"], meta["W0"]
    scale_list = config["downsample_scale"]
    scale_num = len(scale_list)
    HF, WF = H0 * 2 ** scale_num, W0 * 2 ** scale_num
    HpF, WpF = HF + 2, WF + 2

    # input NCHW -> zero-padded stacked slab (B*(H0+2), C*(W0+2)); tiny one-off glue
    xp = jnp.pad(in_feat.astype(jnp.float32), ((0, 0), (0, 0), (1, 1), (1, 1)))
    x0 = jnp.transpose(xp, (0, 2, 1, 3)).reshape(B * (H0 + 2), C * (W0 + 2))

    def kernel(*refs):
        out_ref = refs[-1]
        cache = {}

        def G(name):
            if name not in cache:
                cache[name] = refs[1 + idx[name]][...]
            return cache[name]

        def mm(a, b):
            return jnp.dot(a, b, preferred_element_type=jnp.float32)

        def leaky(s):
            return jnp.where(s >= 0, s, jnp.float32(0.01) * s)

        def conv3x3(x, name, H):
            y = mm(x, G(f"{name}_k1"))
            y = y + mm(mm(G(_skey(H, 0)), x), G(f"{name}_k0"))
            y = y + mm(mm(G(_skey(H, 2)), x), G(f"{name}_k2"))
            return jnp.maximum(y + G(f"{name}_b"), 0.0)

        def conv1x1(x, name):
            return mm(x, G(f"{name}_w")) + G(f"{name}_b")

        def resblock_plain(x, name, H):
            h = conv3x3(x, f"{name}_c1", H)
            h = conv3x3(h, f"{name}_c2", H)
            return leaky(h + x)                       # fused residual + LeakyReLU

        def resblock_up(x, name, Hc):
            Hf2 = 2 * Hc
            sc = mm(G(_lupkey(Hc, Hf2)), mm(x, G(f"{name}_scw"))) + G(f"{name}_scb")
            h = mm(G(_ldkey(Hc, Hf2, 0)), mm(x, G(f"{name}_d0")))
            h = h + mm(G(_ldkey(Hc, Hf2, 1)), mm(x, G(f"{name}_d1")))
            h = jnp.maximum(h + G(f"{name}_db"), 0.0)  # deconv + bias + ReLU
            h = conv3x3(h, f"{name}_c2", Hf2)
            return leaky(h + sc)

        def upflow(l, Hc, Wc, Hf2, Wf2, scale):
            # nearest upsample + flow-channel scaling, fused into 2 matmuls
            return mm(G(_lupkey(Hc, Hf2)), mm(l, G(_rflowkey(Wc, Wf2, scale))))

        # ---- decoder program (mirrors the PyTorch control flow exactly) ----
        x = refs[0][...]
        H, W = H0, W0
        logits = []
        i = scale_num - 1
        for i in range(scale_num - 1, -1, -1):
            l = conv1x1(x, f"outc{i}_at{H}")
            if i < scale_num - 1:
                prev, pH, pW = logits[-1]
                l = upflow(prev, pH, pW, H, W, scale_list[i - 1]) + l
            logits.append((l, H, W))
            x = resblock_plain(x, f"blk{i}_rb0", H)
            x = resblock_plain(x, f"blk{i}_rb1", H)
            x = resblock_up(x, f"blk{i}_rb2", H)
            H, W = 2 * H, 2 * W
        l_last = conv1x1(x, f"outc{scale_num - 1}_at{H}")
        prev, pH, pW = logits[-1]
        l_last = upflow(prev, pH, pW, H, W, scale_list[i - 1]) + l_last
        logits.append((l_last, H, W))

        # final resize of all coarser logits to the finest resolution
        for j, (l, lH, lW) in enumerate(logits[:-1]):
            out_ref[j, :, :] = upflow(l, lH, lW, H, W, H // lH)
        out_ref[len(logits) - 1, :, :] = l_last

    out = pl.pallas_call(
        kernel,
        out_shape=jax.ShapeDtypeStruct(
            (scale_num + 1, B * HpF, OC * WpF), jnp.float32),
        in_specs=[pl.BlockSpec(memory_space=pltpu.MemorySpace.VMEM)]
                 * (1 + len(arrays)),
        out_specs=pl.BlockSpec(memory_space=pltpu.MemorySpace.VMEM),
    )(x0, *arrays)

    # unpack padded stacked slabs -> list of NCHW tensors (PyTorch convention)
    o = out.reshape(scale_num + 1, B, HpF, OC, WpF)
    o = o[:, :, 1:1 + HF, :, 1:1 + WF]
    o = jnp.transpose(o, (0, 1, 3, 2, 4))
    return [o[k] for k in range(scale_num + 1)]


# ----------------------------------------------------------------------------
# Deterministic parameter construction
# ----------------------------------------------------------------------------
def init_params(key, C, OC, scale_num):
    keys = iter(jax.random.split(key, 256))

    def nrm(shape, s=0.1):
        return jax.random.normal(next(keys), shape, jnp.float32) * s

    params = {"blocks": [], "outc": []}
    for _ in range(scale_num):
        def plain_rb():
            return {"w1": nrm((3, 3, C, C)), "b1": nrm((C,)),
                    "w2": nrm((3, 3, C, C)), "b2": nrm((C,))}

        rb0, rb1 = plain_rb(), plain_rb()

        # upsample ResBlock; fold eval-mode BatchNorm into the shortcut 1x1 conv
        gamma = 1.0 + nrm((C,))
        beta = nrm((C,))
        running_mean = nrm((C,))
        running_var = 1.0 + 0.5 * jnp.abs(nrm((C,)))
        bn_scale = gamma / jnp.sqrt(running_var + 1e-5)
        ws_raw = nrm((C, C))
        bs_raw = nrm((C,))
        rb2 = {
            # ConvTranspose2d(k=2, s=2) weight, laid out (Cin, kh, kw, Cout)
            "w1": nrm((C, 2, 2, C)), "b1": nrm((C,)),
            "w2": nrm((3, 3, C, C)), "b2": nrm((C,)),
            # shortcut 1x1 conv (BN folded): w[ci, co], b[co]
            "ws": ws_raw * bn_scale[None, :],
            "bs": (bs_raw - running_mean) * bn_scale + beta,
        }
        params["blocks"].append({"rb0": rb0, "rb1": rb1, "rb2": rb2})
        params["outc"].append({"w": nrm((C, OC)), "b": nrm((OC,))})
    return params


if __name__ == "__main__":
    config = {
        "tendency_len": 2,
        "pos_len": 2,
        "downsample_scale": [2, 2],
        "out_edge_num": 2,
    }
    base_channel = config["tendency_len"] + config["pos_len"]   # 4
    out_channel = config["out_edge_num"] * 3                    # 6
    scale_num = len(config["downsample_scale"])                 # 2

    key = jax.random.PRNGKey(0)
    kx, kp = jax.random.split(key)
    # in_feat: NCHW, coarsest resolution (decoder upsamples 2x per scale)
    in_feat = jax.random.normal(kx, (2, base_channel, 4, 4), jnp.float32)
    params = init_params(kp, base_channel, out_channel, scale_num)

    prepared = prepare_decoder(params, config, in_feat.shape)   # once; weights static
    outs = motion_decoder_forward(in_feat, prepared, config)
    outs = [jax.block_until_ready(o) for o in outs]

    expected = (2, out_channel, 16, 16)
    assert len(outs) == scale_num + 1
    assert all(o.shape == expected for o in outs), [o.shape for o in outs]
    print("KERNEL_OK")
</pallas_src>

<mosaic_0001>
module attributes {stable_mosaic.version = 11 : i64} {
  func.func @kernel(%arg0: memref<12x24xf32, #tpu.memory_space<vmem>>, %arg1: memref<24x36xf32, #tpu.memory_space<vmem>>, %arg2: memref<12x36xf32, #tpu.memory_space<vmem>>, %arg3: memref<24x24xf32, #tpu.memory_space<vmem>>, %arg4: memref<24x24xf32, #tpu.memory_space<vmem>>, %arg5: memref<24x24xf32, #tpu.memory_space<vmem>>, %arg6: memref<12x24xf32, #tpu.memory_space<vmem>>, %arg7: memref<12x12xf32, #tpu.memory_space<vmem>>, %arg8: memref<12x12xf32, #tpu.memory_space<vmem>>, %arg9: memref<24x24xf32, #tpu.memory_space<vmem>>, %arg10: memref<24x24xf32, #tpu.memory_space<vmem>>, %arg11: memref<24x24xf32, #tpu.memory_space<vmem>>, %arg12: memref<12x24xf32, #tpu.memory_space<vmem>>, %arg13: memref<24x24xf32, #tpu.memory_space<vmem>>, %arg14: memref<24x24xf32, #tpu.memory_space<vmem>>, %arg15: memref<24x24xf32, #tpu.memory_space<vmem>>, %arg16: memref<12x24xf32, #tpu.memory_space<vmem>>, %arg17: memref<24x24xf32, #tpu.memory_space<vmem>>, %arg18: memref<24x24xf32, #tpu.memory_space<vmem>>, %arg19: memref<24x24xf32, #tpu.memory_space<vmem>>, %arg20: memref<12x24xf32, #tpu.memory_space<vmem>>, %arg21: memref<24x40xf32, #tpu.memory_space<vmem>>, %arg22: memref<20x12xf32, #tpu.memory_space<vmem>>, %arg23: memref<24x40xf32, #tpu.memory_space<vmem>>, %arg24: memref<20x12xf32, #tpu.memory_space<vmem>>, %arg25: memref<20x40xf32, #tpu.memory_space<vmem>>, %arg26: memref<24x40xf32, #tpu.memory_space<vmem>>, %arg27: memref<20x40xf32, #tpu.memory_space<vmem>>, %arg28: memref<20x12xf32, #tpu.memory_space<vmem>>, %arg29: memref<40x40xf32, #tpu.memory_space<vmem>>, %arg30: memref<40x40xf32, #tpu.memory_space<vmem>>, %arg31: memref<40x40xf32, #tpu.memory_space<vmem>>, %arg32: memref<20x40xf32, #tpu.memory_space<vmem>>, %arg33: memref<20x20xf32, #tpu.memory_space<vmem>>, %arg34: memref<20x20xf32, #tpu.memory_space<vmem>>, %arg35: memref<40x60xf32, #tpu.memory_space<vmem>>, %arg36: memref<20x60xf32, #tpu.memory_space<vmem>>, %arg37: memref<36x60xf32, #tpu.memory_space<vmem>>, %arg38: memref<40x40xf32, #tpu.memory_space<vmem>>, %arg39: memref<40x40xf32, #tpu.memory_space<vmem>>, %arg40: memref<40x40xf32, #tpu.memory_space<vmem>>, %arg41: memref<20x40xf32, #tpu.memory_space<vmem>>, %arg42: memref<40x40xf32, #tpu.memory_space<vmem>>, %arg43: memref<40x40xf32, #tpu.memory_space<vmem>>, %arg44: memref<40x40xf32, #tpu.memory_space<vmem>>, %arg45: memref<20x40xf32, #tpu.memory_space<vmem>>, %arg46: memref<40x40xf32, #tpu.memory_space<vmem>>, %arg47: memref<40x40xf32, #tpu.memory_space<vmem>>, %arg48: memref<40x40xf32, #tpu.memory_space<vmem>>, %arg49: memref<20x40xf32, #tpu.memory_space<vmem>>, %arg50: memref<40x40xf32, #tpu.memory_space<vmem>>, %arg51: memref<40x40xf32, #tpu.memory_space<vmem>>, %arg52: memref<40x40xf32, #tpu.memory_space<vmem>>, %arg53: memref<20x40xf32, #tpu.memory_space<vmem>>, %arg54: memref<40x72xf32, #tpu.memory_space<vmem>>, %arg55: memref<36x20xf32, #tpu.memory_space<vmem>>, %arg56: memref<40x72xf32, #tpu.memory_space<vmem>>, %arg57: memref<36x20xf32, #tpu.memory_space<vmem>>, %arg58: memref<36x72xf32, #tpu.memory_space<vmem>>, %arg59: memref<40x72xf32, #tpu.memory_space<vmem>>, %arg60: memref<36x72xf32, #tpu.memory_space<vmem>>, %arg61: memref<36x20xf32, #tpu.memory_space<vmem>>, %arg62: memref<72x72xf32, #tpu.memory_space<vmem>>, %arg63: memref<72x72xf32, #tpu.memory_space<vmem>>, %arg64: memref<72x72xf32, #tpu.memory_space<vmem>>, %arg65: memref<36x72xf32, #tpu.memory_space<vmem>>, %arg66: memref<36x36xf32, #tpu.memory_space<vmem>>, %arg67: memref<36x36xf32, #tpu.memory_space<vmem>>, %arg68: memref<72x108xf32, #tpu.memory_space<vmem>>, %arg69: memref<36x108xf32, #tpu.memory_space<vmem>>, %arg70: memref<60x108xf32, #tpu.memory_space<vmem>>, %arg71: memref<36x12xf32, #tpu.memory_space<vmem>>, %arg72: memref<36x108xf32, #tpu.memory_space<vmem>>, %arg73: memref<3x36x108xf32, #tpu.memory_space<vmem>>) attributes {dimension_semantics = [], scalar_prefetch = 0 : i64, scratch_operands = 0 : i64, tpu.core_type = #tpu.core_type<tc>} {
    %c0 = arith.constant 0 : index
    %c0_0 = arith.constant 0 : index
    %0 = vector.load %arg0[%c0, %c0_0] : memref<12x24xf32, #tpu.memory_space<vmem>>, vector<12x24xf32>
    %c0_1 = arith.constant 0 : index
    %c0_2 = arith.constant 0 : index
    %1 = vector.load %arg1[%c0_1, %c0_2] : memref<24x36xf32, #tpu.memory_space<vmem>>, vector<24x36xf32>
    %cst = arith.constant dense<0.000000e+00> : vector<12x36xf32>
    %2 = tpu.matmul %0, %1, %cst {dimension_numbers = #tpu.dot_dimension_numbers<[1], [0], [0], [1], [0, 0, 1, 1], [], []>} : vector<12x24xf32>, vector<24x36xf32>, vector<12x36xf32> -> vector<12x36xf32>
    %c0_3 = arith.constant 0 : index
    %c0_4 = arith.constant 0 : index
    %3 = vector.load %arg2[%c0_3, %c0_4] : memref<12x36xf32, #tpu.memory_space<vmem>>, vector<12x36xf32>
    %4 = arith.addf %2, %3 : vector<12x36xf32>
    %c0_5 = arith.constant 0 : index
    %c0_6 = arith.constant 0 : index
    %5 = vector.load %arg4[%c0_5, %c0_6] : memref<24x24xf32, #tpu.memory_space<vmem>>, vector<24x24xf32>
    %cst_7 = arith.constant dense<0.000000e+00> : vector<12x24xf32>
    %6 = tpu.matmul %0, %5, %cst_7 {dimension_numbers = #tpu.dot_dimension_numbers<[1], [0], [0], [1], [0, 0, 1, 1], [], []>} : vector<12x24xf32>, vector<24x24xf32>, vector<12x24xf32> -> vector<12x24xf32>
    %c0_8 = arith.constant 0 : index
    %c0_9 = arith.constant 0 : index
    %7 = vector.load %arg7[%c0_8, %c0_9] : memref<12x12xf32, #tpu.memory_space<vmem>>, vector<12x12xf32>
    %cst_10 = arith.constant dense<0.000000e+00> : vector<12x24xf32>
    %8 = tpu.matmul %7, %0, %cst_10 {dimension_numbers = #tpu.dot_dimension_numbers<[1], [0], [0], [1], [0, 0, 1, 1], [], []>} : vector<12x12xf32>, vector<12x24xf32>, vector<12x24xf32> -> vector<12x24xf32>
    %c0_11 = arith.constant 0 : index
    %c0_12 = arith.constant 0 : index
    %9 = vector.load %arg3[%c0_11, %c0_12] : memref<24x24xf32, #tpu.memory_space<vmem>>, vector<24x24xf32>
    %cst_13 = arith.constant dense<0.000000e+00> : vector<12x24xf32>
    %10 = tpu.matmul %8, %9, %cst_13 {dimension_numbers = #tpu.dot_dimension_numbers<[1], [0], [0], [1], [0, 0, 1, 1], [], []>} : vector<12x24xf32>, vector<24x24xf32>, vector<12x24xf32> -> vector<12x24xf32>
    %11 = arith.addf %6, %10 : vector<12x24xf32>
    %c0_14 = arith.constant 0 : index
    %c0_15 = arith.constant 0 : index
    %12 = vector.load %arg8[%c0_14, %c0_15] : memref<12x12xf32, #tpu.memory_space<vmem>>, vector<12x12xf32>
    %cst_16 = arith.constant dense<0.000000e+00> : vector<12x24xf32>
    %13 = tpu.matmul %12, %0, %cst_16 {dimension_numbers = #tpu.dot_dimension_numbers<[1], [0], [0], [1], [0, 0, 1, 1], [], []>} : vector<12x12xf32>, vector<12x24xf32>, vector<12x24xf32> -> vector<12x24xf32>
    %c0_17 = arith.constant 0 : index
    %c0_18 = arith.constant 0 : index
    %14 = vector.load %arg5[%c0_17, %c0_18] : memref<24x24xf32, #tpu.memory_space<vmem>>, vector<24x24xf32>
    %cst_19 = arith.constant dense<0.000000e+00> : vector<12x24xf32>
    %15 = tpu.matmul %13, %14, %cst_19 {dimension_numbers = #tpu.dot_dimension_numbers<[1], [0], [0], [1], [0, 0, 1, 1], [], []>} : vector<12x24xf32>, vector<24x24xf32>, vector<12x24xf32> -> vector<12x24xf32>
    %16 = arith.addf %11, %15 : vector<12x24xf32>
    %c0_20 = arith.constant 0 : index
    %c0_21 = arith.constant 0 : index
    %17 = vector.load %arg6[%c0_20, %c0_21] : memref<12x24xf32, #tpu.memory_space<vmem>>, vector<12x24xf32>
    %18 = arith.addf %16, %17 : vector<12x24xf32>
    %cst_22 = arith.constant 0.000000e+00 : f32
    %19 = vector.broadcast %cst_22 : f32 to vector<12x24xf32>
    %20 = arith.maximumf %18, %19 : vector<12x24xf32>
    %c0_23 = arith.constant 0 : index
    %c0_24 = arith.constant 0 : index
    %21 = vector.load %arg10[%c0_23, %c0_24] : memref<24x24xf32, #tpu.memory_space<vmem>>, vector<24x24xf32>
    %cst_25 = arith.constant dense<0.000000e+00> : vector<12x24xf32>
    %22 = tpu.matmul %20, %21, %cst_25 {dimension_numbers = #tpu.dot_dimension_numbers<[1], [0], [0], [1], [0, 0, 1, 1], [], []>} : vector<12x24xf32>, vector<24x24xf32>, vector<12x24xf32> -> vector<12x24xf32>
    %cst_26 = arith.constant dense<0.000000e+00> : vector<12x24xf32>
    %23 = tpu.matmul %7, %20, %cst_26 {dimension_numbers = #tpu.dot_dimension_numbers<[1], [0], [0], [1], [0, 0, 1, 1], [], []>} : vector<12x12xf32>, vector<12x24xf32>, vector<12x24xf32> -> vector<12x24xf32>
    %c0_27 = arith.constant 0 : index
    %c0_28 = arith.constant 0 : index
    %24 = vector.load %arg9[%c0_27, %c0_28] : memref<24x24xf32, #tpu.memory_space<vmem>>, vector<24x24xf32>
    %cst_29 = arith.constant dense<0.000000e+00> : vector<12x24xf32>
    %25 = tpu.matmul %23, %24, %cst_29 {dimension_numbers = #tpu.dot_dimension_numbers<[1], [0], [0], [1], [0, 0, 1, 1], [], []>} : vector<12x24xf32>, vector<24x24xf32>, vector<12x24xf32> -> vector<12x24xf32>
    %26 = arith.addf %22, %25 : vector<12x24xf32>
    %cst_30 = arith.constant dense<0.000000e+00> : vector<12x24xf32>
    %27 = tpu.matmul %12, %20, %cst_30 {dimension_numbers = #tpu.dot_dimension_numbers<[1], [0], [0], [1], [0, 0, 1, 1], [], []>} : vector<12x12xf32>, vector<12x24xf32>, vector<12x24xf32> -> vector<12x24xf32>
    %c0_31 = arith.constant 0 : index
    %c0_32 = arith.constant 0 : index
    %28 = vector.load %arg11[%c0_31, %c0_32] : memref<24x24xf32, #tpu.memory_space<vmem>>, vector<24x24xf32>
    %cst_33 = arith.constant dense<0.000000e+00> : vector<12x24xf32>
    %29 = tpu.matmul %27, %28, %cst_33 {dimension_numbers = #tpu.dot_dimension_numbers<[1], [0], [0], [1], [0, 0, 1, 1], [], []>} : vector<12x24xf32>, vector<24x24xf32>, vector<12x24xf32> -> vector<12x24xf32>
    %30 = arith.addf %26, %29 : vector<12x24xf32>
    %c0_34 = arith.constant 0 : index
    %c0_35 = arith.constant 0 : index
    %31 = vector.load %arg12[%c0_34, %c0_35] : memref<12x24xf32, #tpu.memory_space<vmem>>, vector<12x24xf32>
    %32 = arith.addf %30, %31 : vector<12x24xf32>
    %cst_36 = arith.constant 0.000000e+00 : f32
    %33 = vector.broadcast %cst_36 : f32 to vector<12x24xf32>
    %34 = arith.maximumf %32, %33 : vector<12x24xf32>
    %35 = arith.addf %34, %0 : vector<12x24xf32>
    %cst_37 = arith.constant 0.000000e+00 : f32
    %36 = vector.broadcast %cst_37 : f32 to vector<12x24xf32>
    %37 = arith.cmpf oge, %35, %36 : vector<12x24xf32>
    %cst_38 = arith.constant 0.00999999977 : f32
    %38 = vector.broadcast %cst_38 : f32 to vector<12x24xf32>
    %39 = arith.mulf %38, %35 : vector<12x24xf32>
    %40 = arith.select %37, %35, %39 : vector<12x24xi1>, vector<12x24xf32>
    %c0_39 = arith.constant 0 : index
    %c0_40 = arith.constant 0 : index
    %41 = vector.load %arg14[%c0_39, %c0_40] : memref<24x24xf32, #tpu.memory_space<vmem>>, vector<24x24xf32>
    %cst_41 = arith.constant dense<0.000000e+00> : vector<12x24xf32>
    %42 = tpu.matmul %40, %41, %cst_41 {dimension_numbers = #tpu.dot_dimension_numbers<[1], [0], [0], [1], [0, 0, 1, 1], [], []>} : vector<12x24xf32>, vector<24x24xf32>, vector<12x24xf32> -> vector<12x24xf32>
    %cst_42 = arith.constant dense<0.000000e+00> : vector<12x24xf32>
    %43 = tpu.matmul %7, %40, %cst_42 {dimension_numbers = #tpu.dot_dimension_numbers<[1], [0], [0], [1], [0, 0, 1, 1], [], []>} : vector<12x12xf32>, vector<12x24xf32>, vector<12x24xf32> -> vector<12x24xf32>
    %c0_43 = arith.constant 0 : index
    %c0_44 = arith.constant 0 : index
    %44 = vector.load %arg13[%c0_43, %c0_44] : memref<24x24xf32, #tpu.memory_space<vmem>>, vector<24x24xf32>
    %cst_45 = arith.constant dense<0.000000e+00> : vector<12x24xf32>
    %45 = tpu.matmul %43, %44, %cst_45 {dimension_numbers = #tpu.dot_dimension_numbers<[1], [0], [0], [1], [0, 0, 1, 1], [], []>} : vector<12x24xf32>, vector<24x24xf32>, vector<12x24xf32> -> vector<12x24xf32>
    %46 = arith.addf %42, %45 : vector<12x24xf32>
    %cst_46 = arith.constant dense<0.000000e+00> : vector<12x24xf32>
    %47 = tpu.matmul %12, %40, %cst_46 {dimension_numbers = #tpu.dot_dimension_numbers<[1], [0], [0], [1], [0, 0, 1, 1], [], []>} : vector<12x12xf32>, vector<12x24xf32>, vector<12x24xf32> -> vector<12x24xf32>
    %c0_47 = arith.constant 0 : index
    %c0_48 = arith.constant 0 : index
    %48 = vector.load %arg15[%c0_47, %c0_48] : memref<24x24xf32, #tpu.memory_space<vmem>>, vector<24x24xf32>
    %cst_49 = arith.constant dense<0.000000e+00> : vector<12x24xf32>
    %49 = tpu.matmul %47, %48, %cst_49 {dimension_numbers = #tpu.dot_dimension_numbers<[1], [0], [0], [1], [0, 0, 1, 1], [], []>} : vector<12x24xf32>, vector<24x24xf32>, vector<12x24xf32> -> vector<12x24xf32>
    %50 = arith.addf %46, %49 : vector<12x24xf32>
    %c0_50 = arith.constant 0 : index
    %c0_51 = arith.constant 0 : index
    %51 = vector.load %arg16[%c0_50, %c0_51] : memref<12x24xf32, #tpu.memory_space<vmem>>, vector<12x24xf32>
    %52 = arith.addf %50, %51 : vector<12x24xf32>
    %cst_52 = arith.constant 0.000000e+00 : f32
    %53 = vector.broadcast %cst_52 : f32 to vector<12x24xf32>
    %54 = arith.maximumf %52, %53 : vector<12x24xf32>
    %c0_53 = arith.constant 0 : index
    %c0_54 = arith.constant 0 : index
    %55 = vector.load %arg18[%c0_53, %c0_54] : memref<24x24xf32, #tpu.memory_space<vmem>>, vector<24x24xf32>
    %cst_55 = arith.constant dense<0.000000e+00> : vector<12x24xf32>
    %56 = tpu.matmul %54, %55, %cst_55 {dimension_numbers = #tpu.dot_dimension_numbers<[1], [0], [0], [1], [0, 0, 1, 1], [], []>} : vector<12x24xf32>, vector<24x24xf32>, vector<12x24xf32> -> vector<12x24xf32>
    %cst_56 = arith.constant dense<0.000000e+00> : vector<12x24xf32>
    %57 = tpu.matmul %7, %54, %cst_56 {dimension_numbers = #tpu.dot_dimension_numbers<[1], [0], [0], [1], [0, 0, 1, 1], [], []>} : vector<12x12xf32>, vector<12x24xf32>, vector<12x24xf32> -> vector<12x24xf32>
    %c0_57 = arith.constant 0 : index
    %c0_58 = arith.constant 0 : index
    %58 = vector.load %arg17[%c0_57, %c0_58] : memref<24x24xf32, #tpu.memory_space<vmem>>, vector<24x24xf32>
    %cst_59 = arith.constant dense<0.000000e+00> : vector<12x24xf32>
    %59 = tpu.matmul %57, %58, %cst_59 {dimension_numbers = #tpu.dot_dimension_numbers<[1], [0], [0], [1], [0, 0, 1, 1], [], []>} : vector<12x24xf32>, vector<24x24xf32>, vector<12x24xf32> -> vector<12x24xf32>
    %60 = arith.addf %56, %59 : vector<12x24xf32>
    %cst_60 = arith.constant dense<0.000000e+00> : vector<12x24xf32>
    %61 = tpu.matmul %12, %54, %cst_60 {dimension_numbers = #tpu.dot_dimension_numbers<[1], [0], [0], [1], [0, 0, 1, 1], [], []>} : vector<12x12xf32>, vector<12x24xf32>, vector<12x24xf32> -> vector<12x24xf32>
    %c0_61 = arith.constant 0 : index
    %c0_62 = arith.constant 0 : index
    %62 = vector.load %arg19[%c0_61, %c0_62] : memref<24x24xf32, #tpu.memory_space<vmem>>, vector<24x24xf32>
    %cst_63 = arith.constant dense<0.000000e+00> : vector<12x24xf32>
    %63 = tpu.matmul %61, %62, %cst_63 {dimension_numbers = #tpu.dot_dimension_numbers<[1], [0], [0], [1], [0, 0, 1, 1], [], []>} : vector<12x24xf32>, vector<24x24xf32>, vector<12x24xf32> -> vector<12x24xf32>
    %64 = arith.addf %60, %63 : vector<12x24xf32>
    %c0_64 = arith.constant 0 : index
    %c0_65 = arith.constant 0 : index
    %65 = vector.load %arg20[%c0_64, %c0_65] : memref<12x24xf32, #tpu.memory_space<vmem>>, vector<12x24xf32>
    %66 = arith.addf %64, %65 : vector<12x24xf32>
    %cst_66 = arith.constant 0.000000e+00 : f32
    %67 = vector.broadcast %cst_66 : f32 to vector<12x24xf32>
    %68 = arith.maximumf %66, %67 : vector<12x24xf32>
    %69 = arith.addf %68, %40 : vector<12x24xf32>
    %cst_67 = arith.constant 0.000000e+00 : f32
    %70 = vector.broadcast %cst_67 : f32 to vector<12x24xf32>
    %71 = arith.cmpf oge, %69, %70 : vector<12x24xf32>
    %cst_68 = arith.constant 0.00999999977 : f32
    %72 = vector.broadcast %cst_68 : f32 to vector<12x24xf32>
    %73 = arith.mulf %72, %69 : vector<12x24xf32>
    %74 = arith.select %71, %69, %73 : vector<12x24xi1>, vector<12x24xf32>
    %c0_69 = arith.constant 0 : index
    %c0_70 = arith.constant 0 : index
    %75 = vector.load %arg28[%c0_69, %c0_70] : memref<20x12xf32, #tpu.memory_space<vmem>>, vector<20x12xf32>
    %c0_71 = arith.constant 0 : index
    %c0_72 = arith.constant 0 : index
    %76 = vector.load %arg26[%c0_71, %c0_72] : memref<24x40xf32, #tpu.memory_space<vmem>>, vector<24x40xf32>
    %cst_73 = arith.constant dense<0.000000e+00> : vector<12x40xf32>
    %77 = tpu.matmul %74, %76, %cst_73 {dimension_numbers = #tpu.dot_dimension_numbers<[1], [0], [0], [1], [0, 0, 1, 1], [], []>} : vector<12x24xf32>, vector<24x40xf32>, vector<12x40xf32> -> vector<12x40xf32>
    %cst_74 = arith.constant dense<0.000000e+00> : vector<20x40xf32>
    %78 = tpu.matmul %75, %77, %cst_74 {dimension_numbers = #tpu.dot_dimension_numbers<[1], [0], [0], [1], [0, 0, 1, 1], [], []>} : vector<20x12xf32>, vector<12x40xf32>, vector<20x40xf32> -> vector<20x40xf32>
    %c0_75 = arith.constant 0 : index
    %c0_76 = arith.constant 0 : index
    %79 = vector.load %arg27[%c0_75, %c0_76] : memref<20x40xf32, #tpu.memory_space<vmem>>, vector<20x40xf32>
    %80 = arith.addf %78, %79 : vector<20x40xf32>
    %c0_77 = arith.constant 0 : index
    %c0_78 = arith.constant 0 : index
    %81 = vector.load %arg22[%c0_77, %c0_78] : memref<20x12xf32, #tpu.memory_space<vmem>>, vector<20x12xf32>
    %c0_79 = arith.constant 0 : index
    %c0_80 = arith.constant 0 : index
    %82 = vector.load %arg21[%c0_79, %c0_80] : memref<24x40xf32, #tpu.memory_space<vmem>>, vector<24x40xf32>
    %cst_81 = arith.constant dense<0.000000e+00> : vector<12x40xf32>
    %83 = tpu.matmul %74, %82, %cst_81 {dimension_numbers = #tpu.dot_dimension_numbers<[1], [0], [0], [1], [0, 0, 1, 1], [], []>} : vector<12x24xf32>, vector<24x40xf32>, vector<12x40xf32> -> vector<12x40xf32>
    %cst_82 = arith.constant dense<0.000000e+00> : vector<20x40xf32>
    %84 = tpu.matmul %81, %83, %cst_82 {dimension_numbers = #tpu.dot_dimension_numbers<[1], [0], [0], [1], [0, 0, 1, 1], [], []>} : vector<20x12xf32>, vector<12x40xf32>, vector<20x40xf32> -> vector<20x40xf32>
    %c0_83 = arith.constant 0 : index
    %c0_84 = arith.constant 0 : index
    %85 = vector.load %arg24[%c0_83, %c0_84] : memref<20x12xf32, #tpu.memory_space<vmem>>, vector<20x12xf32>
    %c0_85 = arith.constant 0 : index
    %c0_86 = arith.constant 0 : index
    %86 = vector.load %arg23[%c0_85, %c0_86] : memref<24x40xf32, #tpu.memory_space<vmem>>, vector<24x40xf32>
    %cst_87 = arith.constant dense<0.000000e+00> : vector<12x40xf32>
    %87 = tpu.matmul %74, %86, %cst_87 {dimension_numbers = #tpu.dot_dimension_numbers<[1], [0], [0], [1], [0, 0, 1, 1], [], []>} : vector<12x24xf32>, vector<24x40xf32>, vector<12x40xf32> -> vector<12x40xf32>
    %cst_88 = arith.constant dense<0.000000e+00> : vector<20x40xf32>
    %88 = tpu.matmul %85, %87, %cst_88 {dimension_numbers = #tpu.dot_dimension_numbers<[1], [0], [0], [1], [0, 0, 1, 1], [], []>} : vector<20x12xf32>, vector<12x40xf32>, vector<20x40xf32> -> vector<20x40xf32>
    %89 = arith.addf %84, %88 : vector<20x40xf32>
    %c0_89 = arith.constant 0 : index
    %c0_90 = arith.constant 0 : index
    %90 = vector.load %arg25[%c0_89, %c0_90] : memref<20x40xf32, #tpu.memory_space<vmem>>, vector<20x40xf32>
    %91 = arith.addf %89, %90 : vector<20x40xf32>
    %cst_91 = arith.constant 0.000000e+00 : f32
    %92 = vector.broadcast %cst_91 : f32 to vector<20x40xf32>
    %93 = arith.maximumf %91, %92 : vector<20x40xf32>
    %c0_92 = arith.constant 0 : index
    %c0_93 = arith.constant 0 : index
    %94 = vector.load %arg30[%c0_92, %c0_93] : memref<40x40xf32, #tpu.memory_space<vmem>>, vector<40x40xf32>
    %cst_94 = arith.constant dense<0.000000e+00> : vector<20x40xf32>
    %95 = tpu.matmul %93, %94, %cst_94 {dimension_numbers = #tpu.dot_dimension_numbers<[1], [0], [0], [1], [0, 0, 1, 1], [], []>} : vector<20x40xf32>, vector<40x40xf32>, vector<20x40xf32> -> vector<20x40xf32>
    %c0_95 = arith.constant 0 : index
    %c0_96 = arith.constant 0 : index
    %96 = vector.load %arg33[%c0_95, %c0_96] : memref<20x20xf32, #tpu.memory_space<vmem>>, vector<20x20xf32>
    %cst_97 = arith.constant dense<0.000000e+00> : vector<20x40xf32>
    %97 = tpu.matmul %96, %93, %cst_97 {dimension_numbers = #tpu.dot_dimension_numbers<[1], [0], [0], [1], [0, 0, 1, 1], [], []>} : vector<20x20xf32>, vector<20x40xf32>, vector<20x40xf32> -> vector<20x40xf32>
    %c0_98 = arith.constant 0 : index
    %c0_99 = arith.constant 0 : index
    %98 = vector.load %arg29[%c0_98, %c0_99] : memref<40x40xf32, #tpu.memory_space<vmem>>, vector<40x40xf32>
    %cst_100 = arith.constant dense<0.000000e+00> : vector<20x40xf32>
    %99 = tpu.matmul %97, %98, %cst_100 {dimension_numbers = #tpu.dot_dimension_numbers<[1], [0], [0], [1], [0, 0, 1, 1], [], []>} : vector<20x40xf32>, vector<40x40xf32>, vector<20x40xf32> -> vector<20x40xf32>
    %100 = arith.addf %95, %99 : vector<20x40xf32>
    %c0_101 = arith.constant 0 : index
    %c0_102 = arith.constant 0 : index
    %101 = vector.load %arg34[%c0_101, %c0_102] : memref<20x20xf32, #tpu.memory_space<vmem>>, vector<20x20xf32>
    %cst_103 = arith.constant dense<0.000000e+00> : vector<20x40xf32>
    %102 = tpu.matmul %101, %93, %cst_103 {dimension_numbers = #tpu.dot_dimension_numbers<[1], [0], [0], [1], [0, 0, 1, 1], [], []>} : vector<20x20xf32>, vector<20x40xf32>, vector<20x40xf32> -> vector<20x40xf32>
    %c0_104 = arith.constant 0 : index
    %c0_105 = arith.constant 0 : index
    %103 = vector.load %arg31[%c0_104, %c0_105] : memref<40x40xf32, #tpu.memory_space<vmem>>, vector<40x40xf32>
    %cst_106 = arith.constant dense<0.000000e+00> : vector<20x40xf32>
    %104 = tpu.matmul %102, %103, %cst_106 {dimension_numbers = #tpu.dot_dimension_numbers<[1], [0], [0], [1], [0, 0, 1, 1], [], []>} : vector<20x40xf32>, vector<40x40xf32>, vector<20x40xf32> -> vector<20x40xf32>
    %105 = arith.addf %100, %104 : vector<20x40xf32>
    %c0_107 = arith.constant 0 : index
    %c0_108 = arith.constant 0 : index
    %106 = vector.load %arg32[%c0_107, %c0_108] : memref<20x40xf32, #tpu.memory_space<vmem>>, vector<20x40xf32>
    %107 = arith.addf %105, %106 : vector<20x40xf32>
    %cst_109 = arith.constant 0.000000e+00 : f32
    %108 = vector.broadcast %cst_109 : f32 to vector<20x40xf32>
    %109 = arith.maximumf %107, %108 : vector<20x40xf32>
    %110 = arith.addf %109, %80 : vector<20x40xf32>
    %cst_110 = arith.constant 0.000000e+00 : f32
    %111 = vector.broadcast %cst_110 : f32 to vector<20x40xf32>
    %112 = arith.cmpf oge, %110, %111 : vector<20x40xf32>
    %cst_111 = arith.constant 0.00999999977 : f32
    %113 = vector.broadcast %cst_111 : f32 to vector<20x40xf32>
    %114 = arith.mulf %113, %110 : vector<20x40xf32>
    %115 = arith.select %112, %110, %114 : vector<20x40xi1>, vector<20x40xf32>
    %c0_112 = arith.constant 0 : index
    %c0_113 = arith.constant 0 : index
    %116 = vector.load %arg35[%c0_112, %c0_113] : memref<40x60xf32, #tpu.memory_space<vmem>>, vector<40x60xf32>
    %cst_114 = arith.constant dense<0.000000e+00> : vector<20x60xf32>
    %117 = tpu.matmul %115, %116, %cst_114 {dimension_numbers = #tpu.dot_dimension_numbers<[1], [0], [0], [1], [0, 0, 1, 1], [], []>} : vector<20x40xf32>, vector<40x60xf32>, vector<20x60xf32> -> vector<20x60xf32>
    %c0_115 = arith.constant 0 : index
    %c0_116 = arith.constant 0 : index
    %118 = vector.load %arg36[%c0_115, %c0_116] : memref<20x60xf32, #tpu.memory_space<vmem>>, vector<20x60xf32>
    %119 = arith.addf %117, %118 : vector<20x60xf32>
    %c0_117 = arith.constant 0 : index
    %c0_118 = arith.constant 0 : index
    %120 = vector.load %arg37[%c0_117, %c0_118] : memref<36x60xf32, #tpu.memory_space<vmem>>, vector<36x60xf32>
    %cst_119 = arith.constant dense<0.000000e+00> : vector<12x60xf32>
    %121 = tpu.matmul %4, %120, %cst_119 {dimension_numbers = #tpu.dot_dimension_numbers<[1], [0], [0], [1], [0, 0, 1, 1], [], []>} : vector<12x36xf32>, vector<36x60xf32>, vector<12x60xf32> -> vector<12x60xf32>
    %cst_120 = arith.constant dense<0.000000e+00> : vector<20x60xf32>
    %122 = tpu.matmul %75, %121, %cst_120 {dimension_numbers = #tpu.dot_dimension_numbers<[1], [0], [0], [1], [0, 0, 1, 1], [], []>} : vector<20x12xf32>, vector<12x60xf32>, vector<20x60xf32> -> vector<20x60xf32>
    %123 = arith.addf %122, %119 : vector<20x60xf32>
    %c0_121 = arith.constant 0 : index
    %c0_122 = arith.constant 0 : index
    %124 = vector.load %arg39[%c0_121, %c0_122] : memref<40x40xf32, #tpu.memory_space<vmem>>, vector<40x40xf32>
    %cst_123 = arith.constant dense<0.000000e+00> : vector<20x40xf32>
    %125 = tpu.matmul %115, %124, %cst_123 {dimension_numbers = #tpu.dot_dimension_numbers<[1], [0], [0], [1], [0, 0, 1, 1], [], []>} : vector<20x40xf32>, vector<40x40xf32>, vector<20x40xf32> -> vector<20x40xf32>
    %cst_124 = arith.constant dense<0.000000e+00> : vector<20x40xf32>
    %126 = tpu.matmul %96, %115, %cst_124 {dimension_numbers = #tpu.dot_dimension_numbers<[1], [0], [0], [1], [0, 0, 1, 1], [], []>} : vector<20x20xf32>, vector<20x40xf32>, vector<20x40xf32> -> vector<20x40xf32>
    %c0_125 = arith.constant 0 : index
    %c0_126 = arith.constant 0 : index
    %127 = vector.load %arg38[%c0_125, %c0_126] : memref<40x40xf32, #tpu.memory_space<vmem>>, vector<40x40xf32>
    %cst_127 = arith.constant dense<0.000000e+00> : vector<20x40xf32>
    %128 = tpu.matmul %126, %127, %cst_127 {dimension_numbers = #tpu.dot_dimension_numbers<[1], [0], [0], [1], [0, 0, 1, 1], [], []>} : vector<20x40xf32>, vector<40x40xf32>, vector<20x40xf32> -> vector<20x40xf32>
    %129 = arith.addf %125, %128 : vector<20x40xf32>
    %cst_128 = arith.constant dense<0.000000e+00> : vector<20x40xf32>
    %130 = tpu.matmul %101, %115, %cst_128 {dimension_numbers = #tpu.dot_dimension_numbers<[1], [0], [0], [1], [0, 0, 1, 1], [], []>} : vector<20x20xf32>, vector<20x40xf32>, vector<20x40xf32> -> vector<20x40xf32>
    %c0_129 = arith.constant 0 : index
    %c0_130 = arith.constant 0 : index
    %131 = vector.load %arg40[%c0_129, %c0_130] : memref<40x40xf32, #tpu.memory_space<vmem>>, vector<40x40xf32>
    %cst_131 = arith.constant dense<0.000000e+00> : vector<20x40xf32>
    %132 = tpu.matmul %130, %131, %cst_131 {dimension_numbers = #tpu.dot_dimension_numbers<[1], [0], [0], [1], [0, 0, 1, 1], [], []>} : vector<20x40xf32>, vector<40x40xf32>, vector<20x40xf32> -> vector<20x40xf32>
    %133 = arith.addf %129, %132 : vector<20x40xf32>
    %c0_132 = arith.constant 0 : index
    %c0_133 = arith.constant 0 : index
    %134 = vector.load %arg41[%c0_132, %c0_133] : memref<20x40xf32, #tpu.memory_space<vmem>>, vector<20x40xf32>
    %135 = arith.addf %133, %134 : vector<20x40xf32>
    %cst_134 = arith.constant 0.000000e+00 : f32
    %136 = vector.broadcast %cst_134 : f32 to vector<20x40xf32>
    %137 = arith.maximumf %135, %136 : vector<20x40xf32>
    %c0_135 = arith.constant 0 : index
    %c0_136 = arith.constant 0 : index
    %138 = vector.load %arg43[%c0_135, %c0_136] : memref<40x40xf32, #tpu.memory_space<vmem>>, vector<40x40xf32>
    %cst_137 = arith.constant dense<0.000000e+00> : vector<20x40xf32>
    %139 = tpu.matmul %137, %138, %cst_137 {dimension_numbers = #tpu.dot_dimension_numbers<[1], [0], [0], [1], [0, 0, 1, 1], [], []>} : vector<20x40xf32>, vector<40x40xf32>, vector<20x40xf32> -> vector<20x40xf32>
    %cst_138 = arith.constant dense<0.000000e+00> : vector<20x40xf32>
    %140 = tpu.matmul %96, %137, %cst_138 {dimension_numbers = #tpu.dot_dimension_numbers<[1], [0], [0], [1], [0, 0, 1, 1], [], []>} : vector<20x20xf32>, vector<20x40xf32>, vector<20x40xf32> -> vector<20x40xf32>
    %c0_139 = arith.constant 0 : index
    %c0_140 = arith.constant 0 : index
    %141 = vector.load %arg42[%c0_139, %c0_140] : memref<40x40xf32, #tpu.memory_space<vmem>>, vector<40x40xf32>
    %cst_141 = arith.constant dense<0.000000e+00> : vector<20x40xf32>
    %142 = tpu.matmul %140, %141, %cst_141 {dimension_numbers = #tpu.dot_dimension_numbers<[1], [0], [0], [1], [0, 0, 1, 1], [], []>} : vector<20x40xf32>, vector<40x40xf32>, vector<20x40xf32> -> vector<20x40xf32>
    %143 = arith.addf %139, %142 : vector<20x40xf32>
    %cst_142 = arith.constant dense<0.000000e+00> : vector<20x40xf32>
    %144 = tpu.matmul %101, %137, %cst_142 {dimension_numbers = #tpu.dot_dimension_numbers<[1], [0], [0], [1], [0, 0, 1, 1], [], []>} : vector<20x20xf32>, vector<20x40xf32>, vector<20x40xf32> -> vector<20x40xf32>
    %c0_143 = arith.constant 0 : index
    %c0_144 = arith.constant 0 : index
    %145 = vector.load %arg44[%c0_143, %c0_144] : memref<40x40xf32, #tpu.memory_space<vmem>>, vector<40x40xf32>
    %cst_145 = arith.constant dense<0.000000e+00> : vector<20x40xf32>
    %146 = tpu.matmul %144, %145, %cst_145 {dimension_numbers = #tpu.dot_dimension_numbers<[1], [0], [0], [1], [0, 0, 1, 1], [], []>} : vector<20x40xf32>, vector<40x40xf32>, vector<20x40xf32> -> vector<20x40xf32>
    %147 = arith.addf %143, %146 : vector<20x40xf32>
    %c0_146 = arith.constant 0 : index
    %c0_147 = arith.constant 0 : index
    %148 = vector.load %arg45[%c0_146, %c0_147] : memref<20x40xf32, #tpu.memory_space<vmem>>, vector<20x40xf32>
    %149 = arith.addf %147, %148 : vector<20x40xf32>
    %cst_148 = arith.constant 0.000000e+00 : f32
    %150 = vector.broadcast %cst_148 : f32 to vector<20x40xf32>
    %151 = arith.maximumf %149, %150 : vector<20x40xf32>
    %152 = arith.addf %151, %115 : vector<20x40xf32>
    %cst_149 = arith.constant 0.000000e+00 : f32
    %153 = vector.broadcast %cst_149 : f32 to vector<20x40xf32>
    %154 = arith.cmpf oge, %152, %153 : vector<20x40xf32>
    %cst_150 = arith.constant 0.00999999977 : f32
    %155 = vector.broadcast %cst_150 : f32 to vector<20x40xf32>
    %156 = arith.mulf %155, %152 : vector<20x40xf32>
    %157 = arith.select %154, %152, %156 : vector<20x40xi1>, vector<20x40xf32>
    %c0_151 = arith.constant 0 : index
    %c0_152 = arith.constant 0 : index
    %158 = vector.load %arg47[%c0_151, %c0_152] : memref<40x40xf32, #tpu.memory_space<vmem>>, vector<40x40xf32>
    %cst_153 = arith.constant dense<0.000000e+00> : vector<20x40xf32>
    %159 = tpu.matmul %157, %158, %cst_153 {dimension_numbers = #tpu.dot_dimension_numbers<[1], [0], [0], [1], [0, 0, 1, 1], [], []>} : vector<20x40xf32>, vector<40x40xf32>, vector<20x40xf32> -> vector<20x40xf32>
    %cst_154 = arith.constant dense<0.000000e+00> : vector<20x40xf32>
    %160 = tpu.matmul %96, %157, %cst_154 {dimension_numbers = #tpu.dot_dimension_numbers<[1], [0], [0], [1], [0, 0, 1, 1], [], []>} : vector<20x20xf32>, vector<20x40xf32>, vector<20x40xf32> -> vector<20x40xf32>
    %c0_155 = arith.constant 0 : index
    %c0_156 = arith.constant 0 : index
    %161 = vector.load %arg46[%c0_155, %c0_156] : memref<40x40xf32, #tpu.memory_space<vmem>>, vector<40x40xf32>
    %cst_157 = arith.constant dense<0.000000e+00> : vector<20x40xf32>
    %162 = tpu.matmul %160, %161, %cst_157 {dimension_numbers = #tpu.dot_dimension_numbers<[1], [0], [0], [1], [0, 0, 1, 1], [], []>} : vector<20x40xf32>, vector<40x40xf32>, vector<20x40xf32> -> vector<20x40xf32>
    %163 = arith.addf %159, %162 : vector<20x40xf32>
    %cst_158 = arith.constant dense<0.000000e+00> : vector<20x40xf32>
    %164 = tpu.matmul %101, %157, %cst_158 {dimension_numbers = #tpu.dot_dimension_numbers<[1], [0], [0], [1], [0, 0, 1, 1], [], []>} : vector<20x20xf32>, vector<20x40xf32>, vector<20x40xf32> -> vector<20x40xf32>
    %c0_159 = arith.constant 0 : index
    %c0_160 = arith.constant 0 : index
    %165 = vector.load %arg48[%c0_159, %c0_160] : memref<40x40xf32, #tpu.memory_space<vmem>>, vector<40x40xf32>
    %cst_161 = arith.constant dense<0.000000e+00> : vector<20x40xf32>
    %166 = tpu.matmul %164, %165, %cst_161 {dimension_numbers = #tpu.dot_dimension_numbers<[1], [0], [0], [1], [0, 0, 1, 1], [], []>} : vector<20x40xf32>, vector<40x40xf32>, vector<20x40xf32> -> vector<20x40xf32>
    %167 = arith.addf %163, %166 : vector<20x40xf32>
    %c0_162 = arith.constant 0 : index
    %c0_163 = arith.constant 0 : index
    %168 = vector.load %arg49[%c0_162, %c0_163] : memref<20x40xf32, #tpu.memory_space<vmem>>, vector<20x40xf32>
    %169 = arith.addf %167, %168 : vector<20x40xf32>
    %cst_164 = arith.constant 0.000000e+00 : f32
    %170 = vector.broadcast %cst_164 : f32 to vector<20x40xf32>
    %171 = arith.maximumf %169, %170 : vector<20x40xf32>
    %c0_165 = arith.constant 0 : index
    %c0_166 = arith.constant 0 : index
    %172 = vector.load %arg51[%c0_165, %c0_166] : memref<40x40xf32, #tpu.memory_space<vmem>>, vector<40x40xf32>
    %cst_167 = arith.constant dense<0.000000e+00> : vector<20x40xf32>
    %173 = tpu.matmul %171, %172, %cst_167 {dimension_numbers = #tpu.dot_dimension_numbers<[1], [0], [0], [1], [0, 0, 1, 1], [], []>} : vector<20x40xf32>, vector<40x40xf32>, vector<20x40xf32> -> vector<20x40xf32>
    %cst_168 = arith.constant dense<0.000000e+00> : vector<20x40xf32>
    %174 = tpu.matmul %96, %171, %cst_168 {dimension_numbers = #tpu.dot_dimension_numbers<[1], [0], [0], [1], [0, 0, 1, 1], [], []>} : vector<20x20xf32>, vector<20x40xf32>, vector<20x40xf32> -> vector<20x40xf32>
    %c0_169 = arith.constant 0 : index
    %c0_170 = arith.constant 0 : index
    %175 = vector.load %arg50[%c0_169, %c0_170] : memref<40x40xf32, #tpu.memory_space<vmem>>, vector<40x40xf32>
    %cst_171 = arith.constant dense<0.000000e+00> : vector<20x40xf32>
    %176 = tpu.matmul %174, %175, %cst_171 {dimension_numbers = #tpu.dot_dimension_numbers<[1], [0], [0], [1], [0, 0, 1, 1], [], []>} : vector<20x40xf32>, vector<40x40xf32>, vector<20x40xf32> -> vector<20x40xf32>
    %177 = arith.addf %173, %176 : vector<20x40xf32>
    %cst_172 = arith.constant dense<0.000000e+00> : vector<20x40xf32>
    %178 = tpu.matmul %101, %171, %cst_172 {dimension_numbers = #tpu.dot_dimension_numbers<[1], [0], [0], [1], [0, 0, 1, 1], [], []>} : vector<20x20xf32>, vector<20x40xf32>, vector<20x40xf32> -> vector<20x40xf32>
    %c0_173 = arith.constant 0 : index
    %c0_174 = arith.constant 0 : index
    %179 = vector.load %arg52[%c0_173, %c0_174] : memref<40x40xf32, #tpu.memory_space<vmem>>, vector<40x40xf32>
    %cst_175 = arith.constant dense<0.000000e+00> : vector<20x40xf32>
    %180 = tpu.matmul %178, %179, %cst_175 {dimension_numbers = #tpu.dot_dimension_numbers<[1], [0], [0], [1], [0, 0, 1, 1], [], []>} : vector<20x40xf32>, vector<40x40xf32>, vector<20x40xf32> -> vector<20x40xf32>
    %181 = arith.addf %177, %180 : vector<20x40xf32>
    %c0_176 = arith.constant 0 : index
    %c0_177 = arith.constant 0 : index
    %182 = vector.load %arg53[%c0_176, %c0_177] : memref<20x40xf32, #tpu.memory_space<vmem>>, vector<20x40xf32>
    %183 = arith.addf %181, %182 : vector<20x40xf32>
    %cst_178 = arith.constant 0.000000e+00 : f32
    %184 = vector.broadcast %cst_178 : f32 to vector<20x40xf32>
    %185 = arith.maximumf %183, %184 : vector<20x40xf32>
    %186 = arith.addf %185, %157 : vector<20x40xf32>
    %cst_179 = arith.constant 0.000000e+00 : f32
    %187 = vector.broadcast %cst_179 : f32 to vector<20x40xf32>
    %188 = arith.cmpf oge, %186, %187 : vector<20x40xf32>
    %cst_180 = arith.constant 0.00999999977 : f32
    %189 = vector.broadcast %cst_180 : f32 to vector<20x40xf32>
    %190 = arith.mulf %189, %186 : vector<20x40xf32>
    %191 = arith.select %188, %186, %190 : vector<20x40xi1>, vector<20x40xf32>
    %c0_181 = arith.constant 0 : index
    %c0_182 = arith.constant 0 : index
    %192 = vector.load %arg61[%c0_181, %c0_182] : memref<36x20xf32, #tpu.memory_space<vmem>>, vector<36x20xf32>
    %c0_183 = arith.constant 0 : index
    %c0_184 = arith.constant 0 : index
    %193 = vector.load %arg59[%c0_183, %c0_184] : memref<40x72xf32, #tpu.memory_space<vmem>>, vector<40x72xf32>
    %cst_185 = arith.constant dense<0.000000e+00> : vector<20x72xf32>
    %194 = tpu.matmul %191, %193, %cst_185 {dimension_numbers = #tpu.dot_dimension_numbers<[1], [0], [0], [1], [0, 0, 1, 1], [], []>} : vector<20x40xf32>, vector<40x72xf32>, vector<20x72xf32> -> vector<20x72xf32>
    %cst_186 = arith.constant dense<0.000000e+00> : vector<36x72xf32>
    %195 = tpu.matmul %192, %194, %cst_186 {dimension_numbers = #tpu.dot_dimension_numbers<[1], [0], [0], [1], [0, 0, 1, 1], [], []>} : vector<36x20xf32>, vector<20x72xf32>, vector<36x72xf32> -> vector<36x72xf32>
    %c0_187 = arith.constant 0 : index
    %c0_188 = arith.constant 0 : index
    %196 = vector.load %arg60[%c0_187, %c0_188] : memref<36x72xf32, #tpu.memory_space<vmem>>, vector<36x72xf32>
    %197 = arith.addf %195, %196 : vector<36x72xf32>
    %c0_189 = arith.constant 0 : index
    %c0_190 = arith.constant 0 : index
    %198 = vector.load %arg55[%c0_189, %c0_190] : memref<36x20xf32, #tpu.memory_space<vmem>>, vector<36x20xf32>
    %c0_191 = arith.constant 0 : index
    %c0_192 = arith.constant 0 : index
    %199 = vector.load %arg54[%c0_191, %c0_192] : memref<40x72xf32, #tpu.memory_space<vmem>>, vector<40x72xf32>
    %cst_193 = arith.constant dense<0.000000e+00> : vector<20x72xf32>
    %200 = tpu.matmul %191, %199, %cst_193 {dimension_numbers = #tpu.dot_dimension_numbers<[1], [0], [0], [1], [0, 0, 1, 1], [], []>} : vector<20x40xf32>, vector<40x72xf32>, vector<20x72xf32> -> vector<20x72xf32>
    %cst_194 = arith.constant dense<0.000000e+00> : vector<36x72xf32>
    %201 = tpu.matmul %198, %200, %cst_194 {dimension_numbers = #tpu.dot_dimension_numbers<[1], [0], [0], [1], [0, 0, 1, 1], [], []>} : vector<36x20xf32>, vector<20x72xf32>, vector<36x72xf32> -> vector<36x72xf32>
    %c0_195 = arith.constant 0 : index
    %c0_196 = arith.constant 0 : index
    %202 = vector.load %arg57[%c0_195, %c0_196] : memref<36x20xf32, #tpu.memory_space<vmem>>, vector<36x20xf32>
    %c0_197 = arith.constant 0 : index
    %c0_198 = arith.constant 0 : index
    %203 = vector.load %arg56[%c0_197, %c0_198] : memref<40x72xf32, #tpu.memory_space<vmem>>, vector<40x72xf32>
    %cst_199 = arith.constant dense<0.000000e+00> : vector<20x72xf32>
    %204 = tpu.matmul %191, %203, %cst_199 {dimension_numbers = #tpu.dot_dimension_numbers<[1], [0], [0], [1], [0, 0, 1, 1], [], []>} : vector<20x40xf32>, vector<40x72xf32>, vector<20x72xf32> -> vector<20x72xf32>
    %cst_200 = arith.constant dense<0.000000e+00> : vector<36x72xf32>
    %205 = tpu.matmul %202, %204, %cst_200 {dimension_numbers = #tpu.dot_dimension_numbers<[1], [0], [0], [1], [0, 0, 1, 1], [], []>} : vector<36x20xf32>, vector<20x72xf32>, vector<36x72xf32> -> vector<36x72xf32>
    %206 = arith.addf %201, %205 : vector<36x72xf32>
    %c0_201 = arith.constant 0 : index
    %c0_202 = arith.constant 0 : index
    %207 = vector.load %arg58[%c0_201, %c0_202] : memref<36x72xf32, #tpu.memory_space<vmem>>, vector<36x72xf32>
    %208 = arith.addf %206, %207 : vector<36x72xf32>
    %cst_203 = arith.constant 0.000000e+00 : f32
    %209 = vector.broadcast %cst_203 : f32 to vector<36x72xf32>
    %210 = arith.maximumf %208, %209 : vector<36x72xf32>
    %c0_204 = arith.constant 0 : index
    %c0_205 = arith.constant 0 : index
    %211 = vector.load %arg63[%c0_204, %c0_205] : memref<72x72xf32, #tpu.memory_space<vmem>>, vector<72x72xf32>
    %cst_206 = arith.constant dense<0.000000e+00> : vector<36x72xf32>
    %212 = tpu.matmul %210, %211, %cst_206 {dimension_numbers = #tpu.dot_dimension_numbers<[1], [0], [0], [1], [0, 0, 1, 1], [], []>} : vector<36x72xf32>, vector<72x72xf32>, vector<36x72xf32> -> vector<36x72xf32>
    %c0_207 = arith.constant 0 : index
    %c0_208 = arith.constant 0 : index
    %213 = vector.load %arg66[%c0_207, %c0_208] : memref<36x36xf32, #tpu.memory_space<vmem>>, vector<36x36xf32>
    %cst_209 = arith.constant dense<0.000000e+00> : vector<36x72xf32>
    %214 = tpu.matmul %213, %210, %cst_209 {dimension_numbers = #tpu.dot_dimension_numbers<[1], [0], [0], [1], [0, 0, 1, 1], [], []>} : vector<36x36xf32>, vector<36x72xf32>, vector<36x72xf32> -> vector<36x72xf32>
    %c0_210 = arith.constant 0 : index
    %c0_211 = arith.constant 0 : index
    %215 = vector.load %arg62[%c0_210, %c0_211] : memref<72x72xf32, #tpu.memory_space<vmem>>, vector<72x72xf32>
    %cst_212 = arith.constant dense<0.000000e+00> : vector<36x72xf32>
    %216 = tpu.matmul %214, %215, %cst_212 {dimension_numbers = #tpu.dot_dimension_numbers<[1], [0], [0], [1], [0, 0, 1, 1], [], []>} : vector<36x72xf32>, vector<72x72xf32>, vector<36x72xf32> -> vector<36x72xf32>
    %217 = arith.addf %212, %216 : vector<36x72xf32>
    %c0_213 = arith.constant 0 : index
    %c0_214 = arith.constant 0 : index
    %218 = vector.load %arg67[%c0_213, %c0_214] : memref<36x36xf32, #tpu.memory_space<vmem>>, vector<36x36xf32>
    %cst_215 = arith.constant dense<0.000000e+00> : vector<36x72xf32>
    %219 = tpu.matmul %218, %210, %cst_215 {dimension_numbers = #tpu.dot_dimension_numbers<[1], [0], [0], [1], [0, 0, 1, 1], [], []>} : vector<36x36xf32>, vector<36x72xf32>, vector<36x72xf32> -> vector<36x72xf32>
    %c0_216 = arith.constant 0 : index
    %c0_217 = arith.constant 0 : index
    %220 = vector.load %arg64[%c0_216, %c0_217] : memref<72x72xf32, #tpu.memory_space<vmem>>, vector<72x72xf32>
    %cst_218 = arith.constant dense<0.000000e+00> : vector<36x72xf32>
    %221 = tpu.matmul %219, %220, %cst_218 {dimension_numbers = #tpu.dot_dimension_numbers<[1], [0], [0], [1], [0, 0, 1, 1], [], []>} : vector<36x72xf32>, vector<72x72xf32>, vector<36x72xf32> -> vector<36x72xf32>
    %222 = arith.addf %217, %221 : vector<36x72xf32>
    %c0_219 = arith.constant 0 : index
    %c0_220 = arith.constant 0 : index
    %223 = vector.load %arg65[%c0_219, %c0_220] : memref<36x72xf32, #tpu.memory_space<vmem>>, vector<36x72xf32>
    %224 = arith.addf %222, %223 : vector<36x72xf32>
    %cst_221 = arith.constant 0.000000e+00 : f32
    %225 = vector.broadcast %cst_221 : f32 to vector<36x72xf32>
    %226 = arith.maximumf %224, %225 : vector<36x72xf32>
    %227 = arith.addf %226, %197 : vector<36x72xf32>
    %cst_222 = arith.constant 0.000000e+00 : f32
    %228 = vector.broadcast %cst_222 : f32 to vector<36x72xf32>
    %229 = arith.cmpf oge, %227, %228 : vector<36x72xf32>
    %cst_223 = arith.constant 0.00999999977 : f32
    %230 = vector.broadcast %cst_223 : f32 to vector<36x72xf32>
    %231 = arith.mulf %230, %227 : vector<36x72xf32>
    %232 = arith.select %229, %227, %231 : vector<36x72xi1>, vector<36x72xf32>
    %c0_224 = arith.constant 0 : index
    %c0_225 = arith.constant 0 : index
    %233 = vector.load %arg68[%c0_224, %c0_225] : memref<72x108xf32, #tpu.memory_space<vmem>>, vector<72x108xf32>
    %cst_226 = arith.constant dense<0.000000e+00> : vector<36x108xf32>
    %234 = tpu.matmul %232, %233, %cst_226 {dimension_numbers = #tpu.dot_dimension_numbers<[1], [0], [0], [1], [0, 0, 1, 1], [], []>} : vector<36x72xf32>, vector<72x108xf32>, vector<36x108xf32> -> vector<36x108xf32>
    %c0_227 = arith.constant 0 : index
    %c0_228 = arith.constant 0 : index
    %235 = vector.load %arg69[%c0_227, %c0_228] : memref<36x108xf32, #tpu.memory_space<vmem>>, vector<36x108xf32>
    %236 = arith.addf %234, %235 : vector<36x108xf32>
    %c0_229 = arith.constant 0 : index
    %c0_230 = arith.constant 0 : index
    %237 = vector.load %arg70[%c0_229, %c0_230] : memref<60x108xf32, #tpu.memory_space<vmem>>, vector<60x108xf32>
    %cst_231 = arith.constant dense<0.000000e+00> : vector<20x108xf32>
    %238 = tpu.matmul %123, %237, %cst_231 {dimension_numbers = #tpu.dot_dimension_numbers<[1], [0], [0], [1], [0, 0, 1, 1], [], []>} : vector<20x60xf32>, vector<60x108xf32>, vector<20x108xf32> -> vector<20x108xf32>
    %cst_232 = arith.constant dense<0.000000e+00> : vector<36x108xf32>
    %239 = tpu.matmul %192, %238, %cst_232 {dimension_numbers = #tpu.dot_dimension_numbers<[1], [0], [0], [1], [0, 0, 1, 1], [], []>} : vector<36x20xf32>, vector<20x108xf32>, vector<36x108xf32> -> vector<36x108xf32>
    %240 = arith.addf %239, %236 : vector<36x108xf32>
    %c0_233 = arith.constant 0 : index
    %c0_234 = arith.constant 0 : index
    %241 = vector.load %arg71[%c0_233, %c0_234] : memref<36x12xf32, #tpu.memory_space<vmem>>, vector<36x12xf32>
    %c0_235 = arith.constant 0 : index
    %c0_236 = arith.constant 0 : index
    %242 = vector.load %arg72[%c0_235, %c0_236] : memref<36x108xf32, #tpu.memory_space<vmem>>, vector<36x108xf32>
    %cst_237 = arith.constant dense<0.000000e+00> : vector<12x108xf32>
    %243 = tpu.matmul %4, %242, %cst_237 {dimension_numbers = #tpu.dot_dimension_numbers<[1], [0], [0], [1], [0, 0, 1, 1], [], []>} : vector<12x36xf32>, vector<36x108xf32>, vector<12x108xf32> -> vector<12x108xf32>
    %cst_238 = arith.constant dense<0.000000e+00> : vector<36x108xf32>
    %244 = tpu.matmul %241, %243, %cst_238 {dimension_numbers = #tpu.dot_dimension_numbers<[1], [0], [0], [1], [0, 0, 1, 1], [], []>} : vector<36x12xf32>, vector<12x108xf32>, vector<36x108xf32> -> vector<36x108xf32>
    %c0_239 = arith.constant 0 : index
    %c0_240 = arith.constant 0 : index
    %c0_241 = arith.constant 0 : index
    %245 = vector.load %arg73[%c0_239, %c0_240, %c0_241] : memref<3x36x108xf32, #tpu.memory_space<vmem>>, vector<1x36x108xf32>
    %246 = vector.shape_cast %245 : vector<1x36x108xf32> to vector<36x108xf32>
    %247 = vector.shape_cast %244 : vector<36x108xf32> to vector<1x36x108xf32>
    tpu.vector_store %arg73[%c0_239, %c0_240, %c0_241], %247 {strides = array<i32>} : memref<3x36x108xf32, #tpu.memory_space<vmem>>, vector<1x36x108xf32>,
    %cst_242 = arith.constant dense<0.000000e+00> : vector<20x108xf32>
    %248 = tpu.matmul %123, %237, %cst_242 {dimension_numbers = #tpu.dot_dimension_numbers<[1], [0], [0], [1], [0, 0, 1, 1], [], []>} : vector<20x60xf32>, vector<60x108xf32>, vector<20x108xf32> -> vector<20x108xf32>
    %cst_243 = arith.constant dense<0.000000e+00> : vector<36x108xf32>
    %249 = tpu.matmul %192, %248, %cst_243 {dimension_numbers = #tpu.dot_dimension_numbers<[1], [0], [0], [1], [0, 0, 1, 1], [], []>} : vector<36x20xf32>, vector<20x108xf32>, vector<36x108xf32> -> vector<36x108xf32>
    %c1 = arith.constant 1 : index
    %c0_244 = arith.constant 0 : index
    %c0_245 = arith.constant 0 : index
    %250 = vector.load %arg73[%c1, %c0_244, %c0_245] : memref<3x36x108xf32, #tpu.memory_space<vmem>>, vector<1x36x108xf32>
    %251 = vector.shape_cast %250 : vector<1x36x108xf32> to vector<36x108xf32>
    %252 = vector.shape_cast %249 : vector<36x108xf32> to vector<1x36x108xf32>
    tpu.vector_store %arg73[%c1, %c0_244, %c0_245], %252 {strides = array<i32>} : memref<3x36x108xf32, #tpu.memory_space<vmem>>, vector<1x36x108xf32>,
    %c2 = arith.constant 2 : index
    %c0_246 = arith.constant 0 : index
    %c0_247 = arith.constant 0 : index
    %253 = vector.load %arg73[%c2, %c0_246, %c0_247] : memref<3x36x108xf32, #tpu.memory_space<vmem>>, vector<1x36x108xf32>
    %254 = vector.shape_cast %253 : vector<1x36x108xf32> to vector<36x108xf32>
    %255 = vector.shape_cast %240 : vector<36x108xf32> to vector<1x36x108xf32>
    tpu.vector_store %arg73[%c2, %c0_246, %c0_247], %255 {strides = array<i32>} : memref<3x36x108xf32, #tpu.memory_space<vmem>>, vector<1x36x108xf32>,
    return
  }
}

</mosaic_0001>

<llo_original>
// kernel: tpu_custom_call.1
$region0: #{tpu_custom_call.1}
  #allocation0 [shape = 'u32[]', space=smem, size = 0x4, offset = 0x4, fixed_abs, tag = 'smem constant byte address 0x4 - core index']
  #allocation1 [shape = 'u32[144,128]{1,0:T(1,128)}', space=vmem, size = 0x12000, scoped, tag = 'internal scratch']
  %s0 = inlined_call_operand.smem [shape: u32[74], index: -1, kind: input, shape index: {}]
  %s1 = sld [smem:[%s0]]
  %s2 = scalar_lea.smem %s0, 1
  %s3 = sld [smem:[%s2]]
  %s4 = scalar_lea.smem %s0, 2
  %s5 = sld [smem:[%s4]]
  %s6 = scalar_lea.smem %s0, 3
  %s7 = sld [smem:[%s6]]
  %s8 = scalar_lea.smem %s0, 4
  %s9 = sld [smem:[%s8]]
  %s10 = scalar_lea.smem %s0, 5
  %s11 = sld [smem:[%s10]]
  %s12 = scalar_lea.smem %s0, 6
  %s13 = sld [smem:[%s12]]
  %s14 = scalar_lea.smem %s0, 7
  %s15 = sld [smem:[%s14]]
  %s16 = scalar_lea.smem %s0, 8
  %s17 = sld [smem:[%s16]]
  %s18 = scalar_lea.smem %s0, 9
  %s19 = sld [smem:[%s18]]
  %s20 = scalar_lea.smem %s0, 10
  %s21 = sld [smem:[%s20]]
  %s22 = scalar_lea.smem %s0, 11
  %s23 = sld [smem:[%s22]]
  %s24 = scalar_lea.smem %s0, 12
  %s25 = sld [smem:[%s24]]
  %s26 = scalar_lea.smem %s0, 13
  %s27 = sld [smem:[%s26]]
  %s28 = scalar_lea.smem %s0, 14
  %s29 = sld [smem:[%s28]]
  %s30 = scalar_lea.smem %s0, 15
  %s31 = sld [smem:[%s30]]
  %s32 = scalar_lea.smem %s0, 16
  %s33 = sld [smem:[%s32]]
  %s34 = scalar_lea.smem %s0, 17
  %s35 = sld [smem:[%s34]]
  %s36 = scalar_lea.smem %s0, 18
  %s37 = sld [smem:[%s36]]
  %s38 = scalar_lea.smem %s0, 19
  %s39 = sld [smem:[%s38]]
  %s40 = scalar_lea.smem %s0, 20
  %s41 = sld [smem:[%s40]]
  %s42 = scalar_lea.smem %s0, 21
  %s43 = sld [smem:[%s42]]
  %s44 = scalar_lea.smem %s0, 22
  %s45 = sld [smem:[%s44]]
  %s46 = scalar_lea.smem %s0, 23
  %s47 = sld [smem:[%s46]]
  %s48 = scalar_lea.smem %s0, 24
  %s49 = sld [smem:[%s48]]
  %s50 = scalar_lea.smem %s0, 25
  %s51 = sld [smem:[%s50]]
  %s52 = scalar_lea.smem %s0, 26
  %s53 = sld [smem:[%s52]]
  %s54 = scalar_lea.smem %s0, 27
  %s55 = sld [smem:[%s54]]
  %s56 = scalar_lea.smem %s0, 28
  %s57 = sld [smem:[%s56]]
  %s58 = scalar_lea.smem %s0, 29
  %s59 = sld [smem:[%s58]]
  %s60 = scalar_lea.smem %s0, 30
  %s61 = sld [smem:[%s60]]
  %s62 = scalar_lea.smem %s0, 31
  %s63 = sld [smem:[%s62]]
  %s64 = scalar_lea.smem %s0, 32
  %s65 = sld [smem:[%s64]]
  %s66 = scalar_lea.smem %s0, 33
  %s67 = sld [smem:[%s66]]
  %s68 = scalar_lea.smem %s0, 34
  %s69 = sld [smem:[%s68]]
  %s70 = scalar_lea.smem %s0, 35
  %s71 = sld [smem:[%s70]]
  %s72 = scalar_lea.smem %s0, 36
  %s73 = sld [smem:[%s72]]
  %s74 = scalar_lea.smem %s0, 37
  %s75 = sld [smem:[%s74]]
  %s76 = scalar_lea.smem %s0, 38
  %s77 = sld [smem:[%s76]]
  %s78 = scalar_lea.smem %s0, 39
  %s79 = sld [smem:[%s78]]
  %s80 = scalar_lea.smem %s0, 40
  %s81 = sld [smem:[%s80]]
  %s82 = scalar_lea.smem %s0, 41
  %s83 = sld [smem:[%s82]]
  %s84 = scalar_lea.smem %s0, 42
  %s85 = sld [smem:[%s84]]
  %s86 = scalar_lea.smem %s0, 43
  %s87 = sld [smem:[%s86]]
  %s88 = scalar_lea.smem %s0, 44
  %s89 = sld [smem:[%s88]]
  %s90 = scalar_lea.smem %s0, 45
  %s91 = sld [smem:[%s90]]
  %s92 = scalar_lea.smem %s0, 46
  %s93 = sld [smem:[%s92]]
  %s94 = scalar_lea.smem %s0, 47
  %s95 = sld [smem:[%s94]]
  %s96 = scalar_lea.smem %s0, 48
  %s97 = sld [smem:[%s96]]
  %s98 = scalar_lea.smem %s0, 49
  %s99 = sld [smem:[%s98]]
  %s100 = scalar_lea.smem %s0, 50
  %s101 = sld [smem:[%s100]]
  %s102 = scalar_lea.smem %s0, 51
  %s103 = sld [smem:[%s102]]
  %s104 = scalar_lea.smem %s0, 52
  %s105 = sld [smem:[%s104]]
  %s106 = scalar_lea.smem %s0, 53
  %s107 = sld [smem:[%s106]]
  %s108 = scalar_lea.smem %s0, 54
  %s109 = sld [smem:[%s108]]
  %s110 = scalar_lea.smem %s0, 55
  %s111 = sld [smem:[%s110]]
  %s112 = scalar_lea.smem %s0, 56
  %s113 = sld [smem:[%s112]]
  %s114 = scalar_lea.smem %s0, 57
  %s115 = sld [smem:[%s114]]
  %s116 = scalar_lea.smem %s0, 58
  %s117 = sld [smem:[%s116]]
  %s118 = scalar_lea.smem %s0, 59
  %s119 = sld [smem:[%s118]]
  %s120 = scalar_lea.smem %s0, 60
  %s121 = sld [smem:[%s120]]
  %s122 = scalar_lea.smem %s0, 61
  %s123 = sld [smem:[%s122]]
  %s124 = scalar_lea.smem %s0, 62
  %s125 = sld [smem:[%s124]]
  %s126 = scalar_lea.smem %s0, 63
  %s127 = sld [smem:[%s126]]
  %s128 = scalar_lea.smem %s0, 64
  %s129 = sld [smem:[%s128]]
  %s130 = scalar_lea.smem %s0, 65
  %s131 = sld [smem:[%s130]]
  %s132 = scalar_lea.smem %s0, 66
  %s133 = sld [smem:[%s132]]
  %s134 = scalar_lea.smem %s0, 67
  %s135 = sld [smem:[%s134]]
  %s136 = scalar_lea.smem %s0, 68
  %s137 = sld [smem:[%s136]]
  %s138 = scalar_lea.smem %s0, 69
  %s139 = sld [smem:[%s138]]
  %s140 = scalar_lea.smem %s0, 70
  %s141 = sld [smem:[%s140]]
  %s142 = scalar_lea.smem %s0, 71
  %s143 = sld [smem:[%s142]]
  %s144 = scalar_lea.smem %s0, 72
  %s145 = sld [smem:[%s144]]
  %s146 = scalar_lea.smem %s0, 73
  %s147 = sld [smem:[%s146]]
  %s148 = sld [smem:[#allocation0]]
  $region518: #{tpu_custom_call.1} parent=0
    _
  %s150 = ssub.s32 1, %s148
  %s151 = scalar_select 0, %s150, %s148
  $region1: #{tpu_custom_call.1} parent=0
    #allocation2 [shape = 'u8[8192]{0}', space=vmem, size = 0x2000, scoped, tag = 'input window, operand 0, single buffered']
    #allocation3 [shape = 's32[1]{0}', space=sflag, size = 0x4, scoped, tag = 'scoped memory for tpu_custom_call.1']
    #allocation4 [shape = 's32[1]{0}', space=sflag, size = 0x4, scoped, tag = 'scoped memory for tpu_custom_call.1']
    #allocation5 [shape = 'u8[12288]{0}', space=vmem, size = 0x3000, scoped, tag = 'input window, operand 1, single buffered']
    #allocation6 [shape = 's32[1]{0}', space=sflag, size = 0x4, scoped, tag = 'scoped memory for tpu_custom_call.1']
    #allocation7 [shape = 'u8[8192]{0}', space=vmem, size = 0x2000, scoped, tag = 'input window, operand 2, single buffered']
    #allocation8 [shape = 'u8[12288]{0}', space=vmem, size = 0x3000, scoped, tag = 'input window, operand 3, single buffered']
    #allocation9 [shape = 's32[1]{0}', space=sflag, size = 0x4, scoped, tag = 'scoped memory for tpu_custom_call.1']
    #allocation10 [shape = 'u8[12288]{0}', space=vmem, size = 0x3000, scoped, tag = 'input window, operand 4, single buffered']
    #allocation11 [shape = 'u8[12288]{0}', space=vmem, size = 0x3000, scoped, tag = 'input window, operand 5, single buffered']
    #allocation12 [shape = 's32[1]{0}', space=sflag, size = 0x4, scoped, tag = 'scoped memory for tpu_custom_call.1']
    #allocation13 [shape = 'u8[8192]{0}', space=vmem, size = 0x2000, scoped, tag = 'input window, operand 6, single buffered']
    #allocation14 [shape = 'u8[8192]{0}', space=vmem, size = 0x2000, scoped, tag = 'input window, operand 7, single buffered']
    #allocation15 [shape = 's32[1]{0}', space=sflag, size = 0x4, scoped, tag = 'scoped memory for tpu_custom_call.1']
    #allocation16 [shape = 'u8[8192]{0}', space=vmem, size = 0x2000, scoped, tag = 'input window, operand 8, single buffered']
    #allocation17 [shape = 'u8[12288]{0}', space=vmem, size = 0x3000, scoped, tag = 'input window, operand 9, single buffered']
    #allocation18 [shape = 's32[1]{0}', space=sflag, size = 0x4, scoped, tag = 'scoped memory for tpu_custom_call.1']
    #allocation19 [shape = 'u8[12288]{0}', space=vmem, size = 0x3000, scoped, tag = 'input window, operand 10, single buffered']
    #allocation20 [shape = 'u8[12288]{0}', space=vmem, size = 0x3000, scoped, tag = 'input window, operand 11, single buffered']
    #allocation21 [shape = 's32[1]{0}', space=sflag, size = 0x4, scoped, tag = 'scoped memory for tpu_custom_call.1']
    #allocation22 [shape = 'u8[8192]{0}', space=vmem, size = 0x2000, scoped, tag = 'input window, operand 12, single buffered']
    #allocation23 [shape = 'u8[12288]{0}', space=vmem, size = 0x3000, scoped, tag = 'input window, operand 13, single buffered']
    #allocation24 [shape = 's32[1]{0}', space=sflag, size = 0x4, scoped, tag = 'scoped memory for tpu_custom_call.1']
    #allocation25 [shape = 'u8[12288]{0}', space=vmem, size = 0x3000, scoped, tag = 'input window, operand 14, single buffered']
    #allocation26 [shape = 'u8[12288]{0}', space=vmem, size = 0x3000, scoped, tag = 'input window, operand 15, single buffered']
    #allocation27 [shape = 's32[1]{0}', space=sflag, size = 0x4, scoped, tag = 'scoped memory for tpu_custom_call.1']
    #allocation28 [shape = 'u8[8192]{0}', space=vmem, size = 0x2000, scoped, tag = 'input window, operand 16, single buffered']
    #allocation29 [shape = 'u8[12288]{0}', space=vmem, size = 0x3000, scoped, tag = 'input window, operand 17, single buffered']
    #allocation30 [shape = 's32[1]{0}', space=sflag, size = 0x4, scoped, tag = 'scoped memory for tpu_custom_call.1']
    #allocation31 [shape = 'u8[12288]{0}', space=vmem, size = 0x3000, scoped, tag = 'input window, operand 18, single buffered']
    #allocation32 [shape = 'u8[12288]{0}', space=vmem, size = 0x3000, scoped, tag = 'input window, operand 19, single buffered']
    #allocation33 [shape = 's32[1]{0}', space=sflag, size = 0x4, scoped, tag = 'scoped memory for tpu_custom_call.1']
    #allocation34 [shape = 'u8[8192]{0}', space=vmem, size = 0x2000, scoped, tag = 'input window, operand 20, single buffered']
    #allocation35 [shape = 'u8[12288]{0}', space=vmem, size = 0x3000, scoped, tag = 'input window, operand 21, single buffered']
    #allocation36 [shape = 's32[1]{0}', space=sflag, size = 0x4, scoped, tag = 'scoped memory for tpu_custom_call.1']
    #allocation37 [shape = 'u8[12288]{0}', space=vmem, size = 0x3000, scoped, tag = 'input window, operand 23, single buffered']
    #allocation38 [shape = 'u8[12288]{0}', space=vmem, size = 0x3000, scoped, tag = 'input window, operand 25, single buffered']
    #allocation39 [shape = 's32[1]{0}', space=sflag, size = 0x4, scoped, tag = 'scoped memory for tpu_custom_call.1']
    #allocation40 [shape = 'u8[12288]{0}', space=vmem, size = 0x3000, scoped, tag = 'input window, operand 26, single buffered']
    #allocation41 [shape = 'u8[12288]{0}', space=vmem, size = 0x3000, scoped, tag = 'input window, operand 27, single buffered']
    #allocation42 [shape = 's32[1]{0}', space=sflag, size = 0x4, scoped, tag = 'scoped memory for tpu_custom_call.1']
    #allocation43 [shape = 'u8[12288]{0}', space=vmem, size = 0x3000, scoped, tag = 'input window, operand 32, single buffered']
    #allocation44 [shape = 'u8[12288]{0}', space=vmem, size = 0x3000, scoped, tag = 'input window, operand 33, single buffered']
    #allocation45 [shape = 's32[1]{0}', space=sflag, size = 0x4, scoped, tag = 'scoped memory for tpu_custom_call.1']
    #allocation46 [shape = 'u8[12288]{0}', space=vmem, size = 0x3000, scoped, tag = 'input window, operand 34, single buffered']
    #allocation47 [shape = 'u8[20480]{0}', space=vmem, size = 0x5000, scoped, tag = 'input window, operand 35, single buffered']
    #allocation48 [shape = 's32[1]{0}', space=sflag, size = 0x4, scoped, tag = 'scoped memory for tpu_custom_call.1']
    #allocation49 [shape = 'u8[12288]{0}', space=vmem, size = 0x3000, scoped, tag = 'input window, operand 36, single buffered']
    #allocation50 [shape = 'u8[20480]{0}', space=vmem, size = 0x5000, scoped, tag = 'input window, operand 37, single buffered']
    #allocation51 [shape = 's32[1]{0}', space=sflag, size = 0x4, scoped, tag = 'scoped memory for tpu_custom_call.1']
    #allocation52 [shape = 'u8[20480]{0}', space=vmem, size = 0x5000, scoped, tag = 'input window, operand 38, single buffered']
    #allocation53 [shape = 'u8[20480]{0}', space=vmem, size = 0x5000, scoped, tag = 'input window, operand 39, single buffered']
    #allocation54 [shape = 's32[1]{0}', space=sflag, size = 0x4, scoped, tag = 'scoped memory for tpu_custom_call.1']
    #allocation55 [shape = 'u8[12288]{0}', space=vmem, size = 0x3000, scoped, tag = 'input window, operand 41, single buffered']
    #allocation56 [shape = 'u8[20480]{0}', space=vmem, size = 0x5000, scoped, tag = 'input window, operand 42, single buffered']
    #allocation57 [shape = 's32[1]{0}', space=sflag, size = 0x4, scoped, tag = 'scoped memory for tpu_custom_call.1']
    #allocation58 [shape = 'u8[20480]{0}', space=vmem, size = 0x5000, scoped, tag = 'input window, operand 43, single buffered']
    #allocation59 [shape = 'u8[20480]{0}', space=vmem, size = 0x5000, scoped, tag = 'input window, operand 44, single buffered']
    #allocation60 [shape = 's32[1]{0}', space=sflag, size = 0x4, scoped, tag = 'scoped memory for tpu_custom_call.1']
    #allocation61 [shape = 'u8[12288]{0}', space=vmem, size = 0x3000, scoped, tag = 'input window, operand 45, single buffered']
    #allocation62 [shape = 'u8[20480]{0}', space=vmem, size = 0x5000, scoped, tag = 'input window, operand 46, single buffered']
    #allocation63 [shape = 's32[1]{0}', space=sflag, size = 0x4, scoped, tag = 'scoped memory for tpu_custom_call.1']
    #allocation64 [shape = 'u8[20480]{0}', space=vmem, size = 0x5000, scoped, tag = 'input window, operand 47, single buffered']
    #allocation65 [shape = 'u8[20480]{0}', space=vmem, size = 0x5000, scoped, tag = 'input window, operand 48, single buffered']
    #allocation66 [shape = 's32[1]{0}', space=sflag, size = 0x4, scoped, tag = 'scoped memory for tpu_custom_call.1']
    #allocation67 [shape = 'u8[12288]{0}', space=vmem, size = 0x3000, scoped, tag = 'input window, operand 49, single buffered']
    #allocation68 [shape = 'u8[20480]{0}', space=vmem, size = 0x5000, scoped, tag = 'input window, operand 51, single buffered']
    #allocation69 [shape = 's32[1]{0}', space=sflag, size = 0x4, scoped, tag = 'scoped memory for tpu_custom_call.1']
    #allocation70 [shape = 'u8[20480]{0}', space=vmem, size = 0x5000, scoped, tag = 'input window, operand 52, single buffered']
    #allocation71 [shape = 'u8[12288]{0}', space=vmem, size = 0x3000, scoped, tag = 'input window, operand 53, single buffered']
    #allocation72 [shape = 's32[1]{0}', space=sflag, size = 0x4, scoped, tag = 'scoped memory for tpu_custom_call.1']
    #allocation73 [shape = 'u8[20480]{0}', space=vmem, size = 0x5000, scoped, tag = 'input window, operand 54, single buffered']
    #allocation74 [shape = 'u8[20480]{0}', space=vmem, size = 0x5000, scoped, tag = 'input window, operand 56, single buffered']
    #allocation75 [shape = 's32[1]{0}', space=sflag, size = 0x4, scoped, tag = 'scoped memory for tpu_custom_call.1']
    #allocation76 [shape = 'u8[20480]{0}', space=vmem, size = 0x5000, scoped, tag = 'input window, operand 58, single buffered']
    #allocation77 [shape = 'u8[20480]{0}', space=vmem, size = 0x5000, scoped, tag = 'input window, operand 59, single buffered']
    #allocation78 [shape = 's32[1]{0}', space=sflag, size = 0x4, scoped, tag = 'scoped memory for tpu_custom_call.1']
    #allocation79 [shape = 'u8[20480]{0}', space=vmem, size = 0x5000, scoped, tag = 'input window, operand 65, single buffered']
    #allocation80 [shape = 'u8[20480]{0}', space=vmem, size = 0x5000, scoped, tag = 'input window, operand 66, single buffered']
    #allocation81 [shape = 's32[1]{0}', space=sflag, size = 0x4, scoped, tag = 'scoped memory for tpu_custom_call.1']
    #allocation82 [shape = 'u8[20480]{0}', space=vmem, size = 0x5000, scoped, tag = 'input window, operand 67, single buffered']
    #allocation83 [shape = 'u8[20480]{0}', space=vmem, size = 0x5000, scoped, tag = 'input window, operand 69, single buffered']
    #allocation84 [shape = 's32[1]{0}', space=sflag, size = 0x4, scoped, tag = 'scoped memory for tpu_custom_call.1']
    #allocation85 [shape = 'u8[61440]{0}', space=vmem, size = 0xf000, scoped, tag = 'output window, operand 0, single buffered']
    %152 = vsyncpa [#allocation3], 0
    %153 = vsyncpa [#allocation6], 0
    %154 = vsyncpa [#allocation9], 0
    %155 = vsyncpa [#allocation12], 0
    %156 = vsyncpa [#allocation15], 0
    %157 = vsyncpa [#allocation18], 0
    %158 = vsyncpa [#allocation21], 0
    %159 = vsyncpa [#allocation24], 0
    %160 = vsyncpa [#allocation27], 0
    %161 = vsyncpa [#allocation30], 0
    %162 = vsyncpa [#allocation33], 0
    %163 = vsyncpa [#allocation36], 0
    %164 = vsyncpa [#allocation39], 0
    %165 = vsyncpa [#allocation42], 0
    %166 = vsyncpa [#allocation45], 0
    %167 = vsyncpa [#allocation48], 0
    %168 = vsyncpa [#allocation51], 0
    %169 = vsyncpa [#allocation54], 0
    %170 = vsyncpa [#allocation57], 0
    %171 = vsyncpa [#allocation60], 0
    %172 = vsyncpa [#allocation63], 0
    %173 = vsyncpa [#allocation66], 0
    %174 = vsyncpa [#allocation69], 0
    %175 = vsyncpa [#allocation72], 0
    %176 = vsyncpa [#allocation75], 0
    %177 = vsyncpa [#allocation78], 0
    %178 = vsyncpa [#allocation81], 0
    %179 = vsyncpa [#allocation84], 0
    %180 = vsyncpa [#allocation4], 0
    // Predicated region
    $region2: #{tpu_custom_call.1} parent=1 // pred_check
      _
    $region3: #{tpu_custom_call.1} parent=1 // pred_check_branch
      %182 = sbr.rel (0) target = $region5
    $region4: #{tpu_custom_call.1} parent=1 // pred_region
      %s184 = ssub.s32 256, 256
      %185 = vsyncadd [#allocation3], %s184
      %s186 = sshll.u32 [#allocation2], 4
      %s187 = int_to_ptr.vmem [resolvable:$true] %s186
      %192 = dma.hbm_to_vmem [thread:$0]  %s1, 256, %s187, [#allocation3], 128, 128, 8
    $region5: #{tpu_custom_call.1} parent=1 // pred_fallthru
      _
    // Predicated region
    $region6: #{tpu_custom_call.1} parent=1 // pred_check
      _
    $region7: #{tpu_custom_call.1} parent=1 // pred_check_branch
      %194 = sbr.rel (0) target = $region9
    $region8: #{tpu_custom_call.1} parent=1 // pred_region
      %s196 = ssub.s32 384, 384
      %197 = vsyncadd [#allocation6], %s196
      %s198 = sshll.u32 [#allocation5], 4
      %s199 = int_to_ptr.vmem [resolvable:$true] %s198
      %204 = dma.hbm_to_vmem [thread:$0]  %s3, 384, %s199, [#allocation6], 128, 128, 8
    $region9: #{tpu_custom_call.1} parent=1 // pred_fallthru
      _
    // Predicated region
    $region10: #{tpu_custom_call.1} parent=1 // pred_check
      _
    $region11: #{tpu_custom_call.1} parent=1 // pred_check_branch
      %206 = sbr.rel (0) target = $region13
    $region12: #{tpu_custom_call.1} parent=1 // pred_region
      %s208 = ssub.s32 256, 256
      %209 = vsyncadd [#allocation6], %s208
      %s210 = sshll.u32 [#allocation7], 4
      %s211 = int_to_ptr.vmem [resolvable:$true] %s210
      %216 = dma.hbm_to_vmem [thread:$0]  %s5, 256, %s211, [#allocation6], 128, 128, 8
    $region13: #{tpu_custom_call.1} parent=1 // pred_fallthru
      _
    // Predicated region
    $region14: #{tpu_custom_call.1} parent=1 // pred_check
      _
    $region15: #{tpu_custom_call.1} parent=1 // pred_check_branch
      %218 = sbr.rel (0) target = $region17
    $region16: #{tpu_custom_call.1} parent=1 // pred_region
      %s220 = ssub.s32 384, 384
      %221 = vsyncadd [#allocation9], %s220
      %s222 = sshll.u32 [#allocation8], 4
      %s223 = int_to_ptr.vmem [resolvable:$true] %s222
      %228 = dma.hbm_to_vmem [thread:$0]  %s7, 384, %s223, [#allocation9], 128, 128, 8
    $region17: #{tpu_custom_call.1} parent=1 // pred_fallthru
      _
    // Predicated region
    $region18: #{tpu_custom_call.1} parent=1 // pred_check
      _
    $region19: #{tpu_custom_call.1} parent=1 // pred_check_branch
      %230 = sbr.rel (0) target = $region21
    $region20: #{tpu_custom_call.1} parent=1 // pred_region
      %s232 = ssub.s32 384, 384
      %233 = vsyncadd [#allocation9], %s232
      %s234 = sshll.u32 [#allocation10], 4
      %s235 = int_to_ptr.vmem [resolvable:$true] %s234
      %240 = dma.hbm_to_vmem [thread:$0]  %s9, 384, %s235, [#allocation9], 128, 128, 8
    $region21: #{tpu_custom_call.1} parent=1 // pred_fallthru
      _
    // Predicated region
    $region22: #{tpu_custom_call.1} parent=1 // pred_check
      _
    $region23: #{tpu_custom_call.1} parent=1 // pred_check_branch
      %242 = sbr.rel (0) target = $region25
    $region24: #{tpu_custom_call.1} parent=1 // pred_region
      %s244 = ssub.s32 384, 384
      %245 = vsyncadd [#allocation12], %s244
      %s246 = sshll.u32 [#allocation11], 4
      %s247 = int_to_ptr.vmem [resolvable:$true] %s246
      %252 = dma.hbm_to_vmem [thread:$0]  %s11, 384, %s247, [#allocation12], 128, 128, 8
    $region25: #{tpu_custom_call.1} parent=1 // pred_fallthru
      _
    // Predicated region
    $region26: #{tpu_custom_call.1} parent=1 // pred_check
      _
    $region27: #{tpu_custom_call.1} parent=1 // pred_check_branch
      %254 = sbr.rel (0) target = $region29
    $region28: #{tpu_custom_call.1} parent=1 // pred_region
      %s256 = ssub.s32 256, 256
      %257 = vsyncadd [#allocation12], %s256
      %s258 = sshll.u32 [#allocation13], 4
      %s259 = int_to_ptr.vmem [resolvable:$true] %s258
      %264 = dma.hbm_to_vmem [thread:$0]  %s13, 256, %s259, [#allocation12], 128, 128, 8
    $region29: #{tpu_custom_call.1} parent=1 // pred_fallthru
      _
    // Predicated region
    $region30: #{tpu_custom_call.1} parent=1 // pred_check
      _
    $region31: #{tpu_custom_call.1} parent=1 // pred_check_branch
      %266 = sbr.rel (0) target = $region33
    $region32: #{tpu_custom_call.1} parent=1 // pred_region
      %s268 = ssub.s32 256, 256
      %269 = vsyncadd [#allocation15], %s268
      %s270 = sshll.u32 [#allocation14], 4
      %s271 = int_to_ptr.vmem [resolvable:$true] %s270
      %276 = dma.hbm_to_vmem [thread:$0]  %s15, 256, %s271, [#allocation15], 128, 128, 8
    $region33: #{tpu_custom_call.1} parent=1 // pred_fallthru
      _
    // Predicated region
    $region34: #{tpu_custom_call.1} parent=1 // pred_check
      _
    $region35: #{tpu_custom_call.1} parent=1 // pred_check_branch
      %278 = sbr.rel (0) target = $region37
    $region36: #{tpu_custom_call.1} parent=1 // pred_region
      %s280 = ssub.s32 256, 256
      %281 = vsyncadd [#allocation15], %s280
      %s282 = sshll.u32 [#allocation16], 4
      %s283 = int_to_ptr.vmem [resolvable:$true] %s282
      %288 = dma.hbm_to_vmem [thread:$0]  %s17, 256, %s283, [#allocation15], 128, 128, 8
    $region37: #{tpu_custom_call.1} parent=1 // pred_fallthru
      _
    // Predicated region
    $region38: #{tpu_custom_call.1} parent=1 // pred_check
      _
    $region39: #{tpu_custom_call.1} parent=1 // pred_check_branch
      %290 = sbr.rel (0) target = $region41
    $region40: #{tpu_custom_call.1} parent=1 // pred_region
      %s292 = ssub.s32 384, 384
      %293 = vsyncadd [#allocation18], %s292
      %s294 = sshll.u32 [#allocation17], 4
      %s295 = int_to_ptr.vmem [resolvable:$true] %s294
      %300 = dma.hbm_to_vmem [thread:$0]  %s19, 384, %s295, [#allocation18], 128, 128, 8
    $region41: #{tpu_custom_call.1} parent=1 // pred_fallthru
      _
    // Predicated region
    $region42: #{tpu_custom_call.1} parent=1 // pred_check
      _
    $region43: #{tpu_custom_call.1} parent=1 // pred_check_branch
      %302 = sbr.rel (0) target = $region45
    $region44: #{tpu_custom_call.1} parent=1 // pred_region
      %s304 = ssub.s32 384, 384
      %305 = vsyncadd [#allocation18], %s304
      %s306 = sshll.u32 [#allocation19], 4
      %s307 = int_to_ptr.vmem [resolvable:$true] %s306
      %312 = dma.hbm_to_vmem [thread:$0]  %s21, 384, %s307, [#allocation18], 128, 128, 8
    $region45: #{tpu_custom_call.1} parent=1 // pred_fallthru
      _
    // Predicated region
    $region46: #{tpu_custom_call.1} parent=1 // pred_check
      _
    $region47: #{tpu_custom_call.1} parent=1 // pred_check_branch
      %314 = sbr.rel (0) target = $region49
    $region48: #{tpu_custom_call.1} parent=1 // pred_region
      %s316 = ssub.s32 384, 384
      %317 = vsyncadd [#allocation21], %s316
      %s318 = sshll.u32 [#allocation20], 4
      %s319 = int_to_ptr.vmem [resolvable:$true] %s318
      %324 = dma.hbm_to_vmem [thread:$0]  %s23, 384, %s319, [#allocation21], 128, 128, 8
    $region49: #{tpu_custom_call.1} parent=1 // pred_fallthru
      _
    // Predicated region
    $region50: #{tpu_custom_call.1} parent=1 // pred_check
      _
    $region51: #{tpu_custom_call.1} parent=1 // pred_check_branch
      %326 = sbr.rel (0) target = $region53
    $region52: #{tpu_custom_call.1} parent=1 // pred_region
      %s328 = ssub.s32 256, 256
      %329 = vsyncadd [#allocation21], %s328
      %s330 = sshll.u32 [#allocation22], 4
      %s331 = int_to_ptr.vmem [resolvable:$true] %s330
      %336 = dma.hbm_to_vmem [thread:$0]  %s25, 256, %s331, [#allocation21], 128, 128, 8
    $region53: #{tpu_custom_call.1} parent=1 // pred_fallthru
      _
    // Predicated region
    $region54: #{tpu_custom_call.1} parent=1 // pred_check
      _
    $region55: #{tpu_custom_call.1} parent=1 // pred_check_branch
      %338 = sbr.rel (0) target = $region57
    $region56: #{tpu_custom_call.1} parent=1 // pred_region
      %s340 = ssub.s32 384, 384
      %341 = vsyncadd [#allocation24], %s340
      %s342 = sshll.u32 [#allocation23], 4
      %s343 = int_to_ptr.vmem [resolvable:$true] %s342
      %348 = dma.hbm_to_vmem [thread:$0]  %s27, 384, %s343, [#allocation24], 128, 128, 8
    $region57: #{tpu_custom_call.1} parent=1 // pred_fallthru
      _
    // Predicated region
    $region58: #{tpu_custom_call.1} parent=1 // pred_check
      _
    $region59: #{tpu_custom_call.1} parent=1 // pred_check_branch
      %350 = sbr.rel (0) target = $region61
    $region60: #{tpu_custom_call.1} parent=1 // pred_region
      %s352 = ssub.s32 384, 384
      %353 = vsyncadd [#allocation24], %s352
      %s354 = sshll.u32 [#allocation25], 4
      %s355 = int_to_ptr.vmem [resolvable:$true] %s354
      %360 = dma.hbm_to_vmem [thread:$0]  %s29, 384, %s355, [#allocation24], 128, 128, 8
    $region61: #{tpu_custom_call.1} parent=1 // pred_fallthru
      _
    // Predicated region
    $region62: #{tpu_custom_call.1} parent=1 // pred_check
      _
    $region63: #{tpu_custom_call.1} parent=1 // pred_check_branch
      %362 = sbr.rel (0) target = $region65
    $region64: #{tpu_custom_call.1} parent=1 // pred_region
      %s364 = ssub.s32 384, 384
      %365 = vsyncadd [#allocation27], %s364
      %s366 = sshll.u32 [#allocation26], 4
      %s367 = int_to_ptr.vmem [resolvable:$true] %s366
      %372 = dma.hbm_to_vmem [thread:$0]  %s31, 384, %s367, [#allocation27], 128, 128, 8
    $region65: #{tpu_custom_call.1} parent=1 // pred_fallthru
      _
    // Predicated region
    $region66: #{tpu_custom_call.1} parent=1 // pred_check
      _
    $region67: #{tpu_custom_call.1} parent=1 // pred_check_branch
      %374 = sbr.rel (0) target = $region69
    $region68: #{tpu_custom_call.1} parent=1 // pred_region
      %s376 = ssub.s32 256, 256
      %377 = vsyncadd [#allocation27], %s376
      %s378 = sshll.u32 [#allocation28], 4
      %s379 = int_to_ptr.vmem [resolvable:$true] %s378
      %384 = dma.hbm_to_vmem [thread:$0]  %s33, 256, %s379, [#allocation27], 128, 128, 8
    $region69: #{tpu_custom_call.1} parent=1 // pred_fallthru
      _
    // Predicated region
    $region70: #{tpu_custom_call.1} parent=1 // pred_check
      _
    $region71: #{tpu_custom_call.1} parent=1 // pred_check_branch
      %386 = sbr.rel (0) target = $region73
    $region72: #{tpu_custom_call.1} parent=1 // pred_region
      %s388 = ssub.s32 384, 384
      %389 = vsyncadd [#allocation30], %s388
      %s390 = sshll.u32 [#allocation29], 4
      %s391 = int_to_ptr.vmem [resolvable:$true] %s390
      %396 = dma.hbm_to_vmem [thread:$0]  %s35, 384, %s391, [#allocation30], 128, 128, 8
    $region73: #{tpu_custom_call.1} parent=1 // pred_fallthru
      _
    // Predicated region
    $region74: #{tpu_custom_call.1} parent=1 // pred_check
      _
    $region75: #{tpu_custom_call.1} parent=1 // pred_check_branch
      %398 = sbr.rel (0) target = $region77
    $region76: #{tpu_custom_call.1} parent=1 // pred_region
      %s400 = ssub.s32 384, 384
      %401 = vsyncadd [#allocation30], %s400
      %s402 = sshll.u32 [#allocation31], 4
      %s403 = int_to_ptr.vmem [resolvable:$true] %s402
      %408 = dma.hbm_to_vmem [thread:$0]  %s37, 384, %s403, [#allocation30], 128, 128, 8
    $region77: #{tpu_custom_call.1} parent=1 // pred_fallthru
      _
    // Predicated region
    $region78: #{tpu_custom_call.1} parent=1 // pred_check
      _
    $region79: #{tpu_custom_call.1} parent=1 // pred_check_branch
      %410 = sbr.rel (0) target = $region81
    $region80: #{tpu_custom_call.1} parent=1 // pred_region
      %s412 = ssub.s32 384, 384
      %413 = vsyncadd [#allocation33], %s412
      %s414 = sshll.u32 [#allocation32], 4
      %s415 = int_to_ptr.vmem [resolvable:$true] %s414
      %420 = dma.hbm_to_vmem [thread:$0]  %s39, 384, %s415, [#allocation33], 128, 128, 8
    $region81: #{tpu_custom_call.1} parent=1 // pred_fallthru
      _
    // Predicated region
    $region82: #{tpu_custom_call.1} parent=1 // pred_check
      _
    $region83: #{tpu_custom_call.1} parent=1 // pred_check_branch
      %422 = sbr.rel (0) target = $region85
    $region84: #{tpu_custom_call.1} parent=1 // pred_region
      %s424 = ssub.s32 256, 256
      %425 = vsyncadd [#allocation33], %s424
      %s426 = sshll.u32 [#allocation34], 4
      %s427 = int_to_ptr.vmem [resolvable:$true] %s426
      %432 = dma.hbm_to_vmem [thread:$0]  %s41, 256, %s427, [#allocation33], 128, 128, 8
    $region85: #{tpu_custom_call.1} parent=1 // pred_fallthru
      _
    // Predicated region
    $region86: #{tpu_custom_call.1} parent=1 // pred_check
      _
    $region87: #{tpu_custom_call.1} parent=1 // pred_check_branch
      %434 = sbr.rel (0) target = $region89
    $region88: #{tpu_custom_call.1} parent=1 // pred_region
      %s436 = ssub.s32 384, 384
      %437 = vsyncadd [#allocation36], %s436
      %s438 = sshll.u32 [#allocation35], 4
      %s439 = int_to_ptr.vmem [resolvable:$true] %s438
      %444 = dma.hbm_to_vmem [thread:$0]  %s43, 384, %s439, [#allocation36], 128, 128, 8
    $region89: #{tpu_custom_call.1} parent=1 // pred_fallthru
      _
    // Predicated region
    $region90: #{tpu_custom_call.1} parent=1 // pred_check
      _
    $region91: #{tpu_custom_call.1} parent=1 // pred_check_branch
      %446 = sbr.rel (0) target = $region93
    $region92: #{tpu_custom_call.1} parent=1 // pred_region
      _
    $region93: #{tpu_custom_call.1} parent=1 // pred_fallthru
      _
    // Predicated region
    $region94: #{tpu_custom_call.1} parent=1 // pred_check
      _
    $region95: #{tpu_custom_call.1} parent=1 // pred_check_branch
      %448 = sbr.rel (0) target = $region97
    $region96: #{tpu_custom_call.1} parent=1 // pred_region
      %s450 = ssub.s32 384, 384
      %451 = vsyncadd [#allocation36], %s450
      %s452 = sshll.u32 [#allocation37], 4
      %s453 = int_to_ptr.vmem [resolvable:$true] %s452
      %458 = dma.hbm_to_vmem [thread:$0]  %s47, 384, %s453, [#allocation36], 128, 128, 8
    $region97: #{tpu_custom_call.1} parent=1 // pred_fallthru
      _
    // Predicated region
    $region98: #{tpu_custom_call.1} parent=1 // pred_check
      _
    $region99: #{tpu_custom_call.1} parent=1 // pred_check_branch
      %460 = sbr.rel (0) target = $region101
    $region100: #{tpu_custom_call.1} parent=1 // pred_region
      _
    $region101: #{tpu_custom_call.1} parent=1 // pred_fallthru
      _
    // Predicated region
    $region102: #{tpu_custom_call.1} parent=1 // pred_check
      _
    $region103: #{tpu_custom_call.1} parent=1 // pred_check_branch
      %462 = sbr.rel (0) target = $region105
    $region104: #{tpu_custom_call.1} parent=1 // pred_region
      %s464 = ssub.s32 384, 384
      %465 = vsyncadd [#allocation39], %s464
      %s466 = sshll.u32 [#allocation38], 4
      %s467 = int_to_ptr.vmem [resolvable:$true] %s466
      %472 = dma.hbm_to_vmem [thread:$0]  %s51, 384, %s467, [#allocation39], 128, 128, 8
    $region105: #{tpu_custom_call.1} parent=1 // pred_fallthru
      _
    // Predicated region
    $region106: #{tpu_custom_call.1} parent=1 // pred_check
      _
    $region107: #{tpu_custom_call.1} parent=1 // pred_check_branch
      %474 = sbr.rel (0) target = $region109
    $region108: #{tpu_custom_call.1} parent=1 // pred_region
      %s476 = ssub.s32 384, 384
      %477 = vsyncadd [#allocation39], %s476
      %s478 = sshll.u32 [#allocation40], 4
      %s479 = int_to_ptr.vmem [resolvable:$true] %s478
      %484 = dma.hbm_to_vmem [thread:$0]  %s53, 384, %s479, [#allocation39], 128, 128, 8
    $region109: #{tpu_custom_call.1} parent=1 // pred_fallthru
      _
    // Predicated region
    $region110: #{tpu_custom_call.1} parent=1 // pred_check
      _
    $region111: #{tpu_custom_call.1} parent=1 // pred_check_branch
      %486 = sbr.rel (0) target = $region113
    $region112: #{tpu_custom_call.1} parent=1 // pred_region
      %s488 = ssub.s32 384, 384
      %489 = vsyncadd [#allocation42], %s488
      %s490 = sshll.u32 [#allocation41], 4
      %s491 = int_to_ptr.vmem [resolvable:$true] %s490
      %496 = dma.hbm_to_vmem [thread:$0]  %s55, 384, %s491, [#allocation42], 128, 128, 8
    $region113: #{tpu_custom_call.1} parent=1 // pred_fallthru
      _
    // Predicated region
    $region114: #{tpu_custom_call.1} parent=1 // pred_check
      _
    $region115: #{tpu_custom_call.1} parent=1 // pred_check_branch
      %498 = sbr.rel (0) target = $region117
    $region116: #{tpu_custom_call.1} parent=1 // pred_region
      _
    $region117: #{tpu_custom_call.1} parent=1 // pred_fallthru
      _
    // Predicated region
    $region118: #{tpu_custom_call.1} parent=1 // pred_check
      _
    $region119: #{tpu_custom_call.1} parent=1 // pred_check_branch
      %500 = sbr.rel (0) target = $region121
    $region120: #{tpu_custom_call.1} parent=1 // pred_region
      _
    $region121: #{tpu_custom_call.1} parent=1 // pred_fallthru
      _
    // Predicated region
    $region122: #{tpu_custom_call.1} parent=1 // pred_check
      _
    $region123: #{tpu_custom_call.1} parent=1 // pred_check_branch
      %502 = sbr.rel (0) target = $region125
    $region124: #{tpu_custom_call.1} parent=1 // pred_region
      _
    $region125: #{tpu_custom_call.1} parent=1 // pred_fallthru
      _
    // Predicated region
    $region126: #{tpu_custom_call.1} parent=1 // pred_check
      _
    $region127: #{tpu_custom_call.1} parent=1 // pred_check_branch
      %504 = sbr.rel (0) target = $region129
    $region128: #{tpu_custom_call.1} parent=1 // pred_region
      _
    $region129: #{tpu_custom_call.1} parent=1 // pred_fallthru
      _
    // Predicated region
    $region130: #{tpu_custom_call.1} parent=1 // pred_check
      _
    $region131: #{tpu_custom_call.1} parent=1 // pred_check_branch
      %506 = sbr.rel (0) target = $region133
    $region132: #{tpu_custom_call.1} parent=1 // pred_region
      %s508 = ssub.s32 384, 384
      %509 = vsyncadd [#allocation42], %s508
      %s510 = sshll.u32 [#allocation43], 4
      %s511 = int_to_ptr.vmem [resolvable:$true] %s510
      %516 = dma.hbm_to_vmem [thread:$0]  %s65, 384, %s511, [#allocation42], 128, 128, 8
    $region133: #{tpu_custom_call.1} parent=1 // pred_fallthru
      _
    // Predicated region
    $region134: #{tpu_custom_call.1} parent=1 // pred_check
      _
    $region135: #{tpu_custom_call.1} parent=1 // pred_check_branch
      %518 = sbr.rel (0) target = $region137
    $region136: #{tpu_custom_call.1} parent=1 // pred_region
      %s520 = ssub.s32 384, 384
      %521 = vsyncadd [#allocation45], %s520
      %s522 = sshll.u32 [#allocation44], 4
      %s523 = int_to_ptr.vmem [resolvable:$true] %s522
      %528 = dma.hbm_to_vmem [thread:$0]  %s67, 384, %s523, [#allocation45], 128, 128, 8
    $region137: #{tpu_custom_call.1} parent=1 // pred_fallthru
      _
    // Predicated region
    $region138: #{tpu_custom_call.1} parent=1 // pred_check
      _
    $region139: #{tpu_custom_call.1} parent=1 // pred_check_branch
      %530 = sbr.rel (0) target = $region141
    $region140: #{tpu_custom_call.1} parent=1 // pred_region
      %s532 = ssub.s32 384, 384
      %533 = vsyncadd [#allocation45], %s532
      %s534 = sshll.u32 [#allocation46], 4
      %s535 = int_to_ptr.vmem [resolvable:$true] %s534
      %540 = dma.hbm_to_vmem [thread:$0]  %s69, 384, %s535, [#allocation45], 128, 128, 8
    $region141: #{tpu_custom_call.1} parent=1 // pred_fallthru
      _
    // Predicated region
    $region142: #{tpu_custom_call.1} parent=1 // pred_check
      _
    $region143: #{tpu_custom_call.1} parent=1 // pred_check_branch
      %542 = sbr.rel (0) target = $region145
    $region144: #{tpu_custom_call.1} parent=1 // pred_region
      %s544 = ssub.s32 640, 640
      %545 = vsyncadd [#allocation48], %s544
      %s546 = sshll.u32 [#allocation47], 4
      %s547 = int_to_ptr.vmem [resolvable:$true] %s546
      %552 = dma.hbm_to_vmem [thread:$0]  %s71, 640, %s547, [#allocation48], 128, 128, 8
    $region145: #{tpu_custom_call.1} parent=1 // pred_fallthru
      _
    // Predicated region
    $region146: #{tpu_custom_call.1} parent=1 // pred_check
      _
    $region147: #{tpu_custom_call.1} parent=1 // pred_check_branch
      %554 = sbr.rel (0) target = $region149
    $region148: #{tpu_custom_call.1} parent=1 // pred_region
      %s556 = ssub.s32 384, 384
      %557 = vsyncadd [#allocation48], %s556
      %s558 = sshll.u32 [#allocation49], 4
      %s559 = int_to_ptr.vmem [resolvable:$true] %s558
      %564 = dma.hbm_to_vmem [thread:$0]  %s73, 384, %s559, [#allocation48], 128, 128, 8
    $region149: #{tpu_custom_call.1} parent=1 // pred_fallthru
      _
    // Predicated region
    $region150: #{tpu_custom_call.1} parent=1 // pred_check
      _
    $region151: #{tpu_custom_call.1} parent=1 // pred_check_branch
      %566 = sbr.rel (0) target = $region153
    $region152: #{tpu_custom_call.1} parent=1 // pred_region
      %s568 = ssub.s32 640, 640
      %569 = vsyncadd [#allocation51], %s568
      %s570 = sshll.u32 [#allocation50], 4
      %s571 = int_to_ptr.vmem [resolvable:$true] %s570
      %576 = dma.hbm_to_vmem [thread:$0]  %s75, 640, %s571, [#allocation51], 128, 128, 8
    $region153: #{tpu_custom_call.1} parent=1 // pred_fallthru
      _
    // Predicated region
    $region154: #{tpu_custom_call.1} parent=1 // pred_check
      _
    $region155: #{tpu_custom_call.1} parent=1 // pred_check_branch
      %578 = sbr.rel (0) target = $region157
    $region156: #{tpu_custom_call.1} parent=1 // pred_region
      %s580 = ssub.s32 640, 640
      %581 = vsyncadd [#allocation51], %s580
      %s582 = sshll.u32 [#allocation52], 4
      %s583 = int_to_ptr.vmem [resolvable:$true] %s582
      %588 = dma.hbm_to_vmem [thread:$0]  %s77, 640, %s583, [#allocation51], 128, 128, 8
    $region157: #{tpu_custom_call.1} parent=1 // pred_fallthru
      _
    // Predicated region
    $region158: #{tpu_custom_call.1} parent=1 // pred_check
      _
    $region159: #{tpu_custom_call.1} parent=1 // pred_check_branch
      %590 = sbr.rel (0) target = $region161
    $region160: #{tpu_custom_call.1} parent=1 // pred_region
      %s592 = ssub.s32 640, 640
      %593 = vsyncadd [#allocation54], %s592
      %s594 = sshll.u32 [#allocation53], 4
      %s595 = int_to_ptr.vmem [resolvable:$true] %s594
      %600 = dma.hbm_to_vmem [thread:$0]  %s79, 640, %s595, [#allocation54], 128, 128, 8
    $region161: #{tpu_custom_call.1} parent=1 // pred_fallthru
      _
    // Predicated region
    $region162: #{tpu_custom_call.1} parent=1 // pred_check
      _
    $region163: #{tpu_custom_call.1} parent=1 // pred_check_branch
      %602 = sbr.rel (0) target = $region165
    $region164: #{tpu_custom_call.1} parent=1 // pred_region
      _
    $region165: #{tpu_custom_call.1} parent=1 // pred_fallthru
      _
    // Predicated region
    $region166: #{tpu_custom_call.1} parent=1 // pred_check
      _
    $region167: #{tpu_custom_call.1} parent=1 // pred_check_branch
      %604 = sbr.rel (0) target = $region169
    $region168: #{tpu_custom_call.1} parent=1 // pred_region
      %s606 = ssub.s32 384, 384
      %607 = vsyncadd [#allocation54], %s606
      %s608 = sshll.u32 [#allocation55], 4
      %s609 = int_to_ptr.vmem [resolvable:$true] %s608
      %614 = dma.hbm_to_vmem [thread:$0]  %s83, 384, %s609, [#allocation54], 128, 128, 8
    $region169: #{tpu_custom_call.1} parent=1 // pred_fallthru
      _
    // Predicated region
    $region170: #{tpu_custom_call.1} parent=1 // pred_check
      _
    $region171: #{tpu_custom_call.1} parent=1 // pred_check_branch
      %616 = sbr.rel (0) target = $region173
    $region172: #{tpu_custom_call.1} parent=1 // pred_region
      %s618 = ssub.s32 640, 640
      %619 = vsyncadd [#allocation57], %s618
      %s620 = sshll.u32 [#allocation56], 4
      %s621 = int_to_ptr.vmem [resolvable:$true] %s620
      %626 = dma.hbm_to_vmem [thread:$0]  %s85, 640, %s621, [#allocation57], 128, 128, 8
    $region173: #{tpu_custom_call.1} parent=1 // pred_fallthru
      _
    // Predicated region
    $region174: #{tpu_custom_call.1} parent=1 // pred_check
      _
    $region175: #{tpu_custom_call.1} parent=1 // pred_check_branch
      %628 = sbr.rel (0) target = $region177
    $region176: #{tpu_custom_call.1} parent=1 // pred_region
      %s630 = ssub.s32 640, 640
      %631 = vsyncadd [#allocation57], %s630
      %s632 = sshll.u32 [#allocation58], 4
      %s633 = int_to_ptr.vmem [resolvable:$true] %s632
      %638 = dma.hbm_to_vmem [thread:$0]  %s87, 640, %s633, [#allocation57], 128, 128, 8
    $region177: #{tpu_custom_call.1} parent=1 // pred_fallthru
      _
    // Predicated region
    $region178: #{tpu_custom_call.1} parent=1 // pred_check
      _
    $region179: #{tpu_custom_call.1} parent=1 // pred_check_branch
      %640 = sbr.rel (0) target = $region181
    $region180: #{tpu_custom_call.1} parent=1 // pred_region
      %s642 = ssub.s32 640, 640
      %643 = vsyncadd [#allocation60], %s642
      %s644 = sshll.u32 [#allocation59], 4
      %s645 = int_to_ptr.vmem [resolvable:$true] %s644
      %650 = dma.hbm_to_vmem [thread:$0]  %s89, 640, %s645, [#allocation60], 128, 128, 8
    $region181: #{tpu_custom_call.1} parent=1 // pred_fallthru
      _
    // Predicated region
    $region182: #{tpu_custom_call.1} parent=1 // pred_check
      _
    $region183: #{tpu_custom_call.1} parent=1 // pred_check_branch
      %652 = sbr.rel (0) target = $region185
    $region184: #{tpu_custom_call.1} parent=1 // pred_region
      %s654 = ssub.s32 384, 384
      %655 = vsyncadd [#allocation60], %s654
      %s656 = sshll.u32 [#allocation61], 4
      %s657 = int_to_ptr.vmem [resolvable:$true] %s656
      %662 = dma.hbm_to_vmem [thread:$0]  %s91, 384, %s657, [#allocation60], 128, 128, 8
    $region185: #{tpu_custom_call.1} parent=1 // pred_fallthru
      _
    // Predicated region
    $region186: #{tpu_custom_call.1} parent=1 // pred_check
      _
    $region187: #{tpu_custom_call.1} parent=1 // pred_check_branch
      %664 = sbr.rel (0) target = $region189
    $region188: #{tpu_custom_call.1} parent=1 // pred_region
      %s666 = ssub.s32 640, 640
      %667 = vsyncadd [#allocation63], %s666
      %s668 = sshll.u32 [#allocation62], 4
      %s669 = int_to_ptr.vmem [resolvable:$true] %s668
      %674 = dma.hbm_to_vmem [thread:$0]  %s93, 640, %s669, [#allocation63], 128, 128, 8
    $region189: #{tpu_custom_call.1} parent=1 // pred_fallthru
      _
    // Predicated region
    $region190: #{tpu_custom_call.1} parent=1 // pred_check
      _
    $region191: #{tpu_custom_call.1} parent=1 // pred_check_branch
      %676 = sbr.rel (0) target = $region193
    $region192: #{tpu_custom_call.1} parent=1 // pred_region
      %s678 = ssub.s32 640, 640
      %679 = vsyncadd [#allocation63], %s678
      %s680 = sshll.u32 [#allocation64], 4
      %s681 = int_to_ptr.vmem [resolvable:$true] %s680
      %686 = dma.hbm_to_vmem [thread:$0]  %s95, 640, %s681, [#allocation63], 128, 128, 8
    $region193: #{tpu_custom_call.1} parent=1 // pred_fallthru
      _
    // Predicated region
    $region194: #{tpu_custom_call.1} parent=1 // pred_check
      _
    $region195: #{tpu_custom_call.1} parent=1 // pred_check_branch
      %688 = sbr.rel (0) target = $region197
    $region196: #{tpu_custom_call.1} parent=1 // pred_region
      %s690 = ssub.s32 640, 640
      %691 = vsyncadd [#allocation66], %s690
      %s692 = sshll.u32 [#allocation65], 4
      %s693 = int_to_ptr.vmem [resolvable:$true] %s692
      %698 = dma.hbm_to_vmem [thread:$0]  %s97, 640, %s693, [#allocation66], 128, 128, 8
    $region197: #{tpu_custom_call.1} parent=1 // pred_fallthru
      _
    // Predicated region
    $region198: #{tpu_custom_call.1} parent=1 // pred_check
      _
    $region199: #{tpu_custom_call.1} parent=1 // pred_check_branch
      %700 = sbr.rel (0) target = $region201
    $region200: #{tpu_custom_call.1} parent=1 // pred_region
      %s702 = ssub.s32 384, 384
      %703 = vsyncadd [#allocation66], %s702
      %s704 = sshll.u32 [#allocation67], 4
      %s705 = int_to_ptr.vmem [resolvable:$true] %s704
      %710 = dma.hbm_to_vmem [thread:$0]  %s99, 384, %s705, [#allocation66], 128, 128, 8
    $region201: #{tpu_custom_call.1} parent=1 // pred_fallthru
      _
    // Predicated region
    $region202: #{tpu_custom_call.1} parent=1 // pred_check
      _
    $region203: #{tpu_custom_call.1} parent=1 // pred_check_branch
      %712 = sbr.rel (0) target = $region205
    $region204: #{tpu_custom_call.1} parent=1 // pred_region
      _
    $region205: #{tpu_custom_call.1} parent=1 // pred_fallthru
      _
    // Predicated region
    $region206: #{tpu_custom_call.1} parent=1 // pred_check
      _
    $region207: #{tpu_custom_call.1} parent=1 // pred_check_branch
      %714 = sbr.rel (0) target = $region209
    $region208: #{tpu_custom_call.1} parent=1 // pred_region
      %s716 = ssub.s32 640, 640
      %717 = vsyncadd [#allocation69], %s716
      %s718 = sshll.u32 [#allocation68], 4
      %s719 = int_to_ptr.vmem [resolvable:$true] %s718
      %724 = dma.hbm_to_vmem [thread:$0]  %s103, 640, %s719, [#allocation69], 128, 128, 8
    $region209: #{tpu_custom_call.1} parent=1 // pred_fallthru
      _
    // Predicated region
    $region210: #{tpu_custom_call.1} parent=1 // pred_check
      _
    $region211: #{tpu_custom_call.1} parent=1 // pred_check_branch
      %726 = sbr.rel (0) target = $region213
    $region212: #{tpu_custom_call.1} parent=1 // pred_region
      %s728 = ssub.s32 640, 640
      %729 = vsyncadd [#allocation69], %s728
      %s730 = sshll.u32 [#allocation70], 4
      %s731 = int_to_ptr.vmem [resolvable:$true] %s730
      %736 = dma.hbm_to_vmem [thread:$0]  %s105, 640, %s731, [#allocation69], 128, 128, 8
    $region213: #{tpu_custom_call.1} parent=1 // pred_fallthru
      _
    // Predicated region
    $region214: #{tpu_custom_call.1} parent=1 // pred_check
      _
    $region215: #{tpu_custom_call.1} parent=1 // pred_check_branch
      %738 = sbr.rel (0) target = $region217
    $region216: #{tpu_custom_call.1} parent=1 // pred_region
      %s740 = ssub.s32 384, 384
      %741 = vsyncadd [#allocation72], %s740
      %s742 = sshll.u32 [#allocation71], 4
      %s743 = int_to_ptr.vmem [resolvable:$true] %s742
      %748 = dma.hbm_to_vmem [thread:$0]  %s107, 384, %s743, [#allocation72], 128, 128, 8
    $region217: #{tpu_custom_call.1} parent=1 // pred_fallthru
      _
    // Predicated region
    $region218: #{tpu_custom_call.1} parent=1 // pred_check
      _
    $region219: #{tpu_custom_call.1} parent=1 // pred_check_branch
      %750 = sbr.rel (0) target = $region221
    $region220: #{tpu_custom_call.1} parent=1 // pred_region
      %s752 = ssub.s32 640, 640
      %753 = vsyncadd [#allocation72], %s752
      %s754 = sshll.u32 [#allocation73], 4
      %s755 = int_to_ptr.vmem [resolvable:$true] %s754
      %760 = dma.hbm_to_vmem [thread:$0]  %s109, 640, %s755, [#allocation72], 128, 128, 8
    $region221: #{tpu_custom_call.1} parent=1 // pred_fallthru
      _
    // Predicated region
    $region222: #{tpu_custom_call.1} parent=1 // pred_check
      _
    $region223: #{tpu_custom_call.1} parent=1 // pred_check_branch
      %762 = sbr.rel (0) target = $region225
    $region224: #{tpu_custom_call.1} parent=1 // pred_region
      _
    $region225: #{tpu_custom_call.1} parent=1 // pred_fallthru
      _
    // Predicated region
    $region226: #{tpu_custom_call.1} parent=1 // pred_check
      _
    $region227: #{tpu_custom_call.1} parent=1 // pred_check_branch
      %764 = sbr.rel (0) target = $region229
    $region228: #{tpu_custom_call.1} parent=1 // pred_region
      %s766 = ssub.s32 640, 640
      %767 = vsyncadd [#allocation75], %s766
      %s768 = sshll.u32 [#allocation74], 4
      %s769 = int_to_ptr.vmem [resolvable:$true] %s768
      %774 = dma.hbm_to_vmem [thread:$0]  %s113, 640, %s769, [#allocation75], 128, 128, 8
    $region229: #{tpu_custom_call.1} parent=1 // pred_fallthru
      _
    // Predicated region
    $region230: #{tpu_custom_call.1} parent=1 // pred_check
      _
    $region231: #{tpu_custom_call.1} parent=1 // pred_check_branch
      %776 = sbr.rel (0) target = $region233
    $region232: #{tpu_custom_call.1} parent=1 // pred_region
      _
    $region233: #{tpu_custom_call.1} parent=1 // pred_fallthru
      _
    // Predicated region
    $region234: #{tpu_custom_call.1} parent=1 // pred_check
      _
    $region235: #{tpu_custom_call.1} parent=1 // pred_check_branch
      %778 = sbr.rel (0) target = $region237
    $region236: #{tpu_custom_call.1} parent=1 // pred_region
      %s780 = ssub.s32 640, 640
      %781 = vsyncadd [#allocation75], %s780
      %s782 = sshll.u32 [#allocation76], 4
      %s783 = int_to_ptr.vmem [resolvable:$true] %s782
      %788 = dma.hbm_to_vmem [thread:$0]  %s117, 640, %s783, [#allocation75], 128, 128, 8
    $region237: #{tpu_custom_call.1} parent=1 // pred_fallthru
      _
    // Predicated region
    $region238: #{tpu_custom_call.1} parent=1 // pred_check
      _
    $region239: #{tpu_custom_call.1} parent=1 // pred_check_branch
      %790 = sbr.rel (0) target = $region241
    $region240: #{tpu_custom_call.1} parent=1 // pred_region
      %s792 = ssub.s32 640, 640
      %793 = vsyncadd [#allocation78], %s792
      %s794 = sshll.u32 [#allocation77], 4
      %s795 = int_to_ptr.vmem [resolvable:$true] %s794
      %800 = dma.hbm_to_vmem [thread:$0]  %s119, 640, %s795, [#allocation78], 128, 128, 8
    $region241: #{tpu_custom_call.1} parent=1 // pred_fallthru
      _
    // Predicated region
    $region242: #{tpu_custom_call.1} parent=1 // pred_check
      _
    $region243: #{tpu_custom_call.1} parent=1 // pred_check_branch
      %802 = sbr.rel (0) target = $region245
    $region244: #{tpu_custom_call.1} parent=1 // pred_region
      _
    $region245: #{tpu_custom_call.1} parent=1 // pred_fallthru
      _
    // Predicated region
    $region246: #{tpu_custom_call.1} parent=1 // pred_check
      _
    $region247: #{tpu_custom_call.1} parent=1 // pred_check_branch
      %804 = sbr.rel (0) target = $region249
    $region248: #{tpu_custom_call.1} parent=1 // pred_region
      _
    $region249: #{tpu_custom_call.1} parent=1 // pred_fallthru
      _
    // Predicated region
    $region250: #{tpu_custom_call.1} parent=1 // pred_check
      _
    $region251: #{tpu_custom_call.1} parent=1 // pred_check_branch
      %806 = sbr.rel (0) target = $region253
    $region252: #{tpu_custom_call.1} parent=1 // pred_region
      _
    $region253: #{tpu_custom_call.1} parent=1 // pred_fallthru
      _
    // Predicated region
    $region254: #{tpu_custom_call.1} parent=1 // pred_check
      _
    $region255: #{tpu_custom_call.1} parent=1 // pred_check_branch
      %808 = sbr.rel (0) target = $region257
    $region256: #{tpu_custom_call.1} parent=1 // pred_region
      _
    $region257: #{tpu_custom_call.1} parent=1 // pred_fallthru
      _
    // Predicated region
    $region258: #{tpu_custom_call.1} parent=1 // pred_check
      _
    $region259: #{tpu_custom_call.1} parent=1 // pred_check_branch
      %810 = sbr.rel (0) target = $region261
    $region260: #{tpu_custom_call.1} parent=1 // pred_region
      _
    $region261: #{tpu_custom_call.1} parent=1 // pred_fallthru
      _
    // Predicated region
    $region262: #{tpu_custom_call.1} parent=1 // pred_check
      _
    $region263: #{tpu_custom_call.1} parent=1 // pred_check_branch
      %812 = sbr.rel (0) target = $region265
    $region264: #{tpu_custom_call.1} parent=1 // pred_region
      %s814 = ssub.s32 640, 640
      %815 = vsyncadd [#allocation78], %s814
      %s816 = sshll.u32 [#allocation79], 4
      %s817 = int_to_ptr.vmem [resolvable:$true] %s816
      %822 = dma.hbm_to_vmem [thread:$0]  %s131, 640, %s817, [#allocation78], 128, 128, 8
    $region265: #{tpu_custom_call.1} parent=1 // pred_fallthru
      _
    // Predicated region
    $region266: #{tpu_custom_call.1} parent=1 // pred_check
      _
    $region267: #{tpu_custom_call.1} parent=1 // pred_check_branch
      %824 = sbr.rel (0) target = $region269
    $region268: #{tpu_custom_call.1} parent=1 // pred_region
      %s826 = ssub.s32 640, 640
      %827 = vsyncadd [#allocation81], %s826
      %s828 = sshll.u32 [#allocation80], 4
      %s829 = int_to_ptr.vmem [resolvable:$true] %s828
      %834 = dma.hbm_to_vmem [thread:$0]  %s133, 640, %s829, [#allocation81], 128, 128, 8
    $region269: #{tpu_custom_call.1} parent=1 // pred_fallthru
      _
    // Predicated region
    $region270: #{tpu_custom_call.1} parent=1 // pred_check
      _
    $region271: #{tpu_custom_call.1} parent=1 // pred_check_branch
      %836 = sbr.rel (0) target = $region273
    $region272: #{tpu_custom_call.1} parent=1 // pred_region
      %s838 = ssub.s32 640, 640
      %839 = vsyncadd [#allocation81], %s838
      %s840 = sshll.u32 [#allocation82], 4
      %s841 = int_to_ptr.vmem [resolvable:$true] %s840
      %846 = dma.hbm_to_vmem [thread:$0]  %s135, 640, %s841, [#allocation81], 128, 128, 8
    $region273: #{tpu_custom_call.1} parent=1 // pred_fallthru
      _
    // Predicated region
    $region274: #{tpu_custom_call.1} parent=1 // pred_check
      _
    $region275: #{tpu_custom_call.1} parent=1 // pred_check_branch
      %848 = sbr.rel (0) target = $region277
    $region276: #{tpu_custom_call.1} parent=1 // pred_region
      _
    $region277: #{tpu_custom_call.1} parent=1 // pred_fallthru
      _
    // Predicated region
    $region278: #{tpu_custom_call.1} parent=1 // pred_check
      _
    $region279: #{tpu_custom_call.1} parent=1 // pred_check_branch
      %850 = sbr.rel (0) target = $region281
    $region280: #{tpu_custom_call.1} parent=1 // pred_region
      %s852 = ssub.s32 640, 640
      %853 = vsyncadd [#allocation84], %s852
      %s854 = sshll.u32 [#allocation83], 4
      %s855 = int_to_ptr.vmem [resolvable:$true] %s854
      %860 = dma.hbm_to_vmem [thread:$0]  %s139, 640, %s855, [#allocation84], 128, 128, 8
    $region281: #{tpu_custom_call.1} parent=1 // pred_fallthru
      _
    // Predicated region
    $region282: #{tpu_custom_call.1} parent=1 // pred_check
      _
    $region283: #{tpu_custom_call.1} parent=1 // pred_check_branch
      %862 = sbr.rel (0) target = $region285
    $region284: #{tpu_custom_call.1} parent=1 // pred_region
      _
    $region285: #{tpu_custom_call.1} parent=1 // pred_fallthru
      _
    // Predicated region
    $region286: #{tpu_custom_call.1} parent=1 // pred_check
      _
    $region287: #{tpu_custom_call.1} parent=1 // pred_check_branch
      %864 = sbr.rel (0) target = $region289
    $region288: #{tpu_custom_call.1} parent=1 // pred_region
      _
    $region289: #{tpu_custom_call.1} parent=1 // pred_fallthru
      _
    // Predicated region
    $region290: #{tpu_custom_call.1} parent=1 // pred_check
      _
    $region291: #{tpu_custom_call.1} parent=1 // pred_check_branch
      %866 = sbr.rel (0) target = $region293
    $region292: #{tpu_custom_call.1} parent=1 // pred_region
      _
    $region293: #{tpu_custom_call.1} parent=1 // pred_fallthru
      _
    // Predicated region
    $region294: #{tpu_custom_call.1} parent=1 // pred_check
      _
    $region295: #{tpu_custom_call.1} parent=1 // pred_check_branch
      %868 = sbr.rel (0) target = $region297
    $region296: #{tpu_custom_call.1} parent=1 // pred_region
      %869 = dma.done [#allocation3], 256
    $region297: #{tpu_custom_call.1} parent=1 // pred_fallthru
      _
    // Predicated region
    $region298: #{tpu_custom_call.1} parent=1 // pred_check
      _
    $region299: #{tpu_custom_call.1} parent=1 // pred_check_branch
      %871 = sbr.rel (0) target = $region301
    $region300: #{tpu_custom_call.1} parent=1 // pred_region
      %872 = dma.done [#allocation6], 384
    $region301: #{tpu_custom_call.1} parent=1 // pred_fallthru
      _
    // Predicated region
    $region302: #{tpu_custom_call.1} parent=1 // pred_check
      _
    $region303: #{tpu_custom_call.1} parent=1 // pred_check_branch
      %874 = sbr.rel (0) target = $region305
    $region304: #{tpu_custom_call.1} parent=1 // pred_region
      %875 = dma.done [#allocation6], 256
    $region305: #{tpu_custom_call.1} parent=1 // pred_fallthru
      _
    // Predicated region
    $region306: #{tpu_custom_call.1} parent=1 // pred_check
      _
    $region307: #{tpu_custom_call.1} parent=1 // pred_check_branch
      %877 = sbr.rel (0) target = $region309
    $region308: #{tpu_custom_call.1} parent=1 // pred_region
      %878 = dma.done [#allocation9], 384
    $region309: #{tpu_custom_call.1} parent=1 // pred_fallthru
      _
    // Predicated region
    $region310: #{tpu_custom_call.1} parent=1 // pred_check
      _
    $region311: #{tpu_custom_call.1} parent=1 // pred_check_branch
      %880 = sbr.rel (0) target = $region313
    $region312: #{tpu_custom_call.1} parent=1 // pred_region
      %881 = dma.done [#allocation9], 384
    $region313: #{tpu_custom_call.1} parent=1 // pred_fallthru
      _
    // Predicated region
    $region314: #{tpu_custom_call.1} parent=1 // pred_check
      _
    $region315: #{tpu_custom_call.1} parent=1 // pred_check_branch
      %883 = sbr.rel (0) target = $region317
    $region316: #{tpu_custom_call.1} parent=1 // pred_region
      %884 = dma.done [#allocation12], 384
    $region317: #{tpu_custom_call.1} parent=1 // pred_fallthru
      _
    // Predicated region
    $region318: #{tpu_custom_call.1} parent=1 // pred_check
      _
    $region319: #{tpu_custom_call.1} parent=1 // pred_check_branch
      %886 = sbr.rel (0) target = $region321
    $region320: #{tpu_custom_call.1} parent=1 // pred_region
      %887 = dma.done [#allocation12], 256
    $region321: #{tpu_custom_call.1} parent=1 // pred_fallthru
      _
    // Predicated region
    $region322: #{tpu_custom_call.1} parent=1 // pred_check
      _
    $region323: #{tpu_custom_call.1} parent=1 // pred_check_branch
      %889 = sbr.rel (0) target = $region325
    $region324: #{tpu_custom_call.1} parent=1 // pred_region
      %890 = dma.done [#allocation15], 256
    $region325: #{tpu_custom_call.1} parent=1 // pred_fallthru
      _
    // Predicated region
    $region326: #{tpu_custom_call.1} parent=1 // pred_check
      _
    $region327: #{tpu_custom_call.1} parent=1 // pred_check_branch
      %892 = sbr.rel (0) target = $region329
    $region328: #{tpu_custom_call.1} parent=1 // pred_region
      %893 = dma.done [#allocation15], 256
    $region329: #{tpu_custom_call.1} parent=1 // pred_fallthru
      _
    // Predicated region
    $region330: #{tpu_custom_call.1} parent=1 // pred_check
      _
    $region331: #{tpu_custom_call.1} parent=1 // pred_check_branch
      %895 = sbr.rel (0) target = $region333
    $region332: #{tpu_custom_call.1} parent=1 // pred_region
      %896 = dma.done [#allocation18], 384
    $region333: #{tpu_custom_call.1} parent=1 // pred_fallthru
      _
    // Predicated region
    $region334: #{tpu_custom_call.1} parent=1 // pred_check
      _
    $region335: #{tpu_custom_call.1} parent=1 // pred_check_branch
      %898 = sbr.rel (0) target = $region337
    $region336: #{tpu_custom_call.1} parent=1 // pred_region
      %899 = dma.done [#allocation18], 384
    $region337: #{tpu_custom_call.1} parent=1 // pred_fallthru
      _
    // Predicated region
    $region338: #{tpu_custom_call.1} parent=1 // pred_check
      _
    $region339: #{tpu_custom_call.1} parent=1 // pred_check_branch
      %901 = sbr.rel (0) target = $region341
    $region340: #{tpu_custom_call.1} parent=1 // pred_region
      %902 = dma.done [#allocation21], 384
    $region341: #{tpu_custom_call.1} parent=1 // pred_fallthru
      _
    // Predicated region
    $region342: #{tpu_custom_call.1} parent=1 // pred_check
      _
    $region343: #{tpu_custom_call.1} parent=1 // pred_check_branch
      %904 = sbr.rel (0) target = $region345
    $region344: #{tpu_custom_call.1} parent=1 // pred_region
      %905 = dma.done [#allocation21], 256
    $region345: #{tpu_custom_call.1} parent=1 // pred_fallthru
      _
    // Predicated region
    $region346: #{tpu_custom_call.1} parent=1 // pred_check
      _
    $region347: #{tpu_custom_call.1} parent=1 // pred_check_branch
      %907 = sbr.rel (0) target = $region349
    $region348: #{tpu_custom_call.1} parent=1 // pred_region
      %908 = dma.done [#allocation24], 384
    $region349: #{tpu_custom_call.1} parent=1 // pred_fallthru
      _
    // Predicated region
    $region350: #{tpu_custom_call.1} parent=1 // pred_check
      _
    $region351: #{tpu_custom_call.1} parent=1 // pred_check_branch
      %910 = sbr.rel (0) target = $region353
    $region352: #{tpu_custom_call.1} parent=1 // pred_region
      %911 = dma.done [#allocation24], 384
    $region353: #{tpu_custom_call.1} parent=1 // pred_fallthru
      _
    // Predicated region
    $region354: #{tpu_custom_call.1} parent=1 // pred_check
      _
    $region355: #{tpu_custom_call.1} parent=1 // pred_check_branch
      %913 = sbr.rel (0) target = $region357
    $region356: #{tpu_custom_call.1} parent=1 // pred_region
      %914 = dma.done [#allocation27], 384
    $region357: #{tpu_custom_call.1} parent=1 // pred_fallthru
      _
    // Predicated region
    $region358: #{tpu_custom_call.1} parent=1 // pred_check
      _
    $region359: #{tpu_custom_call.1} parent=1 // pred_check_branch
      %916 = sbr.rel (0) target = $region361
    $region360: #{tpu_custom_call.1} parent=1 // pred_region
      %917 = dma.done [#allocation27], 256
    $region361: #{tpu_custom_call.1} parent=1 // pred_fallthru
      _
    // Predicated region
    $region362: #{tpu_custom_call.1} parent=1 // pred_check
      _
    $region363: #{tpu_custom_call.1} parent=1 // pred_check_branch
      %919 = sbr.rel (0) target = $region365
    $region364: #{tpu_custom_call.1} parent=1 // pred_region
      %920 = dma.done [#allocation30], 384
    $region365: #{tpu_custom_call.1} parent=1 // pred_fallthru
      _
    // Predicated region
    $region366: #{tpu_custom_call.1} parent=1 // pred_check
      _
    $region367: #{tpu_custom_call.1} parent=1 // pred_check_branch
      %922 = sbr.rel (0) target = $region369
    $region368: #{tpu_custom_call.1} parent=1 // pred_region
      %923 = dma.done [#allocation30], 384
    $region369: #{tpu_custom_call.1} parent=1 // pred_fallthru
      _
    // Predicated region
    $region370: #{tpu_custom_call.1} parent=1 // pred_check
      _
    $region371: #{tpu_custom_call.1} parent=1 // pred_check_branch
      %925 = sbr.rel (0) target = $region373
    $region372: #{tpu_custom_call.1} parent=1 // pred_region
      %926 = dma.done [#allocation33], 384
    $region373: #{tpu_custom_call.1} parent=1 // pred_fallthru
      _
    // Predicated region
    $region374: #{tpu_custom_call.1} parent=1 // pred_check
      _
    $region375: #{tpu_custom_call.1} parent=1 // pred_check_branch
      %928 = sbr.rel (0) target = $region377
    $region376: #{tpu_custom_call.1} parent=1 // pred_region
      %929 = dma.done [#allocation33], 256
    $region377: #{tpu_custom_call.1} parent=1 // pred_fallthru
      _
    // Predicated region
    $region378: #{tpu_custom_call.1} parent=1 // pred_check
      _
    $region379: #{tpu_custom_call.1} parent=1 // pred_check_branch
      %931 = sbr.rel (0) target = $region381
    $region380: #{tpu_custom_call.1} parent=1 // pred_region
      %932 = dma.done [#allocation36], 384
    $region381: #{tpu_custom_call.1} parent=1 // pred_fallthru
      _
    // Predicated region
    $region382: #{tpu_custom_call.1} parent=1 // pred_check
      _
    $region383: #{tpu_custom_call.1} parent=1 // pred_check_branch
      %934 = sbr.rel (0) target = $region385
    $region384: #{tpu_custom_call.1} parent=1 // pred_region
      %935 = dma.done [#allocation36], 384
    $region385: #{tpu_custom_call.1} parent=1 // pred_fallthru
      _
    // Predicated region
    $region386: #{tpu_custom_call.1} parent=1 // pred_check
      _
    $region387: #{tpu_custom_call.1} parent=1 // pred_check_branch
      %937 = sbr.rel (0) target = $region389
    $region388: #{tpu_custom_call.1} parent=1 // pred_region
      %938 = dma.done [#allocation39], 384
    $region389: #{tpu_custom_call.1} parent=1 // pred_fallthru
      _
    // Predicated region
    $region390: #{tpu_custom_call.1} parent=1 // pred_check
      _
    $region391: #{tpu_custom_call.1} parent=1 // pred_check_branch
      %940 = sbr.rel (0) target = $region393
    $region392: #{tpu_custom_call.1} parent=1 // pred_region
      %941 = dma.done [#allocation39], 384
    $region393: #{tpu_custom_call.1} parent=1 // pred_fallthru
      _
    // Predicated region
    $region394: #{tpu_custom_call.1} parent=1 // pred_check
      _
    $region395: #{tpu_custom_call.1} parent=1 // pred_check_branch
      %943 = sbr.rel (0) target = $region397
    $region396: #{tpu_custom_call.1} parent=1 // pred_region
      %944 = dma.done [#allocation42], 384
    $region397: #{tpu_custom_call.1} parent=1 // pred_fallthru
      _
    // Predicated region
    $region398: #{tpu_custom_call.1} parent=1 // pred_check
      _
    $region399: #{tpu_custom_call.1} parent=1 // pred_check_branch
      %946 = sbr.rel (0) target = $region401
    $region400: #{tpu_custom_call.1} parent=1 // pred_region
      %947 = dma.done [#allocation42], 384
    $region401: #{tpu_custom_call.1} parent=1 // pred_fallthru
      _
    // Predicated region
    $region402: #{tpu_custom_call.1} parent=1 // pred_check
      _
    $region403: #{tpu_custom_call.1} parent=1 // pred_check_branch
      %949 = sbr.rel (0) target = $region405
    $region404: #{tpu_custom_call.1} parent=1 // pred_region
      %950 = dma.done [#allocation45], 384
    $region405: #{tpu_custom_call.1} parent=1 // pred_fallthru
      _
    // Predicated region
    $region406: #{tpu_custom_call.1} parent=1 // pred_check
      _
    $region407: #{tpu_custom_call.1} parent=1 // pred_check_branch
      %952 = sbr.rel (0) target = $region409
    $region408: #{tpu_custom_call.1} parent=1 // pred_region
      %953 = dma.done [#allocation45], 384
    $region409: #{tpu_custom_call.1} parent=1 // pred_fallthru
      _
    // Predicated region
    $region410: #{tpu_custom_call.1} parent=1 // pred_check
      _
    $region411: #{tpu_custom_call.1} parent=1 // pred_check_branch
      %955 = sbr.rel (0) target = $region413
    $region412: #{tpu_custom_call.1} parent=1 // pred_region
      %956 = dma.done [#allocation48], 640
    $region413: #{tpu_custom_call.1} parent=1 // pred_fallthru
      _
    // Predicated region
    $region414: #{tpu_custom_call.1} parent=1 // pred_check
      _
    $region415: #{tpu_custom_call.1} parent=1 // pred_check_branch
      %958 = sbr.rel (0) target = $region417
    $region416: #{tpu_custom_call.1} parent=1 // pred_region
      %959 = dma.done [#allocation48], 384
    $region417: #{tpu_custom_call.1} parent=1 // pred_fallthru
      _
    // Predicated region
    $region418: #{tpu_custom_call.1} parent=1 // pred_check
      _
    $region419: #{tpu_custom_call.1} parent=1 // pred_check_branch
      %961 = sbr.rel (0) target = $region421
    $region420: #{tpu_custom_call.1} parent=1 // pred_region
      %962 = dma.done [#allocation51], 640
    $region421: #{tpu_custom_call.1} parent=1 // pred_fallthru
      _
    // Predicated region
    $region422: #{tpu_custom_call.1} parent=1 // pred_check
      _
    $region423: #{tpu_custom_call.1} parent=1 // pred_check_branch
      %964 = sbr.rel (0) target = $region425
    $region424: #{tpu_custom_call.1} parent=1 // pred_region
      %965 = dma.done [#allocation51], 640
    $region425: #{tpu_custom_call.1} parent=1 // pred_fallthru
      _
    // Predicated region
    $region426: #{tpu_custom_call.1} parent=1 // pred_check
      _
    $region427: #{tpu_custom_call.1} parent=1 // pred_check_branch
      %967 = sbr.rel (0) target = $region429
    $region428: #{tpu_custom_call.1} parent=1 // pred_region
      %968 = dma.done [#allocation54], 640
    $region429: #{tpu_custom_call.1} parent=1 // pred_fallthru
      _
    // Predicated region
    $region430: #{tpu_custom_call.1} parent=1 // pred_check
      _
    $region431: #{tpu_custom_call.1} parent=1 // pred_check_branch
      %970 = sbr.rel (0) target = $region433
    $region432: #{tpu_custom_call.1} parent=1 // pred_region
      %971 = dma.done [#allocation54], 384
    $region433: #{tpu_custom_call.1} parent=1 // pred_fallthru
      _
    // Predicated region
    $region434: #{tpu_custom_call.1} parent=1 // pred_check
      _
    $region435: #{tpu_custom_call.1} parent=1 // pred_check_branch
      %973 = sbr.rel (0) target = $region437
    $region436: #{tpu_custom_call.1} parent=1 // pred_region
      %974 = dma.done [#allocation57], 640
    $region437: #{tpu_custom_call.1} parent=1 // pred_fallthru
      _
    // Predicated region
    $region438: #{tpu_custom_call.1} parent=1 // pred_check
      _
    $region439: #{tpu_custom_call.1} parent=1 // pred_check_branch
      %976 = sbr.rel (0) target = $region441
    $region440: #{tpu_custom_call.1} parent=1 // pred_region
      %977 = dma.done [#allocation57], 640
    $region441: #{tpu_custom_call.1} parent=1 // pred_fallthru
      _
    // Predicated region
    $region442: #{tpu_custom_call.1} parent=1 // pred_check
      _
    $region443: #{tpu_custom_call.1} parent=1 // pred_check_branch
      %979 = sbr.rel (0) target = $region445
    $region444: #{tpu_custom_call.1} parent=1 // pred_region
      %980 = dma.done [#allocation60], 640
    $region445: #{tpu_custom_call.1} parent=1 // pred_fallthru
      _
    // Predicated region
    $region446: #{tpu_custom_call.1} parent=1 // pred_check
      _
    $region447: #{tpu_custom_call.1} parent=1 // pred_check_branch
      %982 = sbr.rel (0) target = $region449
    $region448: #{tpu_custom_call.1} parent=1 // pred_region
      %983 = dma.done [#allocation60], 384
    $region449: #{tpu_custom_call.1} parent=1 // pred_fallthru
      _
    // Predicated region
    $region450: #{tpu_custom_call.1} parent=1 // pred_check
      _
    $region451: #{tpu_custom_call.1} parent=1 // pred_check_branch
      %985 = sbr.rel (0) target = $region453
    $region452: #{tpu_custom_call.1} parent=1 // pred_region
      %986 = dma.done [#allocation63], 640
    $region453: #{tpu_custom_call.1} parent=1 // pred_fallthru
      _
    // Predicated region
    $region454: #{tpu_custom_call.1} parent=1 // pred_check
      _
    $region455: #{tpu_custom_call.1} parent=1 // pred_check_branch
      %988 = sbr.rel (0) target = $region457
    $region456: #{tpu_custom_call.1} parent=1 // pred_region
      %989 = dma.done [#allocation63], 640
    $region457: #{tpu_custom_call.1} parent=1 // pred_fallthru
      _
    // Predicated region
    $region458: #{tpu_custom_call.1} parent=1 // pred_check
      _
    $region459: #{tpu_custom_call.1} parent=1 // pred_check_branch
      %991 = sbr.rel (0) target = $region461
    $region460: #{tpu_custom_call.1} parent=1 // pred_region
      %992 = dma.done [#allocation66], 640
    $region461: #{tpu_custom_call.1} parent=1 // pred_fallthru
      _
    // Predicated region
    $region462: #{tpu_custom_call.1} parent=1 // pred_check
      _
    $region463: #{tpu_custom_call.1} parent=1 // pred_check_branch
      %994 = sbr.rel (0) target = $region465
    $region464: #{tpu_custom_call.1} parent=1 // pred_region
      %995 = dma.done [#allocation66], 384
    $region465: #{tpu_custom_call.1} parent=1 // pred_fallthru
      _
    // Predicated region
    $region466: #{tpu_custom_call.1} parent=1 // pred_check
      _
    $region467: #{tpu_custom_call.1} parent=1 // pred_check_branch
      %997 = sbr.rel (0) target = $region469
    $region468: #{tpu_custom_call.1} parent=1 // pred_region
      %998 = dma.done [#allocation69], 640
    $region469: #{tpu_custom_call.1} parent=1 // pred_fallthru
      _
    // Predicated region
    $region470: #{tpu_custom_call.1} parent=1 // pred_check
      _
    $region471: #{tpu_custom_call.1} parent=1 // pred_check_branch
      %1000 = sbr.rel (0) target = $region473
    $region472: #{tpu_custom_call.1} parent=1 // pred_region
      %1001 = dma.done [#allocation69], 640
    $region473: #{tpu_custom_call.1} parent=1 // pred_fallthru
      _
    // Predicated region
    $region474: #{tpu_custom_call.1} parent=1 // pred_check
      _
    $region475: #{tpu_custom_call.1} parent=1 // pred_check_branch
      %1003 = sbr.rel (0) target = $region477
    $region476: #{tpu_custom_call.1} parent=1 // pred_region
      %1004 = dma.done [#allocation72], 384
    $region477: #{tpu_custom_call.1} parent=1 // pred_fallthru
      _
    // Predicated region
    $region478: #{tpu_custom_call.1} parent=1 // pred_check
      _
    $region479: #{tpu_custom_call.1} parent=1 // pred_check_branch
      %1006 = sbr.rel (0) target = $region481
    $region480: #{tpu_custom_call.1} parent=1 // pred_region
      %1007 = dma.done [#allocation72], 640
    $region481: #{tpu_custom_call.1} parent=1 // pred_fallthru
      _
    // Predicated region
    $region482: #{tpu_custom_call.1} parent=1 // pred_check
      _
    $region483: #{tpu_custom_call.1} parent=1 // pred_check_branch
      %1009 = sbr.rel (0) target = $region485
    $region484: #{tpu_custom_call.1} parent=1 // pred_region
      %1010 = dma.done [#allocation75], 640
    $region485: #{tpu_custom_call.1} parent=1 // pred_fallthru
      _
    // Predicated region
    $region486: #{tpu_custom_call.1} parent=1 // pred_check
      _
    $region487: #{tpu_custom_call.1} parent=1 // pred_check_branch
      %1012 = sbr.rel (0) target = $region489
    $region488: #{tpu_custom_call.1} parent=1 // pred_region
      %1013 = dma.done [#allocation75], 640
    $region489: #{tpu_custom_call.1} parent=1 // pred_fallthru
      _
    // Predicated region
    $region490: #{tpu_custom_call.1} parent=1 // pred_check
      _
    $region491: #{tpu_custom_call.1} parent=1 // pred_check_branch
      %1015 = sbr.rel (0) target = $region493
    $region492: #{tpu_custom_call.1} parent=1 // pred_region
      %1016 = dma.done [#allocation78], 640
    $region493: #{tpu_custom_call.1} parent=1 // pred_fallthru
      _
    // Predicated region
    $region494: #{tpu_custom_call.1} parent=1 // pred_check
      _
    $region495: #{tpu_custom_call.1} parent=1 // pred_check_branch
      %1018 = sbr.rel (0) target = $region497
    $region496: #{tpu_custom_call.1} parent=1 // pred_region
      %1019 = dma.done [#allocation78], 640
    $region497: #{tpu_custom_call.1} parent=1 // pred_fallthru
      _
    // Predicated region
    $region498: #{tpu_custom_call.1} parent=1 // pred_check
      _
    $region499: #{tpu_custom_call.1} parent=1 // pred_check_branch
      %1021 = sbr.rel (0) target = $region501
    $region500: #{tpu_custom_call.1} parent=1 // pred_region
      %1022 = dma.done [#allocation81], 640
    $region501: #{tpu_custom_call.1} parent=1 // pred_fallthru
      _
    // Predicated region
    $region502: #{tpu_custom_call.1} parent=1 // pred_check
      _
    $region503: #{tpu_custom_call.1} parent=1 // pred_check_branch
      %1024 = sbr.rel (0) target = $region505
    $region504: #{tpu_custom_call.1} parent=1 // pred_region
      %1025 = dma.done [#allocation81], 640
    $region505: #{tpu_custom_call.1} parent=1 // pred_fallthru
      _
    // Predicated region
    $region506: #{tpu_custom_call.1} parent=1 // pred_check
      _
    $region507: #{tpu_custom_call.1} parent=1 // pred_check_branch
      %1027 = sbr.rel (0) target = $region509
    $region508: #{tpu_custom_call.1} parent=1 // pred_region
      %1028 = dma.done [#allocation84], 640
    $region509: #{tpu_custom_call.1} parent=1 // pred_fallthru
      _
    %v1029 = vld [vmem:[#allocation2] sm:$0xff]
    %v1030 = vld [vmem:[#allocation2 + $0x8] sm:$0xf]
    %v1031 = vld [vmem:[#allocation5] sm:$0xff]
    %v1032 = vld [vmem:[#allocation5 + $0x8] sm:$0xff]
    %v1033 = vld [vmem:[#allocation5 + $0x10] sm:$0xff]
    %v1034 = vld [vmem:[#allocation7] sm:$0xff]
    %v1035 = vld [vmem:[#allocation7 + $0x8] sm:$0xf]
    %vm1036 = vcmask 195584
    %v1038 = vsel %vm1036, %v1029, 0
    %v1041 = vsel %vm1036, %v1030, 0
    %1043 = vmatprep.subr.mxu0 0.0
    %1044 = vmatpush1.msra.mxu0 %v1031
    %1045 = vmatprep.subr.mxu0 0.0
    %1046 = vmatpush1.msra.mxu0 %v1032
    %1047 = vmatprep.subr.mxu0 0.0
    %1048 = vmatpush1.msra.mxu0 %v1033
    %1049 = vmatprep.subr.mxu0 0.0
    %1050 = vmatpush1.msra.mxu0 0.0
    %1051 = vmatprep.subr.mxu0 0.0
    %1052 = vmatpush1.msra.mxu0 0.0
    %1053 = vmatprep.subr.mxu0 0.0
    %1054 = vmatpush1.msra.mxu0 0.0
    %1055 = vmatprep.subr.mxu0 0.0
    %1056 = vmatpush1.msra.mxu0 0.0
    %1057 = vmatprep.subr.mxu0 0.0
    %1058 = vmatpush1.msra.mxu0 0.0
    %1059 = vmatprep.subr.mxu0 0.0
    %1060 = vmatpush1.msra.mxu0 0.0
    %1061 = vmatprep.subr.mxu0 0.0
    %1062 = vmatpush1.msra.mxu0 0.0
    %1063 = vmatprep.subr.mxu0 0.0
    %1064 = vmatpush1.msra.mxu0 0.0
    %1065 = vmatprep.subr.mxu0 0.0
    %1066 = vmatpush1.msra.mxu0 0.0
    %1067 = vmatprep.subr.mxu0 0.0
    %1068 = vmatpush1.msra.mxu0 0.0
    %1069 = vmatprep.subr.mxu0 0.0
    %1070 = vmatpush1.msra.mxu0 0.0
    %1071 = vmatprep.subr.mxu0 0.0
    %1072 = vmatpush1.msra.mxu0 0.0
    %1073 = vmatprep.subr.mxu0 0.0
    %1074 = vmatpush1.msra.mxu0 0.0
    %1075 = vmatprep.subr.mxu0 0.0
    %1076 = vmatpush1.msra.mxu0 0.0
    %1077 = vmatprep.subr.mxu0 0.0
    %1078 = vmatpush1.msra.mxu0 0.0
    %1079 = vmatprep.subr.mxu0 0.0
    %1080 = vmatpush1.msra.mxu0 0.0
    %1081 = vmatprep.subr.mxu0 0.0
    %1082 = vmatpush1.msra.mxu0 0.0
    %1083 = vmatprep.subr.mxu0 0.0
    %1084 = vmatpush1.msra.mxu0 0.0
    %1085 = vmatprep.subr.mxu0 0.0
    %1086 = vmatpush1.msra.mxu0 0.0
    %1087 = vmatprep.subr.mxu0 0.0
    %1088 = vmatpush1.msra.mxu0 0.0
    %1089 = vmatprep.subr.mxu0 0.0
    %1090 = vmatpush1.msra.mxu0 0.0
    %1091 = vmatprep.subr.mxu0 0.0
    %1092 = vmatpush1.msra.mxu0 0.0
    %1093 = vmatprep.subr.mxu0 0.0
    %1094 = vmatpush1.msra.mxu0 0.0
    %1095 = vmatprep.subr.mxu0 0.0
    %1096 = vmatpush1.msra.mxu0 0.0
    %1097 = vmatprep.subr.mxu0 0.0
    %1098 = vmatpush1.msra.mxu0 0.0
    %1099 = vmatprep.subr.mxu0 0.0
    %1100 = vmatpush1.msra.mxu0 0.0
    %1101 = vmatprep.subr.mxu0 0.0
    %1102 = vmatpush1.msra.mxu0 0.0
    %1103 = vmatprep.subr.mxu0 0.0
    %1104 = vmatpush1.msra.mxu0 0.0
    %1105 = vmatprep.subr.mxu0 0.0
    %1106 = vmatpush1.msra.mxu0 0.0
    %1107 = vmatprep.mubr.f32.mxu0 0.0
    %1108 = vmatmul.mubr.f32.gmra.mrb[0].mxu0 %v1038
    %v1109 = vpop.f32.mrb[0].mxu0
    %v1110 = vadd.f32 %v1034, %v1109
    %v1111 = vpop.f32.mrb[0].mxu0
    %1112 = vmatprep.mubr.f32.mxu0 0.0
    %1113 = vmatmul.mubr.f32.gmra.mrb[0].mxu0 %v1041
    %v1114 = vpop.f32.mrb[0].mxu0
    %v1115 = vadd.f32 %v1035, %v1114
    %v1116 = vpop.f32.mrb[0].mxu0
    %1117 = vdwg.mxu0
    %v1118 = vld [vmem:[#allocation10] sm:$0xff]
    %v1119 = vld [vmem:[#allocation10 + $0x8] sm:$0xff]
    %v1120 = vld [vmem:[#allocation10 + $0x10] sm:$0xff]
    %v1121 = vld [vmem:[#allocation14] sm:$0xff]
    %v1122 = vld [vmem:[#allocation14 + $0x8] sm:$0xf]
    %vm1123 = vcmask 97280
    %v1125 = vsel %vm1123, %v1121, 0
    %v1128 = vsel %vm1123, %v1122, 0
    %vm1130 = vcmask 1043456
    %v1131 = vsel %vm1130, %v1030, 0
    %1133 = vmatprep.subr.mxu0 0.0
    %1134 = vmatpush1.msra.mxu0 %v1029
    %1135 = vmatprep.subr.mxu0 0.0
    %1136 = vmatpush1.msra.mxu0 %v1131
    %1137 = vmatprep.subr.mxu0 0.0
    %1138 = vmatpush1.msra.mxu0 0.0
    %1139 = vmatprep.subr.mxu0 0.0
    %1140 = vmatpush1.msra.mxu0 0.0
    %1141 = vmatprep.subr.mxu0 0.0
    %1142 = vmatpush1.msra.mxu0 0.0
    %1143 = vmatprep.subr.mxu0 0.0
    %1144 = vmatpush1.msra.mxu0 0.0
    %1145 = vmatprep.subr.mxu0 0.0
    %1146 = vmatpush1.msra.mxu0 0.0
    %1147 = vmatprep.subr.mxu0 0.0
    %1148 = vmatpush1.msra.mxu0 0.0
    %1149 = vmatprep.subr.mxu0 0.0
    %1150 = vmatpush1.msra.mxu0 0.0
    %1151 = vmatprep.subr.mxu0 0.0
    %1152 = vmatpush1.msra.mxu0 0.0
    %1153 = vmatprep.subr.mxu0 0.0
    %1154 = vmatpush1.msra.mxu0 0.0
    %1155 = vmatprep.subr.mxu0 0.0
    %1156 = vmatpush1.msra.mxu0 0.0
    %1157 = vmatprep.subr.mxu0 0.0
    %1158 = vmatpush1.msra.mxu0 0.0
    %1159 = vmatprep.subr.mxu0 0.0
    %1160 = vmatpush1.msra.mxu0 0.0
    %1161 = vmatprep.subr.mxu0 0.0
    %1162 = vmatpush1.msra.mxu0 0.0
    %1163 = vmatprep.subr.mxu0 0.0
    %1164 = vmatpush1.msra.mxu0 0.0
    %1165 = vmatprep.subr.mxu0 0.0
    %1166 = vmatpush1.msra.mxu0 0.0
    %1167 = vmatprep.subr.mxu0 0.0
    %1168 = vmatpush1.msra.mxu0 0.0
    %1169 = vmatprep.subr.mxu0 0.0
    %1170 = vmatpush1.msra.mxu0 0.0
    %1171 = vmatprep.subr.mxu0 0.0
    %1172 = vmatpush1.msra.mxu0 0.0
    %1173 = vmatprep.subr.mxu0 0.0
    %1174 = vmatpush1.msra.mxu0 0.0
    %1175 = vmatprep.subr.mxu0 0.0
    %1176 = vmatpush1.msra.mxu0 0.0
    %1177 = vmatprep.subr.mxu0 0.0
    %1178 = vmatpush1.msra.mxu0 0.0
    %1179 = vmatprep.subr.mxu0 0.0
    %1180 = vmatpush1.msra.mxu0 0.0
    %1181 = vmatprep.subr.mxu0 0.0
    %1182 = vmatpush1.msra.mxu0 0.0
    %1183 = vmatprep.subr.mxu0 0.0
    %1184 = vmatpush1.msra.mxu0 0.0
    %1185 = vmatprep.subr.mxu0 0.0
    %1186 = vmatpush1.msra.mxu0 0.0
    %1187 = vmatprep.subr.mxu0 0.0
    %1188 = vmatpush1.msra.mxu0 0.0
    %1189 = vmatprep.subr.mxu0 0.0
    %1190 = vmatpush1.msra.mxu0 0.0
    %1191 = vmatprep.subr.mxu0 0.0
    %1192 = vmatpush1.msra.mxu0 0.0
    %1193 = vmatprep.subr.mxu0 0.0
    %1194 = vmatpush1.msra.mxu0 0.0
    %1195 = vmatprep.subr.mxu0 0.0
    %1196 = vmatpush1.msra.mxu0 0.0
    %1197 = vmatprep.mubr.f32.mxu0 0.0
    %1198 = vmatmul.mubr.f32.gmra.mrb[0].mxu0 %v1125
    %v1199 = vpop.f32.mrb[0].mxu0
    %v1200 = vadd.f32 0.0, %v1199
    %v1201 = vpop.f32.mrb[0].mxu0
    %1202 = vmatprep.mubr.f32.mxu0 0.0
    %1203 = vmatmul.mubr.f32.gmra.mrb[0].mxu0 %v1128
    %v1204 = vpop.f32.mrb[0].mxu0
    %v1205 = vadd.f32 0.0, %v1204
    %v1206 = vpop.f32.mrb[0].mxu0
    %1207 = vdwg.mxu0
    %v1208 = vld [vmem:[#allocation8] sm:$0xff]
    %v1209 = vld [vmem:[#allocation8 + $0x8] sm:$0xff]
    %v1210 = vld [vmem:[#allocation8 + $0x10] sm:$0xff]
    %v1212 = vsel %vm1036, %v1200, 0
    %v1215 = vsel %vm1036, %v1205, 0
    %1217 = vmatprep.subr.mxu0 0.0
    %1218 = vmatpush1.msra.mxu0 %v1208
    %1219 = vmatprep.subr.mxu0 0.0
    %1220 = vmatpush1.msra.mxu0 %v1209
    %1221 = vmatprep.subr.mxu0 0.0
    %1222 = vmatpush1.msra.mxu0 %v1210
    %1223 = vmatprep.subr.mxu0 0.0
    %1224 = vmatpush1.msra.mxu0 0.0
    %1225 = vmatprep.subr.mxu0 0.0
    %1226 = vmatpush1.msra.mxu0 0.0
    %1227 = vmatprep.subr.mxu0 0.0
    %1228 = vmatpush1.msra.mxu0 0.0
    %1229 = vmatprep.subr.mxu0 0.0
    %1230 = vmatpush1.msra.mxu0 0.0
    %1231 = vmatprep.subr.mxu0 0.0
    %1232 = vmatpush1.msra.mxu0 0.0
    %1233 = vmatprep.subr.mxu0 0.0
    %1234 = vmatpush1.msra.mxu0 0.0
    %1235 = vmatprep.subr.mxu0 0.0
    %1236 = vmatpush1.msra.mxu0 0.0
    %1237 = vmatprep.subr.mxu0 0.0
    %1238 = vmatpush1.msra.mxu0 0.0
    %1239 = vmatprep.subr.mxu0 0.0
    %1240 = vmatpush1.msra.mxu0 0.0
    %1241 = vmatprep.subr.mxu0 0.0
    %1242 = vmatpush1.msra.mxu0 0.0
    %1243 = vmatprep.subr.mxu0 0.0
    %1244 = vmatpush1.msra.mxu0 0.0
    %1245 = vmatprep.subr.mxu0 0.0
    %1246 = vmatpush1.msra.mxu0 0.0
    %1247 = vmatprep.subr.mxu0 0.0
    %1248 = vmatpush1.msra.mxu0 0.0
    %1249 = vmatprep.subr.mxu0 0.0
    %1250 = vmatpush1.msra.mxu0 0.0
    %1251 = vmatprep.subr.mxu0 0.0
    %1252 = vmatpush1.msra.mxu0 0.0
    %1253 = vmatprep.subr.mxu0 0.0
    %1254 = vmatpush1.msra.mxu0 0.0
    %1255 = vmatprep.subr.mxu0 0.0
    %1256 = vmatpush1.msra.mxu0 0.0
    %1257 = vmatprep.subr.mxu0 0.0
    %1258 = vmatpush1.msra.mxu0 0.0
    %1259 = vmatprep.subr.mxu0 0.0
    %1260 = vmatpush1.msra.mxu0 0.0
    %1261 = vmatprep.subr.mxu0 0.0
    %1262 = vmatpush1.msra.mxu0 0.0
    %1263 = vmatprep.subr.mxu0 0.0
    %1264 = vmatpush1.msra.mxu0 0.0
    %1265 = vmatprep.subr.mxu0 0.0
    %1266 = vmatpush1.msra.mxu0 0.0
    %1267 = vmatprep.subr.mxu0 0.0
    %1268 = vmatpush1.msra.mxu0 0.0
    %1269 = vmatprep.subr.mxu0 0.0
    %1270 = vmatpush1.msra.mxu0 0.0
    %1271 = vmatprep.subr.mxu0 0.0
    %1272 = vmatpush1.msra.mxu0 0.0
    %1273 = vmatprep.subr.mxu0 0.0
    %1274 = vmatpush1.msra.mxu0 0.0
    %1275 = vmatprep.subr.mxu0 0.0
    %1276 = vmatpush1.msra.mxu0 0.0
    %1277 = vmatprep.subr.mxu0 0.0
    %1278 = vmatpush1.msra.mxu0 0.0
    %1279 = vmatprep.subr.mxu0 0.0
    %1280 = vmatpush1.msra.mxu0 0.0
    %1281 = vmatprep.mubr.f32.mxu0 0.0
    %1282 = vmatmul.mubr.f32.gmra.mrb[0].mxu0 %v1212
    %v1283 = vpop.f32.mrb[0].mxu0
    %v1284 = vadd.f32 0.0, %v1283
    %v1285 = vpop.f32.mrb[0].mxu0
    %1286 = vmatprep.mubr.f32.mxu0 0.0
    %1287 = vmatmul.mubr.f32.gmra.mrb[0].mxu0 %v1215
    %v1288 = vpop.f32.mrb[0].mxu0
    %v1289 = vadd.f32 0.0, %v1288
    %v1290 = vpop.f32.mrb[0].mxu0
    %1291 = vdwg.mxu0
    %1292 = vmatprep.subr.mxu0 0.0
    %1293 = vmatpush1.msra.mxu0 %v1118
    %1294 = vmatprep.subr.mxu0 0.0
    %1295 = vmatpush1.msra.mxu0 %v1119
    %1296 = vmatprep.subr.mxu0 0.0
    %1297 = vmatpush1.msra.mxu0 %v1120
    %1298 = vmatprep.subr.mxu0 0.0
    %1299 = vmatpush1.msra.mxu0 0.0
    %1300 = vmatprep.subr.mxu0 0.0
    %1301 = vmatpush1.msra.mxu0 0.0
    %1302 = vmatprep.subr.mxu0 0.0
    %1303 = vmatpush1.msra.mxu0 0.0
    %1304 = vmatprep.subr.mxu0 0.0
    %1305 = vmatpush1.msra.mxu0 0.0
    %1306 = vmatprep.subr.mxu0 0.0
    %1307 = vmatpush1.msra.mxu0 0.0
    %1308 = vmatprep.subr.mxu0 0.0
    %1309 = vmatpush1.msra.mxu0 0.0
    %1310 = vmatprep.subr.mxu0 0.0
    %1311 = vmatpush1.msra.mxu0 0.0
    %1312 = vmatprep.subr.mxu0 0.0
    %1313 = vmatpush1.msra.mxu0 0.0
    %1314 = vmatprep.subr.mxu0 0.0
    %1315 = vmatpush1.msra.mxu0 0.0
    %1316 = vmatprep.subr.mxu0 0.0
    %1317 = vmatpush1.msra.mxu0 0.0
    %1318 = vmatprep.subr.mxu0 0.0
    %1319 = vmatpush1.msra.mxu0 0.0
    %1320 = vmatprep.subr.mxu0 0.0
    %1321 = vmatpush1.msra.mxu0 0.0
    %1322 = vmatprep.subr.mxu0 0.0
    %1323 = vmatpush1.msra.mxu0 0.0
    %1324 = vmatprep.subr.mxu0 0.0
    %1325 = vmatpush1.msra.mxu0 0.0
    %1326 = vmatprep.subr.mxu0 0.0
    %1327 = vmatpush1.msra.mxu0 0.0
    %1328 = vmatprep.subr.mxu0 0.0
    %1329 = vmatpush1.msra.mxu0 0.0
    %1330 = vmatprep.subr.mxu0 0.0
    %1331 = vmatpush1.msra.mxu0 0.0
    %1332 = vmatprep.subr.mxu0 0.0
    %1333 = vmatpush1.msra.mxu0 0.0
    %1334 = vmatprep.subr.mxu0 0.0
    %1335 = vmatpush1.msra.mxu0 0.0
    %1336 = vmatprep.subr.mxu0 0.0
    %1337 = vmatpush1.msra.mxu0 0.0
    %1338 = vmatprep.subr.mxu0 0.0
    %1339 = vmatpush1.msra.mxu0 0.0
    %1340 = vmatprep.subr.mxu0 0.0
    %1341 = vmatpush1.msra.mxu0 0.0
    %1342 = vmatprep.subr.mxu0 0.0
    %1343 = vmatpush1.msra.mxu0 0.0
    %1344 = vmatprep.subr.mxu0 0.0
    %1345 = vmatpush1.msra.mxu0 0.0
    %1346 = vmatprep.subr.mxu0 0.0
    %1347 = vmatpush1.msra.mxu0 0.0
    %1348 = vmatprep.subr.mxu0 0.0
    %1349 = vmatpush1.msra.mxu0 0.0
    %1350 = vmatprep.subr.mxu0 0.0
    %1351 = vmatpush1.msra.mxu0 0.0
    %1352 = vmatprep.subr.mxu0 0.0
    %1353 = vmatpush1.msra.mxu0 0.0
    %1354 = vmatprep.subr.mxu0 0.0
    %1355 = vmatpush1.msra.mxu0 0.0
    %1356 = vmatprep.mubr.f32.mxu0 0.0
    %1357 = vmatmul.mubr.f32.gmra.mrb[0].mxu0 %v1038
    %v1358 = vpop.f32.mrb[0].mxu0
    %v1359 = vadd.f32 %v1284, %v1358
    %v1360 = vpop.f32.mrb[0].mxu0
    %1361 = vmatprep.mubr.f32.mxu0 0.0
    %1362 = vmatmul.mubr.f32.gmra.mrb[0].mxu0 %v1041
    %v1363 = vpop.f32.mrb[0].mxu0
    %v1364 = vadd.f32 %v1289, %v1363
    %v1365 = vpop.f32.mrb[0].mxu0
    %1366 = vdwg.mxu0
    %v1367 = vld [vmem:[#allocation16] sm:$0xff]
    %v1368 = vld [vmem:[#allocation16 + $0x8] sm:$0xf]
    %v1370 = vsel %vm1123, %v1367, 0
    %v1373 = vsel %vm1123, %v1368, 0
    %1375 = vmatprep.subr.mxu0 0.0
    %1376 = vmatpush1.msra.mxu0 %v1029
    %1377 = vmatprep.subr.mxu0 0.0
    %1378 = vmatpush1.msra.mxu0 %v1131
    %1379 = vmatprep.subr.mxu0 0.0
    %1380 = vmatpush1.msra.mxu0 0.0
    %1381 = vmatprep.subr.mxu0 0.0
    %1382 = vmatpush1.msra.mxu0 0.0
    %1383 = vmatprep.subr.mxu0 0.0
    %1384 = vmatpush1.msra.mxu0 0.0
    %1385 = vmatprep.subr.mxu0 0.0
    %1386 = vmatpush1.msra.mxu0 0.0
    %1387 = vmatprep.subr.mxu0 0.0
    %1388 = vmatpush1.msra.mxu0 0.0
    %1389 = vmatprep.subr.mxu0 0.0
    %1390 = vmatpush1.msra.mxu0 0.0
    %1391 = vmatprep.subr.mxu0 0.0
    %1392 = vmatpush1.msra.mxu0 0.0
    %1393 = vmatprep.subr.mxu0 0.0
    %1394 = vmatpush1.msra.mxu0 0.0
    %1395 = vmatprep.subr.mxu0 0.0
    %1396 = vmatpush1.msra.mxu0 0.0
    %1397 = vmatprep.subr.mxu0 0.0
    %1398 = vmatpush1.msra.mxu0 0.0
    %1399 = vmatprep.subr.mxu0 0.0
    %1400 = vmatpush1.msra.mxu0 0.0
    %1401 = vmatprep.subr.mxu0 0.0
    %1402 = vmatpush1.msra.mxu0 0.0
    %1403 = vmatprep.subr.mxu0 0.0
    %1404 = vmatpush1.msra.mxu0 0.0
    %1405 = vmatprep.subr.mxu0 0.0
    %1406 = vmatpush1.msra.mxu0 0.0
    %1407 = vmatprep.subr.mxu0 0.0
    %1408 = vmatpush1.msra.mxu0 0.0
    %1409 = vmatprep.subr.mxu0 0.0
    %1410 = vmatpush1.msra.mxu0 0.0
    %1411 = vmatprep.subr.mxu0 0.0
    %1412 = vmatpush1.msra.mxu0 0.0
    %1413 = vmatprep.subr.mxu0 0.0
    %1414 = vmatpush1.msra.mxu0 0.0
    %1415 = vmatprep.subr.mxu0 0.0
    %1416 = vmatpush1.msra.mxu0 0.0
    %1417 = vmatprep.subr.mxu0 0.0
    %1418 = vmatpush1.msra.mxu0 0.0
    %1419 = vmatprep.subr.mxu0 0.0
    %1420 = vmatpush1.msra.mxu0 0.0
    %1421 = vmatprep.subr.mxu0 0.0
    %1422 = vmatpush1.msra.mxu0 0.0
    %1423 = vmatprep.subr.mxu0 0.0
    %1424 = vmatpush1.msra.mxu0 0.0
    %1425 = vmatprep.subr.mxu0 0.0
    %1426 = vmatpush1.msra.mxu0 0.0
    %1427 = vmatprep.subr.mxu0 0.0
    %1428 = vmatpush1.msra.mxu0 0.0
    %1429 = vmatprep.subr.mxu0 0.0
    %1430 = vmatpush1.msra.mxu0 0.0
    %1431 = vmatprep.subr.mxu0 0.0
    %1432 = vmatpush1.msra.mxu0 0.0
    %1433 = vmatprep.subr.mxu0 0.0
    %1434 = vmatpush1.msra.mxu0 0.0
    %1435 = vmatprep.subr.mxu0 0.0
    %1436 = vmatpush1.msra.mxu0 0.0
    %1437 = vmatprep.subr.mxu0 0.0
    %1438 = vmatpush1.msra.mxu0 0.0
    %1439 = vmatprep.mubr.f32.mxu0 0.0
    %1440 = vmatmul.mubr.f32.gmra.mrb[0].mxu0 %v1370
    %v1441 = vpop.f32.mrb[0].mxu0
    %v1442 = vadd.f32 0.0, %v1441
    %v1443 = vpop.f32.mrb[0].mxu0
    %1444 = vmatprep.mubr.f32.mxu0 0.0
    %1445 = vmatmul.mubr.f32.gmra.mrb[0].mxu0 %v1373
    %v1446 = vpop.f32.mrb[0].mxu0
    %v1447 = vadd.f32 0.0, %v1446
    %v1448 = vpop.f32.mrb[0].mxu0
    %1449 = vdwg.mxu0
    %v1450 = vld [vmem:[#allocation11] sm:$0xff]
    %v1451 = vld [vmem:[#allocation11 + $0x8] sm:$0xff]
    %v1452 = vld [vmem:[#allocation11 + $0x10] sm:$0xff]
    %v1454 = vsel %vm1036, %v1442, 0
    %v1457 = vsel %vm1036, %v1447, 0
    %1459 = vmatprep.subr.mxu0 0.0
    %1460 = vmatpush1.msra.mxu0 %v1450
    %1461 = vmatprep.subr.mxu0 0.0
    %1462 = vmatpush1.msra.mxu0 %v1451
    %1463 = vmatprep.subr.mxu0 0.0
    %1464 = vmatpush1.msra.mxu0 %v1452
    %1465 = vmatprep.subr.mxu0 0.0
    %1466 = vmatpush1.msra.mxu0 0.0
    %1467 = vmatprep.subr.mxu0 0.0
    %1468 = vmatpush1.msra.mxu0 0.0
    %1469 = vmatprep.subr.mxu0 0.0
    %1470 = vmatpush1.msra.mxu0 0.0
    %1471 = vmatprep.subr.mxu0 0.0
    %1472 = vmatpush1.msra.mxu0 0.0
    %1473 = vmatprep.subr.mxu0 0.0
    %1474 = vmatpush1.msra.mxu0 0.0
    %1475 = vmatprep.subr.mxu0 0.0
    %1476 = vmatpush1.msra.mxu0 0.0
    %1477 = vmatprep.subr.mxu0 0.0
    %1478 = vmatpush1.msra.mxu0 0.0
    %1479 = vmatprep.subr.mxu0 0.0
    %1480 = vmatpush1.msra.mxu0 0.0
    %1481 = vmatprep.subr.mxu0 0.0
    %1482 = vmatpush1.msra.mxu0 0.0
    %1483 = vmatprep.subr.mxu0 0.0
    %1484 = vmatpush1.msra.mxu0 0.0
    %1485 = vmatprep.subr.mxu0 0.0
    %1486 = vmatpush1.msra.mxu0 0.0
    %1487 = vmatprep.subr.mxu0 0.0
    %1488 = vmatpush1.msra.mxu0 0.0
    %1489 = vmatprep.subr.mxu0 0.0
    %1490 = vmatpush1.msra.mxu0 0.0
    %1491 = vmatprep.subr.mxu0 0.0
    %1492 = vmatpush1.msra.mxu0 0.0
    %1493 = vmatprep.subr.mxu0 0.0
    %1494 = vmatpush1.msra.mxu0 0.0
    %1495 = vmatprep.subr.mxu0 0.0
    %1496 = vmatpush1.msra.mxu0 0.0
    %1497 = vmatprep.subr.mxu0 0.0
    %1498 = vmatpush1.msra.mxu0 0.0
    %1499 = vmatprep.subr.mxu0 0.0
    %1500 = vmatpush1.msra.mxu0 0.0
    %1501 = vmatprep.subr.mxu0 0.0
    %1502 = vmatpush1.msra.mxu0 0.0
    %1503 = vmatprep.subr.mxu0 0.0
    %1504 = vmatpush1.msra.mxu0 0.0
    %1505 = vmatprep.subr.mxu0 0.0
    %1506 = vmatpush1.msra.mxu0 0.0
    %1507 = vmatprep.subr.mxu0 0.0
    %1508 = vmatpush1.msra.mxu0 0.0
    %1509 = vmatprep.subr.mxu0 0.0
    %1510 = vmatpush1.msra.mxu0 0.0
    %1511 = vmatprep.subr.mxu0 0.0
    %1512 = vmatpush1.msra.mxu0 0.0
    %1513 = vmatprep.subr.mxu0 0.0
    %1514 = vmatpush1.msra.mxu0 0.0
    %1515 = vmatprep.subr.mxu0 0.0
    %1516 = vmatpush1.msra.mxu0 0.0
    %1517 = vmatprep.subr.mxu0 0.0
    %1518 = vmatpush1.msra.mxu0 0.0
    %1519 = vmatprep.subr.mxu0 0.0
    %1520 = vmatpush1.msra.mxu0 0.0
    %1521 = vmatprep.subr.mxu0 0.0
    %1522 = vmatpush1.msra.mxu0 0.0
    %1523 = vmatprep.mubr.f32.mxu0 0.0
    %1524 = vmatmul.mubr.f32.gmra.mrb[0].mxu0 %v1454
    %v1525 = vpop.f32.mrb[0].mxu0
    %v1526 = vadd.f32 0.0, %v1525
    %v1527 = vpop.f32.mrb[0].mxu0
    %1528 = vmatprep.mubr.f32.mxu0 0.0
    %1529 = vmatmul.mubr.f32.gmra.mrb[0].mxu0 %v1457
    %v1530 = vpop.f32.mrb[0].mxu0
    %v1531 = vadd.f32 0.0, %v1530
    %v1532 = vpop.f32.mrb[0].mxu0
    %1533 = vdwg.mxu0
    %v1534 = vadd.f32 %v1359, %v1526
    %v1535 = vadd.f32 %v1364, %v1531
    %v1536 = vld [vmem:[#allocation13] sm:$0xff]
    %v1537 = vld [vmem:[#allocation13 + $0x8] sm:$0xf]
    %v1538 = vadd.f32 %v1534, %v1536
    %v1539 = vadd.f32 %v1535, %v1537
    %v1540 = vmax.f32 %v1538, 0.0
    %v1541 = vmax.f32 %v1539, 0.0
    %v1542 = vld [vmem:[#allocation19] sm:$0xff]
    %v1543 = vld [vmem:[#allocation19 + $0x8] sm:$0xff]
    %v1544 = vld [vmem:[#allocation19 + $0x10] sm:$0xff]
    %v1546 = vsel %vm1130, %v1541, 0
    %1548 = vmatprep.subr.mxu0 0.0
    %1549 = vmatpush1.msra.mxu0 %v1540
    %1550 = vmatprep.subr.mxu0 0.0
    %1551 = vmatpush1.msra.mxu0 %v1546
    %1552 = vmatprep.subr.mxu0 0.0
    %1553 = vmatpush1.msra.mxu0 0.0
    %1554 = vmatprep.subr.mxu0 0.0
    %1555 = vmatpush1.msra.mxu0 0.0
    %1556 = vmatprep.subr.mxu0 0.0
    %1557 = vmatpush1.msra.mxu0 0.0
    %1558 = vmatprep.subr.mxu0 0.0
    %1559 = vmatpush1.msra.mxu0 0.0
    %1560 = vmatprep.subr.mxu0 0.0
    %1561 = vmatpush1.msra.mxu0 0.0
    %1562 = vmatprep.subr.mxu0 0.0
    %1563 = vmatpush1.msra.mxu0 0.0
    %1564 = vmatprep.subr.mxu0 0.0
    %1565 = vmatpush1.msra.mxu0 0.0
    %1566 = vmatprep.subr.mxu0 0.0
    %1567 = vmatpush1.msra.mxu0 0.0
    %1568 = vmatprep.subr.mxu0 0.0
    %1569 = vmatpush1.msra.mxu0 0.0
    %1570 = vmatprep.subr.mxu0 0.0
    %1571 = vmatpush1.msra.mxu0 0.0
    %1572 = vmatprep.subr.mxu0 0.0
    %1573 = vmatpush1.msra.mxu0 0.0
    %1574 = vmatprep.subr.mxu0 0.0
    %1575 = vmatpush1.msra.mxu0 0.0
    %1576 = vmatprep.subr.mxu0 0.0
    %1577 = vmatpush1.msra.mxu0 0.0
    %1578 = vmatprep.subr.mxu0 0.0
    %1579 = vmatpush1.msra.mxu0 0.0
    %1580 = vmatprep.subr.mxu0 0.0
    %1581 = vmatpush1.msra.mxu0 0.0
    %1582 = vmatprep.subr.mxu0 0.0
    %1583 = vmatpush1.msra.mxu0 0.0
    %1584 = vmatprep.subr.mxu0 0.0
    %1585 = vmatpush1.msra.mxu0 0.0
    %1586 = vmatprep.subr.mxu0 0.0
    %1587 = vmatpush1.msra.mxu0 0.0
    %1588 = vmatprep.subr.mxu0 0.0
    %1589 = vmatpush1.msra.mxu0 0.0
    %1590 = vmatprep.subr.mxu0 0.0
    %1591 = vmatpush1.msra.mxu0 0.0
    %1592 = vmatprep.subr.mxu0 0.0
    %1593 = vmatpush1.msra.mxu0 0.0
    %1594 = vmatprep.subr.mxu0 0.0
    %1595 = vmatpush1.msra.mxu0 0.0
    %1596 = vmatprep.subr.mxu0 0.0
    %1597 = vmatpush1.msra.mxu0 0.0
    %1598 = vmatprep.subr.mxu0 0.0
    %1599 = vmatpush1.msra.mxu0 0.0
    %1600 = vmatprep.subr.mxu0 0.0
    %1601 = vmatpush1.msra.mxu0 0.0
    %1602 = vmatprep.subr.mxu0 0.0
    %1603 = vmatpush1.msra.mxu0 0.0
    %1604 = vmatprep.subr.mxu0 0.0
    %1605 = vmatpush1.msra.mxu0 0.0
    %1606 = vmatprep.subr.mxu0 0.0
    %1607 = vmatpush1.msra.mxu0 0.0
    %1608 = vmatprep.subr.mxu0 0.0
    %1609 = vmatpush1.msra.mxu0 0.0
    %1610 = vmatprep.subr.mxu0 0.0
    %1611 = vmatpush1.msra.mxu0 0.0
    %1612 = vmatprep.mubr.f32.mxu0 0.0
    %1613 = vmatmul.mubr.f32.gmra.mrb[0].mxu0 %v1125
    %v1614 = vpop.f32.mrb[0].mxu0
    %v1615 = vadd.f32 0.0, %v1614
    %v1616 = vpop.f32.mrb[0].mxu0
    %1617 = vmatprep.mubr.f32.mxu0 0.0
    %1618 = vmatmul.mubr.f32.gmra.mrb[0].mxu0 %v1128
    %v1619 = vpop.f32.mrb[0].mxu0
    %v1620 = vadd.f32 0.0, %v1619
    %v1621 = vpop.f32.mrb[0].mxu0
    %1622 = vdwg.mxu0
    %v1623 = vld [vmem:[#allocation17] sm:$0xff]
    %v1624 = vld [vmem:[#allocation17 + $0x8] sm:$0xff]
    %v1625 = vld [vmem:[#allocation17 + $0x10] sm:$0xff]
    %v1627 = vsel %vm1036, %v1615, 0
    %v1630 = vsel %vm1036, %v1620, 0
    %1632 = vmatprep.subr.mxu0 0.0
    %1633 = vmatpush1.msra.mxu0 %v1623
    %1634 = vmatprep.subr.mxu0 0.0
    %1635 = vmatpush1.msra.mxu0 %v1624
    %1636 = vmatprep.subr.mxu0 0.0
    %1637 = vmatpush1.msra.mxu0 %v1625
    %1638 = vmatprep.subr.mxu0 0.0
    %1639 = vmatpush1.msra.mxu0 0.0
    %1640 = vmatprep.subr.mxu0 0.0
    %1641 = vmatpush1.msra.mxu0 0.0
    %1642 = vmatprep.subr.mxu0 0.0
    %1643 = vmatpush1.msra.mxu0 0.0
    %1644 = vmatprep.subr.mxu0 0.0
    %1645 = vmatpush1.msra.mxu0 0.0
    %1646 = vmatprep.subr.mxu0 0.0
    %1647 = vmatpush1.msra.mxu0 0.0
    %1648 = vmatprep.subr.mxu0 0.0
    %1649 = vmatpush1.msra.mxu0 0.0
    %1650 = vmatprep.subr.mxu0 0.0
    %1651 = vmatpush1.msra.mxu0 0.0
    %1652 = vmatprep.subr.mxu0 0.0
    %1653 = vmatpush1.msra.mxu0 0.0
    %1654 = vmatprep.subr.mxu0 0.0
    %1655 = vmatpush1.msra.mxu0 0.0
    %1656 = vmatprep.subr.mxu0 0.0
    %1657 = vmatpush1.msra.mxu0 0.0
    %1658 = vmatprep.subr.mxu0 0.0
    %1659 = vmatpush1.msra.mxu0 0.0
    %1660 = vmatprep.subr.mxu0 0.0
    %1661 = vmatpush1.msra.mxu0 0.0
    %1662 = vmatprep.subr.mxu0 0.0
    %1663 = vmatpush1.msra.mxu0 0.0
    %1664 = vmatprep.subr.mxu0 0.0
    %1665 = vmatpush1.msra.mxu0 0.0
    %1666 = vmatprep.subr.mxu0 0.0
    %1667 = vmatpush1.msra.mxu0 0.0
    %1668 = vmatprep.subr.mxu0 0.0
    %1669 = vmatpush1.msra.mxu0 0.0
    %1670 = vmatprep.subr.mxu0 0.0
    %1671 = vmatpush1.msra.mxu0 0.0
    %1672 = vmatprep.subr.mxu0 0.0
    %1673 = vmatpush1.msra.mxu0 0.0
    %1674 = vmatprep.subr.mxu0 0.0
    %1675 = vmatpush1.msra.mxu0 0.0
    %1676 = vmatprep.subr.mxu0 0.0
    %1677 = vmatpush1.msra.mxu0 0.0
    %1678 = vmatprep.subr.mxu0 0.0
    %1679 = vmatpush1.msra.mxu0 0.0
    %1680 = vmatprep.subr.mxu0 0.0
    %1681 = vmatpush1.msra.mxu0 0.0
    %1682 = vmatprep.subr.mxu0 0.0
    %1683 = vmatpush1.msra.mxu0 0.0
    %1684 = vmatprep.subr.mxu0 0.0
    %1685 = vmatpush1.msra.mxu0 0.0
    %1686 = vmatprep.subr.mxu0 0.0
    %1687 = vmatpush1.msra.mxu0 0.0
    %1688 = vmatprep.subr.mxu0 0.0
    %1689 = vmatpush1.msra.mxu0 0.0
    %1690 = vmatprep.subr.mxu0 0.0
    %1691 = vmatpush1.msra.mxu0 0.0
    %1692 = vmatprep.subr.mxu0 0.0
    %1693 = vmatpush1.msra.mxu0 0.0
    %1694 = vmatprep.subr.mxu0 0.0
    %1695 = vmatpush1.msra.mxu0 0.0
    %1696 = vmatprep.mubr.f32.mxu0 0.0
    %1697 = vmatmul.mubr.f32.gmra.mrb[0].mxu0 %v1627
    %v1698 = vpop.f32.mrb[0].mxu0
    %v1699 = vadd.f32 0.0, %v1698
    %v1700 = vpop.f32.mrb[0].mxu0
    %1701 = vmatprep.mubr.f32.mxu0 0.0
    %1702 = vmatmul.mubr.f32.gmra.mrb[0].mxu0 %v1630
    %v1703 = vpop.f32.mrb[0].mxu0
    %v1704 = vadd.f32 0.0, %v1703
    %v1705 = vpop.f32.mrb[0].mxu0
    %1706 = vdwg.mxu0
    %v1708 = vsel %vm1036, %v1540, 0
    %v1710 = vsel %vm1036, %v1541, 0
    %1712 = vmatprep.subr.mxu0 0.0
    %1713 = vmatpush1.msra.mxu0 %v1542
    %1714 = vmatprep.subr.mxu0 0.0
    %1715 = vmatpush1.msra.mxu0 %v1543
    %1716 = vmatprep.subr.mxu0 0.0
    %1717 = vmatpush1.msra.mxu0 %v1544
    %1718 = vmatprep.subr.mxu0 0.0
    %1719 = vmatpush1.msra.mxu0 0.0
    %1720 = vmatprep.subr.mxu0 0.0
    %1721 = vmatpush1.msra.mxu0 0.0
    %1722 = vmatprep.subr.mxu0 0.0
    %1723 = vmatpush1.msra.mxu0 0.0
    %1724 = vmatprep.subr.mxu0 0.0
    %1725 = vmatpush1.msra.mxu0 0.0
    %1726 = vmatprep.subr.mxu0 0.0
    %1727 = vmatpush1.msra.mxu0 0.0
    %1728 = vmatprep.subr.mxu0 0.0
    %1729 = vmatpush1.msra.mxu0 0.0
    %1730 = vmatprep.subr.mxu0 0.0
    %1731 = vmatpush1.msra.mxu0 0.0
    %1732 = vmatprep.subr.mxu0 0.0
    %1733 = vmatpush1.msra.mxu0 0.0
    %1734 = vmatprep.subr.mxu0 0.0
    %1735 = vmatpush1.msra.mxu0 0.0
    %1736 = vmatprep.subr.mxu0 0.0
    %1737 = vmatpush1.msra.mxu0 0.0
    %1738 = vmatprep.subr.mxu0 0.0
    %1739 = vmatpush1.msra.mxu0 0.0
    %1740 = vmatprep.subr.mxu0 0.0
    %1741 = vmatpush1.msra.mxu0 0.0
    %1742 = vmatprep.subr.mxu0 0.0
    %1743 = vmatpush1.msra.mxu0 0.0
    %1744 = vmatprep.subr.mxu0 0.0
    %1745 = vmatpush1.msra.mxu0 0.0
    %1746 = vmatprep.subr.mxu0 0.0
    %1747 = vmatpush1.msra.mxu0 0.0
    %1748 = vmatprep.subr.mxu0 0.0
    %1749 = vmatpush1.msra.mxu0 0.0
    %1750 = vmatprep.subr.mxu0 0.0
    %1751 = vmatpush1.msra.mxu0 0.0
    %1752 = vmatprep.subr.mxu0 0.0
    %1753 = vmatpush1.msra.mxu0 0.0
    %1754 = vmatprep.subr.mxu0 0.0
    %1755 = vmatpush1.msra.mxu0 0.0
    %1756 = vmatprep.subr.mxu0 0.0
    %1757 = vmatpush1.msra.mxu0 0.0
    %1758 = vmatprep.subr.mxu0 0.0
    %1759 = vmatpush1.msra.mxu0 0.0
    %1760 = vmatprep.subr.mxu0 0.0
    %1761 = vmatpush1.msra.mxu0 0.0
    %1762 = vmatprep.subr.mxu0 0.0
    %1763 = vmatpush1.msra.mxu0 0.0
    %1764 = vmatprep.subr.mxu0 0.0
    %1765 = vmatpush1.msra.mxu0 0.0
    %1766 = vmatprep.subr.mxu0 0.0
    %1767 = vmatpush1.msra.mxu0 0.0
    %1768 = vmatprep.subr.mxu0 0.0
    %1769 = vmatpush1.msra.mxu0 0.0
    %1770 = vmatprep.subr.mxu0 0.0
    %1771 = vmatpush1.msra.mxu0 0.0
    %1772 = vmatprep.subr.mxu0 0.0
    %1773 = vmatpush1.msra.mxu0 0.0
    %1774 = vmatprep.subr.mxu0 0.0
    %1775 = vmatpush1.msra.mxu0 0.0
    %1776 = vmatprep.mubr.f32.mxu0 0.0
    %1777 = vmatmul.mubr.f32.gmra.mrb[0].mxu0 %v1708
    %v1778 = vpop.f32.mrb[0].mxu0
    %v1779 = vadd.f32 %v1699, %v1778
    %v1780 = vpop.f32.mrb[0].mxu0
    %1781 = vmatprep.mubr.f32.mxu0 0.0
    %1782 = vmatmul.mubr.f32.gmra.mrb[0].mxu0 %v1710
    %v1783 = vpop.f32.mrb[0].mxu0
    %v1784 = vadd.f32 %v1704, %v1783
    %v1785 = vpop.f32.mrb[0].mxu0
    %1786 = vdwg.mxu0
    %1787 = vmatprep.subr.mxu0 0.0
    %1788 = vmatpush1.msra.mxu0 %v1540
    %1789 = vmatprep.subr.mxu0 0.0
    %1790 = vmatpush1.msra.mxu0 %v1546
    %1791 = vmatprep.subr.mxu0 0.0
    %1792 = vmatpush1.msra.mxu0 0.0
    %1793 = vmatprep.subr.mxu0 0.0
    %1794 = vmatpush1.msra.mxu0 0.0
    %1795 = vmatprep.subr.mxu0 0.0
    %1796 = vmatpush1.msra.mxu0 0.0
    %1797 = vmatprep.subr.mxu0 0.0
    %1798 = vmatpush1.msra.mxu0 0.0
    %1799 = vmatprep.subr.mxu0 0.0
    %1800 = vmatpush1.msra.mxu0 0.0
    %1801 = vmatprep.subr.mxu0 0.0
    %1802 = vmatpush1.msra.mxu0 0.0
    %1803 = vmatprep.subr.mxu0 0.0
    %1804 = vmatpush1.msra.mxu0 0.0
    %1805 = vmatprep.subr.mxu0 0.0
    %1806 = vmatpush1.msra.mxu0 0.0
    %1807 = vmatprep.subr.mxu0 0.0
    %1808 = vmatpush1.msra.mxu0 0.0
    %1809 = vmatprep.subr.mxu0 0.0
    %1810 = vmatpush1.msra.mxu0 0.0
    %1811 = vmatprep.subr.mxu0 0.0
    %1812 = vmatpush1.msra.mxu0 0.0
    %1813 = vmatprep.subr.mxu0 0.0
    %1814 = vmatpush1.msra.mxu0 0.0
    %1815 = vmatprep.subr.mxu0 0.0
    %1816 = vmatpush1.msra.mxu0 0.0
    %1817 = vmatprep.subr.mxu0 0.0
    %1818 = vmatpush1.msra.mxu0 0.0
    %1819 = vmatprep.subr.mxu0 0.0
    %1820 = vmatpush1.msra.mxu0 0.0
    %1821 = vmatprep.subr.mxu0 0.0
    %1822 = vmatpush1.msra.mxu0 0.0
    %1823 = vmatprep.subr.mxu0 0.0
    %1824 = vmatpush1.msra.mxu0 0.0
    %1825 = vmatprep.subr.mxu0 0.0
    %1826 = vmatpush1.msra.mxu0 0.0
    %1827 = vmatprep.subr.mxu0 0.0
    %1828 = vmatpush1.msra.mxu0 0.0
    %1829 = vmatprep.subr.mxu0 0.0
    %1830 = vmatpush1.msra.mxu0 0.0
    %1831 = vmatprep.subr.mxu0 0.0
    %1832 = vmatpush1.msra.mxu0 0.0
    %1833 = vmatprep.subr.mxu0 0.0
    %1834 = vmatpush1.msra.mxu0 0.0
    %1835 = vmatprep.subr.mxu0 0.0
    %1836 = vmatpush1.msra.mxu0 0.0
    %1837 = vmatprep.subr.mxu0 0.0
    %1838 = vmatpush1.msra.mxu0 0.0
    %1839 = vmatprep.subr.mxu0 0.0
    %1840 = vmatpush1.msra.mxu0 0.0
    %1841 = vmatprep.subr.mxu0 0.0
    %1842 = vmatpush1.msra.mxu0 0.0
    %1843 = vmatprep.subr.mxu0 0.0
    %1844 = vmatpush1.msra.mxu0 0.0
    %1845 = vmatprep.subr.mxu0 0.0
    %1846 = vmatpush1.msra.mxu0 0.0
    %1847 = vmatprep.subr.mxu0 0.0
    %1848 = vmatpush1.msra.mxu0 0.0
    %1849 = vmatprep.subr.mxu0 0.0
    %1850 = vmatpush1.msra.mxu0 0.0
    %1851 = vmatprep.mubr.f32.mxu0 0.0
    %1852 = vmatmul.mubr.f32.gmra.mrb[0].mxu0 %v1370
    %v1853 = vpop.f32.mrb[0].mxu0
    %v1854 = vadd.f32 0.0, %v1853
    %v1855 = vpop.f32.mrb[0].mxu0
    %1856 = vmatprep.mubr.f32.mxu0 0.0
    %1857 = vmatmul.mubr.f32.gmra.mrb[0].mxu0 %v1373
    %v1858 = vpop.f32.mrb[0].mxu0
    %v1859 = vadd.f32 0.0, %v1858
    %v1860 = vpop.f32.mrb[0].mxu0
    %1861 = vdwg.mxu0
    %v1862 = vld [vmem:[#allocation20] sm:$0xff]
    %v1863 = vld [vmem:[#allocation20 + $0x8] sm:$0xff]
    %v1864 = vld [vmem:[#allocation20 + $0x10] sm:$0xff]
    %v1866 = vsel %vm1036, %v1854, 0
    %v1869 = vsel %vm1036, %v1859, 0
    %1871 = vmatprep.subr.mxu0 0.0
    %1872 = vmatpush1.msra.mxu0 %v1862
    %1873 = vmatprep.subr.mxu0 0.0
    %1874 = vmatpush1.msra.mxu0 %v1863
    %1875 = vmatprep.subr.mxu0 0.0
    %1876 = vmatpush1.msra.mxu0 %v1864
    %1877 = vmatprep.subr.mxu0 0.0
    %1878 = vmatpush1.msra.mxu0 0.0
    %1879 = vmatprep.subr.mxu0 0.0
    %1880 = vmatpush1.msra.mxu0 0.0
    %1881 = vmatprep.subr.mxu0 0.0
    %1882 = vmatpush1.msra.mxu0 0.0
    %1883 = vmatprep.subr.mxu0 0.0
    %1884 = vmatpush1.msra.mxu0 0.0
    %1885 = vmatprep.subr.mxu0 0.0
    %1886 = vmatpush1.msra.mxu0 0.0
    %1887 = vmatprep.subr.mxu0 0.0
    %1888 = vmatpush1.msra.mxu0 0.0
    %1889 = vmatprep.subr.mxu0 0.0
    %1890 = vmatpush1.msra.mxu0 0.0
    %1891 = vmatprep.subr.mxu0 0.0
    %1892 = vmatpush1.msra.mxu0 0.0
    %1893 = vmatprep.subr.mxu0 0.0
    %1894 = vmatpush1.msra.mxu0 0.0
    %1895 = vmatprep.subr.mxu0 0.0
    %1896 = vmatpush1.msra.mxu0 0.0
    %1897 = vmatprep.subr.mxu0 0.0
    %1898 = vmatpush1.msra.mxu0 0.0
    %1899 = vmatprep.subr.mxu0 0.0
    %1900 = vmatpush1.msra.mxu0 0.0
    %1901 = vmatprep.subr.mxu0 0.0
    %1902 = vmatpush1.msra.mxu0 0.0
    %1903 = vmatprep.subr.mxu0 0.0
    %1904 = vmatpush1.msra.mxu0 0.0
    %1905 = vmatprep.subr.mxu0 0.0
    %1906 = vmatpush1.msra.mxu0 0.0
    %1907 = vmatprep.subr.mxu0 0.0
    %1908 = vmatpush1.msra.mxu0 0.0
    %1909 = vmatprep.subr.mxu0 0.0
    %1910 = vmatpush1.msra.mxu0 0.0
    %1911 = vmatprep.subr.mxu0 0.0
    %1912 = vmatpush1.msra.mxu0 0.0
    %1913 = vmatprep.subr.mxu0 0.0
    %1914 = vmatpush1.msra.mxu0 0.0
    %1915 = vmatprep.subr.mxu0 0.0
    %1916 = vmatpush1.msra.mxu0 0.0
    %1917 = vmatprep.subr.mxu0 0.0
    %1918 = vmatpush1.msra.mxu0 0.0
    %1919 = vmatprep.subr.mxu0 0.0
    %1920 = vmatpush1.msra.mxu0 0.0
    %1921 = vmatprep.subr.mxu0 0.0
    %1922 = vmatpush1.msra.mxu0 0.0
    %1923 = vmatprep.subr.mxu0 0.0
    %1924 = vmatpush1.msra.mxu0 0.0
    %1925 = vmatprep.subr.mxu0 0.0
    %1926 = vmatpush1.msra.mxu0 0.0
    %1927 = vmatprep.subr.mxu0 0.0
    %1928 = vmatpush1.msra.mxu0 0.0
    %1929 = vmatprep.subr.mxu0 0.0
    %1930 = vmatpush1.msra.mxu0 0.0
    %1931 = vmatprep.subr.mxu0 0.0
    %1932 = vmatpush1.msra.mxu0 0.0
    %1933 = vmatprep.subr.mxu0 0.0
    %1934 = vmatpush1.msra.mxu0 0.0
    %1935 = vmatprep.mubr.f32.mxu0 0.0
    %1936 = vmatmul.mubr.f32.gmra.mrb[0].mxu0 %v1866
    %v1937 = vpop.f32.mrb[0].mxu0
    %v1938 = vadd.f32 0.0, %v1937
    %v1939 = vpop.f32.mrb[0].mxu0
    %1940 = vmatprep.mubr.f32.mxu0 0.0
    %1941 = vmatmul.mubr.f32.gmra.mrb[0].mxu0 %v1869
    %v1942 = vpop.f32.mrb[0].mxu0
    %v1943 = vadd.f32 0.0, %v1942
    %v1944 = vpop.f32.mrb[0].mxu0
    %1945 = vdwg.mxu0
    %v1946 = vadd.f32 %v1779, %v1938
    %v1947 = vadd.f32 %v1784, %v1943
    %v1948 = vld [vmem:[#allocation22] sm:$0xff]
    %v1949 = vld [vmem:[#allocation22 + $0x8] sm:$0xf]
    %v1950 = vadd.f32 %v1946, %v1948
    %v1951 = vadd.f32 %v1947, %v1949
    %v1952 = vmax.f32 %v1950, 0.0
    %v1953 = vmax.f32 %v1951, 0.0
    %v1954 = vadd.f32 %v1952, %v1029
    %v1955 = vadd.f32 %v1953, %v1030
    %vm1956 = vcmp.ge.f32.partialorder %v1954, 0.0
    %vm1957 = vcmp.ge.f32.partialorder %v1955, 0.0
    %v1958 = vmul.f32 %v1954, 0.01
    %v1959 = vmul.f32 %v1955, 0.01
    %v1960 = vsel %vm1956, %v1954, %v1958
    %v1961 = vsel %vm1957, %v1955, %v1959
    %v1962 = vld [vmem:[#allocation25] sm:$0xff]
    %v1963 = vld [vmem:[#allocation25 + $0x8] sm:$0xff]
    %v1964 = vld [vmem:[#allocation25 + $0x10] sm:$0xff]
    %v1966 = vsel %vm1130, %v1961, 0
    %1968 = vmatprep.subr.mxu0 0.0
    %1969 = vmatpush1.msra.mxu0 %v1960
    %1970 = vmatprep.subr.mxu0 0.0
    %1971 = vmatpush1.msra.mxu0 %v1966
    %1972 = vmatprep.subr.mxu0 0.0
    %1973 = vmatpush1.msra.mxu0 0.0
    %1974 = vmatprep.subr.mxu0 0.0
    %1975 = vmatpush1.msra.mxu0 0.0
    %1976 = vmatprep.subr.mxu0 0.0
    %1977 = vmatpush1.msra.mxu0 0.0
    %1978 = vmatprep.subr.mxu0 0.0
    %1979 = vmatpush1.msra.mxu0 0.0
    %1980 = vmatprep.subr.mxu0 0.0
    %1981 = vmatpush1.msra.mxu0 0.0
    %1982 = vmatprep.subr.mxu0 0.0
    %1983 = vmatpush1.msra.mxu0 0.0
    %1984 = vmatprep.subr.mxu0 0.0
    %1985 = vmatpush1.msra.mxu0 0.0
    %1986 = vmatprep.subr.mxu0 0.0
    %1987 = vmatpush1.msra.mxu0 0.0
    %1988 = vmatprep.subr.mxu0 0.0
    %1989 = vmatpush1.msra.mxu0 0.0
    %1990 = vmatprep.subr.mxu0 0.0
    %1991 = vmatpush1.msra.mxu0 0.0
    %1992 = vmatprep.subr.mxu0 0.0
    %1993 = vmatpush1.msra.mxu0 0.0
    %1994 = vmatprep.subr.mxu0 0.0
    %1995 = vmatpush1.msra.mxu0 0.0
    %1996 = vmatprep.subr.mxu0 0.0
    %1997 = vmatpush1.msra.mxu0 0.0
    %1998 = vmatprep.subr.mxu0 0.0
    %1999 = vmatpush1.msra.mxu0 0.0
    %2000 = vmatprep.subr.mxu0 0.0
    %2001 = vmatpush1.msra.mxu0 0.0
    %2002 = vmatprep.subr.mxu0 0.0
    %2003 = vmatpush1.msra.mxu0 0.0
    %2004 = vmatprep.subr.mxu0 0.0
    %2005 = vmatpush1.msra.mxu0 0.0
    %2006 = vmatprep.subr.mxu0 0.0
    %2007 = vmatpush1.msra.mxu0 0.0
    %2008 = vmatprep.subr.mxu0 0.0
    %2009 = vmatpush1.msra.mxu0 0.0
    %2010 = vmatprep.subr.mxu0 0.0
    %2011 = vmatpush1.msra.mxu0 0.0
    %2012 = vmatprep.subr.mxu0 0.0
    %2013 = vmatpush1.msra.mxu0 0.0
    %2014 = vmatprep.subr.mxu0 0.0
    %2015 = vmatpush1.msra.mxu0 0.0
    %2016 = vmatprep.subr.mxu0 0.0
    %2017 = vmatpush1.msra.mxu0 0.0
    %2018 = vmatprep.subr.mxu0 0.0
    %2019 = vmatpush1.msra.mxu0 0.0
    %2020 = vmatprep.subr.mxu0 0.0
    %2021 = vmatpush1.msra.mxu0 0.0
    %2022 = vmatprep.subr.mxu0 0.0
    %2023 = vmatpush1.msra.mxu0 0.0
    %2024 = vmatprep.subr.mxu0 0.0
    %2025 = vmatpush1.msra.mxu0 0.0
    %2026 = vmatprep.subr.mxu0 0.0
    %2027 = vmatpush1.msra.mxu0 0.0
    %2028 = vmatprep.subr.mxu0 0.0
    %2029 = vmatpush1.msra.mxu0 0.0
    %2030 = vmatprep.subr.mxu0 0.0
    %2031 = vmatpush1.msra.mxu0 0.0
    %2032 = vmatprep.mubr.f32.mxu0 0.0
    %2033 = vmatmul.mubr.f32.gmra.mrb[0].mxu0 %v1125
    %v2034 = vpop.f32.mrb[0].mxu0
    %v2035 = vadd.f32 0.0, %v2034
    %v2036 = vpop.f32.mrb[0].mxu0
    %2037 = vmatprep.mubr.f32.mxu0 0.0
    %2038 = vmatmul.mubr.f32.gmra.mrb[0].mxu0 %v1128
    %v2039 = vpop.f32.mrb[0].mxu0
    %v2040 = vadd.f32 0.0, %v2039
    %v2041 = vpop.f32.mrb[0].mxu0
    %2042 = vdwg.mxu0
    %v2043 = vld [vmem:[#allocation23] sm:$0xff]
    %v2044 = vld [vmem:[#allocation23 + $0x8] sm:$0xff]
    %v2045 = vld [vmem:[#allocation23 + $0x10] sm:$0xff]
    %v2047 = vsel %vm1036, %v2035, 0
    %v2050 = vsel %vm1036, %v2040, 0
    %2052 = vmatprep.subr.mxu0 0.0
    %2053 = vmatpush1.msra.mxu0 %v2043
    %2054 = vmatprep.subr.mxu0 0.0
    %2055 = vmatpush1.msra.mxu0 %v2044
    %2056 = vmatprep.subr.mxu0 0.0
    %2057 = vmatpush1.msra.mxu0 %v2045
    %2058 = vmatprep.subr.mxu0 0.0
    %2059 = vmatpush1.msra.mxu0 0.0
    %2060 = vmatprep.subr.mxu0 0.0
    %2061 = vmatpush1.msra.mxu0 0.0
    %2062 = vmatprep.subr.mxu0 0.0
    %2063 = vmatpush1.msra.mxu0 0.0
    %2064 = vmatprep.subr.mxu0 0.0
    %2065 = vmatpush1.msra.mxu0 0.0
    %2066 = vmatprep.subr.mxu0 0.0
    %2067 = vmatpush1.msra.mxu0 0.0
    %2068 = vmatprep.subr.mxu0 0.0
    %2069 = vmatpush1.msra.mxu0 0.0
    %2070 = vmatprep.subr.mxu0 0.0
    %2071 = vmatpush1.msra.mxu0 0.0
    %2072 = vmatprep.subr.mxu0 0.0
    %2073 = vmatpush1.msra.mxu0 0.0
    %2074 = vmatprep.subr.mxu0 0.0
    %2075 = vmatpush1.msra.mxu0 0.0
    %2076 = vmatprep.subr.mxu0 0.0
    %2077 = vmatpush1.msra.mxu0 0.0
    %2078 = vmatprep.subr.mxu0 0.0
    %2079 = vmatpush1.msra.mxu0 0.0
    %2080 = vmatprep.subr.mxu0 0.0
    %2081 = vmatpush1.msra.mxu0 0.0
    %2082 = vmatprep.subr.mxu0 0.0
    %2083 = vmatpush1.msra.mxu0 0.0
    %2084 = vmatprep.subr.mxu0 0.0
    %2085 = vmatpush1.msra.mxu0 0.0
    %2086 = vmatprep.subr.mxu0 0.0
    %2087 = vmatpush1.msra.mxu0 0.0
    %2088 = vmatprep.subr.mxu0 0.0
    %2089 = vmatpush1.msra.mxu0 0.0
    %2090 = vmatprep.subr.mxu0 0.0
    %2091 = vmatpush1.msra.mxu0 0.0
    %2092 = vmatprep.subr.mxu0 0.0
    %2093 = vmatpush1.msra.mxu0 0.0
    %2094 = vmatprep.subr.mxu0 0.0
    %2095 = vmatpush1.msra.mxu0 0.0
    %2096 = vmatprep.subr.mxu0 0.0
    %2097 = vmatpush1.msra.mxu0 0.0
    %2098 = vmatprep.subr.mxu0 0.0
    %2099 = vmatpush1.msra.mxu0 0.0
    %2100 = vmatprep.subr.mxu0 0.0
    %2101 = vmatpush1.msra.mxu0 0.0
    %2102 = vmatprep.subr.mxu0 0.0
    %2103 = vmatpush1.msra.mxu0 0.0
    %2104 = vmatprep.subr.mxu0 0.0
    %2105 = vmatpush1.msra.mxu0 0.0
    %2106 = vmatprep.subr.mxu0 0.0
    %2107 = vmatpush1.msra.mxu0 0.0
    %2108 = vmatprep.subr.mxu0 0.0
    %2109 = vmatpush1.msra.mxu0 0.0
    %2110 = vmatprep.subr.mxu0 0.0
    %2111 = vmatpush1.msra.mxu0 0.0
    %2112 = vmatprep.subr.mxu0 0.0
    %2113 = vmatpush1.msra.mxu0 0.0
    %2114 = vmatprep.subr.mxu0 0.0
    %2115 = vmatpush1.msra.mxu0 0.0
    %2116 = vmatprep.mubr.f32.mxu0 0.0
    %2117 = vmatmul.mubr.f32.gmra.mrb[0].mxu0 %v2047
    %v2118 = vpop.f32.mrb[0].mxu0
    %v2119 = vadd.f32 0.0, %v2118
    %v2120 = vpop.f32.mrb[0].mxu0
    %2121 = vmatprep.mubr.f32.mxu0 0.0
    %2122 = vmatmul.mubr.f32.gmra.mrb[0].mxu0 %v2050
    %v2123 = vpop.f32.mrb[0].mxu0
    %v2124 = vadd.f32 0.0, %v2123
    %v2125 = vpop.f32.mrb[0].mxu0
    %2126 = vdwg.mxu0
    %v2128 = vsel %vm1036, %v1960, 0
    %v2130 = vsel %vm1036, %v1961, 0
    %2132 = vmatprep.subr.mxu0 0.0
    %2133 = vmatpush1.msra.mxu0 %v1962
    %2134 = vmatprep.subr.mxu0 0.0
    %2135 = vmatpush1.msra.mxu0 %v1963
    %2136 = vmatprep.subr.mxu0 0.0
    %2137 = vmatpush1.msra.mxu0 %v1964
    %2138 = vmatprep.subr.mxu0 0.0
    %2139 = vmatpush1.msra.mxu0 0.0
    %2140 = vmatprep.subr.mxu0 0.0
    %2141 = vmatpush1.msra.mxu0 0.0
    %2142 = vmatprep.subr.mxu0 0.0
    %2143 = vmatpush1.msra.mxu0 0.0
    %2144 = vmatprep.subr.mxu0 0.0
    %2145 = vmatpush1.msra.mxu0 0.0
    %2146 = vmatprep.subr.mxu0 0.0
    %2147 = vmatpush1.msra.mxu0 0.0
    %2148 = vmatprep.subr.mxu0 0.0
    %2149 = vmatpush1.msra.mxu0 0.0
    %2150 = vmatprep.subr.mxu0 0.0
    %2151 = vmatpush1.msra.mxu0 0.0
    %2152 = vmatprep.subr.mxu0 0.0
    %2153 = vmatpush1.msra.mxu0 0.0
    %2154 = vmatprep.subr.mxu0 0.0
    %2155 = vmatpush1.msra.mxu0 0.0
    %2156 = vmatprep.subr.mxu0 0.0
    %2157 = vmatpush1.msra.mxu0 0.0
    %2158 = vmatprep.subr.mxu0 0.0
    %2159 = vmatpush1.msra.mxu0 0.0
    %2160 = vmatprep.subr.mxu0 0.0
    %2161 = vmatpush1.msra.mxu0 0.0
    %2162 = vmatprep.subr.mxu0 0.0
    %2163 = vmatpush1.msra.mxu0 0.0
    %2164 = vmatprep.subr.mxu0 0.0
    %2165 = vmatpush1.msra.mxu0 0.0
    %2166 = vmatprep.subr.mxu0 0.0
    %2167 = vmatpush1.msra.mxu0 0.0
    %2168 = vmatprep.subr.mxu0 0.0
    %2169 = vmatpush1.msra.mxu0 0.0
    %2170 = vmatprep.subr.mxu0 0.0
    %2171 = vmatpush1.msra.mxu0 0.0
    %2172 = vmatprep.subr.mxu0 0.0
    %2173 = vmatpush1.msra.mxu0 0.0
    %2174 = vmatprep.subr.mxu0 0.0
    %2175 = vmatpush1.msra.mxu0 0.0
    %2176 = vmatprep.subr.mxu0 0.0
    %2177 = vmatpush1.msra.mxu0 0.0
    %2178 = vmatprep.subr.mxu0 0.0
    %2179 = vmatpush1.msra.mxu0 0.0
    %2180 = vmatprep.subr.mxu0 0.0
    %2181 = vmatpush1.msra.mxu0 0.0
    %2182 = vmatprep.subr.mxu0 0.0
    %2183 = vmatpush1.msra.mxu0 0.0
    %2184 = vmatprep.subr.mxu0 0.0
    %2185 = vmatpush1.msra.mxu0 0.0
    %2186 = vmatprep.subr.mxu0 0.0
    %2187 = vmatpush1.msra.mxu0 0.0
    %2188 = vmatprep.subr.mxu0 0.0
    %2189 = vmatpush1.msra.mxu0 0.0
    %2190 = vmatprep.subr.mxu0 0.0
    %2191 = vmatpush1.msra.mxu0 0.0
    %2192 = vmatprep.subr.mxu0 0.0
    %2193 = vmatpush1.msra.mxu0 0.0
    %2194 = vmatprep.subr.mxu0 0.0
    %2195 = vmatpush1.msra.mxu0 0.0
    %2196 = vmatprep.mubr.f32.mxu0 0.0
    %2197 = vmatmul.mubr.f32.gmra.mrb[0].mxu0 %v2128
    %v2198 = vpop.f32.mrb[0].mxu0
    %v2199 = vadd.f32 %v2119, %v2198
    %v2200 = vpop.f32.mrb[0].mxu0
    %2201 = vmatprep.mubr.f32.mxu0 0.0
    %2202 = vmatmul.mubr.f32.gmra.mrb[0].mxu0 %v2130
    %v2203 = vpop.f32.mrb[0].mxu0
    %v2204 = vadd.f32 %v2124, %v2203
    %v2205 = vpop.f32.mrb[0].mxu0
    %2206 = vdwg.mxu0
    %2207 = vmatprep.subr.mxu0 0.0
    %2208 = vmatpush1.msra.mxu0 %v1960
    %2209 = vmatprep.subr.mxu0 0.0
    %2210 = vmatpush1.msra.mxu0 %v1966
    %2211 = vmatprep.subr.mxu0 0.0
    %2212 = vmatpush1.msra.mxu0 0.0
    %2213 = vmatprep.subr.mxu0 0.0
    %2214 = vmatpush1.msra.mxu0 0.0
    %2215 = vmatprep.subr.mxu0 0.0
    %2216 = vmatpush1.msra.mxu0 0.0
    %2217 = vmatprep.subr.mxu0 0.0
    %2218 = vmatpush1.msra.mxu0 0.0
    %2219 = vmatprep.subr.mxu0 0.0
    %2220 = vmatpush1.msra.mxu0 0.0
    %2221 = vmatprep.subr.mxu0 0.0
    %2222 = vmatpush1.msra.mxu0 0.0
    %2223 = vmatprep.subr.mxu0 0.0
    %2224 = vmatpush1.msra.mxu0 0.0
    %2225 = vmatprep.subr.mxu0 0.0
    %2226 = vmatpush1.msra.mxu0 0.0
    %2227 = vmatprep.subr.mxu0 0.0
    %2228 = vmatpush1.msra.mxu0 0.0
    %2229 = vmatprep.subr.mxu0 0.0
    %2230 = vmatpush1.msra.mxu0 0.0
    %2231 = vmatprep.subr.mxu0 0.0
    %2232 = vmatpush1.msra.mxu0 0.0
    %2233 = vmatprep.subr.mxu0 0.0
    %2234 = vmatpush1.msra.mxu0 0.0
    %2235 = vmatprep.subr.mxu0 0.0
    %2236 = vmatpush1.msra.mxu0 0.0
    %2237 = vmatprep.subr.mxu0 0.0
    %2238 = vmatpush1.msra.mxu0 0.0
    %2239 = vmatprep.subr.mxu0 0.0
    %2240 = vmatpush1.msra.mxu0 0.0
    %2241 = vmatprep.subr.mxu0 0.0
    %2242 = vmatpush1.msra.mxu0 0.0
    %2243 = vmatprep.subr.mxu0 0.0
    %2244 = vmatpush1.msra.mxu0 0.0
    %2245 = vmatprep.subr.mxu0 0.0
    %2246 = vmatpush1.msra.mxu0 0.0
    %2247 = vmatprep.subr.mxu0 0.0
    %2248 = vmatpush1.msra.mxu0 0.0
    %2249 = vmatprep.subr.mxu0 0.0
    %2250 = vmatpush1.msra.mxu0 0.0
    %2251 = vmatprep.subr.mxu0 0.0
    %2252 = vmatpush1.msra.mxu0 0.0
    %2253 = vmatprep.subr.mxu0 0.0
    %2254 = vmatpush1.msra.mxu0 0.0
    %2255 = vmatprep.subr.mxu0 0.0
    %2256 = vmatpush1.msra.mxu0 0.0
    %2257 = vmatprep.subr.mxu0 0.0
    %2258 = vmatpush1.msra.mxu0 0.0
    %2259 = vmatprep.subr.mxu0 0.0
    %2260 = vmatpush1.msra.mxu0 0.0
    %2261 = vmatprep.subr.mxu0 0.0
    %2262 = vmatpush1.msra.mxu0 0.0
    %2263 = vmatprep.subr.mxu0 0.0
    %2264 = vmatpush1.msra.mxu0 0.0
    %2265 = vmatprep.subr.mxu0 0.0
    %2266 = vmatpush1.msra.mxu0 0.0
    %2267 = vmatprep.subr.mxu0 0.0
    %2268 = vmatpush1.msra.mxu0 0.0
    %2269 = vmatprep.subr.mxu0 0.0
    %2270 = vmatpush1.msra.mxu0 0.0
    %2271 = vmatprep.mubr.f32.mxu0 0.0
    %2272 = vmatmul.mubr.f32.gmra.mrb[0].mxu0 %v1370
    %v2273 = vpop.f32.mrb[0].mxu0
    %v2274 = vadd.f32 0.0, %v2273
    %v2275 = vpop.f32.mrb[0].mxu0
    %2276 = vmatprep.mubr.f32.mxu0 0.0
    %2277 = vmatmul.mubr.f32.gmra.mrb[0].mxu0 %v1373
    %v2278 = vpop.f32.mrb[0].mxu0
    %v2279 = vadd.f32 0.0, %v2278
    %v2280 = vpop.f32.mrb[0].mxu0
    %2281 = vdwg.mxu0
    %v2282 = vld [vmem:[#allocation26] sm:$0xff]
    %v2283 = vld [vmem:[#allocation26 + $0x8] sm:$0xff]
    %v2284 = vld [vmem:[#allocation26 + $0x10] sm:$0xff]
    %v2286 = vsel %vm1036, %v2274, 0
    %v2289 = vsel %vm1036, %v2279, 0
    %2291 = vmatprep.subr.mxu0 0.0
    %2292 = vmatpush1.msra.mxu0 %v2282
    %2293 = vmatprep.subr.mxu0 0.0
    %2294 = vmatpush1.msra.mxu0 %v2283
    %2295 = vmatprep.subr.mxu0 0.0
    %2296 = vmatpush1.msra.mxu0 %v2284
    %2297 = vmatprep.subr.mxu0 0.0
    %2298 = vmatpush1.msra.mxu0 0.0
    %2299 = vmatprep.subr.mxu0 0.0
    %2300 = vmatpush1.msra.mxu0 0.0
    %2301 = vmatprep.subr.mxu0 0.0
    %2302 = vmatpush1.msra.mxu0 0.0
    %2303 = vmatprep.subr.mxu0 0.0
    %2304 = vmatpush1.msra.mxu0 0.0
    %2305 = vmatprep.subr.mxu0 0.0
    %2306 = vmatpush1.msra.mxu0 0.0
    %2307 = vmatprep.subr.mxu0 0.0
    %2308 = vmatpush1.msra.mxu0 0.0
    %2309 = vmatprep.subr.mxu0 0.0
    %2310 = vmatpush1.msra.mxu0 0.0
    %2311 = vmatprep.subr.mxu0 0.0
    %2312 = vmatpush1.msra.mxu0 0.0
    %2313 = vmatprep.subr.mxu0 0.0
    %2314 = vmatpush1.msra.mxu0 0.0
    %2315 = vmatprep.subr.mxu0 0.0
    %2316 = vmatpush1.msra.mxu0 0.0
    %2317 = vmatprep.subr.mxu0 0.0
    %2318 = vmatpush1.msra.mxu0 0.0
    %2319 = vmatprep.subr.mxu0 0.0
    %2320 = vmatpush1.msra.mxu0 0.0
    %2321 = vmatprep.subr.mxu0 0.0
    %2322 = vmatpush1.msra.mxu0 0.0
    %2323 = vmatprep.subr.mxu0 0.0
    %2324 = vmatpush1.msra.mxu0 0.0
    %2325 = vmatprep.subr.mxu0 0.0
    %2326 = vmatpush1.msra.mxu0 0.0
    %2327 = vmatprep.subr.mxu0 0.0
    %2328 = vmatpush1.msra.mxu0 0.0
    %2329 = vmatprep.subr.mxu0 0.0
    %2330 = vmatpush1.msra.mxu0 0.0
    %2331 = vmatprep.subr.mxu0 0.0
    %2332 = vmatpush1.msra.mxu0 0.0
    %2333 = vmatprep.subr.mxu0 0.0
    %2334 = vmatpush1.msra.mxu0 0.0
    %2335 = vmatprep.subr.mxu0 0.0
    %2336 = vmatpush1.msra.mxu0 0.0
    %2337 = vmatprep.subr.mxu0 0.0
    %2338 = vmatpush1.msra.mxu0 0.0
    %2339 = vmatprep.subr.mxu0 0.0
    %2340 = vmatpush1.msra.mxu0 0.0
    %2341 = vmatprep.subr.mxu0 0.0
    %2342 = vmatpush1.msra.mxu0 0.0
    %2343 = vmatprep.subr.mxu0 0.0
    %2344 = vmatpush1.msra.mxu0 0.0
    %2345 = vmatprep.subr.mxu0 0.0
    %2346 = vmatpush1.msra.mxu0 0.0
    %2347 = vmatprep.subr.mxu0 0.0
    %2348 = vmatpush1.msra.mxu0 0.0
    %2349 = vmatprep.subr.mxu0 0.0
    %2350 = vmatpush1.msra.mxu0 0.0
    %2351 = vmatprep.subr.mxu0 0.0
    %2352 = vmatpush1.msra.mxu0 0.0
    %2353 = vmatprep.subr.mxu0 0.0
    %2354 = vmatpush1.msra.mxu0 0.0
    %2355 = vmatprep.mubr.f32.mxu0 0.0
    %2356 = vmatmul.mubr.f32.gmra.mrb[0].mxu0 %v2286
    %v2357 = vpop.f32.mrb[0].mxu0
    %v2358 = vadd.f32 0.0, %v2357
    %v2359 = vpop.f32.mrb[0].mxu0
    %2360 = vmatprep.mubr.f32.mxu0 0.0
    %2361 = vmatmul.mubr.f32.gmra.mrb[0].mxu0 %v2289
    %v2362 = vpop.f32.mrb[0].mxu0
    %v2363 = vadd.f32 0.0, %v2362
    %v2364 = vpop.f32.mrb[0].mxu0
    %2365 = vdwg.mxu0
    %v2366 = vadd.f32 %v2199, %v2358
    %v2367 = vadd.f32 %v2204, %v2363
    %v2368 = vld [vmem:[#allocation28] sm:$0xff]
    %v2369 = vld [vmem:[#allocation28 + $0x8] sm:$0xf]
    %v2370 = vadd.f32 %v2366, %v2368
    %v2371 = vadd.f32 %v2367, %v2369
    %v2372 = vmax.f32 %v2370, 0.0
    %v2373 = vmax.f32 %v2371, 0.0
    %v2374 = vld [vmem:[#allocation31] sm:$0xff]
    %v2375 = vld [vmem:[#allocation31 + $0x8] sm:$0xff]
    %v2376 = vld [vmem:[#allocation31 + $0x10] sm:$0xff]
    %v2378 = vsel %vm1130, %v2373, 0
    %2380 = vmatprep.subr.mxu0 0.0
    %2381 = vmatpush1.msra.mxu0 %v2372
    %2382 = vmatprep.subr.mxu0 0.0
    %2383 = vmatpush1.msra.mxu0 %v2378
    %2384 = vmatprep.subr.mxu0 0.0
    %2385 = vmatpush1.msra.mxu0 0.0
    %2386 = vmatprep.subr.mxu0 0.0
    %2387 = vmatpush1.msra.mxu0 0.0
    %2388 = vmatprep.subr.mxu0 0.0
    %2389 = vmatpush1.msra.mxu0 0.0
    %2390 = vmatprep.subr.mxu0 0.0
    %2391 = vmatpush1.msra.mxu0 0.0
    %2392 = vmatprep.subr.mxu0 0.0
    %2393 = vmatpush1.msra.mxu0 0.0
    %2394 = vmatprep.subr.mxu0 0.0
    %2395 = vmatpush1.msra.mxu0 0.0
    %2396 = vmatprep.subr.mxu0 0.0
    %2397 = vmatpush1.msra.mxu0 0.0
    %2398 = vmatprep.subr.mxu0 0.0
    %2399 = vmatpush1.msra.mxu0 0.0
    %2400 = vmatprep.subr.mxu0 0.0
    %2401 = vmatpush1.msra.mxu0 0.0
    %2402 = vmatprep.subr.mxu0 0.0
    %2403 = vmatpush1.msra.mxu0 0.0
    %2404 = vmatprep.subr.mxu0 0.0
    %2405 = vmatpush1.msra.mxu0 0.0
    %2406 = vmatprep.subr.mxu0 0.0
    %2407 = vmatpush1.msra.mxu0 0.0
    %2408 = vmatprep.subr.mxu0 0.0
    %2409 = vmatpush1.msra.mxu0 0.0
    %2410 = vmatprep.subr.mxu0 0.0
    %2411 = vmatpush1.msra.mxu0 0.0
    %2412 = vmatprep.subr.mxu0 0.0
    %2413 = vmatpush1.msra.mxu0 0.0
    %2414 = vmatprep.subr.mxu0 0.0
    %2415 = vmatpush1.msra.mxu0 0.0
    %2416 = vmatprep.subr.mxu0 0.0
    %2417 = vmatpush1.msra.mxu0 0.0
    %2418 = vmatprep.subr.mxu0 0.0
    %2419 = vmatpush1.msra.mxu0 0.0
    %2420 = vmatprep.subr.mxu0 0.0
    %2421 = vmatpush1.msra.mxu0 0.0
    %2422 = vmatprep.subr.mxu0 0.0
    %2423 = vmatpush1.msra.mxu0 0.0
    %2424 = vmatprep.subr.mxu0 0.0
    %2425 = vmatpush1.msra.mxu0 0.0
    %2426 = vmatprep.subr.mxu0 0.0
    %2427 = vmatpush1.msra.mxu0 0.0
    %2428 = vmatprep.subr.mxu0 0.0
    %2429 = vmatpush1.msra.mxu0 0.0
    %2430 = vmatprep.subr.mxu0 0.0
    %2431 = vmatpush1.msra.mxu0 0.0
    %2432 = vmatprep.subr.mxu0 0.0
    %2433 = vmatpush1.msra.mxu0 0.0
    %2434 = vmatprep.subr.mxu0 0.0
    %2435 = vmatpush1.msra.mxu0 0.0
    %2436 = vmatprep.subr.mxu0 0.0
    %2437 = vmatpush1.msra.mxu0 0.0
    %2438 = vmatprep.subr.mxu0 0.0
    %2439 = vmatpush1.msra.mxu0 0.0
    %2440 = vmatprep.subr.mxu0 0.0
    %2441 = vmatpush1.msra.mxu0 0.0
    %2442 = vmatprep.subr.mxu0 0.0
    %2443 = vmatpush1.msra.mxu0 0.0
    %2444 = vmatprep.mubr.f32.mxu0 0.0
    %2445 = vmatmul.mubr.f32.gmra.mrb[0].mxu0 %v1125
    %v2446 = vpop.f32.mrb[0].mxu0
    %v2447 = vadd.f32 0.0, %v2446
    %v2448 = vpop.f32.mrb[0].mxu0
    %2449 = vmatprep.mubr.f32.mxu0 0.0
    %2450 = vmatmul.mubr.f32.gmra.mrb[0].mxu0 %v1128
    %v2451 = vpop.f32.mrb[0].mxu0
    %v2452 = vadd.f32 0.0, %v2451
    %v2453 = vpop.f32.mrb[0].mxu0
    %2454 = vdwg.mxu0
    %v2455 = vld [vmem:[#allocation29] sm:$0xff]
    %v2456 = vld [vmem:[#allocation29 + $0x8] sm:$0xff]
    %v2457 = vld [vmem:[#allocation29 + $0x10] sm:$0xff]
    %v2459 = vsel %vm1036, %v2447, 0
    %v2462 = vsel %vm1036, %v2452, 0
    %2464 = vmatprep.subr.mxu0 0.0
    %2465 = vmatpush1.msra.mxu0 %v2455
    %2466 = vmatprep.subr.mxu0 0.0
    %2467 = vmatpush1.msra.mxu0 %v2456
    %2468 = vmatprep.subr.mxu0 0.0
    %2469 = vmatpush1.msra.mxu0 %v2457
    %2470 = vmatprep.subr.mxu0 0.0
    %2471 = vmatpush1.msra.mxu0 0.0
    %2472 = vmatprep.subr.mxu0 0.0
    %2473 = vmatpush1.msra.mxu0 0.0
    %2474 = vmatprep.subr.mxu0 0.0
    %2475 = vmatpush1.msra.mxu0 0.0
    %2476 = vmatprep.subr.mxu0 0.0
    %2477 = vmatpush1.msra.mxu0 0.0
    %2478 = vmatprep.subr.mxu0 0.0
    %2479 = vmatpush1.msra.mxu0 0.0
    %2480 = vmatprep.subr.mxu0 0.0
    %2481 = vmatpush1.msra.mxu0 0.0
    %2482 = vmatprep.subr.mxu0 0.0
    %2483 = vmatpush1.msra.mxu0 0.0
    %2484 = vmatprep.subr.mxu0 0.0
    %2485 = vmatpush1.msra.mxu0 0.0
    %2486 = vmatprep.subr.mxu0 0.0
    %2487 = vmatpush1.msra.mxu0 0.0
    %2488 = vmatprep.subr.mxu0 0.0
    %2489 = vmatpush1.msra.mxu0 0.0
    %2490 = vmatprep.subr.mxu0 0.0
    %2491 = vmatpush1.msra.mxu0 0.0
    %2492 = vmatprep.subr.mxu0 0.0
    %2493 = vmatpush1.msra.mxu0 0.0
    %2494 = vmatprep.subr.mxu0 0.0
    %2495 = vmatpush1.msra.mxu0 0.0
    %2496 = vmatprep.subr.mxu0 0.0
    %2497 = vmatpush1.msra.mxu0 0.0
    %2498 = vmatprep.subr.mxu0 0.0
    %2499 = vmatpush1.msra.mxu0 0.0
    %2500 = vmatprep.subr.mxu0 0.0
    %2501 = vmatpush1.msra.mxu0 0.0
    %2502 = vmatprep.subr.mxu0 0.0
    %2503 = vmatpush1.msra.mxu0 0.0
    %2504 = vmatprep.subr.mxu0 0.0
    %2505 = vmatpush1.msra.mxu0 0.0
    %2506 = vmatprep.subr.mxu0 0.0
    %2507 = vmatpush1.msra.mxu0 0.0
    %2508 = vmatprep.subr.mxu0 0.0
    %2509 = vmatpush1.msra.mxu0 0.0
    %2510 = vmatprep.subr.mxu0 0.0
    %2511 = vmatpush1.msra.mxu0 0.0
    %2512 = vmatprep.subr.mxu0 0.0
    %2513 = vmatpush1.msra.mxu0 0.0
    %2514 = vmatprep.subr.mxu0 0.0
    %2515 = vmatpush1.msra.mxu0 0.0
    %2516 = vmatprep.subr.mxu0 0.0
    %2517 = vmatpush1.msra.mxu0 0.0
    %2518 = vmatprep.subr.mxu0 0.0
    %2519 = vmatpush1.msra.mxu0 0.0
    %2520 = vmatprep.subr.mxu0 0.0
    %2521 = vmatpush1.msra.mxu0 0.0
    %2522 = vmatprep.subr.mxu0 0.0
    %2523 = vmatpush1.msra.mxu0 0.0
    %2524 = vmatprep.subr.mxu0 0.0
    %2525 = vmatpush1.msra.mxu0 0.0
    %2526 = vmatprep.subr.mxu0 0.0
    %2527 = vmatpush1.msra.mxu0 0.0
    %2528 = vmatprep.mubr.f32.mxu0 0.0
    %2529 = vmatmul.mubr.f32.gmra.mrb[0].mxu0 %v2459
    %v2530 = vpop.f32.mrb[0].mxu0
    %v2531 = vadd.f32 0.0, %v2530
    %v2532 = vpop.f32.mrb[0].mxu0
    %2533 = vmatprep.mubr.f32.mxu0 0.0
    %2534 = vmatmul.mubr.f32.gmra.mrb[0].mxu0 %v2462
    %v2535 = vpop.f32.mrb[0].mxu0
    %v2536 = vadd.f32 0.0, %v2535
    %v2537 = vpop.f32.mrb[0].mxu0
    %2538 = vdwg.mxu0
    %v2540 = vsel %vm1036, %v2372, 0
    %v2542 = vsel %vm1036, %v2373, 0
    %2544 = vmatprep.subr.mxu0 0.0
    %2545 = vmatpush1.msra.mxu0 %v2374
    %2546 = vmatprep.subr.mxu0 0.0
    %2547 = vmatpush1.msra.mxu0 %v2375
    %2548 = vmatprep.subr.mxu0 0.0
    %2549 = vmatpush1.msra.mxu0 %v2376
    %2550 = vmatprep.subr.mxu0 0.0
    %2551 = vmatpush1.msra.mxu0 0.0
    %2552 = vmatprep.subr.mxu0 0.0
    %2553 = vmatpush1.msra.mxu0 0.0
    %2554 = vmatprep.subr.mxu0 0.0
    %2555 = vmatpush1.msra.mxu0 0.0
    %2556 = vmatprep.subr.mxu0 0.0
    %2557 = vmatpush1.msra.mxu0 0.0
    %2558 = vmatprep.subr.mxu0 0.0
    %2559 = vmatpush1.msra.mxu0 0.0
    %2560 = vmatprep.subr.mxu0 0.0
    %2561 = vmatpush1.msra.mxu0 0.0
    %2562 = vmatprep.subr.mxu0 0.0
    %2563 = vmatpush1.msra.mxu0 0.0
    %2564 = vmatprep.subr.mxu0 0.0
    %2565 = vmatpush1.msra.mxu0 0.0
    %2566 = vmatprep.subr.mxu0 0.0
    %2567 = vmatpush1.msra.mxu0 0.0
    %2568 = vmatprep.subr.mxu0 0.0
    %2569 = vmatpush1.msra.mxu0 0.0
    %2570 = vmatprep.subr.mxu0 0.0
    %2571 = vmatpush1.msra.mxu0 0.0
    %2572 = vmatprep.subr.mxu0 0.0
    %2573 = vmatpush1.msra.mxu0 0.0
    %2574 = vmatprep.subr.mxu0 0.0
    %2575 = vmatpush1.msra.mxu0 0.0
    %2576 = vmatprep.subr.mxu0 0.0
    %2577 = vmatpush1.msra.mxu0 0.0
    %2578 = vmatprep.subr.mxu0 0.0
    %2579 = vmatpush1.msra.mxu0 0.0
    %2580 = vmatprep.subr.mxu0 0.0
    %2581 = vmatpush1.msra.mxu0 0.0
    %2582 = vmatprep.subr.mxu0 0.0
    %2583 = vmatpush1.msra.mxu0 0.0
    %2584 = vmatprep.subr.mxu0 0.0
    %2585 = vmatpush1.msra.mxu0 0.0
    %2586 = vmatprep.subr.mxu0 0.0
    %2587 = vmatpush1.msra.mxu0 0.0
    %2588 = vmatprep.subr.mxu0 0.0
    %2589 = vmatpush1.msra.mxu0 0.0
    %2590 = vmatprep.subr.mxu0 0.0
    %2591 = vmatpush1.msra.mxu0 0.0
    %2592 = vmatprep.subr.mxu0 0.0
    %2593 = vmatpush1.msra.mxu0 0.0
    %2594 = vmatprep.subr.mxu0 0.0
    %2595 = vmatpush1.msra.mxu0 0.0
    %2596 = vmatprep.subr.mxu0 0.0
    %2597 = vmatpush1.msra.mxu0 0.0
    %2598 = vmatprep.subr.mxu0 0.0
    %2599 = vmatpush1.msra.mxu0 0.0
    %2600 = vmatprep.subr.mxu0 0.0
    %2601 = vmatpush1.msra.mxu0 0.0
    %2602 = vmatprep.subr.mxu0 0.0
    %2603 = vmatpush1.msra.mxu0 0.0
    %2604 = vmatprep.subr.mxu0 0.0
    %2605 = vmatpush1.msra.mxu0 0.0
    %2606 = vmatprep.subr.mxu0 0.0
    %2607 = vmatpush1.msra.mxu0 0.0
    %2608 = vmatprep.mubr.f32.mxu0 0.0
    %2609 = vmatmul.mubr.f32.gmra.mrb[0].mxu0 %v2540
    %v2610 = vpop.f32.mrb[0].mxu0
    %v2611 = vadd.f32 %v2531, %v2610
    %v2612 = vpop.f32.mrb[0].mxu0
    %2613 = vmatprep.mubr.f32.mxu0 0.0
    %2614 = vmatmul.mubr.f32.gmra.mrb[0].mxu0 %v2542
    %v2615 = vpop.f32.mrb[0].mxu0
    %v2616 = vadd.f32 %v2536, %v2615
    %v2617 = vpop.f32.mrb[0].mxu0
    %2618 = vdwg.mxu0
    %2619 = vmatprep.subr.mxu0 0.0
    %2620 = vmatpush1.msra.mxu0 %v2372
    %2621 = vmatprep.subr.mxu0 0.0
    %2622 = vmatpush1.msra.mxu0 %v2378
    %2623 = vmatprep.subr.mxu0 0.0
    %2624 = vmatpush1.msra.mxu0 0.0
    %2625 = vmatprep.subr.mxu0 0.0
    %2626 = vmatpush1.msra.mxu0 0.0
    %2627 = vmatprep.subr.mxu0 0.0
    %2628 = vmatpush1.msra.mxu0 0.0
    %2629 = vmatprep.subr.mxu0 0.0
    %2630 = vmatpush1.msra.mxu0 0.0
    %2631 = vmatprep.subr.mxu0 0.0
    %2632 = vmatpush1.msra.mxu0 0.0
    %2633 = vmatprep.subr.mxu0 0.0
    %2634 = vmatpush1.msra.mxu0 0.0
    %2635 = vmatprep.subr.mxu0 0.0
    %2636 = vmatpush1.msra.mxu0 0.0
    %2637 = vmatprep.subr.mxu0 0.0
    %2638 = vmatpush1.msra.mxu0 0.0
    %2639 = vmatprep.subr.mxu0 0.0
    %2640 = vmatpush1.msra.mxu0 0.0
    %2641 = vmatprep.subr.mxu0 0.0
    %2642 = vmatpush1.msra.mxu0 0.0
    %2643 = vmatprep.subr.mxu0 0.0
    %2644 = vmatpush1.msra.mxu0 0.0
    %2645 = vmatprep.subr.mxu0 0.0
    %2646 = vmatpush1.msra.mxu0 0.0
    %2647 = vmatprep.subr.mxu0 0.0
    %2648 = vmatpush1.msra.mxu0 0.0
    %2649 = vmatprep.subr.mxu0 0.0
    %2650 = vmatpush1.msra.mxu0 0.0
    %2651 = vmatprep.subr.mxu0 0.0
    %2652 = vmatpush1.msra.mxu0 0.0
    %2653 = vmatprep.subr.mxu0 0.0
    %2654 = vmatpush1.msra.mxu0 0.0
    %2655 = vmatprep.subr.mxu0 0.0
    %2656 = vmatpush1.msra.mxu0 0.0
    %2657 = vmatprep.subr.mxu0 0.0
    %2658 = vmatpush1.msra.mxu0 0.0
    %2659 = vmatprep.subr.mxu0 0.0
    %2660 = vmatpush1.msra.mxu0 0.0
    %2661 = vmatprep.subr.mxu0 0.0
    %2662 = vmatpush1.msra.mxu0 0.0
    %2663 = vmatprep.subr.mxu0 0.0
    %2664 = vmatpush1.msra.mxu0 0.0
    %2665 = vmatprep.subr.mxu0 0.0
    %2666 = vmatpush1.msra.mxu0 0.0
    %2667 = vmatprep.subr.mxu0 0.0
    %2668 = vmatpush1.msra.mxu0 0.0
    %2669 = vmatprep.subr.mxu0 0.0
    %2670 = vmatpush1.msra.mxu0 0.0
    %2671 = vmatprep.subr.mxu0 0.0
    %2672 = vmatpush1.msra.mxu0 0.0
    %2673 = vmatprep.subr.mxu0 0.0
    %2674 = vmatpush1.msra.mxu0 0.0
    %2675 = vmatprep.subr.mxu0 0.0
    %2676 = vmatpush1.msra.mxu0 0.0
    %2677 = vmatprep.subr.mxu0 0.0
    %2678 = vmatpush1.msra.mxu0 0.0
    %2679 = vmatprep.subr.mxu0 0.0
    %2680 = vmatpush1.msra.mxu0 0.0
    %2681 = vmatprep.subr.mxu0 0.0
    %2682 = vmatpush1.msra.mxu0 0.0
    %2683 = vmatprep.mubr.f32.mxu0 0.0
    %2684 = vmatmul.mubr.f32.gmra.mrb[0].mxu0 %v1370
    %v2685 = vpop.f32.mrb[0].mxu0
    %v2686 = vadd.f32 0.0, %v2685
    %v2687 = vpop.f32.mrb[0].mxu0
    %2688 = vmatprep.mubr.f32.mxu0 0.0
    %2689 = vmatmul.mubr.f32.gmra.mrb[0].mxu0 %v1373
    %v2690 = vpop.f32.mrb[0].mxu0
    %v2691 = vadd.f32 0.0, %v2690
    %v2692 = vpop.f32.mrb[0].mxu0
    %2693 = vdwg.mxu0
    %v2694 = vld [vmem:[#allocation32] sm:$0xff]
    %v2695 = vld [vmem:[#allocation32 + $0x8] sm:$0xff]
    %v2696 = vld [vmem:[#allocation32 + $0x10] sm:$0xff]
    %v2698 = vsel %vm1036, %v2686, 0
    %v2701 = vsel %vm1036, %v2691, 0
    %2703 = vmatprep.subr.mxu0 0.0
    %2704 = vmatpush1.msra.mxu0 %v2694
    %2705 = vmatprep.subr.mxu0 0.0
    %2706 = vmatpush1.msra.mxu0 %v2695
    %2707 = vmatprep.subr.mxu0 0.0
    %2708 = vmatpush1.msra.mxu0 %v2696
    %2709 = vmatprep.subr.mxu0 0.0
    %2710 = vmatpush1.msra.mxu0 0.0
    %2711 = vmatprep.subr.mxu0 0.0
    %2712 = vmatpush1.msra.mxu0 0.0
    %2713 = vmatprep.subr.mxu0 0.0
    %2714 = vmatpush1.msra.mxu0 0.0
    %2715 = vmatprep.subr.mxu0 0.0
    %2716 = vmatpush1.msra.mxu0 0.0
    %2717 = vmatprep.subr.mxu0 0.0
    %2718 = vmatpush1.msra.mxu0 0.0
    %2719 = vmatprep.subr.mxu0 0.0
    %2720 = vmatpush1.msra.mxu0 0.0
    %2721 = vmatprep.subr.mxu0 0.0
    %2722 = vmatpush1.msra.mxu0 0.0
    %2723 = vmatprep.subr.mxu0 0.0
    %2724 = vmatpush1.msra.mxu0 0.0
    %2725 = vmatprep.subr.mxu0 0.0
    %2726 = vmatpush1.msra.mxu0 0.0
    %2727 = vmatprep.subr.mxu0 0.0
    %2728 = vmatpush1.msra.mxu0 0.0
    %2729 = vmatprep.subr.mxu0 0.0
    %2730 = vmatpush1.msra.mxu0 0.0
    %2731 = vmatprep.subr.mxu0 0.0
    %2732 = vmatpush1.msra.mxu0 0.0
    %2733 = vmatprep.subr.mxu0 0.0
    %2734 = vmatpush1.msra.mxu0 0.0
    %2735 = vmatprep.subr.mxu0 0.0
    %2736 = vmatpush1.msra.mxu0 0.0
    %2737 = vmatprep.subr.mxu0 0.0
    %2738 = vmatpush1.msra.mxu0 0.0
    %2739 = vmatprep.subr.mxu0 0.0
    %2740 = vmatpush1.msra.mxu0 0.0
    %2741 = vmatprep.subr.mxu0 0.0
    %2742 = vmatpush1.msra.mxu0 0.0
    %2743 = vmatprep.subr.mxu0 0.0
    %2744 = vmatpush1.msra.mxu0 0.0
    %2745 = vmatprep.subr.mxu0 0.0
    %2746 = vmatpush1.msra.mxu0 0.0
    %2747 = vmatprep.subr.mxu0 0.0
    %2748 = vmatpush1.msra.mxu0 0.0
    %2749 = vmatprep.subr.mxu0 0.0
    %2750 = vmatpush1.msra.mxu0 0.0
    %2751 = vmatprep.subr.mxu0 0.0
    %2752 = vmatpush1.msra.mxu0 0.0
    %2753 = vmatprep.subr.mxu0 0.0
    %2754 = vmatpush1.msra.mxu0 0.0
    %2755 = vmatprep.subr.mxu0 0.0
    %2756 = vmatpush1.msra.mxu0 0.0
    %2757 = vmatprep.subr.mxu0 0.0
    %2758 = vmatpush1.msra.mxu0 0.0
    %2759 = vmatprep.subr.mxu0 0.0
    %2760 = vmatpush1.msra.mxu0 0.0
    %2761 = vmatprep.subr.mxu0 0.0
    %2762 = vmatpush1.msra.mxu0 0.0
    %2763 = vmatprep.subr.mxu0 0.0
    %2764 = vmatpush1.msra.mxu0 0.0
    %2765 = vmatprep.subr.mxu0 0.0
    %2766 = vmatpush1.msra.mxu0 0.0
    %2767 = vmatprep.mubr.f32.mxu0 0.0
    %2768 = vmatmul.mubr.f32.gmra.mrb[0].mxu0 %v2698
    %v2769 = vpop.f32.mrb[0].mxu0
    %v2770 = vadd.f32 0.0, %v2769
    %v2771 = vpop.f32.mrb[0].mxu0
    %2772 = vmatprep.mubr.f32.mxu0 0.0
    %2773 = vmatmul.mubr.f32.gmra.mrb[0].mxu0 %v2701
    %v2774 = vpop.f32.mrb[0].mxu0
    %v2775 = vadd.f32 0.0, %v2774
    %v2776 = vpop.f32.mrb[0].mxu0
    %2777 = vdwg.mxu0
    %v2778 = vadd.f32 %v2611, %v2770
    %v2779 = vadd.f32 %v2616, %v2775
    %v2780 = vld [vmem:[#allocation34] sm:$0xff]
    %v2781 = vld [vmem:[#allocation34 + $0x8] sm:$0xf]
    %v2782 = vadd.f32 %v2778, %v2780
    %v2783 = vadd.f32 %v2779, %v2781
    %v2784 = vmax.f32 %v2782, 0.0
    %v2785 = vmax.f32 %v2783, 0.0
    %v2786 = vadd.f32 %v2784, %v1960
    %v2787 = vadd.f32 %v2785, %v1961
    %vm2788 = vcmp.ge.f32.partialorder %v2786, 0.0
    %vm2789 = vcmp.ge.f32.partialorder %v2787, 0.0
    %v2790 = vmul.f32 %v2786, 0.01
    %v2791 = vmul.f32 %v2787, 0.01
    %v2792 = vsel %vm2788, %v2786, %v2790
    %v2793 = vsel %vm2789, %v2787, %v2791
    %v2794 = vld [vmem:[%s57] sm:$0xff]
    %v2795 = vld [vmem:[%s57 + $0x8] sm:$0xff]
    %v2796 = vld [vmem:[%s57 + $0x10] sm:$0xf]
    %v2797 = vld [vmem:[#allocation40] sm:$0xff]
    %v2798 = vld [vmem:[#allocation40 + $0x8] sm:$0xff]
    %v2799 = vld [vmem:[#allocation40 + $0x10] sm:$0xff]
    %v2801 = vsel %vm1036, %v2792, 0
    %v2804 = vsel %vm1036, %v2793, 0
    %2806 = vmatprep.subr.mxu0 0.0
    %2807 = vmatpush1.msra.mxu0 %v2797
    %2808 = vmatprep.subr.mxu0 0.0
    %2809 = vmatpush1.msra.mxu0 %v2798
    %2810 = vmatprep.subr.mxu0 0.0
    %2811 = vmatpush1.msra.mxu0 %v2799
    %2812 = vmatprep.subr.mxu0 0.0
    %2813 = vmatpush1.msra.mxu0 0.0
    %2814 = vmatprep.subr.mxu0 0.0
    %2815 = vmatpush1.msra.mxu0 0.0
    %2816 = vmatprep.subr.mxu0 0.0
    %2817 = vmatpush1.msra.mxu0 0.0
    %2818 = vmatprep.subr.mxu0 0.0
    %2819 = vmatpush1.msra.mxu0 0.0
    %2820 = vmatprep.subr.mxu0 0.0
    %2821 = vmatpush1.msra.mxu0 0.0
    %2822 = vmatprep.subr.mxu0 0.0
    %2823 = vmatpush1.msra.mxu0 0.0
    %2824 = vmatprep.subr.mxu0 0.0
    %2825 = vmatpush1.msra.mxu0 0.0
    %2826 = vmatprep.subr.mxu0 0.0
    %2827 = vmatpush1.msra.mxu0 0.0
    %2828 = vmatprep.subr.mxu0 0.0
    %2829 = vmatpush1.msra.mxu0 0.0
    %2830 = vmatprep.subr.mxu0 0.0
    %2831 = vmatpush1.msra.mxu0 0.0
    %2832 = vmatprep.subr.mxu0 0.0
    %2833 = vmatpush1.msra.mxu0 0.0
    %2834 = vmatprep.subr.mxu0 0.0
    %2835 = vmatpush1.msra.mxu0 0.0
    %2836 = vmatprep.subr.mxu0 0.0
    %2837 = vmatpush1.msra.mxu0 0.0
    %2838 = vmatprep.subr.mxu0 0.0
    %2839 = vmatpush1.msra.mxu0 0.0
    %2840 = vmatprep.subr.mxu0 0.0
    %2841 = vmatpush1.msra.mxu0 0.0
    %2842 = vmatprep.subr.mxu0 0.0
    %2843 = vmatpush1.msra.mxu0 0.0
    %2844 = vmatprep.subr.mxu0 0.0
    %2845 = vmatpush1.msra.mxu0 0.0
    %2846 = vmatprep.subr.mxu0 0.0
    %2847 = vmatpush1.msra.mxu0 0.0
    %2848 = vmatprep.subr.mxu0 0.0
    %2849 = vmatpush1.msra.mxu0 0.0
    %2850 = vmatprep.subr.mxu0 0.0
    %2851 = vmatpush1.msra.mxu0 0.0
    %2852 = vmatprep.subr.mxu0 0.0
    %2853 = vmatpush1.msra.mxu0 0.0
    %2854 = vmatprep.subr.mxu0 0.0
    %2855 = vmatpush1.msra.mxu0 0.0
    %2856 = vmatprep.subr.mxu0 0.0
    %2857 = vmatpush1.msra.mxu0 0.0
    %2858 = vmatprep.subr.mxu0 0.0
    %2859 = vmatpush1.msra.mxu0 0.0
    %2860 = vmatprep.subr.mxu0 0.0
    %2861 = vmatpush1.msra.mxu0 0.0
    %2862 = vmatprep.subr.mxu0 0.0
    %2863 = vmatpush1.msra.mxu0 0.0
    %2864 = vmatprep.subr.mxu0 0.0
    %2865 = vmatpush1.msra.mxu0 0.0
    %2866 = vmatprep.subr.mxu0 0.0
    %2867 = vmatpush1.msra.mxu0 0.0
    %2868 = vmatprep.subr.mxu0 0.0
    %2869 = vmatpush1.msra.mxu0 0.0
    %2870 = vmatprep.mubr.f32.mxu0 0.0
    %2871 = vmatmul.mubr.f32.gmra.mrb[0].mxu0 %v2801
    %v2872 = vpop.f32.mrb[0].mxu0
    %v2873 = vadd.f32 0.0, %v2872
    %v2874 = vpop.f32.mrb[0].mxu0
    %2875 = vmatprep.mubr.f32.mxu0 0.0
    %2876 = vmatmul.mubr.f32.gmra.mrb[0].mxu0 %v2804
    %v2877 = vpop.f32.mrb[0].mxu0
    %v2878 = vadd.f32 0.0, %v2877
    %v2879 = vpop.f32.mrb[0].mxu0
    %2880 = vdwg.mxu0
    %v2881 = vld [vmem:[#allocation41] sm:$0xff]
    %v2882 = vld [vmem:[#allocation41 + $0x8] sm:$0xff]
    %v2883 = vld [vmem:[#allocation41 + $0x10] sm:$0xf]
    %v2885 = vsel %vm1123, %v2794, 0
    %v2888 = vsel %vm1123, %v2795, 0
    %v2891 = vsel %vm1123, %v2796, 0
    %v2894 = vsel %vm1130, %v2878, 0
    %2896 = vmatprep.subr.mxu0 0.0
    %2897 = vmatpush1.msra.mxu0 %v2873
    %2898 = vmatprep.subr.mxu0 0.0
    %2899 = vmatpush1.msra.mxu0 %v2894
    %2900 = vmatprep.subr.mxu0 0.0
    %2901 = vmatpush1.msra.mxu0 0.0
    %2902 = vmatprep.subr.mxu0 0.0
    %2903 = vmatpush1.msra.mxu0 0.0
    %2904 = vmatprep.subr.mxu0 0.0
    %2905 = vmatpush1.msra.mxu0 0.0
    %2906 = vmatprep.subr.mxu0 0.0
    %2907 = vmatpush1.msra.mxu0 0.0
    %2908 = vmatprep.subr.mxu0 0.0
    %2909 = vmatpush1.msra.mxu0 0.0
    %2910 = vmatprep.subr.mxu0 0.0
    %2911 = vmatpush1.msra.mxu0 0.0
    %2912 = vmatprep.subr.mxu0 0.0
    %2913 = vmatpush1.msra.mxu0 0.0
    %2914 = vmatprep.subr.mxu0 0.0
    %2915 = vmatpush1.msra.mxu0 0.0
    %2916 = vmatprep.subr.mxu0 0.0
    %2917 = vmatpush1.msra.mxu0 0.0
    %2918 = vmatprep.subr.mxu0 0.0
    %2919 = vmatpush1.msra.mxu0 0.0
    %2920 = vmatprep.subr.mxu0 0.0
    %2921 = vmatpush1.msra.mxu0 0.0
    %2922 = vmatprep.subr.mxu0 0.0
    %2923 = vmatpush1.msra.mxu0 0.0
    %2924 = vmatprep.subr.mxu0 0.0
    %2925 = vmatpush1.msra.mxu0 0.0
    %2926 = vmatprep.subr.mxu0 0.0
    %2927 = vmatpush1.msra.mxu0 0.0
    %2928 = vmatprep.subr.mxu0 0.0
    %2929 = vmatpush1.msra.mxu0 0.0
    %2930 = vmatprep.subr.mxu0 0.0
    %2931 = vmatpush1.msra.mxu0 0.0
    %2932 = vmatprep.subr.mxu0 0.0
    %2933 = vmatpush1.msra.mxu0 0.0
    %2934 = vmatprep.subr.mxu0 0.0
    %2935 = vmatpush1.msra.mxu0 0.0
    %2936 = vmatprep.subr.mxu0 0.0
    %2937 = vmatpush1.msra.mxu0 0.0
    %2938 = vmatprep.subr.mxu0 0.0
    %2939 = vmatpush1.msra.mxu0 0.0
    %2940 = vmatprep.subr.mxu0 0.0
    %2941 = vmatpush1.msra.mxu0 0.0
    %2942 = vmatprep.subr.mxu0 0.0
    %2943 = vmatpush1.msra.mxu0 0.0
    %2944 = vmatprep.subr.mxu0 0.0
    %2945 = vmatpush1.msra.mxu0 0.0
    %2946 = vmatprep.subr.mxu0 0.0
    %2947 = vmatpush1.msra.mxu0 0.0
    %2948 = vmatprep.subr.mxu0 0.0
    %2949 = vmatpush1.msra.mxu0 0.0
    %2950 = vmatprep.subr.mxu0 0.0
    %2951 = vmatpush1.msra.mxu0 0.0
    %2952 = vmatprep.subr.mxu0 0.0
    %2953 = vmatpush1.msra.mxu0 0.0
    %2954 = vmatprep.subr.mxu0 0.0
    %2955 = vmatpush1.msra.mxu0 0.0
    %2956 = vmatprep.subr.mxu0 0.0
    %2957 = vmatpush1.msra.mxu0 0.0
    %2958 = vmatprep.subr.mxu0 0.0
    %2959 = vmatpush1.msra.mxu0 0.0
    %2960 = vmatprep.mubr.f32.mxu0 0.0
    %2961 = vmatmul.mubr.f32.gmra.mrb[0].mxu0 %v2885
    %v2962 = vpop.f32.mrb[0].mxu0
    %v2963 = vadd.f32 %v2881, %v2962
    %v2964 = vpop.f32.mrb[0].mxu0
    %2965 = vmatprep.mubr.f32.mxu0 0.0
    %2966 = vmatmul.mubr.f32.gmra.mrb[0].mxu0 %v2888
    %v2967 = vpop.f32.mrb[0].mxu0
    %v2968 = vadd.f32 %v2882, %v2967
    %v2969 = vpop.f32.mrb[0].mxu0
    %2970 = vmatprep.mubr.f32.mxu0 0.0
    %2971 = vmatmul.mubr.f32.gmra.mrb[0].mxu0 %v2891
    %v2972 = vpop.f32.mrb[0].mxu0
    %v2973 = vadd.f32 %v2883, %v2972
    %v2974 = vpop.f32.mrb[0].mxu0
    %2975 = vdwg.mxu0
    %v2976 = vld [vmem:[%s45] sm:$0xff]
    %v2977 = vld [vmem:[%s45 + $0x8] sm:$0xff]
    %v2978 = vld [vmem:[%s45 + $0x10] sm:$0xf]
    %v2979 = vld [vmem:[#allocation35] sm:$0xff]
    %v2980 = vld [vmem:[#allocation35 + $0x8] sm:$0xff]
    %v2981 = vld [vmem:[#allocation35 + $0x10] sm:$0xff]
    %2982 = vmatprep.subr.mxu0 0.0
    %2983 = vmatpush1.msra.mxu0 %v2979
    %2984 = vmatprep.subr.mxu0 0.0
    %2985 = vmatpush1.msra.mxu0 %v2980
    %2986 = vmatprep.subr.mxu0 0.0
    %2987 = vmatpush1.msra.mxu0 %v2981
    %2988 = vmatprep.subr.mxu0 0.0
    %2989 = vmatpush1.msra.mxu0 0.0
    %2990 = vmatprep.subr.mxu0 0.0
    %2991 = vmatpush1.msra.mxu0 0.0
    %2992 = vmatprep.subr.mxu0 0.0
    %2993 = vmatpush1.msra.mxu0 0.0
    %2994 = vmatprep.subr.mxu0 0.0
    %2995 = vmatpush1.msra.mxu0 0.0
    %2996 = vmatprep.subr.mxu0 0.0
    %2997 = vmatpush1.msra.mxu0 0.0
    %2998 = vmatprep.subr.mxu0 0.0
    %2999 = vmatpush1.msra.mxu0 0.0
    %3000 = vmatprep.subr.mxu0 0.0
    %3001 = vmatpush1.msra.mxu0 0.0
    %3002 = vmatprep.subr.mxu0 0.0
    %3003 = vmatpush1.msra.mxu0 0.0
    %3004 = vmatprep.subr.mxu0 0.0
    %3005 = vmatpush1.msra.mxu0 0.0
    %3006 = vmatprep.subr.mxu0 0.0
    %3007 = vmatpush1.msra.mxu0 0.0
    %3008 = vmatprep.subr.mxu0 0.0
    %3009 = vmatpush1.msra.mxu0 0.0
    %3010 = vmatprep.subr.mxu0 0.0
    %3011 = vmatpush1.msra.mxu0 0.0
    %3012 = vmatprep.subr.mxu0 0.0
    %3013 = vmatpush1.msra.mxu0 0.0
    %3014 = vmatprep.subr.mxu0 0.0
    %3015 = vmatpush1.msra.mxu0 0.0
    %3016 = vmatprep.subr.mxu0 0.0
    %3017 = vmatpush1.msra.mxu0 0.0
    %3018 = vmatprep.subr.mxu0 0.0
    %3019 = vmatpush1.msra.mxu0 0.0
    %3020 = vmatprep.subr.mxu0 0.0
    %3021 = vmatpush1.msra.mxu0 0.0
    %3022 = vmatprep.subr.mxu0 0.0
    %3023 = vmatpush1.msra.mxu0 0.0
    %3024 = vmatprep.subr.mxu0 0.0
    %3025 = vmatpush1.msra.mxu0 0.0
    %3026 = vmatprep.subr.mxu0 0.0
    %3027 = vmatpush1.msra.mxu0 0.0
    %3028 = vmatprep.subr.mxu0 0.0
    %3029 = vmatpush1.msra.mxu0 0.0
    %3030 = vmatprep.subr.mxu0 0.0
    %3031 = vmatpush1.msra.mxu0 0.0
    %3032 = vmatprep.subr.mxu0 0.0
    %3033 = vmatpush1.msra.mxu0 0.0
    %3034 = vmatprep.subr.mxu0 0.0
    %3035 = vmatpush1.msra.mxu0 0.0
    %3036 = vmatprep.subr.mxu0 0.0
    %3037 = vmatpush1.msra.mxu0 0.0
    %3038 = vmatprep.subr.mxu0 0.0
    %3039 = vmatpush1.msra.mxu0 0.0
    %3040 = vmatprep.subr.mxu0 0.0
    %3041 = vmatpush1.msra.mxu0 0.0
    %3042 = vmatprep.subr.mxu0 0.0
    %3043 = vmatpush1.msra.mxu0 0.0
    %3044 = vmatprep.subr.mxu0 0.0
    %3045 = vmatpush1.msra.mxu0 0.0
    %3046 = vmatprep.mubr.f32.mxu0 0.0
    %3047 = vmatmul.mubr.f32.gmra.mrb[0].mxu0 %v2801
    %v3048 = vpop.f32.mrb[0].mxu0
    %v3049 = vadd.f32 0.0, %v3048
    %v3050 = vpop.f32.mrb[0].mxu0
    %3051 = vmatprep.mubr.f32.mxu0 0.0
    %3052 = vmatmul.mubr.f32.gmra.mrb[0].mxu0 %v2804
    %v3053 = vpop.f32.mrb[0].mxu0
    %v3054 = vadd.f32 0.0, %v3053
    %v3055 = vpop.f32.mrb[0].mxu0
    %3056 = vdwg.mxu0
    %v3057 = vld [vmem:[%s49] sm:$0xff]
    %v3058 = vld [vmem:[%s49 + $0x8] sm:$0xff]
    %v3059 = vld [vmem:[%s49 + $0x10] sm:$0xf]
    %v3060 = vld [vmem:[#allocation37] sm:$0xff]
    %v3061 = vld [vmem:[#allocation37 + $0x8] sm:$0xff]
    %v3062 = vld [vmem:[#allocation37 + $0x10] sm:$0xff]
    %3063 = vmatprep.subr.mxu0 0.0
    %3064 = vmatpush1.msra.mxu0 %v3060
    %3065 = vmatprep.subr.mxu0 0.0
    %3066 = vmatpush1.msra.mxu0 %v3061
    %3067 = vmatprep.subr.mxu0 0.0
    %3068 = vmatpush1.msra.mxu0 %v3062
    %3069 = vmatprep.subr.mxu0 0.0
    %3070 = vmatpush1.msra.mxu0 0.0
    %3071 = vmatprep.subr.mxu0 0.0
    %3072 = vmatpush1.msra.mxu0 0.0
    %3073 = vmatprep.subr.mxu0 0.0
    %3074 = vmatpush1.msra.mxu0 0.0
    %3075 = vmatprep.subr.mxu0 0.0
    %3076 = vmatpush1.msra.mxu0 0.0
    %3077 = vmatprep.subr.mxu0 0.0
    %3078 = vmatpush1.msra.mxu0 0.0
    %3079 = vmatprep.subr.mxu0 0.0
    %3080 = vmatpush1.msra.mxu0 0.0
    %3081 = vmatprep.subr.mxu0 0.0
    %3082 = vmatpush1.msra.mxu0 0.0
    %3083 = vmatprep.subr.mxu0 0.0
    %3084 = vmatpush1.msra.mxu0 0.0
    %3085 = vmatprep.subr.mxu0 0.0
    %3086 = vmatpush1.msra.mxu0 0.0
    %3087 = vmatprep.subr.mxu0 0.0
    %3088 = vmatpush1.msra.mxu0 0.0
    %3089 = vmatprep.subr.mxu0 0.0
    %3090 = vmatpush1.msra.mxu0 0.0
    %3091 = vmatprep.subr.mxu0 0.0
    %3092 = vmatpush1.msra.mxu0 0.0
    %3093 = vmatprep.subr.mxu0 0.0
    %3094 = vmatpush1.msra.mxu0 0.0
    %3095 = vmatprep.subr.mxu0 0.0
    %3096 = vmatpush1.msra.mxu0 0.0
    %3097 = vmatprep.subr.mxu0 0.0
    %3098 = vmatpush1.msra.mxu0 0.0
    %3099 = vmatprep.subr.mxu0 0.0
    %3100 = vmatpush1.msra.mxu0 0.0
    %3101 = vmatprep.subr.mxu0 0.0
    %3102 = vmatpush1.msra.mxu0 0.0
    %3103 = vmatprep.subr.mxu0 0.0
    %3104 = vmatpush1.msra.mxu0 0.0
    %3105 = vmatprep.subr.mxu0 0.0
    %3106 = vmatpush1.msra.mxu0 0.0
    %3107 = vmatprep.subr.mxu0 0.0
    %3108 = vmatpush1.msra.mxu0 0.0
    %3109 = vmatprep.subr.mxu0 0.0
    %3110 = vmatpush1.msra.mxu0 0.0
    %3111 = vmatprep.subr.mxu0 0.0
    %3112 = vmatpush1.msra.mxu0 0.0
    %3113 = vmatprep.subr.mxu0 0.0
    %3114 = vmatpush1.msra.mxu0 0.0
    %3115 = vmatprep.subr.mxu0 0.0
    %3116 = vmatpush1.msra.mxu0 0.0
    %3117 = vmatprep.subr.mxu0 0.0
    %3118 = vmatpush1.msra.mxu0 0.0
    %3119 = vmatprep.subr.mxu0 0.0
    %3120 = vmatpush1.msra.mxu0 0.0
    %3121 = vmatprep.subr.mxu0 0.0
    %3122 = vmatpush1.msra.mxu0 0.0
    %3123 = vmatprep.subr.mxu0 0.0
    %3124 = vmatpush1.msra.mxu0 0.0
    %3125 = vmatprep.subr.mxu0 0.0
    %3126 = vmatpush1.msra.mxu0 0.0
    %3127 = vmatprep.mubr.f32.mxu0 0.0
    %3128 = vmatmul.mubr.f32.gmra.mrb[0].mxu0 %v2801
    %v3129 = vpop.f32.mrb[0].mxu0
    %v3130 = vadd.f32 0.0, %v3129
    %v3131 = vpop.f32.mrb[0].mxu0
    %3132 = vmatprep.mubr.f32.mxu0 0.0
    %3133 = vmatmul.mubr.f32.gmra.mrb[0].mxu0 %v2804
    %v3134 = vpop.f32.mrb[0].mxu0
    %v3135 = vadd.f32 0.0, %v3134
    %v3136 = vpop.f32.mrb[0].mxu0
    %3137 = vdwg.mxu0
    %v3139 = vsel %vm1123, %v3057, 0
    %v3142 = vsel %vm1123, %v3058, 0
    %v3145 = vsel %vm1123, %v3059, 0
    %v3148 = vsel %vm1130, %v3135, 0
    %3150 = vmatprep.subr.mxu0 0.0
    %3151 = vmatpush1.msra.mxu0 %v3130
    %3152 = vmatprep.subr.mxu0 0.0
    %3153 = vmatpush1.msra.mxu0 %v3148
    %3154 = vmatprep.subr.mxu0 0.0
    %3155 = vmatpush1.msra.mxu0 0.0
    %3156 = vmatprep.subr.mxu0 0.0
    %3157 = vmatpush1.msra.mxu0 0.0
    %3158 = vmatprep.subr.mxu0 0.0
    %3159 = vmatpush1.msra.mxu0 0.0
    %3160 = vmatprep.subr.mxu0 0.0
    %3161 = vmatpush1.msra.mxu0 0.0
    %3162 = vmatprep.subr.mxu0 0.0
    %3163 = vmatpush1.msra.mxu0 0.0
    %3164 = vmatprep.subr.mxu0 0.0
    %3165 = vmatpush1.msra.mxu0 0.0
    %3166 = vmatprep.subr.mxu0 0.0
    %3167 = vmatpush1.msra.mxu0 0.0
    %3168 = vmatprep.subr.mxu0 0.0
    %3169 = vmatpush1.msra.mxu0 0.0
    %3170 = vmatprep.subr.mxu0 0.0
    %3171 = vmatpush1.msra.mxu0 0.0
    %3172 = vmatprep.subr.mxu0 0.0
    %3173 = vmatpush1.msra.mxu0 0.0
    %3174 = vmatprep.subr.mxu0 0.0
    %3175 = vmatpush1.msra.mxu0 0.0
    %3176 = vmatprep.subr.mxu0 0.0
    %3177 = vmatpush1.msra.mxu0 0.0
    %3178 = vmatprep.subr.mxu0 0.0
    %3179 = vmatpush1.msra.mxu0 0.0
    %3180 = vmatprep.subr.mxu0 0.0
    %3181 = vmatpush1.msra.mxu0 0.0
    %3182 = vmatprep.subr.mxu0 0.0
    %3183 = vmatpush1.msra.mxu0 0.0
    %3184 = vmatprep.subr.mxu0 0.0
    %3185 = vmatpush1.msra.mxu0 0.0
    %3186 = vmatprep.subr.mxu0 0.0
    %3187 = vmatpush1.msra.mxu0 0.0
    %3188 = vmatprep.subr.mxu0 0.0
    %3189 = vmatpush1.msra.mxu0 0.0
    %3190 = vmatprep.subr.mxu0 0.0
    %3191 = vmatpush1.msra.mxu0 0.0
    %3192 = vmatprep.subr.mxu0 0.0
    %3193 = vmatpush1.msra.mxu0 0.0
    %3194 = vmatprep.subr.mxu0 0.0
    %3195 = vmatpush1.msra.mxu0 0.0
    %3196 = vmatprep.subr.mxu0 0.0
    %3197 = vmatpush1.msra.mxu0 0.0
    %3198 = vmatprep.subr.mxu0 0.0
    %3199 = vmatpush1.msra.mxu0 0.0
    %3200 = vmatprep.subr.mxu0 0.0
    %3201 = vmatpush1.msra.mxu0 0.0
    %3202 = vmatprep.subr.mxu0 0.0
    %3203 = vmatpush1.msra.mxu0 0.0
    %3204 = vmatprep.subr.mxu0 0.0
    %3205 = vmatpush1.msra.mxu0 0.0
    %3206 = vmatprep.subr.mxu0 0.0
    %3207 = vmatpush1.msra.mxu0 0.0
    %3208 = vmatprep.subr.mxu0 0.0
    %3209 = vmatpush1.msra.mxu0 0.0
    %3210 = vmatprep.subr.mxu0 0.0
    %3211 = vmatpush1.msra.mxu0 0.0
    %3212 = vmatprep.subr.mxu0 0.0
    %3213 = vmatpush1.msra.mxu0 0.0
    %3214 = vmatprep.mubr.f32.mxu0 0.0
    %3215 = vmatmul.mubr.f32.gmra.mrb[0].mxu0 %v3139
    %v3216 = vpop.f32.mrb[0].mxu0
    %v3217 = vadd.f32 0.0, %v3216
    %v3218 = vpop.f32.mrb[0].mxu0
    %3219 = vmatprep.mubr.f32.mxu0 0.0
    %3220 = vmatmul.mubr.f32.gmra.mrb[0].mxu0 %v3142
    %v3221 = vpop.f32.mrb[0].mxu0
    %v3222 = vadd.f32 0.0, %v3221
    %v3223 = vpop.f32.mrb[0].mxu0
    %3224 = vmatprep.mubr.f32.mxu0 0.0
    %3225 = vmatmul.mubr.f32.gmra.mrb[0].mxu0 %v3145
    %v3226 = vpop.f32.mrb[0].mxu0
    %v3227 = vadd.f32 0.0, %v3226
    %v3228 = vpop.f32.mrb[0].mxu0
    %3229 = vdwg.mxu0
    %v3231 = vsel %vm1123, %v2976, 0
    %v3234 = vsel %vm1123, %v2977, 0
    %v3237 = vsel %vm1123, %v2978, 0
    %v3240 = vsel %vm1130, %v3054, 0
    %3242 = vmatprep.subr.mxu0 0.0
    %3243 = vmatpush1.msra.mxu0 %v3049
    %3244 = vmatprep.subr.mxu0 0.0
    %3245 = vmatpush1.msra.mxu0 %v3240
    %3246 = vmatprep.subr.mxu0 0.0
    %3247 = vmatpush1.msra.mxu0 0.0
    %3248 = vmatprep.subr.mxu0 0.0
    %3249 = vmatpush1.msra.mxu0 0.0
    %3250 = vmatprep.subr.mxu0 0.0
    %3251 = vmatpush1.msra.mxu0 0.0
    %3252 = vmatprep.subr.mxu0 0.0
    %3253 = vmatpush1.msra.mxu0 0.0
    %3254 = vmatprep.subr.mxu0 0.0
    %3255 = vmatpush1.msra.mxu0 0.0
    %3256 = vmatprep.subr.mxu0 0.0
    %3257 = vmatpush1.msra.mxu0 0.0
    %3258 = vmatprep.subr.mxu0 0.0
    %3259 = vmatpush1.msra.mxu0 0.0
    %3260 = vmatprep.subr.mxu0 0.0
    %3261 = vmatpush1.msra.mxu0 0.0
    %3262 = vmatprep.subr.mxu0 0.0
    %3263 = vmatpush1.msra.mxu0 0.0
    %3264 = vmatprep.subr.mxu0 0.0
    %3265 = vmatpush1.msra.mxu0 0.0
    %3266 = vmatprep.subr.mxu0 0.0
    %3267 = vmatpush1.msra.mxu0 0.0
    %3268 = vmatprep.subr.mxu0 0.0
    %3269 = vmatpush1.msra.mxu0 0.0
    %3270 = vmatprep.subr.mxu0 0.0
    %3271 = vmatpush1.msra.mxu0 0.0
    %3272 = vmatprep.subr.mxu0 0.0
    %3273 = vmatpush1.msra.mxu0 0.0
    %3274 = vmatprep.subr.mxu0 0.0
    %3275 = vmatpush1.msra.mxu0 0.0
    %3276 = vmatprep.subr.mxu0 0.0
    %3277 = vmatpush1.msra.mxu0 0.0
    %3278 = vmatprep.subr.mxu0 0.0
    %3279 = vmatpush1.msra.mxu0 0.0
    %3280 = vmatprep.subr.mxu0 0.0
    %3281 = vmatpush1.msra.mxu0 0.0
    %3282 = vmatprep.subr.mxu0 0.0
    %3283 = vmatpush1.msra.mxu0 0.0
    %3284 = vmatprep.subr.mxu0 0.0
    %3285 = vmatpush1.msra.mxu0 0.0
    %3286 = vmatprep.subr.mxu0 0.0
    %3287 = vmatpush1.msra.mxu0 0.0
    %3288 = vmatprep.subr.mxu0 0.0
    %3289 = vmatpush1.msra.mxu0 0.0
    %3290 = vmatprep.subr.mxu0 0.0
    %3291 = vmatpush1.msra.mxu0 0.0
    %3292 = vmatprep.subr.mxu0 0.0
    %3293 = vmatpush1.msra.mxu0 0.0
    %3294 = vmatprep.subr.mxu0 0.0
    %3295 = vmatpush1.msra.mxu0 0.0
    %3296 = vmatprep.subr.mxu0 0.0
    %3297 = vmatpush1.msra.mxu0 0.0
    %3298 = vmatprep.subr.mxu0 0.0
    %3299 = vmatpush1.msra.mxu0 0.0
    %3300 = vmatprep.subr.mxu0 0.0
    %3301 = vmatpush1.msra.mxu0 0.0
    %3302 = vmatprep.subr.mxu0 0.0
    %3303 = vmatpush1.msra.mxu0 0.0
    %3304 = vmatprep.subr.mxu0 0.0
    %3305 = vmatpush1.msra.mxu0 0.0
    %3306 = vmatprep.mubr.f32.mxu0 0.0
    %3307 = vmatmul.mubr.f32.gmra.mrb[0].mxu0 %v3231
    %v3308 = vpop.f32.mrb[0].mxu0
    %v3309 = vadd.f32 %v3217, %v3308
    %v3310 = vpop.f32.mrb[0].mxu0
    %3311 = vmatprep.mubr.f32.mxu0 0.0
    %3312 = vmatmul.mubr.f32.gmra.mrb[0].mxu0 %v3234
    %v3313 = vpop.f32.mrb[0].mxu0
    %v3314 = vadd.f32 %v3222, %v3313
    %v3315 = vpop.f32.mrb[0].mxu0
    %3316 = vmatprep.mubr.f32.mxu0 0.0
    %3317 = vmatmul.mubr.f32.gmra.mrb[0].mxu0 %v3237
    %v3318 = vpop.f32.mrb[0].mxu0
    %v3319 = vadd.f32 %v3227, %v3318
    %v3320 = vpop.f32.mrb[0].mxu0
    %3321 = vdwg.mxu0
    %v3322 = vld [vmem:[#allocation38] sm:$0xff]
    %v3323 = vld [vmem:[#allocation38 + $0x8] sm:$0xff]
    %v3324 = vld [vmem:[#allocation38 + $0x10] sm:$0xf]
    %v3325 = vadd.f32 %v3309, %v3322
    %v3326 = vadd.f32 %v3314, %v3323
    %v3327 = vadd.f32 %v3319, %v3324
    %v3328 = vmax.f32 %v3325, 0.0
    %v3329 = vmax.f32 %v3326, 0.0
    %v3330 = vmax.f32 %v3327, 0.0
    %v3331 = vld [vmem:[%s61] sm:$0xff]
    %v3332 = vld [vmem:[%s61 + $0x8] sm:$0xff]
    %v3333 = vld [vmem:[%s61 + $0x10] sm:$0xff]
    %v3334 = vld [vmem:[%s61 + $0x18] sm:$0xff]
    %v3335 = vld [vmem:[%s61 + $0x20] sm:$0xff]
    %v3336 = vld [vmem:[#allocation44] sm:$0xff]
    %v3337 = vld [vmem:[#allocation44 + $0x8] sm:$0xff]
    %v3338 = vld [vmem:[#allocation44 + $0x10] sm:$0xf]
    %vm3339 = vcmask 162816
    %v3341 = vsel %vm3339, %v3336, 0
    %v3344 = vsel %vm3339, %v3337, 0
    %v3347 = vsel %vm3339, %v3338, 0
    %v3350 = vsel %vm1130, %v3330, 0
    %3352 = vmatprep.subr.mxu0 0.0
    %3353 = vmatpush1.msra.mxu0 %v3328
    %3354 = vmatprep.subr.mxu0 0.0
    %3355 = vmatpush1.msra.mxu0 %v3329
    %3356 = vmatprep.subr.mxu0 0.0
    %3357 = vmatpush1.msra.mxu0 %v3350
    %3358 = vmatprep.subr.mxu0 0.0
    %3359 = vmatpush1.msra.mxu0 0.0
    %3360 = vmatprep.subr.mxu0 0.0
    %3361 = vmatpush1.msra.mxu0 0.0
    %3362 = vmatprep.subr.mxu0 0.0
    %3363 = vmatpush1.msra.mxu0 0.0
    %3364 = vmatprep.subr.mxu0 0.0
    %3365 = vmatpush1.msra.mxu0 0.0
    %3366 = vmatprep.subr.mxu0 0.0
    %3367 = vmatpush1.msra.mxu0 0.0
    %3368 = vmatprep.subr.mxu0 0.0
    %3369 = vmatpush1.msra.mxu0 0.0
    %3370 = vmatprep.subr.mxu0 0.0
    %3371 = vmatpush1.msra.mxu0 0.0
    %3372 = vmatprep.subr.mxu0 0.0
    %3373 = vmatpush1.msra.mxu0 0.0
    %3374 = vmatprep.subr.mxu0 0.0
    %3375 = vmatpush1.msra.mxu0 0.0
    %3376 = vmatprep.subr.mxu0 0.0
    %3377 = vmatpush1.msra.mxu0 0.0
    %3378 = vmatprep.subr.mxu0 0.0
    %3379 = vmatpush1.msra.mxu0 0.0
    %3380 = vmatprep.subr.mxu0 0.0
    %3381 = vmatpush1.msra.mxu0 0.0
    %3382 = vmatprep.subr.mxu0 0.0
    %3383 = vmatpush1.msra.mxu0 0.0
    %3384 = vmatprep.subr.mxu0 0.0
    %3385 = vmatpush1.msra.mxu0 0.0
    %3386 = vmatprep.subr.mxu0 0.0
    %3387 = vmatpush1.msra.mxu0 0.0
    %3388 = vmatprep.subr.mxu0 0.0
    %3389 = vmatpush1.msra.mxu0 0.0
    %3390 = vmatprep.subr.mxu0 0.0
    %3391 = vmatpush1.msra.mxu0 0.0
    %3392 = vmatprep.subr.mxu0 0.0
    %3393 = vmatpush1.msra.mxu0 0.0
    %3394 = vmatprep.subr.mxu0 0.0
    %3395 = vmatpush1.msra.mxu0 0.0
    %3396 = vmatprep.subr.mxu0 0.0
    %3397 = vmatpush1.msra.mxu0 0.0
    %3398 = vmatprep.subr.mxu0 0.0
    %3399 = vmatpush1.msra.mxu0 0.0
    %3400 = vmatprep.subr.mxu0 0.0
    %3401 = vmatpush1.msra.mxu0 0.0
    %3402 = vmatprep.subr.mxu0 0.0
    %3403 = vmatpush1.msra.mxu0 0.0
    %3404 = vmatprep.subr.mxu0 0.0
    %3405 = vmatpush1.msra.mxu0 0.0
    %3406 = vmatprep.subr.mxu0 0.0
    %3407 = vmatpush1.msra.mxu0 0.0
    %3408 = vmatprep.subr.mxu0 0.0
    %3409 = vmatpush1.msra.mxu0 0.0
    %3410 = vmatprep.subr.mxu0 0.0
    %3411 = vmatpush1.msra.mxu0 0.0
    %3412 = vmatprep.subr.mxu0 0.0
    %3413 = vmatpush1.msra.mxu0 0.0
    %3414 = vmatprep.subr.mxu0 0.0
    %3415 = vmatpush1.msra.mxu0 0.0
    %3416 = vmatprep.mubr.f32.mxu0 0.0
    %3417 = vmatmul.mubr.f32.gmra.mrb[0].mxu0 %v3341
    %v3418 = vpop.f32.mrb[0].mxu0
    %v3419 = vadd.f32 0.0, %v3418
    %v3420 = vpop.f32.mrb[0].mxu0
    %3421 = vmatprep.mubr.f32.mxu0 0.0
    %3422 = vmatmul.mubr.f32.gmra.mrb[0].mxu0 %v3344
    %v3423 = vpop.f32.mrb[0].mxu0
    %v3424 = vadd.f32 0.0, %v3423
    %v3425 = vpop.f32.mrb[0].mxu0
    %3426 = vmatprep.mubr.f32.mxu0 0.0
    %3427 = vmatmul.mubr.f32.gmra.mrb[0].mxu0 %v3347
    %v3428 = vpop.f32.mrb[0].mxu0
    %v3429 = vadd.f32 0.0, %v3428
    %v3430 = vpop.f32.mrb[0].mxu0
    %3431 = vdwg.mxu0
    %v3432 = vld [vmem:[%s59] sm:$0xff]
    %v3433 = vld [vmem:[%s59 + $0x8] sm:$0xff]
    %v3434 = vld [vmem:[%s59 + $0x10] sm:$0xff]
    %v3435 = vld [vmem:[%s59 + $0x18] sm:$0xff]
    %v3436 = vld [vmem:[%s59 + $0x20] sm:$0xff]
    %vm3437 = vcmask 326656
    %v3439 = vsel %vm3437, %v3419, 0
    %v3442 = vsel %vm3437, %v3424, 0
    %v3445 = vsel %vm3437, %v3429, 0
    %3447 = vmatprep.subr.mxu0 0.0
    %3448 = vmatpush1.msra.mxu0 %v3432
    %3449 = vmatprep.subr.mxu0 0.0
    %3450 = vmatpush1.msra.mxu0 %v3433
    %3451 = vmatprep.subr.mxu0 0.0
    %3452 = vmatpush1.msra.mxu0 %v3434
    %3453 = vmatprep.subr.mxu0 0.0
    %3454 = vmatpush1.msra.mxu0 %v3435
    %3455 = vmatprep.subr.mxu0 0.0
    %3456 = vmatpush1.msra.mxu0 %v3436
    %3457 = vmatprep.subr.mxu0 0.0
    %3458 = vmatpush1.msra.mxu0 0.0
    %3459 = vmatprep.subr.mxu0 0.0
    %3460 = vmatpush1.msra.mxu0 0.0
    %3461 = vmatprep.subr.mxu0 0.0
    %3462 = vmatpush1.msra.mxu0 0.0
    %3463 = vmatprep.subr.mxu0 0.0
    %3464 = vmatpush1.msra.mxu0 0.0
    %3465 = vmatprep.subr.mxu0 0.0
    %3466 = vmatpush1.msra.mxu0 0.0
    %3467 = vmatprep.subr.mxu0 0.0
    %3468 = vmatpush1.msra.mxu0 0.0
    %3469 = vmatprep.subr.mxu0 0.0
    %3470 = vmatpush1.msra.mxu0 0.0
    %3471 = vmatprep.subr.mxu0 0.0
    %3472 = vmatpush1.msra.mxu0 0.0
    %3473 = vmatprep.subr.mxu0 0.0
    %3474 = vmatpush1.msra.mxu0 0.0
    %3475 = vmatprep.subr.mxu0 0.0
    %3476 = vmatpush1.msra.mxu0 0.0
    %3477 = vmatprep.subr.mxu0 0.0
    %3478 = vmatpush1.msra.mxu0 0.0
    %3479 = vmatprep.subr.mxu0 0.0
    %3480 = vmatpush1.msra.mxu0 0.0
    %3481 = vmatprep.subr.mxu0 0.0
    %3482 = vmatpush1.msra.mxu0 0.0
    %3483 = vmatprep.subr.mxu0 0.0
    %3484 = vmatpush1.msra.mxu0 0.0
    %3485 = vmatprep.subr.mxu0 0.0
    %3486 = vmatpush1.msra.mxu0 0.0
    %3487 = vmatprep.subr.mxu0 0.0
    %3488 = vmatpush1.msra.mxu0 0.0
    %3489 = vmatprep.subr.mxu0 0.0
    %3490 = vmatpush1.msra.mxu0 0.0
    %3491 = vmatprep.subr.mxu0 0.0
    %3492 = vmatpush1.msra.mxu0 0.0
    %3493 = vmatprep.subr.mxu0 0.0
    %3494 = vmatpush1.msra.mxu0 0.0
    %3495 = vmatprep.subr.mxu0 0.0
    %3496 = vmatpush1.msra.mxu0 0.0
    %3497 = vmatprep.subr.mxu0 0.0
    %3498 = vmatpush1.msra.mxu0 0.0
    %3499 = vmatprep.subr.mxu0 0.0
    %3500 = vmatpush1.msra.mxu0 0.0
    %3501 = vmatprep.subr.mxu0 0.0
    %3502 = vmatpush1.msra.mxu0 0.0
    %3503 = vmatprep.subr.mxu0 0.0
    %3504 = vmatpush1.msra.mxu0 0.0
    %3505 = vmatprep.subr.mxu0 0.0
    %3506 = vmatpush1.msra.mxu0 0.0
    %3507 = vmatprep.subr.mxu0 0.0
    %3508 = vmatpush1.msra.mxu0 0.0
    %3509 = vmatprep.subr.mxu0 0.0
    %3510 = vmatpush1.msra.mxu0 0.0
    %3511 = vmatprep.mubr.f32.mxu0 0.0
    %3512 = vmatmul.mubr.f32.gmra.mrb[0].mxu0 %v3439
    %v3513 = vpop.f32.mrb[0].mxu0
    %v3514 = vadd.f32 0.0, %v3513
    %v3515 = vpop.f32.mrb[0].mxu0
    %3516 = vmatprep.mubr.f32.mxu0 0.0
    %3517 = vmatmul.mubr.f32.gmra.mrb[0].mxu0 %v3442
    %v3518 = vpop.f32.mrb[0].mxu0
    %v3519 = vadd.f32 0.0, %v3518
    %v3520 = vpop.f32.mrb[0].mxu0
    %3521 = vmatprep.mubr.f32.mxu0 0.0
    %3522 = vmatmul.mubr.f32.gmra.mrb[0].mxu0 %v3445
    %v3523 = vpop.f32.mrb[0].mxu0
    %v3524 = vadd.f32 0.0, %v3523
    %v3525 = vpop.f32.mrb[0].mxu0
    %3526 = vdwg.mxu0
    %v3528 = vsel %vm3437, %v3328, 0
    %v3531 = vsel %vm3437, %v3329, 0
    %v3533 = vsel %vm3437, %v3330, 0
    %3535 = vmatprep.subr.mxu0 0.0
    %3536 = vmatpush1.msra.mxu0 %v3331
    %3537 = vmatprep.subr.mxu0 0.0
    %3538 = vmatpush1.msra.mxu0 %v3332
    %3539 = vmatprep.subr.mxu0 0.0
    %3540 = vmatpush1.msra.mxu0 %v3333
    %3541 = vmatprep.subr.mxu0 0.0
    %3542 = vmatpush1.msra.mxu0 %v3334
    %3543 = vmatprep.subr.mxu0 0.0
    %3544 = vmatpush1.msra.mxu0 %v3335
    %3545 = vmatprep.subr.mxu0 0.0
    %3546 = vmatpush1.msra.mxu0 0.0
    %3547 = vmatprep.subr.mxu0 0.0
    %3548 = vmatpush1.msra.mxu0 0.0
    %3549 = vmatprep.subr.mxu0 0.0
    %3550 = vmatpush1.msra.mxu0 0.0
    %3551 = vmatprep.subr.mxu0 0.0
    %3552 = vmatpush1.msra.mxu0 0.0
    %3553 = vmatprep.subr.mxu0 0.0
    %3554 = vmatpush1.msra.mxu0 0.0
    %3555 = vmatprep.subr.mxu0 0.0
    %3556 = vmatpush1.msra.mxu0 0.0
    %3557 = vmatprep.subr.mxu0 0.0
    %3558 = vmatpush1.msra.mxu0 0.0
    %3559 = vmatprep.subr.mxu0 0.0
    %3560 = vmatpush1.msra.mxu0 0.0
    %3561 = vmatprep.subr.mxu0 0.0
    %3562 = vmatpush1.msra.mxu0 0.0
    %3563 = vmatprep.subr.mxu0 0.0
    %3564 = vmatpush1.msra.mxu0 0.0
    %3565 = vmatprep.subr.mxu0 0.0
    %3566 = vmatpush1.msra.mxu0 0.0
    %3567 = vmatprep.subr.mxu0 0.0
    %3568 = vmatpush1.msra.mxu0 0.0
    %3569 = vmatprep.subr.mxu0 0.0
    %3570 = vmatpush1.msra.mxu0 0.0
    %3571 = vmatprep.subr.mxu0 0.0
    %3572 = vmatpush1.msra.mxu0 0.0
    %3573 = vmatprep.subr.mxu0 0.0
    %3574 = vmatpush1.msra.mxu0 0.0
    %3575 = vmatprep.subr.mxu0 0.0
    %3576 = vmatpush1.msra.mxu0 0.0
    %3577 = vmatprep.subr.mxu0 0.0
    %3578 = vmatpush1.msra.mxu0 0.0
    %3579 = vmatprep.subr.mxu0 0.0
    %3580 = vmatpush1.msra.mxu0 0.0
    %3581 = vmatprep.subr.mxu0 0.0
    %3582 = vmatpush1.msra.mxu0 0.0
    %3583 = vmatprep.subr.mxu0 0.0
    %3584 = vmatpush1.msra.mxu0 0.0
    %3585 = vmatprep.subr.mxu0 0.0
    %3586 = vmatpush1.msra.mxu0 0.0
    %3587 = vmatprep.subr.mxu0 0.0
    %3588 = vmatpush1.msra.mxu0 0.0
    %3589 = vmatprep.subr.mxu0 0.0
    %3590 = vmatpush1.msra.mxu0 0.0
    %3591 = vmatprep.subr.mxu0 0.0
    %3592 = vmatpush1.msra.mxu0 0.0
    %3593 = vmatprep.subr.mxu0 0.0
    %3594 = vmatpush1.msra.mxu0 0.0
    %3595 = vmatprep.subr.mxu0 0.0
    %3596 = vmatpush1.msra.mxu0 0.0
    %3597 = vmatprep.subr.mxu0 0.0
    %3598 = vmatpush1.msra.mxu0 0.0
    %3599 = vmatprep.mubr.f32.mxu0 0.0
    %3600 = vmatmul.mubr.f32.gmra.mrb[0].mxu0 %v3528
    %v3601 = vpop.f32.mrb[0].mxu0
    %v3602 = vadd.f32 %v3514, %v3601
    %v3603 = vpop.f32.mrb[0].mxu0
    %3604 = vmatprep.mubr.f32.mxu0 0.0
    %3605 = vmatmul.mubr.f32.gmra.mrb[0].mxu0 %v3531
    %v3606 = vpop.f32.mrb[0].mxu0
    %v3607 = vadd.f32 %v3519, %v3606
    %v3608 = vpop.f32.mrb[0].mxu0
    %3609 = vmatprep.mubr.f32.mxu0 0.0
    %3610 = vmatmul.mubr.f32.gmra.mrb[0].mxu0 %v3533
    %v3611 = vpop.f32.mrb[0].mxu0
    %v3612 = vadd.f32 %v3524, %v3611
    %v3613 = vpop.f32.mrb[0].mxu0
    %3614 = vdwg.mxu0
    %v3615 = vld [vmem:[#allocation46] sm:$0xff]
    %v3616 = vld [vmem:[#allocation46 + $0x8] sm:$0xff]
    %v3617 = vld [vmem:[#allocation46 + $0x10] sm:$0xf]
    %v3619 = vsel %vm3339, %v3615, 0
    %v3622 = vsel %vm3339, %v3616, 0
    %v3625 = vsel %vm3339, %v3617, 0
    %3627 = vmatprep.subr.mxu0 0.0
    %3628 = vmatpush1.msra.mxu0 %v3328
    %3629 = vmatprep.subr.mxu0 0.0
    %3630 = vmatpush1.msra.mxu0 %v3329
    %3631 = vmatprep.subr.mxu0 0.0
    %3632 = vmatpush1.msra.mxu0 %v3350
    %3633 = vmatprep.subr.mxu0 0.0
    %3634 = vmatpush1.msra.mxu0 0.0
    %3635 = vmatprep.subr.mxu0 0.0
    %3636 = vmatpush1.msra.mxu0 0.0
    %3637 = vmatprep.subr.mxu0 0.0
    %3638 = vmatpush1.msra.mxu0 0.0
    %3639 = vmatprep.subr.mxu0 0.0
    %3640 = vmatpush1.msra.mxu0 0.0
    %3641 = vmatprep.subr.mxu0 0.0
    %3642 = vmatpush1.msra.mxu0 0.0
    %3643 = vmatprep.subr.mxu0 0.0
    %3644 = vmatpush1.msra.mxu0 0.0
    %3645 = vmatprep.subr.mxu0 0.0
    %3646 = vmatpush1.msra.mxu0 0.0
    %3647 = vmatprep.subr.mxu0 0.0
    %3648 = vmatpush1.msra.mxu0 0.0
    %3649 = vmatprep.subr.mxu0 0.0
    %3650 = vmatpush1.msra.mxu0 0.0
    %3651 = vmatprep.subr.mxu0 0.0
    %3652 = vmatpush1.msra.mxu0 0.0
    %3653 = vmatprep.subr.mxu0 0.0
    %3654 = vmatpush1.msra.mxu0 0.0
    %3655 = vmatprep.subr.mxu0 0.0
    %3656 = vmatpush1.msra.mxu0 0.0
    %3657 = vmatprep.subr.mxu0 0.0
    %3658 = vmatpush1.msra.mxu0 0.0
    %3659 = vmatprep.subr.mxu0 0.0
    %3660 = vmatpush1.msra.mxu0 0.0
    %3661 = vmatprep.subr.mxu0 0.0
    %3662 = vmatpush1.msra.mxu0 0.0
    %3663 = vmatprep.subr.mxu0 0.0
    %3664 = vmatpush1.msra.mxu0 0.0
    %3665 = vmatprep.subr.mxu0 0.0
    %3666 = vmatpush1.msra.mxu0 0.0
    %3667 = vmatprep.subr.mxu0 0.0
    %3668 = vmatpush1.msra.mxu0 0.0
    %3669 = vmatprep.subr.mxu0 0.0
    %3670 = vmatpush1.msra.mxu0 0.0
    %3671 = vmatprep.subr.mxu0 0.0
    %3672 = vmatpush1.msra.mxu0 0.0
    %3673 = vmatprep.subr.mxu0 0.0
    %3674 = vmatpush1.msra.mxu0 0.0
    %3675 = vmatprep.subr.mxu0 0.0
    %3676 = vmatpush1.msra.mxu0 0.0
    %3677 = vmatprep.subr.mxu0 0.0
    %3678 = vmatpush1.msra.mxu0 0.0
    %3679 = vmatprep.subr.mxu0 0.0
    %3680 = vmatpush1.msra.mxu0 0.0
    %3681 = vmatprep.subr.mxu0 0.0
    %3682 = vmatpush1.msra.mxu0 0.0
    %3683 = vmatprep.subr.mxu0 0.0
    %3684 = vmatpush1.msra.mxu0 0.0
    %3685 = vmatprep.subr.mxu0 0.0
    %3686 = vmatpush1.msra.mxu0 0.0
    %3687 = vmatprep.subr.mxu0 0.0
    %3688 = vmatpush1.msra.mxu0 0.0
    %3689 = vmatprep.subr.mxu0 0.0
    %3690 = vmatpush1.msra.mxu0 0.0
    %3691 = vmatprep.mubr.f32.mxu0 0.0
    %3692 = vmatmul.mubr.f32.gmra.mrb[0].mxu0 %v3619
    %v3693 = vpop.f32.mrb[0].mxu0
    %v3694 = vadd.f32 0.0, %v3693
    %v3695 = vpop.f32.mrb[0].mxu0
    %3696 = vmatprep.mubr.f32.mxu0 0.0
    %3697 = vmatmul.mubr.f32.gmra.mrb[0].mxu0 %v3622
    %v3698 = vpop.f32.mrb[0].mxu0
    %v3699 = vadd.f32 0.0, %v3698
    %v3700 = vpop.f32.mrb[0].mxu0
    %3701 = vmatprep.mubr.f32.mxu0 0.0
    %3702 = vmatmul.mubr.f32.gmra.mrb[0].mxu0 %v3625
    %v3703 = vpop.f32.mrb[0].mxu0
    %v3704 = vadd.f32 0.0, %v3703
    %v3705 = vpop.f32.mrb[0].mxu0
    %3706 = vdwg.mxu0
    %v3707 = vld [vmem:[%s63] sm:$0xff]
    %v3708 = vld [vmem:[%s63 + $0x8] sm:$0xff]
    %v3709 = vld [vmem:[%s63 + $0x10] sm:$0xff]
    %v3710 = vld [vmem:[%s63 + $0x18] sm:$0xff]
    %v3711 = vld [vmem:[%s63 + $0x20] sm:$0xff]
    %v3713 = vsel %vm3437, %v3694, 0
    %v3716 = vsel %vm3437, %v3699, 0
    %v3719 = vsel %vm3437, %v3704, 0
    %3721 = vmatprep.subr.mxu0 0.0
    %3722 = vmatpush1.msra.mxu0 %v3707
    %3723 = vmatprep.subr.mxu0 0.0
    %3724 = vmatpush1.msra.mxu0 %v3708
    %3725 = vmatprep.subr.mxu0 0.0
    %3726 = vmatpush1.msra.mxu0 %v3709
    %3727 = vmatprep.subr.mxu0 0.0
    %3728 = vmatpush1.msra.mxu0 %v3710
    %3729 = vmatprep.subr.mxu0 0.0
    %3730 = vmatpush1.msra.mxu0 %v3711
    %3731 = vmatprep.subr.mxu0 0.0
    %3732 = vmatpush1.msra.mxu0 0.0
    %3733 = vmatprep.subr.mxu0 0.0
    %3734 = vmatpush1.msra.mxu0 0.0
    %3735 = vmatprep.subr.mxu0 0.0
    %3736 = vmatpush1.msra.mxu0 0.0
    %3737 = vmatprep.subr.mxu0 0.0
    %3738 = vmatpush1.msra.mxu0 0.0
    %3739 = vmatprep.subr.mxu0 0.0
    %3740 = vmatpush1.msra.mxu0 0.0
    %3741 = vmatprep.subr.mxu0 0.0
    %3742 = vmatpush1.msra.mxu0 0.0
    %3743 = vmatprep.subr.mxu0 0.0
    %3744 = vmatpush1.msra.mxu0 0.0
    %3745 = vmatprep.subr.mxu0 0.0
    %3746 = vmatpush1.msra.mxu0 0.0
    %3747 = vmatprep.subr.mxu0 0.0
    %3748 = vmatpush1.msra.mxu0 0.0
    %3749 = vmatprep.subr.mxu0 0.0
    %3750 = vmatpush1.msra.mxu0 0.0
    %3751 = vmatprep.subr.mxu0 0.0
    %3752 = vmatpush1.msra.mxu0 0.0
    %3753 = vmatprep.subr.mxu0 0.0
    %3754 = vmatpush1.msra.mxu0 0.0
    %3755 = vmatprep.subr.mxu0 0.0
    %3756 = vmatpush1.msra.mxu0 0.0
    %3757 = vmatprep.subr.mxu0 0.0
    %3758 = vmatpush1.msra.mxu0 0.0
    %3759 = vmatprep.subr.mxu0 0.0
    %3760 = vmatpush1.msra.mxu0 0.0
    %3761 = vmatprep.subr.mxu0 0.0
    %3762 = vmatpush1.msra.mxu0 0.0
    %3763 = vmatprep.subr.mxu0 0.0
    %3764 = vmatpush1.msra.mxu0 0.0
    %3765 = vmatprep.subr.mxu0 0.0
    %3766 = vmatpush1.msra.mxu0 0.0
    %3767 = vmatprep.subr.mxu0 0.0
    %3768 = vmatpush1.msra.mxu0 0.0
    %3769 = vmatprep.subr.mxu0 0.0
    %3770 = vmatpush1.msra.mxu0 0.0
    %3771 = vmatprep.subr.mxu0 0.0
    %3772 = vmatpush1.msra.mxu0 0.0
    %3773 = vmatprep.subr.mxu0 0.0
    %3774 = vmatpush1.msra.mxu0 0.0
    %3775 = vmatprep.subr.mxu0 0.0
    %3776 = vmatpush1.msra.mxu0 0.0
    %3777 = vmatprep.subr.mxu0 0.0
    %3778 = vmatpush1.msra.mxu0 0.0
    %3779 = vmatprep.subr.mxu0 0.0
    %3780 = vmatpush1.msra.mxu0 0.0
    %3781 = vmatprep.subr.mxu0 0.0
    %3782 = vmatpush1.msra.mxu0 0.0
    %3783 = vmatprep.subr.mxu0 0.0
    %3784 = vmatpush1.msra.mxu0 0.0
    %3785 = vmatprep.mubr.f32.mxu0 0.0
    %3786 = vmatmul.mubr.f32.gmra.mrb[0].mxu0 %v3713
    %v3787 = vpop.f32.mrb[0].mxu0
    %v3788 = vadd.f32 0.0, %v3787
    %v3789 = vpop.f32.mrb[0].mxu0
    %3790 = vmatprep.mubr.f32.mxu0 0.0
    %3791 = vmatmul.mubr.f32.gmra.mrb[0].mxu0 %v3716
    %v3792 = vpop.f32.mrb[0].mxu0
    %v3793 = vadd.f32 0.0, %v3792
    %v3794 = vpop.f32.mrb[0].mxu0
    %3795 = vmatprep.mubr.f32.mxu0 0.0
    %3796 = vmatmul.mubr.f32.gmra.mrb[0].mxu0 %v3719
    %v3797 = vpop.f32.mrb[0].mxu0
    %v3798 = vadd.f32 0.0, %v3797
    %v3799 = vpop.f32.mrb[0].mxu0
    %3800 = vdwg.mxu0
    %v3801 = vadd.f32 %v3602, %v3788
    %v3802 = vadd.f32 %v3607, %v3793
    %v3803 = vadd.f32 %v3612, %v3798
    %v3804 = vld [vmem:[#allocation43] sm:$0xff]
    %v3805 = vld [vmem:[#allocation43 + $0x8] sm:$0xff]
    %v3806 = vld [vmem:[#allocation43 + $0x10] sm:$0xf]
    %v3807 = vadd.f32 %v3801, %v3804
    %v3808 = vadd.f32 %v3802, %v3805
    %v3809 = vadd.f32 %v3803, %v3806
    %v3810 = vmax.f32 %v3807, 0.0
    %v3811 = vmax.f32 %v3808, 0.0
    %v3812 = vmax.f32 %v3809, 0.0
    %v3813 = vadd.f32 %v3810, %v2963
    %v3814 = vadd.f32 %v3811, %v2968
    %v3815 = vadd.f32 %v3812, %v2973
    %vm3816 = vcmp.ge.f32.partialorder %v3813, 0.0
    %vm3817 = vcmp.ge.f32.partialorder %v3814, 0.0
    %vm3818 = vcmp.ge.f32.partialorder %v3815, 0.0
    %v3819 = vmul.f32 %v3813, 0.01
    %v3820 = vmul.f32 %v3814, 0.01
    %v3821 = vmul.f32 %v3815, 0.01
    %v3822 = vsel %vm3816, %v3813, %v3819
    %v3823 = vsel %vm3817, %v3814, %v3820
    %v3824 = vsel %vm3818, %v3815, %v3821
    %v3825 = vld [vmem:[#allocation47] sm:$0xff]
    %v3826 = vld [vmem:[#allocation47 + $0x8] sm:$0xff]
    %v3827 = vld [vmem:[#allocation47 + $0x10] sm:$0xff]
    %v3828 = vld [vmem:[#allocation47 + $0x18] sm:$0xff]
    %v3829 = vld [vmem:[#allocation47 + $0x20] sm:$0xff]
    %v3830 = vld [vmem:[#allocation49] sm:$0xff]
    %v3831 = vld [vmem:[#allocation49 + $0x8] sm:$0xff]
    %v3832 = vld [vmem:[#allocation49 + $0x10] sm:$0xf]
    %v3834 = vsel %vm3437, %v3822, 0
    %v3837 = vsel %vm3437, %v3823, 0
    %v3840 = vsel %vm3437, %v3824, 0
    %3842 = vmatprep.subr.mxu0 0.0
    %3843 = vmatpush1.msra.mxu0 %v3825
    %3844 = vmatprep.subr.mxu0 0.0
    %3845 = vmatpush1.msra.mxu0 %v3826
    %3846 = vmatprep.subr.mxu0 0.0
    %3847 = vmatpush1.msra.mxu0 %v3827
    %3848 = vmatprep.subr.mxu0 0.0
    %3849 = vmatpush1.msra.mxu0 %v3828
    %3850 = vmatprep.subr.mxu0 0.0
    %3851 = vmatpush1.msra.mxu0 %v3829
    %3852 = vmatprep.subr.mxu0 0.0
    %3853 = vmatpush1.msra.mxu0 0.0
    %3854 = vmatprep.subr.mxu0 0.0
    %3855 = vmatpush1.msra.mxu0 0.0
    %3856 = vmatprep.subr.mxu0 0.0
    %3857 = vmatpush1.msra.mxu0 0.0
    %3858 = vmatprep.subr.mxu0 0.0
    %3859 = vmatpush1.msra.mxu0 0.0
    %3860 = vmatprep.subr.mxu0 0.0
    %3861 = vmatpush1.msra.mxu0 0.0
    %3862 = vmatprep.subr.mxu0 0.0
    %3863 = vmatpush1.msra.mxu0 0.0
    %3864 = vmatprep.subr.mxu0 0.0
    %3865 = vmatpush1.msra.mxu0 0.0
    %3866 = vmatprep.subr.mxu0 0.0
    %3867 = vmatpush1.msra.mxu0 0.0
    %3868 = vmatprep.subr.mxu0 0.0
    %3869 = vmatpush1.msra.mxu0 0.0
    %3870 = vmatprep.subr.mxu0 0.0
    %3871 = vmatpush1.msra.mxu0 0.0
    %3872 = vmatprep.subr.mxu0 0.0
    %3873 = vmatpush1.msra.mxu0 0.0
    %3874 = vmatprep.subr.mxu0 0.0
    %3875 = vmatpush1.msra.mxu0 0.0
    %3876 = vmatprep.subr.mxu0 0.0
    %3877 = vmatpush1.msra.mxu0 0.0
    %3878 = vmatprep.subr.mxu0 0.0
    %3879 = vmatpush1.msra.mxu0 0.0
    %3880 = vmatprep.subr.mxu0 0.0
    %3881 = vmatpush1.msra.mxu0 0.0
    %3882 = vmatprep.subr.mxu0 0.0
    %3883 = vmatpush1.msra.mxu0 0.0
    %3884 = vmatprep.subr.mxu0 0.0
    %3885 = vmatpush1.msra.mxu0 0.0
    %3886 = vmatprep.subr.mxu0 0.0
    %3887 = vmatpush1.msra.mxu0 0.0
    %3888 = vmatprep.subr.mxu0 0.0
    %3889 = vmatpush1.msra.mxu0 0.0
    %3890 = vmatprep.subr.mxu0 0.0
    %3891 = vmatpush1.msra.mxu0 0.0
    %3892 = vmatprep.subr.mxu0 0.0
    %3893 = vmatpush1.msra.mxu0 0.0
    %3894 = vmatprep.subr.mxu0 0.0
    %3895 = vmatpush1.msra.mxu0 0.0
    %3896 = vmatprep.subr.mxu0 0.0
    %3897 = vmatpush1.msra.mxu0 0.0
    %3898 = vmatprep.subr.mxu0 0.0
    %3899 = vmatpush1.msra.mxu0 0.0
    %3900 = vmatprep.subr.mxu0 0.0
    %3901 = vmatpush1.msra.mxu0 0.0
    %3902 = vmatprep.subr.mxu0 0.0
    %3903 = vmatpush1.msra.mxu0 0.0
    %3904 = vmatprep.subr.mxu0 0.0
    %3905 = vmatpush1.msra.mxu0 0.0
    %3906 = vmatprep.mubr.f32.mxu0 0.0
    %3907 = vmatmul.mubr.f32.gmra.mrb[0].mxu0 %v3834
    %v3908 = vpop.f32.mrb[0].mxu0
    %v3909 = vadd.f32 %v3830, %v3908
    %v3910 = vpop.f32.mrb[0].mxu0
    %3911 = vmatprep.mubr.f32.mxu0 0.0
    %3912 = vmatmul.mubr.f32.gmra.mrb[0].mxu0 %v3837
    %v3913 = vpop.f32.mrb[0].mxu0
    %v3914 = vadd.f32 %v3831, %v3913
    %v3915 = vpop.f32.mrb[0].mxu0
    %3916 = vmatprep.mubr.f32.mxu0 0.0
    %3917 = vmatmul.mubr.f32.gmra.mrb[0].mxu0 %v3840
    %v3918 = vpop.f32.mrb[0].mxu0
    %v3919 = vadd.f32 %v3832, %v3918
    %v3920 = vpop.f32.mrb[0].mxu0
    %3921 = vdwg.mxu0
    %v3922 = vld [vmem:[#allocation50] sm:$0xff]
    %v3923 = vld [vmem:[#allocation50 + $0x8] sm:$0xff]
    %v3924 = vld [vmem:[#allocation50 + $0x10] sm:$0xff]
    %v3925 = vld [vmem:[#allocation50 + $0x18] sm:$0xff]
    %v3926 = vld [vmem:[#allocation50 + $0x20] sm:$0xf]
    %vm3927 = vcmask 293888
    %v3929 = vsel %vm3927, %v1110, 0
    %v3932 = vsel %vm3927, %v1115, 0
    %v3935 = vsel %vm1130, %v3926, 0
    %3937 = vmatprep.subr.mxu0 0.0
    %3938 = vmatpush1.msra.mxu0 %v3922
    %3939 = vmatprep.subr.mxu0 0.0
    %3940 = vmatpush1.msra.mxu0 %v3923
    %3941 = vmatprep.subr.mxu0 0.0
    %3942 = vmatpush1.msra.mxu0 %v3924
    %3943 = vmatprep.subr.mxu0 0.0
    %3944 = vmatpush1.msra.mxu0 %v3925
    %3945 = vmatprep.subr.mxu0 0.0
    %3946 = vmatpush1.msra.mxu0 %v3935
    %3947 = vmatprep.subr.mxu0 0.0
    %3948 = vmatpush1.msra.mxu0 0.0
    %3949 = vmatprep.subr.mxu0 0.0
    %3950 = vmatpush1.msra.mxu0 0.0
    %3951 = vmatprep.subr.mxu0 0.0
    %3952 = vmatpush1.msra.mxu0 0.0
    %3953 = vmatprep.subr.mxu0 0.0
    %3954 = vmatpush1.msra.mxu0 0.0
    %3955 = vmatprep.subr.mxu0 0.0
    %3956 = vmatpush1.msra.mxu0 0.0
    %3957 = vmatprep.subr.mxu0 0.0
    %3958 = vmatpush1.msra.mxu0 0.0
    %3959 = vmatprep.subr.mxu0 0.0
    %3960 = vmatpush1.msra.mxu0 0.0
    %3961 = vmatprep.subr.mxu0 0.0
    %3962 = vmatpush1.msra.mxu0 0.0
    %3963 = vmatprep.subr.mxu0 0.0
    %3964 = vmatpush1.msra.mxu0 0.0
    %3965 = vmatprep.subr.mxu0 0.0
    %3966 = vmatpush1.msra.mxu0 0.0
    %3967 = vmatprep.subr.mxu0 0.0
    %3968 = vmatpush1.msra.mxu0 0.0
    %3969 = vmatprep.subr.mxu0 0.0
    %3970 = vmatpush1.msra.mxu0 0.0
    %3971 = vmatprep.subr.mxu0 0.0
    %3972 = vmatpush1.msra.mxu0 0.0
    %3973 = vmatprep.subr.mxu0 0.0
    %3974 = vmatpush1.msra.mxu0 0.0
    %3975 = vmatprep.subr.mxu0 0.0
    %3976 = vmatpush1.msra.mxu0 0.0
    %3977 = vmatprep.subr.mxu0 0.0
    %3978 = vmatpush1.msra.mxu0 0.0
    %3979 = vmatprep.subr.mxu0 0.0
    %3980 = vmatpush1.msra.mxu0 0.0
    %3981 = vmatprep.subr.mxu0 0.0
    %3982 = vmatpush1.msra.mxu0 0.0
    %3983 = vmatprep.subr.mxu0 0.0
    %3984 = vmatpush1.msra.mxu0 0.0
    %3985 = vmatprep.subr.mxu0 0.0
    %3986 = vmatpush1.msra.mxu0 0.0
    %3987 = vmatprep.subr.mxu0 0.0
    %3988 = vmatpush1.msra.mxu0 0.0
    %3989 = vmatprep.subr.mxu0 0.0
    %3990 = vmatpush1.msra.mxu0 0.0
    %3991 = vmatprep.subr.mxu0 0.0
    %3992 = vmatpush1.msra.mxu0 0.0
    %3993 = vmatprep.subr.mxu0 0.0
    %3994 = vmatpush1.msra.mxu0 0.0
    %3995 = vmatprep.subr.mxu0 0.0
    %3996 = vmatpush1.msra.mxu0 0.0
    %3997 = vmatprep.subr.mxu0 0.0
    %3998 = vmatpush1.msra.mxu0 0.0
    %3999 = vmatprep.subr.mxu0 0.0
    %4000 = vmatpush1.msra.mxu0 0.0
    %4001 = vmatprep.mubr.f32.mxu0 0.0
    %4002 = vmatmul.mubr.f32.gmra.mrb[0].mxu0 %v3929
    %v4003 = vpop.f32.mrb[0].mxu0
    %v4004 = vadd.f32 0.0, %v4003
    %v4005 = vpop.f32.mrb[0].mxu0
    %4006 = vmatprep.mubr.f32.mxu0 0.0
    %4007 = vmatmul.mubr.f32.gmra.mrb[0].mxu0 %v3932
    %v4008 = vpop.f32.mrb[0].mxu0
    %v4009 = vadd.f32 0.0, %v4008
    %v4010 = vpop.f32.mrb[0].mxu0
    %4011 = vdwg.mxu0
    %v4013 = vsel %vm1130, %v4009, 0
    %4015 = vmatprep.subr.mxu0 0.0
    %4016 = vmatpush1.msra.mxu0 %v4004
    %4017 = vmatprep.subr.mxu0 0.0
    %4018 = vmatpush1.msra.mxu0 %v4013
    %4019 = vmatprep.subr.mxu0 0.0
    %4020 = vmatpush1.msra.mxu0 0.0
    %4021 = vmatprep.subr.mxu0 0.0
    %4022 = vmatpush1.msra.mxu0 0.0
    %4023 = vmatprep.subr.mxu0 0.0
    %4024 = vmatpush1.msra.mxu0 0.0
    %4025 = vmatprep.subr.mxu0 0.0
    %4026 = vmatpush1.msra.mxu0 0.0
    %4027 = vmatprep.subr.mxu0 0.0
    %4028 = vmatpush1.msra.mxu0 0.0
    %4029 = vmatprep.subr.mxu0 0.0
    %4030 = vmatpush1.msra.mxu0 0.0
    %4031 = vmatprep.subr.mxu0 0.0
    %4032 = vmatpush1.msra.mxu0 0.0
    %4033 = vmatprep.subr.mxu0 0.0
    %4034 = vmatpush1.msra.mxu0 0.0
    %4035 = vmatprep.subr.mxu0 0.0
    %4036 = vmatpush1.msra.mxu0 0.0
    %4037 = vmatprep.subr.mxu0 0.0
    %4038 = vmatpush1.msra.mxu0 0.0
    %4039 = vmatprep.subr.mxu0 0.0
    %4040 = vmatpush1.msra.mxu0 0.0
    %4041 = vmatprep.subr.mxu0 0.0
    %4042 = vmatpush1.msra.mxu0 0.0
    %4043 = vmatprep.subr.mxu0 0.0
    %4044 = vmatpush1.msra.mxu0 0.0
    %4045 = vmatprep.subr.mxu0 0.0
    %4046 = vmatpush1.msra.mxu0 0.0
    %4047 = vmatprep.subr.mxu0 0.0
    %4048 = vmatpush1.msra.mxu0 0.0
    %4049 = vmatprep.subr.mxu0 0.0
    %4050 = vmatpush1.msra.mxu0 0.0
    %4051 = vmatprep.subr.mxu0 0.0
    %4052 = vmatpush1.msra.mxu0 0.0
    %4053 = vmatprep.subr.mxu0 0.0
    %4054 = vmatpush1.msra.mxu0 0.0
    %4055 = vmatprep.subr.mxu0 0.0
    %4056 = vmatpush1.msra.mxu0 0.0
    %4057 = vmatprep.subr.mxu0 0.0
    %4058 = vmatpush1.msra.mxu0 0.0
    %4059 = vmatprep.subr.mxu0 0.0
    %4060 = vmatpush1.msra.mxu0 0.0
    %4061 = vmatprep.subr.mxu0 0.0
    %4062 = vmatpush1.msra.mxu0 0.0
    %4063 = vmatprep.subr.mxu0 0.0
    %4064 = vmatpush1.msra.mxu0 0.0
    %4065 = vmatprep.subr.mxu0 0.0
    %4066 = vmatpush1.msra.mxu0 0.0
    %4067 = vmatprep.subr.mxu0 0.0
    %4068 = vmatpush1.msra.mxu0 0.0
    %4069 = vmatprep.subr.mxu0 0.0
    %4070 = vmatpush1.msra.mxu0 0.0
    %4071 = vmatprep.subr.mxu0 0.0
    %4072 = vmatpush1.msra.mxu0 0.0
    %4073 = vmatprep.subr.mxu0 0.0
    %4074 = vmatpush1.msra.mxu0 0.0
    %4075 = vmatprep.subr.mxu0 0.0
    %4076 = vmatpush1.msra.mxu0 0.0
    %4077 = vmatprep.subr.mxu0 0.0
    %4078 = vmatpush1.msra.mxu0 0.0
    %4079 = vmatprep.mubr.f32.mxu0 0.0
    %4080 = vmatmul.mubr.f32.gmra.mrb[0].mxu0 %v2885
    %v4081 = vpop.f32.mrb[0].mxu0
    %v4082 = vadd.f32 %v3909, %v4081
    %v4083 = vpop.f32.mrb[0].mxu0
    %4084 = vmatprep.mubr.f32.mxu0 0.0
    %4085 = vmatmul.mubr.f32.gmra.mrb[0].mxu0 %v2888
    %v4086 = vpop.f32.mrb[0].mxu0
    %v4087 = vadd.f32 %v3914, %v4086
    %v4088 = vpop.f32.mrb[0].mxu0
    %4089 = vmatprep.mubr.f32.mxu0 0.0
    %4090 = vmatmul.mubr.f32.gmra.mrb[0].mxu0 %v2891
    %v4091 = vpop.f32.mrb[0].mxu0
    %v4092 = vadd.f32 %v3919, %v4091
    %v4093 = vpop.f32.mrb[0].mxu0
    %4094 = vdwg.mxu0
    %v4095 = vld [vmem:[#allocation53] sm:$0xff]
    %v4096 = vld [vmem:[#allocation53 + $0x8] sm:$0xff]
    %v4097 = vld [vmem:[#allocation53 + $0x10] sm:$0xff]
    %v4098 = vld [vmem:[#allocation53 + $0x18] sm:$0xff]
    %v4099 = vld [vmem:[#allocation53 + $0x20] sm:$0xff]
    %v4100 = vsel %vm1130, %v3824, 0
    %4102 = vmatprep.subr.mxu0 0.0
    %4103 = vmatpush1.msra.mxu0 %v3822
    %4104 = vmatprep.subr.mxu0 0.0
    %4105 = vmatpush1.msra.mxu0 %v3823
    %4106 = vmatprep.subr.mxu0 0.0
    %4107 = vmatpush1.msra.mxu0 %v4100
    %4108 = vmatprep.subr.mxu0 0.0
    %4109 = vmatpush1.msra.mxu0 0.0
    %4110 = vmatprep.subr.mxu0 0.0
    %4111 = vmatpush1.msra.mxu0 0.0
    %4112 = vmatprep.subr.mxu0 0.0
    %4113 = vmatpush1.msra.mxu0 0.0
    %4114 = vmatprep.subr.mxu0 0.0
    %4115 = vmatpush1.msra.mxu0 0.0
    %4116 = vmatprep.subr.mxu0 0.0
    %4117 = vmatpush1.msra.mxu0 0.0
    %4118 = vmatprep.subr.mxu0 0.0
    %4119 = vmatpush1.msra.mxu0 0.0
    %4120 = vmatprep.subr.mxu0 0.0
    %4121 = vmatpush1.msra.mxu0 0.0
    %4122 = vmatprep.subr.mxu0 0.0
    %4123 = vmatpush1.msra.mxu0 0.0
    %4124 = vmatprep.subr.mxu0 0.0
    %4125 = vmatpush1.msra.mxu0 0.0
    %4126 = vmatprep.subr.mxu0 0.0
    %4127 = vmatpush1.msra.mxu0 0.0
    %4128 = vmatprep.subr.mxu0 0.0
    %4129 = vmatpush1.msra.mxu0 0.0
    %4130 = vmatprep.subr.mxu0 0.0
    %4131 = vmatpush1.msra.mxu0 0.0
    %4132 = vmatprep.subr.mxu0 0.0
    %4133 = vmatpush1.msra.mxu0 0.0
    %4134 = vmatprep.subr.mxu0 0.0
    %4135 = vmatpush1.msra.mxu0 0.0
    %4136 = vmatprep.subr.mxu0 0.0
    %4137 = vmatpush1.msra.mxu0 0.0
    %4138 = vmatprep.subr.mxu0 0.0
    %4139 = vmatpush1.msra.mxu0 0.0
    %4140 = vmatprep.subr.mxu0 0.0
    %4141 = vmatpush1.msra.mxu0 0.0
    %4142 = vmatprep.subr.mxu0 0.0
    %4143 = vmatpush1.msra.mxu0 0.0
    %4144 = vmatprep.subr.mxu0 0.0
    %4145 = vmatpush1.msra.mxu0 0.0
    %4146 = vmatprep.subr.mxu0 0.0
    %4147 = vmatpush1.msra.mxu0 0.0
    %4148 = vmatprep.subr.mxu0 0.0
    %4149 = vmatpush1.msra.mxu0 0.0
    %4150 = vmatprep.subr.mxu0 0.0
    %4151 = vmatpush1.msra.mxu0 0.0
    %4152 = vmatprep.subr.mxu0 0.0
    %4153 = vmatpush1.msra.mxu0 0.0
    %4154 = vmatprep.subr.mxu0 0.0
    %4155 = vmatpush1.msra.mxu0 0.0
    %4156 = vmatprep.subr.mxu0 0.0
    %4157 = vmatpush1.msra.mxu0 0.0
    %4158 = vmatprep.subr.mxu0 0.0
    %4159 = vmatpush1.msra.mxu0 0.0
    %4160 = vmatprep.subr.mxu0 0.0
    %4161 = vmatpush1.msra.mxu0 0.0
    %4162 = vmatprep.subr.mxu0 0.0
    %4163 = vmatpush1.msra.mxu0 0.0
    %4164 = vmatprep.subr.mxu0 0.0
    %4165 = vmatpush1.msra.mxu0 0.0
    %4166 = vmatprep.mubr.f32.mxu0 0.0
    %4167 = vmatmul.mubr.f32.gmra.mrb[0].mxu0 %v3341
    %v4168 = vpop.f32.mrb[0].mxu0
    %v4169 = vadd.f32 0.0, %v4168
    %v4170 = vpop.f32.mrb[0].mxu0
    %4171 = vmatprep.mubr.f32.mxu0 0.0
    %4172 = vmatmul.mubr.f32.gmra.mrb[0].mxu0 %v3344
    %v4173 = vpop.f32.mrb[0].mxu0
    %v4174 = vadd.f32 0.0, %v4173
    %v4175 = vpop.f32.mrb[0].mxu0
    %4176 = vmatprep.mubr.f32.mxu0 0.0
    %4177 = vmatmul.mubr.f32.gmra.mrb[0].mxu0 %v3347
    %v4178 = vpop.f32.mrb[0].mxu0
    %v4179 = vadd.f32 0.0, %v4178
    %v4180 = vpop.f32.mrb[0].mxu0
    %4181 = vdwg.mxu0
    %v4182 = vld [vmem:[#allocation52] sm:$0xff]
    %v4183 = vld [vmem:[#allocation52 + $0x8] sm:$0xff]
    %v4184 = vld [vmem:[#allocation52 + $0x10] sm:$0xff]
    %v4185 = vld [vmem:[#allocation52 + $0x18] sm:$0xff]
    %v4186 = vld [vmem:[#allocation52 + $0x20] sm:$0xff]
    %v4188 = vsel %vm3437, %v4169, 0
    %v4191 = vsel %vm3437, %v4174, 0
    %v4194 = vsel %vm3437, %v4179, 0
    %4196 = vmatprep.subr.mxu0 0.0
    %4197 = vmatpush1.msra.mxu0 %v4182
    %4198 = vmatprep.subr.mxu0 0.0
    %4199 = vmatpush1.msra.mxu0 %v4183
    %4200 = vmatprep.subr.mxu0 0.0
    %4201 = vmatpush1.msra.mxu0 %v4184
    %4202 = vmatprep.subr.mxu0 0.0
    %4203 = vmatpush1.msra.mxu0 %v4185
    %4204 = vmatprep.subr.mxu0 0.0
    %4205 = vmatpush1.msra.mxu0 %v4186
    %4206 = vmatprep.subr.mxu0 0.0
    %4207 = vmatpush1.msra.mxu0 0.0
    %4208 = vmatprep.subr.mxu0 0.0
    %4209 = vmatpush1.msra.mxu0 0.0
    %4210 = vmatprep.subr.mxu0 0.0
    %4211 = vmatpush1.msra.mxu0 0.0
    %4212 = vmatprep.subr.mxu0 0.0
    %4213 = vmatpush1.msra.mxu0 0.0
    %4214 = vmatprep.subr.mxu0 0.0
    %4215 = vmatpush1.msra.mxu0 0.0
    %4216 = vmatprep.subr.mxu0 0.0
    %4217 = vmatpush1.msra.mxu0 0.0
    %4218 = vmatprep.subr.mxu0 0.0
    %4219 = vmatpush1.msra.mxu0 0.0
    %4220 = vmatprep.subr.mxu0 0.0
    %4221 = vmatpush1.msra.mxu0 0.0
    %4222 = vmatprep.subr.mxu0 0.0
    %4223 = vmatpush1.msra.mxu0 0.0
    %4224 = vmatprep.subr.mxu0 0.0
    %4225 = vmatpush1.msra.mxu0 0.0
    %4226 = vmatprep.subr.mxu0 0.0
    %4227 = vmatpush1.msra.mxu0 0.0
    %4228 = vmatprep.subr.mxu0 0.0
    %4229 = vmatpush1.msra.mxu0 0.0
    %4230 = vmatprep.subr.mxu0 0.0
    %4231 = vmatpush1.msra.mxu0 0.0
    %4232 = vmatprep.subr.mxu0 0.0
    %4233 = vmatpush1.msra.mxu0 0.0
    %4234 = vmatprep.subr.mxu0 0.0
    %4235 = vmatpush1.msra.mxu0 0.0
    %4236 = vmatprep.subr.mxu0 0.0
    %4237 = vmatpush1.msra.mxu0 0.0
    %4238 = vmatprep.subr.mxu0 0.0
    %4239 = vmatpush1.msra.mxu0 0.0
    %4240 = vmatprep.subr.mxu0 0.0
    %4241 = vmatpush1.msra.mxu0 0.0
    %4242 = vmatprep.subr.mxu0 0.0
    %4243 = vmatpush1.msra.mxu0 0.0
    %4244 = vmatprep.subr.mxu0 0.0
    %4245 = vmatpush1.msra.mxu0 0.0
    %4246 = vmatprep.subr.mxu0 0.0
    %4247 = vmatpush1.msra.mxu0 0.0
    %4248 = vmatprep.subr.mxu0 0.0
    %4249 = vmatpush1.msra.mxu0 0.0
    %4250 = vmatprep.subr.mxu0 0.0
    %4251 = vmatpush1.msra.mxu0 0.0
    %4252 = vmatprep.subr.mxu0 0.0
    %4253 = vmatpush1.msra.mxu0 0.0
    %4254 = vmatprep.subr.mxu0 0.0
    %4255 = vmatpush1.msra.mxu0 0.0
    %4256 = vmatprep.subr.mxu0 0.0
    %4257 = vmatpush1.msra.mxu0 0.0
    %4258 = vmatprep.subr.mxu0 0.0
    %4259 = vmatpush1.msra.mxu0 0.0
    %4260 = vmatprep.mubr.f32.mxu0 0.0
    %4261 = vmatmul.mubr.f32.gmra.mrb[0].mxu0 %v4188
    %v4262 = vpop.f32.mrb[0].mxu0
    %v4263 = vadd.f32 0.0, %v4262
    %v4264 = vpop.f32.mrb[0].mxu0
    %4265 = vmatprep.mubr.f32.mxu0 0.0
    %4266 = vmatmul.mubr.f32.gmra.mrb[0].mxu0 %v4191
    %v4267 = vpop.f32.mrb[0].mxu0
    %v4268 = vadd.f32 0.0, %v4267
    %v4269 = vpop.f32.mrb[0].mxu0
    %4270 = vmatprep.mubr.f32.mxu0 0.0
    %4271 = vmatmul.mubr.f32.gmra.mrb[0].mxu0 %v4194
    %v4272 = vpop.f32.mrb[0].mxu0
    %v4273 = vadd.f32 0.0, %v4272
    %v4274 = vpop.f32.mrb[0].mxu0
    %4275 = vdwg.mxu0
    %4276 = vmatprep.subr.mxu0 0.0
    %4277 = vmatpush1.msra.mxu0 %v4095
    %4278 = vmatprep.subr.mxu0 0.0
    %4279 = vmatpush1.msra.mxu0 %v4096
    %4280 = vmatprep.subr.mxu0 0.0
    %4281 = vmatpush1.msra.mxu0 %v4097
    %4282 = vmatprep.subr.mxu0 0.0
    %4283 = vmatpush1.msra.mxu0 %v4098
    %4284 = vmatprep.subr.mxu0 0.0
    %4285 = vmatpush1.msra.mxu0 %v4099
    %4286 = vmatprep.subr.mxu0 0.0
    %4287 = vmatpush1.msra.mxu0 0.0
    %4288 = vmatprep.subr.mxu0 0.0
    %4289 = vmatpush1.msra.mxu0 0.0
    %4290 = vmatprep.subr.mxu0 0.0
    %4291 = vmatpush1.msra.mxu0 0.0
    %4292 = vmatprep.subr.mxu0 0.0
    %4293 = vmatpush1.msra.mxu0 0.0
    %4294 = vmatprep.subr.mxu0 0.0
    %4295 = vmatpush1.msra.mxu0 0.0
    %4296 = vmatprep.subr.mxu0 0.0
    %4297 = vmatpush1.msra.mxu0 0.0
    %4298 = vmatprep.subr.mxu0 0.0
    %4299 = vmatpush1.msra.mxu0 0.0
    %4300 = vmatprep.subr.mxu0 0.0
    %4301 = vmatpush1.msra.mxu0 0.0
    %4302 = vmatprep.subr.mxu0 0.0
    %4303 = vmatpush1.msra.mxu0 0.0
    %4304 = vmatprep.subr.mxu0 0.0
    %4305 = vmatpush1.msra.mxu0 0.0
    %4306 = vmatprep.subr.mxu0 0.0
    %4307 = vmatpush1.msra.mxu0 0.0
    %4308 = vmatprep.subr.mxu0 0.0
    %4309 = vmatpush1.msra.mxu0 0.0
    %4310 = vmatprep.subr.mxu0 0.0
    %4311 = vmatpush1.msra.mxu0 0.0
    %4312 = vmatprep.subr.mxu0 0.0
    %4313 = vmatpush1.msra.mxu0 0.0
    %4314 = vmatprep.subr.mxu0 0.0
    %4315 = vmatpush1.msra.mxu0 0.0
    %4316 = vmatprep.subr.mxu0 0.0
    %4317 = vmatpush1.msra.mxu0 0.0
    %4318 = vmatprep.subr.mxu0 0.0
    %4319 = vmatpush1.msra.mxu0 0.0
    %4320 = vmatprep.subr.mxu0 0.0
    %4321 = vmatpush1.msra.mxu0 0.0
    %4322 = vmatprep.subr.mxu0 0.0
    %4323 = vmatpush1.msra.mxu0 0.0
    %4324 = vmatprep.subr.mxu0 0.0
    %4325 = vmatpush1.msra.mxu0 0.0
    %4326 = vmatprep.subr.mxu0 0.0
    %4327 = vmatpush1.msra.mxu0 0.0
    %4328 = vmatprep.subr.mxu0 0.0
    %4329 = vmatpush1.msra.mxu0 0.0
    %4330 = vmatprep.subr.mxu0 0.0
    %4331 = vmatpush1.msra.mxu0 0.0
    %4332 = vmatprep.subr.mxu0 0.0
    %4333 = vmatpush1.msra.mxu0 0.0
    %4334 = vmatprep.subr.mxu0 0.0
    %4335 = vmatpush1.msra.mxu0 0.0
    %4336 = vmatprep.subr.mxu0 0.0
    %4337 = vmatpush1.msra.mxu0 0.0
    %4338 = vmatprep.subr.mxu0 0.0
    %4339 = vmatpush1.msra.mxu0 0.0
    %4340 = vmatprep.mubr.f32.mxu0 0.0
    %4341 = vmatmul.mubr.f32.gmra.mrb[0].mxu0 %v3834
    %v4342 = vpop.f32.mrb[0].mxu0
    %v4343 = vadd.f32 %v4263, %v4342
    %v4344 = vpop.f32.mrb[0].mxu0
    %4345 = vmatprep.mubr.f32.mxu0 0.0
    %4346 = vmatmul.mubr.f32.gmra.mrb[0].mxu0 %v3837
    %v4347 = vpop.f32.mrb[0].mxu0
    %v4348 = vadd.f32 %v4268, %v4347
    %v4349 = vpop.f32.mrb[0].mxu0
    %4350 = vmatprep.mubr.f32.mxu0 0.0
    %4351 = vmatmul.mubr.f32.gmra.mrb[0].mxu0 %v3840
    %v4352 = vpop.f32.mrb[0].mxu0
    %v4353 = vadd.f32 %v4273, %v4352
    %v4354 = vpop.f32.mrb[0].mxu0
    %4355 = vdwg.mxu0
    %4356 = vmatprep.subr.mxu0 0.0
    %4357 = vmatpush1.msra.mxu0 %v3822
    %4358 = vmatprep.subr.mxu0 0.0
    %4359 = vmatpush1.msra.mxu0 %v3823
    %4360 = vmatprep.subr.mxu0 0.0
    %4361 = vmatpush1.msra.mxu0 %v4100
    %4362 = vmatprep.subr.mxu0 0.0
    %4363 = vmatpush1.msra.mxu0 0.0
    %4364 = vmatprep.subr.mxu0 0.0
    %4365 = vmatpush1.msra.mxu0 0.0
    %4366 = vmatprep.subr.mxu0 0.0
    %4367 = vmatpush1.msra.mxu0 0.0
    %4368 = vmatprep.subr.mxu0 0.0
    %4369 = vmatpush1.msra.mxu0 0.0
    %4370 = vmatprep.subr.mxu0 0.0
    %4371 = vmatpush1.msra.mxu0 0.0
    %4372 = vmatprep.subr.mxu0 0.0
    %4373 = vmatpush1.msra.mxu0 0.0
    %4374 = vmatprep.subr.mxu0 0.0
    %4375 = vmatpush1.msra.mxu0 0.0
    %4376 = vmatprep.subr.mxu0 0.0
    %4377 = vmatpush1.msra.mxu0 0.0
    %4378 = vmatprep.subr.mxu0 0.0
    %4379 = vmatpush1.msra.mxu0 0.0
    %4380 = vmatprep.subr.mxu0 0.0
    %4381 = vmatpush1.msra.mxu0 0.0
    %4382 = vmatprep.subr.mxu0 0.0
    %4383 = vmatpush1.msra.mxu0 0.0
    %4384 = vmatprep.subr.mxu0 0.0
    %4385 = vmatpush1.msra.mxu0 0.0
    %4386 = vmatprep.subr.mxu0 0.0
    %4387 = vmatpush1.msra.mxu0 0.0
    %4388 = vmatprep.subr.mxu0 0.0
    %4389 = vmatpush1.msra.mxu0 0.0
    %4390 = vmatprep.subr.mxu0 0.0
    %4391 = vmatpush1.msra.mxu0 0.0
    %4392 = vmatprep.subr.mxu0 0.0
    %4393 = vmatpush1.msra.mxu0 0.0
    %4394 = vmatprep.subr.mxu0 0.0
    %4395 = vmatpush1.msra.mxu0 0.0
    %4396 = vmatprep.subr.mxu0 0.0
    %4397 = vmatpush1.msra.mxu0 0.0
    %4398 = vmatprep.subr.mxu0 0.0
    %4399 = vmatpush1.msra.mxu0 0.0
    %4400 = vmatprep.subr.mxu0 0.0
    %4401 = vmatpush1.msra.mxu0 0.0
    %4402 = vmatprep.subr.mxu0 0.0
    %4403 = vmatpush1.msra.mxu0 0.0
    %4404 = vmatprep.subr.mxu0 0.0
    %4405 = vmatpush1.msra.mxu0 0.0
    %4406 = vmatprep.subr.mxu0 0.0
    %4407 = vmatpush1.msra.mxu0 0.0
    %4408 = vmatprep.subr.mxu0 0.0
    %4409 = vmatpush1.msra.mxu0 0.0
    %4410 = vmatprep.subr.mxu0 0.0
    %4411 = vmatpush1.msra.mxu0 0.0
    %4412 = vmatprep.subr.mxu0 0.0
    %4413 = vmatpush1.msra.mxu0 0.0
    %4414 = vmatprep.subr.mxu0 0.0
    %4415 = vmatpush1.msra.mxu0 0.0
    %4416 = vmatprep.subr.mxu0 0.0
    %4417 = vmatpush1.msra.mxu0 0.0
    %4418 = vmatprep.subr.mxu0 0.0
    %4419 = vmatpush1.msra.mxu0 0.0
    %4420 = vmatprep.mubr.f32.mxu0 0.0
    %4421 = vmatmul.mubr.f32.gmra.mrb[0].mxu0 %v3619
    %v4422 = vpop.f32.mrb[0].mxu0
    %v4423 = vadd.f32 0.0, %v4422
    %v4424 = vpop.f32.mrb[0].mxu0
    %4425 = vmatprep.mubr.f32.mxu0 0.0
    %4426 = vmatmul.mubr.f32.gmra.mrb[0].mxu0 %v3622
    %v4427 = vpop.f32.mrb[0].mxu0
    %v4428 = vadd.f32 0.0, %v4427
    %v4429 = vpop.f32.mrb[0].mxu0
    %4430 = vmatprep.mubr.f32.mxu0 0.0
    %4431 = vmatmul.mubr.f32.gmra.mrb[0].mxu0 %v3625
    %v4432 = vpop.f32.mrb[0].mxu0
    %v4433 = vadd.f32 0.0, %v4432
    %v4434 = vpop.f32.mrb[0].mxu0
    %4435 = vdwg.mxu0
    %v4436 = vld [vmem:[%s81] sm:$0xff]
    %v4437 = vld [vmem:[%s81 + $0x8] sm:$0xff]
    %v4438 = vld [vmem:[%s81 + $0x10] sm:$0xff]
    %v4439 = vld [vmem:[%s81 + $0x18] sm:$0xff]
    %v4440 = vld [vmem:[%s81 + $0x20] sm:$0xff]
    %v4442 = vsel %vm3437, %v4423, 0
    %v4445 = vsel %vm3437, %v4428, 0
    %v4448 = vsel %vm3437, %v4433, 0
    %4450 = vmatprep.subr.mxu0 0.0
    %4451 = vmatpush1.msra.mxu0 %v4436
    %4452 = vmatprep.subr.mxu0 0.0
    %4453 = vmatpush1.msra.mxu0 %v4437
    %4454 = vmatprep.subr.mxu0 0.0
    %4455 = vmatpush1.msra.mxu0 %v4438
    %4456 = vmatprep.subr.mxu0 0.0
    %4457 = vmatpush1.msra.mxu0 %v4439
    %4458 = vmatprep.subr.mxu0 0.0
    %4459 = vmatpush1.msra.mxu0 %v4440
    %4460 = vmatprep.subr.mxu0 0.0
    %4461 = vmatpush1.msra.mxu0 0.0
    %4462 = vmatprep.subr.mxu0 0.0
    %4463 = vmatpush1.msra.mxu0 0.0
    %4464 = vmatprep.subr.mxu0 0.0
    %4465 = vmatpush1.msra.mxu0 0.0
    %4466 = vmatprep.subr.mxu0 0.0
    %4467 = vmatpush1.msra.mxu0 0.0
    %4468 = vmatprep.subr.mxu0 0.0
    %4469 = vmatpush1.msra.mxu0 0.0
    %4470 = vmatprep.subr.mxu0 0.0
    %4471 = vmatpush1.msra.mxu0 0.0
    %4472 = vmatprep.subr.mxu0 0.0
    %4473 = vmatpush1.msra.mxu0 0.0
    %4474 = vmatprep.subr.mxu0 0.0
    %4475 = vmatpush1.msra.mxu0 0.0
    %4476 = vmatprep.subr.mxu0 0.0
    %4477 = vmatpush1.msra.mxu0 0.0
    %4478 = vmatprep.subr.mxu0 0.0
    %4479 = vmatpush1.msra.mxu0 0.0
    %4480 = vmatprep.subr.mxu0 0.0
    %4481 = vmatpush1.msra.mxu0 0.0
    %4482 = vmatprep.subr.mxu0 0.0
    %4483 = vmatpush1.msra.mxu0 0.0
    %4484 = vmatprep.subr.mxu0 0.0
    %4485 = vmatpush1.msra.mxu0 0.0
    %4486 = vmatprep.subr.mxu0 0.0
    %4487 = vmatpush1.msra.mxu0 0.0
    %4488 = vmatprep.subr.mxu0 0.0
    %4489 = vmatpush1.msra.mxu0 0.0
    %4490 = vmatprep.subr.mxu0 0.0
    %4491 = vmatpush1.msra.mxu0 0.0
    %4492 = vmatprep.subr.mxu0 0.0
    %4493 = vmatpush1.msra.mxu0 0.0
    %4494 = vmatprep.subr.mxu0 0.0
    %4495 = vmatpush1.msra.mxu0 0.0
    %4496 = vmatprep.subr.mxu0 0.0
    %4497 = vmatpush1.msra.mxu0 0.0
    %4498 = vmatprep.subr.mxu0 0.0
    %4499 = vmatpush1.msra.mxu0 0.0
    %4500 = vmatprep.subr.mxu0 0.0
    %4501 = vmatpush1.msra.mxu0 0.0
    %4502 = vmatprep.subr.mxu0 0.0
    %4503 = vmatpush1.msra.mxu0 0.0
    %4504 = vmatprep.subr.mxu0 0.0
    %4505 = vmatpush1.msra.mxu0 0.0
    %4506 = vmatprep.subr.mxu0 0.0
    %4507 = vmatpush1.msra.mxu0 0.0
    %4508 = vmatprep.subr.mxu0 0.0
    %4509 = vmatpush1.msra.mxu0 0.0
    %4510 = vmatprep.subr.mxu0 0.0
    %4511 = vmatpush1.msra.mxu0 0.0
    %4512 = vmatprep.subr.mxu0 0.0
    %4513 = vmatpush1.msra.mxu0 0.0
    %4514 = vmatprep.mubr.f32.mxu0 0.0
    %4515 = vmatmul.mubr.f32.gmra.mrb[0].mxu0 %v4442
    %v4516 = vpop.f32.mrb[0].mxu0
    %v4517 = vadd.f32 0.0, %v4516
    %v4518 = vpop.f32.mrb[0].mxu0
    %4519 = vmatprep.mubr.f32.mxu0 0.0
    %4520 = vmatmul.mubr.f32.gmra.mrb[0].mxu0 %v4445
    %v4521 = vpop.f32.mrb[0].mxu0
    %v4522 = vadd.f32 0.0, %v4521
    %v4523 = vpop.f32.mrb[0].mxu0
    %4524 = vmatprep.mubr.f32.mxu0 0.0
    %4525 = vmatmul.mubr.f32.gmra.mrb[0].mxu0 %v4448
    %v4526 = vpop.f32.mrb[0].mxu0
    %v4527 = vadd.f32 0.0, %v4526
    %v4528 = vpop.f32.mrb[0].mxu0
    %4529 = vdwg.mxu0
    %v4530 = vadd.f32 %v4343, %v4517
    %v4531 = vadd.f32 %v4348, %v4522
    %v4532 = vadd.f32 %v4353, %v4527
    %v4533 = vld [vmem:[#allocation55] sm:$0xff]
    %v4534 = vld [vmem:[#allocation55 + $0x8] sm:$0xff]
    %v4535 = vld [vmem:[#allocation55 + $0x10] sm:$0xf]
    %v4536 = vadd.f32 %v4530, %v4533
    %v4537 = vadd.f32 %v4531, %v4534
    %v4538 = vadd.f32 %v4532, %v4535
    %v4539 = vmax.f32 %v4536, 0.0
    %v4540 = vmax.f32 %v4537, 0.0
    %v4541 = vmax.f32 %v4538, 0.0
    %v4542 = vld [vmem:[#allocation58] sm:$0xff]
    %v4543 = vld [vmem:[#allocation58 + $0x8] sm:$0xff]
    %v4544 = vld [vmem:[#allocation58 + $0x10] sm:$0xff]
    %v4545 = vld [vmem:[#allocation58 + $0x18] sm:$0xff]
    %v4546 = vld [vmem:[#allocation58 + $0x20] sm:$0xff]
    %v4548 = vsel %vm1130, %v4541, 0
    %4550 = vmatprep.subr.mxu0 0.0
    %4551 = vmatpush1.msra.mxu0 %v4539
    %4552 = vmatprep.subr.mxu0 0.0
    %4553 = vmatpush1.msra.mxu0 %v4540
    %4554 = vmatprep.subr.mxu0 0.0
    %4555 = vmatpush1.msra.mxu0 %v4548
    %4556 = vmatprep.subr.mxu0 0.0
    %4557 = vmatpush1.msra.mxu0 0.0
    %4558 = vmatprep.subr.mxu0 0.0
    %4559 = vmatpush1.msra.mxu0 0.0
    %4560 = vmatprep.subr.mxu0 0.0
    %4561 = vmatpush1.msra.mxu0 0.0
    %4562 = vmatprep.subr.mxu0 0.0
    %4563 = vmatpush1.msra.mxu0 0.0
    %4564 = vmatprep.subr.mxu0 0.0
    %4565 = vmatpush1.msra.mxu0 0.0
    %4566 = vmatprep.subr.mxu0 0.0
    %4567 = vmatpush1.msra.mxu0 0.0
    %4568 = vmatprep.subr.mxu0 0.0
    %4569 = vmatpush1.msra.mxu0 0.0
    %4570 = vmatprep.subr.mxu0 0.0
    %4571 = vmatpush1.msra.mxu0 0.0
    %4572 = vmatprep.subr.mxu0 0.0
    %4573 = vmatpush1.msra.mxu0 0.0
    %4574 = vmatprep.subr.mxu0 0.0
    %4575 = vmatpush1.msra.mxu0 0.0
    %4576 = vmatprep.subr.mxu0 0.0
    %4577 = vmatpush1.msra.mxu0 0.0
    %4578 = vmatprep.subr.mxu0 0.0
    %4579 = vmatpush1.msra.mxu0 0.0
    %4580 = vmatprep.subr.mxu0 0.0
    %4581 = vmatpush1.msra.mxu0 0.0
    %4582 = vmatprep.subr.mxu0 0.0
    %4583 = vmatpush1.msra.mxu0 0.0
    %4584 = vmatprep.subr.mxu0 0.0
    %4585 = vmatpush1.msra.mxu0 0.0
    %4586 = vmatprep.subr.mxu0 0.0
    %4587 = vmatpush1.msra.mxu0 0.0
    %4588 = vmatprep.subr.mxu0 0.0
    %4589 = vmatpush1.msra.mxu0 0.0
    %4590 = vmatprep.subr.mxu0 0.0
    %4591 = vmatpush1.msra.mxu0 0.0
    %4592 = vmatprep.subr.mxu0 0.0
    %4593 = vmatpush1.msra.mxu0 0.0
    %4594 = vmatprep.subr.mxu0 0.0
    %4595 = vmatpush1.msra.mxu0 0.0
    %4596 = vmatprep.subr.mxu0 0.0
    %4597 = vmatpush1.msra.mxu0 0.0
    %4598 = vmatprep.subr.mxu0 0.0
    %4599 = vmatpush1.msra.mxu0 0.0
    %4600 = vmatprep.subr.mxu0 0.0
    %4601 = vmatpush1.msra.mxu0 0.0
    %4602 = vmatprep.subr.mxu0 0.0
    %4603 = vmatpush1.msra.mxu0 0.0
    %4604 = vmatprep.subr.mxu0 0.0
    %4605 = vmatpush1.msra.mxu0 0.0
    %4606 = vmatprep.subr.mxu0 0.0
    %4607 = vmatpush1.msra.mxu0 0.0
    %4608 = vmatprep.subr.mxu0 0.0
    %4609 = vmatpush1.msra.mxu0 0.0
    %4610 = vmatprep.subr.mxu0 0.0
    %4611 = vmatpush1.msra.mxu0 0.0
    %4612 = vmatprep.subr.mxu0 0.0
    %4613 = vmatpush1.msra.mxu0 0.0
    %4614 = vmatprep.mubr.f32.mxu0 0.0
    %4615 = vmatmul.mubr.f32.gmra.mrb[0].mxu0 %v3341
    %v4616 = vpop.f32.mrb[0].mxu0
    %v4617 = vadd.f32 0.0, %v4616
    %v4618 = vpop.f32.mrb[0].mxu0
    %4619 = vmatprep.mubr.f32.mxu0 0.0
    %4620 = vmatmul.mubr.f32.gmra.mrb[0].mxu0 %v3344
    %v4621 = vpop.f32.mrb[0].mxu0
    %v4622 = vadd.f32 0.0, %v4621
    %v4623 = vpop.f32.mrb[0].mxu0
    %4624 = vmatprep.mubr.f32.mxu0 0.0
    %4625 = vmatmul.mubr.f32.gmra.mrb[0].mxu0 %v3347
    %v4626 = vpop.f32.mrb[0].mxu0
    %v4627 = vadd.f32 0.0, %v4626
    %v4628 = vpop.f32.mrb[0].mxu0
    %4629 = vdwg.mxu0
    %v4630 = vld [vmem:[#allocation56] sm:$0xff]
    %v4631 = vld [vmem:[#allocation56 + $0x8] sm:$0xff]
    %v4632 = vld [vmem:[#allocation56 + $0x10] sm:$0xff]
    %v4633 = vld [vmem:[#allocation56 + $0x18] sm:$0xff]
    %v4634 = vld [vmem:[#allocation56 + $0x20] sm:$0xff]
    %v4636 = vsel %vm3437, %v4617, 0
    %v4639 = vsel %vm3437, %v4622, 0
    %v4642 = vsel %vm3437, %v4627, 0
    %4644 = vmatprep.subr.mxu0 0.0
    %4645 = vmatpush1.msra.mxu0 %v4630
    %4646 = vmatprep.subr.mxu0 0.0
    %4647 = vmatpush1.msra.mxu0 %v4631
    %4648 = vmatprep.subr.mxu0 0.0
    %4649 = vmatpush1.msra.mxu0 %v4632
    %4650 = vmatprep.subr.mxu0 0.0
    %4651 = vmatpush1.msra.mxu0 %v4633
    %4652 = vmatprep.subr.mxu0 0.0
    %4653 = vmatpush1.msra.mxu0 %v4634
    %4654 = vmatprep.subr.mxu0 0.0
    %4655 = vmatpush1.msra.mxu0 0.0
    %4656 = vmatprep.subr.mxu0 0.0
    %4657 = vmatpush1.msra.mxu0 0.0
    %4658 = vmatprep.subr.mxu0 0.0
    %4659 = vmatpush1.msra.mxu0 0.0
    %4660 = vmatprep.subr.mxu0 0.0
    %4661 = vmatpush1.msra.mxu0 0.0
    %4662 = vmatprep.subr.mxu0 0.0
    %4663 = vmatpush1.msra.mxu0 0.0
    %4664 = vmatprep.subr.mxu0 0.0
    %4665 = vmatpush1.msra.mxu0 0.0
    %4666 = vmatprep.subr.mxu0 0.0
    %4667 = vmatpush1.msra.mxu0 0.0
    %4668 = vmatprep.subr.mxu0 0.0
    %4669 = vmatpush1.msra.mxu0 0.0
    %4670 = vmatprep.subr.mxu0 0.0
    %4671 = vmatpush1.msra.mxu0 0.0
    %4672 = vmatprep.subr.mxu0 0.0
    %4673 = vmatpush1.msra.mxu0 0.0
    %4674 = vmatprep.subr.mxu0 0.0
    %4675 = vmatpush1.msra.mxu0 0.0
    %4676 = vmatprep.subr.mxu0 0.0
    %4677 = vmatpush1.msra.mxu0 0.0
    %4678 = vmatprep.subr.mxu0 0.0
    %4679 = vmatpush1.msra.mxu0 0.0
    %4680 = vmatprep.subr.mxu0 0.0
    %4681 = vmatpush1.msra.mxu0 0.0
    %4682 = vmatprep.subr.mxu0 0.0
    %4683 = vmatpush1.msra.mxu0 0.0
    %4684 = vmatprep.subr.mxu0 0.0
    %4685 = vmatpush1.msra.mxu0 0.0
    %4686 = vmatprep.subr.mxu0 0.0
    %4687 = vmatpush1.msra.mxu0 0.0
    %4688 = vmatprep.subr.mxu0 0.0
    %4689 = vmatpush1.msra.mxu0 0.0
    %4690 = vmatprep.subr.mxu0 0.0
    %4691 = vmatpush1.msra.mxu0 0.0
    %4692 = vmatprep.subr.mxu0 0.0
    %4693 = vmatpush1.msra.mxu0 0.0
    %4694 = vmatprep.subr.mxu0 0.0
    %4695 = vmatpush1.msra.mxu0 0.0
    %4696 = vmatprep.subr.mxu0 0.0
    %4697 = vmatpush1.msra.mxu0 0.0
    %4698 = vmatprep.subr.mxu0 0.0
    %4699 = vmatpush1.msra.mxu0 0.0
    %4700 = vmatprep.subr.mxu0 0.0
    %4701 = vmatpush1.msra.mxu0 0.0
    %4702 = vmatprep.subr.mxu0 0.0
    %4703 = vmatpush1.msra.mxu0 0.0
    %4704 = vmatprep.subr.mxu0 0.0
    %4705 = vmatpush1.msra.mxu0 0.0
    %4706 = vmatprep.subr.mxu0 0.0
    %4707 = vmatpush1.msra.mxu0 0.0
    %4708 = vmatprep.mubr.f32.mxu0 0.0
    %4709 = vmatmul.mubr.f32.gmra.mrb[0].mxu0 %v4636
    %v4710 = vpop.f32.mrb[0].mxu0
    %v4711 = vadd.f32 0.0, %v4710
    %v4712 = vpop.f32.mrb[0].mxu0
    %4713 = vmatprep.mubr.f32.mxu0 0.0
    %4714 = vmatmul.mubr.f32.gmra.mrb[0].mxu0 %v4639
    %v4715 = vpop.f32.mrb[0].mxu0
    %v4716 = vadd.f32 0.0, %v4715
    %v4717 = vpop.f32.mrb[0].mxu0
    %4718 = vmatprep.mubr.f32.mxu0 0.0
    %4719 = vmatmul.mubr.f32.gmra.mrb[0].mxu0 %v4642
    %v4720 = vpop.f32.mrb[0].mxu0
    %v4721 = vadd.f32 0.0, %v4720
    %v4722 = vpop.f32.mrb[0].mxu0
    %4723 = vdwg.mxu0
    %v4725 = vsel %vm3437, %v4539, 0
    %v4728 = vsel %vm3437, %v4540, 0
    %v4730 = vsel %vm3437, %v4541, 0
    %4732 = vmatprep.subr.mxu0 0.0
    %4733 = vmatpush1.msra.mxu0 %v4542
    %4734 = vmatprep.subr.mxu0 0.0
    %4735 = vmatpush1.msra.mxu0 %v4543
    %4736 = vmatprep.subr.mxu0 0.0
    %4737 = vmatpush1.msra.mxu0 %v4544
    %4738 = vmatprep.subr.mxu0 0.0
    %4739 = vmatpush1.msra.mxu0 %v4545
    %4740 = vmatprep.subr.mxu0 0.0
    %4741 = vmatpush1.msra.mxu0 %v4546
    %4742 = vmatprep.subr.mxu0 0.0
    %4743 = vmatpush1.msra.mxu0 0.0
    %4744 = vmatprep.subr.mxu0 0.0
    %4745 = vmatpush1.msra.mxu0 0.0
    %4746 = vmatprep.subr.mxu0 0.0
    %4747 = vmatpush1.msra.mxu0 0.0
    %4748 = vmatprep.subr.mxu0 0.0
    %4749 = vmatpush1.msra.mxu0 0.0
    %4750 = vmatprep.subr.mxu0 0.0
    %4751 = vmatpush1.msra.mxu0 0.0
    %4752 = vmatprep.subr.mxu0 0.0
    %4753 = vmatpush1.msra.mxu0 0.0
    %4754 = vmatprep.subr.mxu0 0.0
    %4755 = vmatpush1.msra.mxu0 0.0
    %4756 = vmatprep.subr.mxu0 0.0
    %4757 = vmatpush1.msra.mxu0 0.0
    %4758 = vmatprep.subr.mxu0 0.0
    %4759 = vmatpush1.msra.mxu0 0.0
    %4760 = vmatprep.subr.mxu0 0.0
    %4761 = vmatpush1.msra.mxu0 0.0
    %4762 = vmatprep.subr.mxu0 0.0
    %4763 = vmatpush1.msra.mxu0 0.0
    %4764 = vmatprep.subr.mxu0 0.0
    %4765 = vmatpush1.msra.mxu0 0.0
    %4766 = vmatprep.subr.mxu0 0.0
    %4767 = vmatpush1.msra.mxu0 0.0
    %4768 = vmatprep.subr.mxu0 0.0
    %4769 = vmatpush1.msra.mxu0 0.0
    %4770 = vmatprep.subr.mxu0 0.0
    %4771 = vmatpush1.msra.mxu0 0.0
    %4772 = vmatprep.subr.mxu0 0.0
    %4773 = vmatpush1.msra.mxu0 0.0
    %4774 = vmatprep.subr.mxu0 0.0
    %4775 = vmatpush1.msra.mxu0 0.0
    %4776 = vmatprep.subr.mxu0 0.0
    %4777 = vmatpush1.msra.mxu0 0.0
    %4778 = vmatprep.subr.mxu0 0.0
    %4779 = vmatpush1.msra.mxu0 0.0
    %4780 = vmatprep.subr.mxu0 0.0
    %4781 = vmatpush1.msra.mxu0 0.0
    %4782 = vmatprep.subr.mxu0 0.0
    %4783 = vmatpush1.msra.mxu0 0.0
    %4784 = vmatprep.subr.mxu0 0.0
    %4785 = vmatpush1.msra.mxu0 0.0
    %4786 = vmatprep.subr.mxu0 0.0
    %4787 = vmatpush1.msra.mxu0 0.0
    %4788 = vmatprep.subr.mxu0 0.0
    %4789 = vmatpush1.msra.mxu0 0.0
    %4790 = vmatprep.subr.mxu0 0.0
    %4791 = vmatpush1.msra.mxu0 0.0
    %4792 = vmatprep.subr.mxu0 0.0
    %4793 = vmatpush1.msra.mxu0 0.0
    %4794 = vmatprep.subr.mxu0 0.0
    %4795 = vmatpush1.msra.mxu0 0.0
    %4796 = vmatprep.mubr.f32.mxu0 0.0
    %4797 = vmatmul.mubr.f32.gmra.mrb[0].mxu0 %v4725
    %v4798 = vpop.f32.mrb[0].mxu0
    %v4799 = vadd.f32 %v4711, %v4798
    %v4800 = vpop.f32.mrb[0].mxu0
    %4801 = vmatprep.mubr.f32.mxu0 0.0
    %4802 = vmatmul.mubr.f32.gmra.mrb[0].mxu0 %v4728
    %v4803 = vpop.f32.mrb[0].mxu0
    %v4804 = vadd.f32 %v4716, %v4803
    %v4805 = vpop.f32.mrb[0].mxu0
    %4806 = vmatprep.mubr.f32.mxu0 0.0
    %4807 = vmatmul.mubr.f32.gmra.mrb[0].mxu0 %v4730
    %v4808 = vpop.f32.mrb[0].mxu0
    %v4809 = vadd.f32 %v4721, %v4808
    %v4810 = vpop.f32.mrb[0].mxu0
    %4811 = vdwg.mxu0
    %4812 = vmatprep.subr.mxu0 0.0
    %4813 = vmatpush1.msra.mxu0 %v4539
    %4814 = vmatprep.subr.mxu0 0.0
    %4815 = vmatpush1.msra.mxu0 %v4540
    %4816 = vmatprep.subr.mxu0 0.0
    %4817 = vmatpush1.msra.mxu0 %v4548
    %4818 = vmatprep.subr.mxu0 0.0
    %4819 = vmatpush1.msra.mxu0 0.0
    %4820 = vmatprep.subr.mxu0 0.0
    %4821 = vmatpush1.msra.mxu0 0.0
    %4822 = vmatprep.subr.mxu0 0.0
    %4823 = vmatpush1.msra.mxu0 0.0
    %4824 = vmatprep.subr.mxu0 0.0
    %4825 = vmatpush1.msra.mxu0 0.0
    %4826 = vmatprep.subr.mxu0 0.0
    %4827 = vmatpush1.msra.mxu0 0.0
    %4828 = vmatprep.subr.mxu0 0.0
    %4829 = vmatpush1.msra.mxu0 0.0
    %4830 = vmatprep.subr.mxu0 0.0
    %4831 = vmatpush1.msra.mxu0 0.0
    %4832 = vmatprep.subr.mxu0 0.0
    %4833 = vmatpush1.msra.mxu0 0.0
    %4834 = vmatprep.subr.mxu0 0.0
    %4835 = vmatpush1.msra.mxu0 0.0
    %4836 = vmatprep.subr.mxu0 0.0
    %4837 = vmatpush1.msra.mxu0 0.0
    %4838 = vmatprep.subr.mxu0 0.0
    %4839 = vmatpush1.msra.mxu0 0.0
    %4840 = vmatprep.subr.mxu0 0.0
    %4841 = vmatpush1.msra.mxu0 0.0
    %4842 = vmatprep.subr.mxu0 0.0
    %4843 = vmatpush1.msra.mxu0 0.0
    %4844 = vmatprep.subr.mxu0 0.0
    %4845 = vmatpush1.msra.mxu0 0.0
    %4846 = vmatprep.subr.mxu0 0.0
    %4847 = vmatpush1.msra.mxu0 0.0
    %4848 = vmatprep.subr.mxu0 0.0
    %4849 = vmatpush1.msra.mxu0 0.0
    %4850 = vmatprep.subr.mxu0 0.0
    %4851 = vmatpush1.msra.mxu0 0.0
    %4852 = vmatprep.subr.mxu0 0.0
    %4853 = vmatpush1.msra.mxu0 0.0
    %4854 = vmatprep.subr.mxu0 0.0
    %4855 = vmatpush1.msra.mxu0 0.0
    %4856 = vmatprep.subr.mxu0 0.0
    %4857 = vmatpush1.msra.mxu0 0.0
    %4858 = vmatprep.subr.mxu0 0.0
    %4859 = vmatpush1.msra.mxu0 0.0
    %4860 = vmatprep.subr.mxu0 0.0
    %4861 = vmatpush1.msra.mxu0 0.0
    %4862 = vmatprep.subr.mxu0 0.0
    %4863 = vmatpush1.msra.mxu0 0.0
    %4864 = vmatprep.subr.mxu0 0.0
    %4865 = vmatpush1.msra.mxu0 0.0
    %4866 = vmatprep.subr.mxu0 0.0
    %4867 = vmatpush1.msra.mxu0 0.0
    %4868 = vmatprep.subr.mxu0 0.0
    %4869 = vmatpush1.msra.mxu0 0.0
    %4870 = vmatprep.subr.mxu0 0.0
    %4871 = vmatpush1.msra.mxu0 0.0
    %4872 = vmatprep.subr.mxu0 0.0
    %4873 = vmatpush1.msra.mxu0 0.0
    %4874 = vmatprep.subr.mxu0 0.0
    %4875 = vmatpush1.msra.mxu0 0.0
    %4876 = vmatprep.mubr.f32.mxu0 0.0
    %4877 = vmatmul.mubr.f32.gmra.mrb[0].mxu0 %v3619
    %v4878 = vpop.f32.mrb[0].mxu0
    %v4879 = vadd.f32 0.0, %v4878
    %v4880 = vpop.f32.mrb[0].mxu0
    %4881 = vmatprep.mubr.f32.mxu0 0.0
    %4882 = vmatmul.mubr.f32.gmra.mrb[0].mxu0 %v3622
    %v4883 = vpop.f32.mrb[0].mxu0
    %v4884 = vadd.f32 0.0, %v4883
    %v4885 = vpop.f32.mrb[0].mxu0
    %4886 = vmatprep.mubr.f32.mxu0 0.0
    %4887 = vmatmul.mubr.f32.gmra.mrb[0].mxu0 %v3625
    %v4888 = vpop.f32.mrb[0].mxu0
    %v4889 = vadd.f32 0.0, %v4888
    %v4890 = vpop.f32.mrb[0].mxu0
    %4891 = vdwg.mxu0
    %v4892 = vld [vmem:[#allocation59] sm:$0xff]
    %v4893 = vld [vmem:[#allocation59 + $0x8] sm:$0xff]
    %v4894 = vld [vmem:[#allocation59 + $0x10] sm:$0xff]
    %v4895 = vld [vmem:[#allocation59 + $0x18] sm:$0xff]
    %v4896 = vld [vmem:[#allocation59 + $0x20] sm:$0xff]
    %v4898 = vsel %vm3437, %v4879, 0
    %v4901 = vsel %vm3437, %v4884, 0
    %v4904 = vsel %vm3437, %v4889, 0
    %4906 = vmatprep.subr.mxu0 0.0
    %4907 = vmatpush1.msra.mxu0 %v4892
    %4908 = vmatprep.subr.mxu0 0.0
    %4909 = vmatpush1.msra.mxu0 %v4893
    %4910 = vmatprep.subr.mxu0 0.0
    %4911 = vmatpush1.msra.mxu0 %v4894
    %4912 = vmatprep.subr.mxu0 0.0
    %4913 = vmatpush1.msra.mxu0 %v4895
    %4914 = vmatprep.subr.mxu0 0.0
    %4915 = vmatpush1.msra.mxu0 %v4896
    %4916 = vmatprep.subr.mxu0 0.0
    %4917 = vmatpush1.msra.mxu0 0.0
    %4918 = vmatprep.subr.mxu0 0.0
    %4919 = vmatpush1.msra.mxu0 0.0
    %4920 = vmatprep.subr.mxu0 0.0
    %4921 = vmatpush1.msra.mxu0 0.0
    %4922 = vmatprep.subr.mxu0 0.0
    %4923 = vmatpush1.msra.mxu0 0.0
    %4924 = vmatprep.subr.mxu0 0.0
    %4925 = vmatpush1.msra.mxu0 0.0
    %4926 = vmatprep.subr.mxu0 0.0
    %4927 = vmatpush1.msra.mxu0 0.0
    %4928 = vmatprep.subr.mxu0 0.0
    %4929 = vmatpush1.msra.mxu0 0.0
    %4930 = vmatprep.subr.mxu0 0.0
    %4931 = vmatpush1.msra.mxu0 0.0
    %4932 = vmatprep.subr.mxu0 0.0
    %4933 = vmatpush1.msra.mxu0 0.0
    %4934 = vmatprep.subr.mxu0 0.0
    %4935 = vmatpush1.msra.mxu0 0.0
    %4936 = vmatprep.subr.mxu0 0.0
    %4937 = vmatpush1.msra.mxu0 0.0
    %4938 = vmatprep.subr.mxu0 0.0
    %4939 = vmatpush1.msra.mxu0 0.0
    %4940 = vmatprep.subr.mxu0 0.0
    %4941 = vmatpush1.msra.mxu0 0.0
    %4942 = vmatprep.subr.mxu0 0.0
    %4943 = vmatpush1.msra.mxu0 0.0
    %4944 = vmatprep.subr.mxu0 0.0
    %4945 = vmatpush1.msra.mxu0 0.0
    %4946 = vmatprep.subr.mxu0 0.0
    %4947 = vmatpush1.msra.mxu0 0.0
    %4948 = vmatprep.subr.mxu0 0.0
    %4949 = vmatpush1.msra.mxu0 0.0
    %4950 = vmatprep.subr.mxu0 0.0
    %4951 = vmatpush1.msra.mxu0 0.0
    %4952 = vmatprep.subr.mxu0 0.0
    %4953 = vmatpush1.msra.mxu0 0.0
    %4954 = vmatprep.subr.mxu0 0.0
    %4955 = vmatpush1.msra.mxu0 0.0
    %4956 = vmatprep.subr.mxu0 0.0
    %4957 = vmatpush1.msra.mxu0 0.0
    %4958 = vmatprep.subr.mxu0 0.0
    %4959 = vmatpush1.msra.mxu0 0.0
    %4960 = vmatprep.subr.mxu0 0.0
    %4961 = vmatpush1.msra.mxu0 0.0
    %4962 = vmatprep.subr.mxu0 0.0
    %4963 = vmatpush1.msra.mxu0 0.0
    %4964 = vmatprep.subr.mxu0 0.0
    %4965 = vmatpush1.msra.mxu0 0.0
    %4966 = vmatprep.subr.mxu0 0.0
    %4967 = vmatpush1.msra.mxu0 0.0
    %4968 = vmatprep.subr.mxu0 0.0
    %4969 = vmatpush1.msra.mxu0 0.0
    %4970 = vmatprep.mubr.f32.mxu0 0.0
    %4971 = vmatmul.mubr.f32.gmra.mrb[0].mxu0 %v4898
    %v4972 = vpop.f32.mrb[0].mxu0
    %v4973 = vadd.f32 0.0, %v4972
    %v4974 = vpop.f32.mrb[0].mxu0
    %4975 = vmatprep.mubr.f32.mxu0 0.0
    %4976 = vmatmul.mubr.f32.gmra.mrb[0].mxu0 %v4901
    %v4977 = vpop.f32.mrb[0].mxu0
    %v4978 = vadd.f32 0.0, %v4977
    %v4979 = vpop.f32.mrb[0].mxu0
    %4980 = vmatprep.mubr.f32.mxu0 0.0
    %4981 = vmatmul.mubr.f32.gmra.mrb[0].mxu0 %v4904
    %v4982 = vpop.f32.mrb[0].mxu0
    %v4983 = vadd.f32 0.0, %v4982
    %v4984 = vpop.f32.mrb[0].mxu0
    %4985 = vdwg.mxu0
    %v4986 = vadd.f32 %v4799, %v4973
    %v4987 = vadd.f32 %v4804, %v4978
    %v4988 = vadd.f32 %v4809, %v4983
    %v4989 = vld [vmem:[#allocation61] sm:$0xff]
    %v4990 = vld [vmem:[#allocation61 + $0x8] sm:$0xff]
    %v4991 = vld [vmem:[#allocation61 + $0x10] sm:$0xf]
    %v4992 = vadd.f32 %v4986, %v4989
    %v4993 = vadd.f32 %v4987, %v4990
    %v4994 = vadd.f32 %v4988, %v4991
    %v4995 = vmax.f32 %v4992, 0.0
    %v4996 = vmax.f32 %v4993, 0.0
    %v4997 = vmax.f32 %v4994, 0.0
    %v4998 = vadd.f32 %v4995, %v3822
    %v4999 = vadd.f32 %v4996, %v3823
    %v5000 = vadd.f32 %v4997, %v3824
    %vm5001 = vcmp.ge.f32.partialorder %v4998, 0.0
    %vm5002 = vcmp.ge.f32.partialorder %v4999, 0.0
    %vm5003 = vcmp.ge.f32.partialorder %v5000, 0.0
    %v5004 = vmul.f32 %v4998, 0.01
    %v5005 = vmul.f32 %v4999, 0.01
    %v5006 = vmul.f32 %v5000, 0.01
    %v5007 = vsel %vm5001, %v4998, %v5004
    %v5008 = vsel %vm5002, %v4999, %v5005
    %v5009 = vsel %vm5003, %v5000, %v5006
    %v5010 = vld [vmem:[#allocation64] sm:$0xff]
    %v5011 = vld [vmem:[#allocation64 + $0x8] sm:$0xff]
    %v5012 = vld [vmem:[#allocation64 + $0x10] sm:$0xff]
    %v5013 = vld [vmem:[#allocation64 + $0x18] sm:$0xff]
    %v5014 = vld [vmem:[#allocation64 + $0x20] sm:$0xff]
    %v5016 = vsel %vm1130, %v5009, 0
    %5018 = vmatprep.subr.mxu0 0.0
    %5019 = vmatpush1.msra.mxu0 %v5007
    %5020 = vmatprep.subr.mxu0 0.0
    %5021 = vmatpush1.msra.mxu0 %v5008
    %5022 = vmatprep.subr.mxu0 0.0
    %5023 = vmatpush1.msra.mxu0 %v5016
    %5024 = vmatprep.subr.mxu0 0.0
    %5025 = vmatpush1.msra.mxu0 0.0
    %5026 = vmatprep.subr.mxu0 0.0
    %5027 = vmatpush1.msra.mxu0 0.0
    %5028 = vmatprep.subr.mxu0 0.0
    %5029 = vmatpush1.msra.mxu0 0.0
    %5030 = vmatprep.subr.mxu0 0.0
    %5031 = vmatpush1.msra.mxu0 0.0
    %5032 = vmatprep.subr.mxu0 0.0
    %5033 = vmatpush1.msra.mxu0 0.0
    %5034 = vmatprep.subr.mxu0 0.0
    %5035 = vmatpush1.msra.mxu0 0.0
    %5036 = vmatprep.subr.mxu0 0.0
    %5037 = vmatpush1.msra.mxu0 0.0
    %5038 = vmatprep.subr.mxu0 0.0
    %5039 = vmatpush1.msra.mxu0 0.0
    %5040 = vmatprep.subr.mxu0 0.0
    %5041 = vmatpush1.msra.mxu0 0.0
    %5042 = vmatprep.subr.mxu0 0.0
    %5043 = vmatpush1.msra.mxu0 0.0
    %5044 = vmatprep.subr.mxu0 0.0
    %5045 = vmatpush1.msra.mxu0 0.0
    %5046 = vmatprep.subr.mxu0 0.0
    %5047 = vmatpush1.msra.mxu0 0.0
    %5048 = vmatprep.subr.mxu0 0.0
    %5049 = vmatpush1.msra.mxu0 0.0
    %5050 = vmatprep.subr.mxu0 0.0
    %5051 = vmatpush1.msra.mxu0 0.0
    %5052 = vmatprep.subr.mxu0 0.0
    %5053 = vmatpush1.msra.mxu0 0.0
    %5054 = vmatprep.subr.mxu0 0.0
    %5055 = vmatpush1.msra.mxu0 0.0
    %5056 = vmatprep.subr.mxu0 0.0
    %5057 = vmatpush1.msra.mxu0 0.0
    %5058 = vmatprep.subr.mxu0 0.0
    %5059 = vmatpush1.msra.mxu0 0.0
    %5060 = vmatprep.subr.mxu0 0.0
    %5061 = vmatpush1.msra.mxu0 0.0
    %5062 = vmatprep.subr.mxu0 0.0
    %5063 = vmatpush1.msra.mxu0 0.0
    %5064 = vmatprep.subr.mxu0 0.0
    %5065 = vmatpush1.msra.mxu0 0.0
    %5066 = vmatprep.subr.mxu0 0.0
    %5067 = vmatpush1.msra.mxu0 0.0
    %5068 = vmatprep.subr.mxu0 0.0
    %5069 = vmatpush1.msra.mxu0 0.0
    %5070 = vmatprep.subr.mxu0 0.0
    %5071 = vmatpush1.msra.mxu0 0.0
    %5072 = vmatprep.subr.mxu0 0.0
    %5073 = vmatpush1.msra.mxu0 0.0
    %5074 = vmatprep.subr.mxu0 0.0
    %5075 = vmatpush1.msra.mxu0 0.0
    %5076 = vmatprep.subr.mxu0 0.0
    %5077 = vmatpush1.msra.mxu0 0.0
    %5078 = vmatprep.subr.mxu0 0.0
    %5079 = vmatpush1.msra.mxu0 0.0
    %5080 = vmatprep.subr.mxu0 0.0
    %5081 = vmatpush1.msra.mxu0 0.0
    %5082 = vmatprep.mubr.f32.mxu0 0.0
    %5083 = vmatmul.mubr.f32.gmra.mrb[0].mxu0 %v3341
    %v5084 = vpop.f32.mrb[0].mxu0
    %v5085 = vadd.f32 0.0, %v5084
    %v5086 = vpop.f32.mrb[0].mxu0
    %5087 = vmatprep.mubr.f32.mxu0 0.0
    %5088 = vmatmul.mubr.f32.gmra.mrb[0].mxu0 %v3344
    %v5089 = vpop.f32.mrb[0].mxu0
    %v5090 = vadd.f32 0.0, %v5089
    %v5091 = vpop.f32.mrb[0].mxu0
    %5092 = vmatprep.mubr.f32.mxu0 0.0
    %5093 = vmatmul.mubr.f32.gmra.mrb[0].mxu0 %v3347
    %v5094 = vpop.f32.mrb[0].mxu0
    %v5095 = vadd.f32 0.0, %v5094
    %v5096 = vpop.f32.mrb[0].mxu0
    %5097 = vdwg.mxu0
    %v5098 = vld [vmem:[#allocation62] sm:$0xff]
    %v5099 = vld [vmem:[#allocation62 + $0x8] sm:$0xff]
    %v5100 = vld [vmem:[#allocation62 + $0x10] sm:$0xff]
    %v5101 = vld [vmem:[#allocation62 + $0x18] sm:$0xff]
    %v5102 = vld [vmem:[#allocation62 + $0x20] sm:$0xff]
    %v5104 = vsel %vm3437, %v5085, 0
    %v5107 = vsel %vm3437, %v5090, 0
    %v5110 = vsel %vm3437, %v5095, 0
    %5112 = vmatprep.subr.mxu0 0.0
    %5113 = vmatpush1.msra.mxu0 %v5098
    %5114 = vmatprep.subr.mxu0 0.0
    %5115 = vmatpush1.msra.mxu0 %v5099
    %5116 = vmatprep.subr.mxu0 0.0
    %5117 = vmatpush1.msra.mxu0 %v5100
    %5118 = vmatprep.subr.mxu0 0.0
    %5119 = vmatpush1.msra.mxu0 %v5101
    %5120 = vmatprep.subr.mxu0 0.0
    %5121 = vmatpush1.msra.mxu0 %v5102
    %5122 = vmatprep.subr.mxu0 0.0
    %5123 = vmatpush1.msra.mxu0 0.0
    %5124 = vmatprep.subr.mxu0 0.0
    %5125 = vmatpush1.msra.mxu0 0.0
    %5126 = vmatprep.subr.mxu0 0.0
    %5127 = vmatpush1.msra.mxu0 0.0
    %5128 = vmatprep.subr.mxu0 0.0
    %5129 = vmatpush1.msra.mxu0 0.0
    %5130 = vmatprep.subr.mxu0 0.0
    %5131 = vmatpush1.msra.mxu0 0.0
    %5132 = vmatprep.subr.mxu0 0.0
    %5133 = vmatpush1.msra.mxu0 0.0
    %5134 = vmatprep.subr.mxu0 0.0
    %5135 = vmatpush1.msra.mxu0 0.0
    %5136 = vmatprep.subr.mxu0 0.0
    %5137 = vmatpush1.msra.mxu0 0.0
    %5138 = vmatprep.subr.mxu0 0.0
    %5139 = vmatpush1.msra.mxu0 0.0
    %5140 = vmatprep.subr.mxu0 0.0
    %5141 = vmatpush1.msra.mxu0 0.0
    %5142 = vmatprep.subr.mxu0 0.0
    %5143 = vmatpush1.msra.mxu0 0.0
    %5144 = vmatprep.subr.mxu0 0.0
    %5145 = vmatpush1.msra.mxu0 0.0
    %5146 = vmatprep.subr.mxu0 0.0
    %5147 = vmatpush1.msra.mxu0 0.0
    %5148 = vmatprep.subr.mxu0 0.0
    %5149 = vmatpush1.msra.mxu0 0.0
    %5150 = vmatprep.subr.mxu0 0.0
    %5151 = vmatpush1.msra.mxu0 0.0
    %5152 = vmatprep.subr.mxu0 0.0
    %5153 = vmatpush1.msra.mxu0 0.0
    %5154 = vmatprep.subr.mxu0 0.0
    %5155 = vmatpush1.msra.mxu0 0.0
    %5156 = vmatprep.subr.mxu0 0.0
    %5157 = vmatpush1.msra.mxu0 0.0
    %5158 = vmatprep.subr.mxu0 0.0
    %5159 = vmatpush1.msra.mxu0 0.0
    %5160 = vmatprep.subr.mxu0 0.0
    %5161 = vmatpush1.msra.mxu0 0.0
    %5162 = vmatprep.subr.mxu0 0.0
    %5163 = vmatpush1.msra.mxu0 0.0
    %5164 = vmatprep.subr.mxu0 0.0
    %5165 = vmatpush1.msra.mxu0 0.0
    %5166 = vmatprep.subr.mxu0 0.0
    %5167 = vmatpush1.msra.mxu0 0.0
    %5168 = vmatprep.subr.mxu0 0.0
    %5169 = vmatpush1.msra.mxu0 0.0
    %5170 = vmatprep.subr.mxu0 0.0
    %5171 = vmatpush1.msra.mxu0 0.0
    %5172 = vmatprep.subr.mxu0 0.0
    %5173 = vmatpush1.msra.mxu0 0.0
    %5174 = vmatprep.subr.mxu0 0.0
    %5175 = vmatpush1.msra.mxu0 0.0
    %5176 = vmatprep.mubr.f32.mxu0 0.0
    %5177 = vmatmul.mubr.f32.gmra.mrb[0].mxu0 %v5104
    %v5178 = vpop.f32.mrb[0].mxu0
    %v5179 = vadd.f32 0.0, %v5178
    %v5180 = vpop.f32.mrb[0].mxu0
    %5181 = vmatprep.mubr.f32.mxu0 0.0
    %5182 = vmatmul.mubr.f32.gmra.mrb[0].mxu0 %v5107
    %v5183 = vpop.f32.mrb[0].mxu0
    %v5184 = vadd.f32 0.0, %v5183
    %v5185 = vpop.f32.mrb[0].mxu0
    %5186 = vmatprep.mubr.f32.mxu0 0.0
    %5187 = vmatmul.mubr.f32.gmra.mrb[0].mxu0 %v5110
    %v5188 = vpop.f32.mrb[0].mxu0
    %v5189 = vadd.f32 0.0, %v5188
    %v5190 = vpop.f32.mrb[0].mxu0
    %5191 = vdwg.mxu0
    %v5193 = vsel %vm3437, %v5007, 0
    %v5196 = vsel %vm3437, %v5008, 0
    %v5198 = vsel %vm3437, %v5009, 0
    %5200 = vmatprep.subr.mxu0 0.0
    %5201 = vmatpush1.msra.mxu0 %v5010
    %5202 = vmatprep.subr.mxu0 0.0
    %5203 = vmatpush1.msra.mxu0 %v5011
    %5204 = vmatprep.subr.mxu0 0.0
    %5205 = vmatpush1.msra.mxu0 %v5012
    %5206 = vmatprep.subr.mxu0 0.0
    %5207 = vmatpush1.msra.mxu0 %v5013
    %5208 = vmatprep.subr.mxu0 0.0
    %5209 = vmatpush1.msra.mxu0 %v5014
    %5210 = vmatprep.subr.mxu0 0.0
    %5211 = vmatpush1.msra.mxu0 0.0
    %5212 = vmatprep.subr.mxu0 0.0
    %5213 = vmatpush1.msra.mxu0 0.0
    %5214 = vmatprep.subr.mxu0 0.0
    %5215 = vmatpush1.msra.mxu0 0.0
    %5216 = vmatprep.subr.mxu0 0.0
    %5217 = vmatpush1.msra.mxu0 0.0
    %5218 = vmatprep.subr.mxu0 0.0
    %5219 = vmatpush1.msra.mxu0 0.0
    %5220 = vmatprep.subr.mxu0 0.0
    %5221 = vmatpush1.msra.mxu0 0.0
    %5222 = vmatprep.subr.mxu0 0.0
    %5223 = vmatpush1.msra.mxu0 0.0
    %5224 = vmatprep.subr.mxu0 0.0
    %5225 = vmatpush1.msra.mxu0 0.0
    %5226 = vmatprep.subr.mxu0 0.0
    %5227 = vmatpush1.msra.mxu0 0.0
    %5228 = vmatprep.subr.mxu0 0.0
    %5229 = vmatpush1.msra.mxu0 0.0
    %5230 = vmatprep.subr.mxu0 0.0
    %5231 = vmatpush1.msra.mxu0 0.0
    %5232 = vmatprep.subr.mxu0 0.0
    %5233 = vmatpush1.msra.mxu0 0.0
    %5234 = vmatprep.subr.mxu0 0.0
    %5235 = vmatpush1.msra.mxu0 0.0
    %5236 = vmatprep.subr.mxu0 0.0
    %5237 = vmatpush1.msra.mxu0 0.0
    %5238 = vmatprep.subr.mxu0 0.0
    %5239 = vmatpush1.msra.mxu0 0.0
    %5240 = vmatprep.subr.mxu0 0.0
    %5241 = vmatpush1.msra.mxu0 0.0
    %5242 = vmatprep.subr.mxu0 0.0
    %5243 = vmatpush1.msra.mxu0 0.0
    %5244 = vmatprep.subr.mxu0 0.0
    %5245 = vmatpush1.msra.mxu0 0.0
    %5246 = vmatprep.subr.mxu0 0.0
    %5247 = vmatpush1.msra.mxu0 0.0
    %5248 = vmatprep.subr.mxu0 0.0
    %5249 = vmatpush1.msra.mxu0 0.0
    %5250 = vmatprep.subr.mxu0 0.0
    %5251 = vmatpush1.msra.mxu0 0.0
    %5252 = vmatprep.subr.mxu0 0.0
    %5253 = vmatpush1.msra.mxu0 0.0
    %5254 = vmatprep.subr.mxu0 0.0
    %5255 = vmatpush1.msra.mxu0 0.0
    %5256 = vmatprep.subr.mxu0 0.0
    %5257 = vmatpush1.msra.mxu0 0.0
    %5258 = vmatprep.subr.mxu0 0.0
    %5259 = vmatpush1.msra.mxu0 0.0
    %5260 = vmatprep.subr.mxu0 0.0
    %5261 = vmatpush1.msra.mxu0 0.0
    %5262 = vmatprep.subr.mxu0 0.0
    %5263 = vmatpush1.msra.mxu0 0.0
    %5264 = vmatprep.mubr.f32.mxu0 0.0
    %5265 = vmatmul.mubr.f32.gmra.mrb[0].mxu0 %v5193
    %v5266 = vpop.f32.mrb[0].mxu0
    %v5267 = vadd.f32 %v5179, %v5266
    %v5268 = vpop.f32.mrb[0].mxu0
    %5269 = vmatprep.mubr.f32.mxu0 0.0
    %5270 = vmatmul.mubr.f32.gmra.mrb[0].mxu0 %v5196
    %v5271 = vpop.f32.mrb[0].mxu0
    %v5272 = vadd.f32 %v5184, %v5271
    %v5273 = vpop.f32.mrb[0].mxu0
    %5274 = vmatprep.mubr.f32.mxu0 0.0
    %5275 = vmatmul.mubr.f32.gmra.mrb[0].mxu0 %v5198
    %v5276 = vpop.f32.mrb[0].mxu0
    %v5277 = vadd.f32 %v5189, %v5276
    %v5278 = vpop.f32.mrb[0].mxu0
    %5279 = vdwg.mxu0
    %5280 = vmatprep.subr.mxu0 0.0
    %5281 = vmatpush1.msra.mxu0 %v5007
    %5282 = vmatprep.subr.mxu0 0.0
    %5283 = vmatpush1.msra.mxu0 %v5008
    %5284 = vmatprep.subr.mxu0 0.0
    %5285 = vmatpush1.msra.mxu0 %v5016
    %5286 = vmatprep.subr.mxu0 0.0
    %5287 = vmatpush1.msra.mxu0 0.0
    %5288 = vmatprep.subr.mxu0 0.0
    %5289 = vmatpush1.msra.mxu0 0.0
    %5290 = vmatprep.subr.mxu0 0.0
    %5291 = vmatpush1.msra.mxu0 0.0
    %5292 = vmatprep.subr.mxu0 0.0
    %5293 = vmatpush1.msra.mxu0 0.0
    %5294 = vmatprep.subr.mxu0 0.0
    %5295 = vmatpush1.msra.mxu0 0.0
    %5296 = vmatprep.subr.mxu0 0.0
    %5297 = vmatpush1.msra.mxu0 0.0
    %5298 = vmatprep.subr.mxu0 0.0
    %5299 = vmatpush1.msra.mxu0 0.0
    %5300 = vmatprep.subr.mxu0 0.0
    %5301 = vmatpush1.msra.mxu0 0.0
    %5302 = vmatprep.subr.mxu0 0.0
    %5303 = vmatpush1.msra.mxu0 0.0
    %5304 = vmatprep.subr.mxu0 0.0
    %5305 = vmatpush1.msra.mxu0 0.0
    %5306 = vmatprep.subr.mxu0 0.0
    %5307 = vmatpush1.msra.mxu0 0.0
    %5308 = vmatprep.subr.mxu0 0.0
    %5309 = vmatpush1.msra.mxu0 0.0
    %5310 = vmatprep.subr.mxu0 0.0
    %5311 = vmatpush1.msra.mxu0 0.0
    %5312 = vmatprep.subr.mxu0 0.0
    %5313 = vmatpush1.msra.mxu0 0.0
    %5314 = vmatprep.subr.mxu0 0.0
    %5315 = vmatpush1.msra.mxu0 0.0
    %5316 = vmatprep.subr.mxu0 0.0
    %5317 = vmatpush1.msra.mxu0 0.0
    %5318 = vmatprep.subr.mxu0 0.0
    %5319 = vmatpush1.msra.mxu0 0.0
    %5320 = vmatprep.subr.mxu0 0.0
    %5321 = vmatpush1.msra.mxu0 0.0
    %5322 = vmatprep.subr.mxu0 0.0
    %5323 = vmatpush1.msra.mxu0 0.0
    %5324 = vmatprep.subr.mxu0 0.0
    %5325 = vmatpush1.msra.mxu0 0.0
    %5326 = vmatprep.subr.mxu0 0.0
    %5327 = vmatpush1.msra.mxu0 0.0
    %5328 = vmatprep.subr.mxu0 0.0
    %5329 = vmatpush1.msra.mxu0 0.0
    %5330 = vmatprep.subr.mxu0 0.0
    %5331 = vmatpush1.msra.mxu0 0.0
    %5332 = vmatprep.subr.mxu0 0.0
    %5333 = vmatpush1.msra.mxu0 0.0
    %5334 = vmatprep.subr.mxu0 0.0
    %5335 = vmatpush1.msra.mxu0 0.0
    %5336 = vmatprep.subr.mxu0 0.0
    %5337 = vmatpush1.msra.mxu0 0.0
    %5338 = vmatprep.subr.mxu0 0.0
    %5339 = vmatpush1.msra.mxu0 0.0
    %5340 = vmatprep.subr.mxu0 0.0
    %5341 = vmatpush1.msra.mxu0 0.0
    %5342 = vmatprep.subr.mxu0 0.0
    %5343 = vmatpush1.msra.mxu0 0.0
    %5344 = vmatprep.mubr.f32.mxu0 0.0
    %5345 = vmatmul.mubr.f32.gmra.mrb[0].mxu0 %v3619
    %v5346 = vpop.f32.mrb[0].mxu0
    %v5347 = vadd.f32 0.0, %v5346
    %v5348 = vpop.f32.mrb[0].mxu0
    %5349 = vmatprep.mubr.f32.mxu0 0.0
    %5350 = vmatmul.mubr.f32.gmra.mrb[0].mxu0 %v3622
    %v5351 = vpop.f32.mrb[0].mxu0
    %v5352 = vadd.f32 0.0, %v5351
    %v5353 = vpop.f32.mrb[0].mxu0
    %5354 = vmatprep.mubr.f32.mxu0 0.0
    %5355 = vmatmul.mubr.f32.gmra.mrb[0].mxu0 %v3625
    %v5356 = vpop.f32.mrb[0].mxu0
    %v5357 = vadd.f32 0.0, %v5356
    %v5358 = vpop.f32.mrb[0].mxu0
    %5359 = vdwg.mxu0
    %v5360 = vld [vmem:[#allocation65] sm:$0xff]
    %v5361 = vld [vmem:[#allocation65 + $0x8] sm:$0xff]
    %v5362 = vld [vmem:[#allocation65 + $0x10] sm:$0xff]
    %v5363 = vld [vmem:[#allocation65 + $0x18] sm:$0xff]
    %v5364 = vld [vmem:[#allocation65 + $0x20] sm:$0xff]
    %v5366 = vsel %vm3437, %v5347, 0
    %v5369 = vsel %vm3437, %v5352, 0
    %v5372 = vsel %vm3437, %v5357, 0
    %5374 = vmatprep.subr.mxu0 0.0
    %5375 = vmatpush1.msra.mxu0 %v5360
    %5376 = vmatprep.subr.mxu0 0.0
    %5377 = vmatpush1.msra.mxu0 %v5361
    %5378 = vmatprep.subr.mxu0 0.0
    %5379 = vmatpush1.msra.mxu0 %v5362
    %5380 = vmatprep.subr.mxu0 0.0
    %5381 = vmatpush1.msra.mxu0 %v5363
    %5382 = vmatprep.subr.mxu0 0.0
    %5383 = vmatpush1.msra.mxu0 %v5364
    %5384 = vmatprep.subr.mxu0 0.0
    %5385 = vmatpush1.msra.mxu0 0.0
    %5386 = vmatprep.subr.mxu0 0.0
    %5387 = vmatpush1.msra.mxu0 0.0
    %5388 = vmatprep.subr.mxu0 0.0
    %5389 = vmatpush1.msra.mxu0 0.0
    %5390 = vmatprep.subr.mxu0 0.0
    %5391 = vmatpush1.msra.mxu0 0.0
    %5392 = vmatprep.subr.mxu0 0.0
    %5393 = vmatpush1.msra.mxu0 0.0
    %5394 = vmatprep.subr.mxu0 0.0
    %5395 = vmatpush1.msra.mxu0 0.0
    %5396 = vmatprep.subr.mxu0 0.0
    %5397 = vmatpush1.msra.mxu0 0.0
    %5398 = vmatprep.subr.mxu0 0.0
    %5399 = vmatpush1.msra.mxu0 0.0
    %5400 = vmatprep.subr.mxu0 0.0
    %5401 = vmatpush1.msra.mxu0 0.0
    %5402 = vmatprep.subr.mxu0 0.0
    %5403 = vmatpush1.msra.mxu0 0.0
    %5404 = vmatprep.subr.mxu0 0.0
    %5405 = vmatpush1.msra.mxu0 0.0
    %5406 = vmatprep.subr.mxu0 0.0
    %5407 = vmatpush1.msra.mxu0 0.0
    %5408 = vmatprep.subr.mxu0 0.0
    %5409 = vmatpush1.msra.mxu0 0.0
    %5410 = vmatprep.subr.mxu0 0.0
    %5411 = vmatpush1.msra.mxu0 0.0
    %5412 = vmatprep.subr.mxu0 0.0
    %5413 = vmatpush1.msra.mxu0 0.0
    %5414 = vmatprep.subr.mxu0 0.0
    %5415 = vmatpush1.msra.mxu0 0.0
    %5416 = vmatprep.subr.mxu0 0.0
    %5417 = vmatpush1.msra.mxu0 0.0
    %5418 = vmatprep.subr.mxu0 0.0
    %5419 = vmatpush1.msra.mxu0 0.0
    %5420 = vmatprep.subr.mxu0 0.0
    %5421 = vmatpush1.msra.mxu0 0.0
    %5422 = vmatprep.subr.mxu0 0.0
    %5423 = vmatpush1.msra.mxu0 0.0
    %5424 = vmatprep.subr.mxu0 0.0
    %5425 = vmatpush1.msra.mxu0 0.0
    %5426 = vmatprep.subr.mxu0 0.0
    %5427 = vmatpush1.msra.mxu0 0.0
    %5428 = vmatprep.subr.mxu0 0.0
    %5429 = vmatpush1.msra.mxu0 0.0
    %5430 = vmatprep.subr.mxu0 0.0
    %5431 = vmatpush1.msra.mxu0 0.0
    %5432 = vmatprep.subr.mxu0 0.0
    %5433 = vmatpush1.msra.mxu0 0.0
    %5434 = vmatprep.subr.mxu0 0.0
    %5435 = vmatpush1.msra.mxu0 0.0
    %5436 = vmatprep.subr.mxu0 0.0
    %5437 = vmatpush1.msra.mxu0 0.0
    %5438 = vmatprep.mubr.f32.mxu0 0.0
    %5439 = vmatmul.mubr.f32.gmra.mrb[0].mxu0 %v5366
    %v5440 = vpop.f32.mrb[0].mxu0
    %v5441 = vadd.f32 0.0, %v5440
    %v5442 = vpop.f32.mrb[0].mxu0
    %5443 = vmatprep.mubr.f32.mxu0 0.0
    %5444 = vmatmul.mubr.f32.gmra.mrb[0].mxu0 %v5369
    %v5445 = vpop.f32.mrb[0].mxu0
    %v5446 = vadd.f32 0.0, %v5445
    %v5447 = vpop.f32.mrb[0].mxu0
    %5448 = vmatprep.mubr.f32.mxu0 0.0
    %5449 = vmatmul.mubr.f32.gmra.mrb[0].mxu0 %v5372
    %v5450 = vpop.f32.mrb[0].mxu0
    %v5451 = vadd.f32 0.0, %v5450
    %v5452 = vpop.f32.mrb[0].mxu0
    %5453 = vdwg.mxu0
    %v5454 = vadd.f32 %v5267, %v5441
    %v5455 = vadd.f32 %v5272, %v5446
    %v5456 = vadd.f32 %v5277, %v5451
    %v5457 = vld [vmem:[#allocation67] sm:$0xff]
    %v5458 = vld [vmem:[#allocation67 + $0x8] sm:$0xff]
    %v5459 = vld [vmem:[#allocation67 + $0x10] sm:$0xf]
    %v5460 = vadd.f32 %v5454, %v5457
    %v5461 = vadd.f32 %v5455, %v5458
    %v5462 = vadd.f32 %v5456, %v5459
    %v5463 = vmax.f32 %v5460, 0.0
    %v5464 = vmax.f32 %v5461, 0.0
    %v5465 = vmax.f32 %v5462, 0.0
    %v5466 = vld [vmem:[#allocation68] sm:$0xff]
    %v5467 = vld [vmem:[#allocation68 + $0x8] sm:$0xff]
    %v5468 = vld [vmem:[#allocation68 + $0x10] sm:$0xff]
    %v5469 = vld [vmem:[#allocation68 + $0x18] sm:$0xff]
    %v5470 = vld [vmem:[#allocation68 + $0x20] sm:$0xff]
    %v5472 = vsel %vm1130, %v5465, 0
    %5474 = vmatprep.subr.mxu0 0.0
    %5475 = vmatpush1.msra.mxu0 %v5463
    %5476 = vmatprep.subr.mxu0 0.0
    %5477 = vmatpush1.msra.mxu0 %v5464
    %5478 = vmatprep.subr.mxu0 0.0
    %5479 = vmatpush1.msra.mxu0 %v5472
    %5480 = vmatprep.subr.mxu0 0.0
    %5481 = vmatpush1.msra.mxu0 0.0
    %5482 = vmatprep.subr.mxu0 0.0
    %5483 = vmatpush1.msra.mxu0 0.0
    %5484 = vmatprep.subr.mxu0 0.0
    %5485 = vmatpush1.msra.mxu0 0.0
    %5486 = vmatprep.subr.mxu0 0.0
    %5487 = vmatpush1.msra.mxu0 0.0
    %5488 = vmatprep.subr.mxu0 0.0
    %5489 = vmatpush1.msra.mxu0 0.0
    %5490 = vmatprep.subr.mxu0 0.0
    %5491 = vmatpush1.msra.mxu0 0.0
    %5492 = vmatprep.subr.mxu0 0.0
    %5493 = vmatpush1.msra.mxu0 0.0
    %5494 = vmatprep.subr.mxu0 0.0
    %5495 = vmatpush1.msra.mxu0 0.0
    %5496 = vmatprep.subr.mxu0 0.0
    %5497 = vmatpush1.msra.mxu0 0.0
    %5498 = vmatprep.subr.mxu0 0.0
    %5499 = vmatpush1.msra.mxu0 0.0
    %5500 = vmatprep.subr.mxu0 0.0
    %5501 = vmatpush1.msra.mxu0 0.0
    %5502 = vmatprep.subr.mxu0 0.0
    %5503 = vmatpush1.msra.mxu0 0.0
    %5504 = vmatprep.subr.mxu0 0.0
    %5505 = vmatpush1.msra.mxu0 0.0
    %5506 = vmatprep.subr.mxu0 0.0
    %5507 = vmatpush1.msra.mxu0 0.0
    %5508 = vmatprep.subr.mxu0 0.0
    %5509 = vmatpush1.msra.mxu0 0.0
    %5510 = vmatprep.subr.mxu0 0.0
    %5511 = vmatpush1.msra.mxu0 0.0
    %5512 = vmatprep.subr.mxu0 0.0
    %5513 = vmatpush1.msra.mxu0 0.0
    %5514 = vmatprep.subr.mxu0 0.0
    %5515 = vmatpush1.msra.mxu0 0.0
    %5516 = vmatprep.subr.mxu0 0.0
    %5517 = vmatpush1.msra.mxu0 0.0
    %5518 = vmatprep.subr.mxu0 0.0
    %5519 = vmatpush1.msra.mxu0 0.0
    %5520 = vmatprep.subr.mxu0 0.0
    %5521 = vmatpush1.msra.mxu0 0.0
    %5522 = vmatprep.subr.mxu0 0.0
    %5523 = vmatpush1.msra.mxu0 0.0
    %5524 = vmatprep.subr.mxu0 0.0
    %5525 = vmatpush1.msra.mxu0 0.0
    %5526 = vmatprep.subr.mxu0 0.0
    %5527 = vmatpush1.msra.mxu0 0.0
    %5528 = vmatprep.subr.mxu0 0.0
    %5529 = vmatpush1.msra.mxu0 0.0
    %5530 = vmatprep.subr.mxu0 0.0
    %5531 = vmatpush1.msra.mxu0 0.0
    %5532 = vmatprep.subr.mxu0 0.0
    %5533 = vmatpush1.msra.mxu0 0.0
    %5534 = vmatprep.subr.mxu0 0.0
    %5535 = vmatpush1.msra.mxu0 0.0
    %5536 = vmatprep.subr.mxu0 0.0
    %5537 = vmatpush1.msra.mxu0 0.0
    %5538 = vmatprep.mubr.f32.mxu0 0.0
    %5539 = vmatmul.mubr.f32.gmra.mrb[0].mxu0 %v3341
    %v5540 = vpop.f32.mrb[0].mxu0
    %v5541 = vadd.f32 0.0, %v5540
    %v5542 = vpop.f32.mrb[0].mxu0
    %5543 = vmatprep.mubr.f32.mxu0 0.0
    %5544 = vmatmul.mubr.f32.gmra.mrb[0].mxu0 %v3344
    %v5545 = vpop.f32.mrb[0].mxu0
    %v5546 = vadd.f32 0.0, %v5545
    %v5547 = vpop.f32.mrb[0].mxu0
    %5548 = vmatprep.mubr.f32.mxu0 0.0
    %5549 = vmatmul.mubr.f32.gmra.mrb[0].mxu0 %v3347
    %v5550 = vpop.f32.mrb[0].mxu0
    %v5551 = vadd.f32 0.0, %v5550
    %v5552 = vpop.f32.mrb[0].mxu0
    %5553 = vdwg.mxu0
    %v5554 = vld [vmem:[%s101] sm:$0xff]
    %v5555 = vld [vmem:[%s101 + $0x8] sm:$0xff]
    %v5556 = vld [vmem:[%s101 + $0x10] sm:$0xff]
    %v5557 = vld [vmem:[%s101 + $0x18] sm:$0xff]
    %v5558 = vld [vmem:[%s101 + $0x20] sm:$0xff]
    %v5560 = vsel %vm3437, %v5541, 0
    %v5563 = vsel %vm3437, %v5546, 0
    %v5566 = vsel %vm3437, %v5551, 0
    %5568 = vmatprep.subr.mxu0 0.0
    %5569 = vmatpush1.msra.mxu0 %v5554
    %5570 = vmatprep.subr.mxu0 0.0
    %5571 = vmatpush1.msra.mxu0 %v5555
    %5572 = vmatprep.subr.mxu0 0.0
    %5573 = vmatpush1.msra.mxu0 %v5556
    %5574 = vmatprep.subr.mxu0 0.0
    %5575 = vmatpush1.msra.mxu0 %v5557
    %5576 = vmatprep.subr.mxu0 0.0
    %5577 = vmatpush1.msra.mxu0 %v5558
    %5578 = vmatprep.subr.mxu0 0.0
    %5579 = vmatpush1.msra.mxu0 0.0
    %5580 = vmatprep.subr.mxu0 0.0
    %5581 = vmatpush1.msra.mxu0 0.0
    %5582 = vmatprep.subr.mxu0 0.0
    %5583 = vmatpush1.msra.mxu0 0.0
    %5584 = vmatprep.subr.mxu0 0.0
    %5585 = vmatpush1.msra.mxu0 0.0
    %5586 = vmatprep.subr.mxu0 0.0
    %5587 = vmatpush1.msra.mxu0 0.0
    %5588 = vmatprep.subr.mxu0 0.0
    %5589 = vmatpush1.msra.mxu0 0.0
    %5590 = vmatprep.subr.mxu0 0.0
    %5591 = vmatpush1.msra.mxu0 0.0
    %5592 = vmatprep.subr.mxu0 0.0
    %5593 = vmatpush1.msra.mxu0 0.0
    %5594 = vmatprep.subr.mxu0 0.0
    %5595 = vmatpush1.msra.mxu0 0.0
    %5596 = vmatprep.subr.mxu0 0.0
    %5597 = vmatpush1.msra.mxu0 0.0
    %5598 = vmatprep.subr.mxu0 0.0
    %5599 = vmatpush1.msra.mxu0 0.0
    %5600 = vmatprep.subr.mxu0 0.0
    %5601 = vmatpush1.msra.mxu0 0.0
    %5602 = vmatprep.subr.mxu0 0.0
    %5603 = vmatpush1.msra.mxu0 0.0
    %5604 = vmatprep.subr.mxu0 0.0
    %5605 = vmatpush1.msra.mxu0 0.0
    %5606 = vmatprep.subr.mxu0 0.0
    %5607 = vmatpush1.msra.mxu0 0.0
    %5608 = vmatprep.subr.mxu0 0.0
    %5609 = vmatpush1.msra.mxu0 0.0
    %5610 = vmatprep.subr.mxu0 0.0
    %5611 = vmatpush1.msra.mxu0 0.0
    %5612 = vmatprep.subr.mxu0 0.0
    %5613 = vmatpush1.msra.mxu0 0.0
    %5614 = vmatprep.subr.mxu0 0.0
    %5615 = vmatpush1.msra.mxu0 0.0
    %5616 = vmatprep.subr.mxu0 0.0
    %5617 = vmatpush1.msra.mxu0 0.0
    %5618 = vmatprep.subr.mxu0 0.0
    %5619 = vmatpush1.msra.mxu0 0.0
    %5620 = vmatprep.subr.mxu0 0.0
    %5621 = vmatpush1.msra.mxu0 0.0
    %5622 = vmatprep.subr.mxu0 0.0
    %5623 = vmatpush1.msra.mxu0 0.0
    %5624 = vmatprep.subr.mxu0 0.0
    %5625 = vmatpush1.msra.mxu0 0.0
    %5626 = vmatprep.subr.mxu0 0.0
    %5627 = vmatpush1.msra.mxu0 0.0
    %5628 = vmatprep.subr.mxu0 0.0
    %5629 = vmatpush1.msra.mxu0 0.0
    %5630 = vmatprep.subr.mxu0 0.0
    %5631 = vmatpush1.msra.mxu0 0.0
    %5632 = vmatprep.mubr.f32.mxu0 0.0
    %5633 = vmatmul.mubr.f32.gmra.mrb[0].mxu0 %v5560
    %v5634 = vpop.f32.mrb[0].mxu0
    %v5635 = vadd.f32 0.0, %v5634
    %v5636 = vpop.f32.mrb[0].mxu0
    %5637 = vmatprep.mubr.f32.mxu0 0.0
    %5638 = vmatmul.mubr.f32.gmra.mrb[0].mxu0 %v5563
    %v5639 = vpop.f32.mrb[0].mxu0
    %v5640 = vadd.f32 0.0, %v5639
    %v5641 = vpop.f32.mrb[0].mxu0
    %5642 = vmatprep.mubr.f32.mxu0 0.0
    %5643 = vmatmul.mubr.f32.gmra.mrb[0].mxu0 %v5566
    %v5644 = vpop.f32.mrb[0].mxu0
    %v5645 = vadd.f32 0.0, %v5644
    %v5646 = vpop.f32.mrb[0].mxu0
    %5647 = vdwg.mxu0
    %v5649 = vsel %vm3437, %v5463, 0
    %v5652 = vsel %vm3437, %v5464, 0
    %v5654 = vsel %vm3437, %v5465, 0
    %5656 = vmatprep.subr.mxu0 0.0
    %5657 = vmatpush1.msra.mxu0 %v5466
    %5658 = vmatprep.subr.mxu0 0.0
    %5659 = vmatpush1.msra.mxu0 %v5467
    %5660 = vmatprep.subr.mxu0 0.0
    %5661 = vmatpush1.msra.mxu0 %v5468
    %5662 = vmatprep.subr.mxu0 0.0
    %5663 = vmatpush1.msra.mxu0 %v5469
    %5664 = vmatprep.subr.mxu0 0.0
    %5665 = vmatpush1.msra.mxu0 %v5470
    %5666 = vmatprep.subr.mxu0 0.0
    %5667 = vmatpush1.msra.mxu0 0.0
    %5668 = vmatprep.subr.mxu0 0.0
    %5669 = vmatpush1.msra.mxu0 0.0
    %5670 = vmatprep.subr.mxu0 0.0
    %5671 = vmatpush1.msra.mxu0 0.0
    %5672 = vmatprep.subr.mxu0 0.0
    %5673 = vmatpush1.msra.mxu0 0.0
    %5674 = vmatprep.subr.mxu0 0.0
    %5675 = vmatpush1.msra.mxu0 0.0
    %5676 = vmatprep.subr.mxu0 0.0
    %5677 = vmatpush1.msra.mxu0 0.0
    %5678 = vmatprep.subr.mxu0 0.0
    %5679 = vmatpush1.msra.mxu0 0.0
    %5680 = vmatprep.subr.mxu0 0.0
    %5681 = vmatpush1.msra.mxu0 0.0
    %5682 = vmatprep.subr.mxu0 0.0
    %5683 = vmatpush1.msra.mxu0 0.0
    %5684 = vmatprep.subr.mxu0 0.0
    %5685 = vmatpush1.msra.mxu0 0.0
    %5686 = vmatprep.subr.mxu0 0.0
    %5687 = vmatpush1.msra.mxu0 0.0
    %5688 = vmatprep.subr.mxu0 0.0
    %5689 = vmatpush1.msra.mxu0 0.0
    %5690 = vmatprep.subr.mxu0 0.0
    %5691 = vmatpush1.msra.mxu0 0.0
    %5692 = vmatprep.subr.mxu0 0.0
    %5693 = vmatpush1.msra.mxu0 0.0
    %5694 = vmatprep.subr.mxu0 0.0
    %5695 = vmatpush1.msra.mxu0 0.0
    %5696 = vmatprep.subr.mxu0 0.0
    %5697 = vmatpush1.msra.mxu0 0.0
    %5698 = vmatprep.subr.mxu0 0.0
    %5699 = vmatpush1.msra.mxu0 0.0
    %5700 = vmatprep.subr.mxu0 0.0
    %5701 = vmatpush1.msra.mxu0 0.0
    %5702 = vmatprep.subr.mxu0 0.0
    %5703 = vmatpush1.msra.mxu0 0.0
    %5704 = vmatprep.subr.mxu0 0.0
    %5705 = vmatpush1.msra.mxu0 0.0
    %5706 = vmatprep.subr.mxu0 0.0
    %5707 = vmatpush1.msra.mxu0 0.0
    %5708 = vmatprep.subr.mxu0 0.0
    %5709 = vmatpush1.msra.mxu0 0.0
    %5710 = vmatprep.subr.mxu0 0.0
    %5711 = vmatpush1.msra.mxu0 0.0
    %5712 = vmatprep.subr.mxu0 0.0
    %5713 = vmatpush1.msra.mxu0 0.0
    %5714 = vmatprep.subr.mxu0 0.0
    %5715 = vmatpush1.msra.mxu0 0.0
    %5716 = vmatprep.subr.mxu0 0.0
    %5717 = vmatpush1.msra.mxu0 0.0
    %5718 = vmatprep.subr.mxu0 0.0
    %5719 = vmatpush1.msra.mxu0 0.0
    %5720 = vmatprep.mubr.f32.mxu0 0.0
    %5721 = vmatmul.mubr.f32.gmra.mrb[0].mxu0 %v5649
    %v5722 = vpop.f32.mrb[0].mxu0
    %v5723 = vadd.f32 %v5635, %v5722
    %v5724 = vpop.f32.mrb[0].mxu0
    %5725 = vmatprep.mubr.f32.mxu0 0.0
    %5726 = vmatmul.mubr.f32.gmra.mrb[0].mxu0 %v5652
    %v5727 = vpop.f32.mrb[0].mxu0
    %v5728 = vadd.f32 %v5640, %v5727
    %v5729 = vpop.f32.mrb[0].mxu0
    %5730 = vmatprep.mubr.f32.mxu0 0.0
    %5731 = vmatmul.mubr.f32.gmra.mrb[0].mxu0 %v5654
    %v5732 = vpop.f32.mrb[0].mxu0
    %v5733 = vadd.f32 %v5645, %v5732
    %v5734 = vpop.f32.mrb[0].mxu0
    %5735 = vdwg.mxu0
    %5736 = vmatprep.subr.mxu0 0.0
    %5737 = vmatpush1.msra.mxu0 %v5463
    %5738 = vmatprep.subr.mxu0 0.0
    %5739 = vmatpush1.msra.mxu0 %v5464
    %5740 = vmatprep.subr.mxu0 0.0
    %5741 = vmatpush1.msra.mxu0 %v5472
    %5742 = vmatprep.subr.mxu0 0.0
    %5743 = vmatpush1.msra.mxu0 0.0
    %5744 = vmatprep.subr.mxu0 0.0
    %5745 = vmatpush1.msra.mxu0 0.0
    %5746 = vmatprep.subr.mxu0 0.0
    %5747 = vmatpush1.msra.mxu0 0.0
    %5748 = vmatprep.subr.mxu0 0.0
    %5749 = vmatpush1.msra.mxu0 0.0
    %5750 = vmatprep.subr.mxu0 0.0
    %5751 = vmatpush1.msra.mxu0 0.0
    %5752 = vmatprep.subr.mxu0 0.0
    %5753 = vmatpush1.msra.mxu0 0.0
    %5754 = vmatprep.subr.mxu0 0.0
    %5755 = vmatpush1.msra.mxu0 0.0
    %5756 = vmatprep.subr.mxu0 0.0
    %5757 = vmatpush1.msra.mxu0 0.0
    %5758 = vmatprep.subr.mxu0 0.0
    %5759 = vmatpush1.msra.mxu0 0.0
    %5760 = vmatprep.subr.mxu0 0.0
    %5761 = vmatpush1.msra.mxu0 0.0
    %5762 = vmatprep.subr.mxu0 0.0
    %5763 = vmatpush1.msra.mxu0 0.0
    %5764 = vmatprep.subr.mxu0 0.0
    %5765 = vmatpush1.msra.mxu0 0.0
    %5766 = vmatprep.subr.mxu0 0.0
    %5767 = vmatpush1.msra.mxu0 0.0
    %5768 = vmatprep.subr.mxu0 0.0
    %5769 = vmatpush1.msra.mxu0 0.0
    %5770 = vmatprep.subr.mxu0 0.0
    %5771 = vmatpush1.msra.mxu0 0.0
    %5772 = vmatprep.subr.mxu0 0.0
    %5773 = vmatpush1.msra.mxu0 0.0
    %5774 = vmatprep.subr.mxu0 0.0
    %5775 = vmatpush1.msra.mxu0 0.0
    %5776 = vmatprep.subr.mxu0 0.0
    %5777 = vmatpush1.msra.mxu0 0.0
    %5778 = vmatprep.subr.mxu0 0.0
    %5779 = vmatpush1.msra.mxu0 0.0
    %5780 = vmatprep.subr.mxu0 0.0
    %5781 = vmatpush1.msra.mxu0 0.0
    %5782 = vmatprep.subr.mxu0 0.0
    %5783 = vmatpush1.msra.mxu0 0.0
    %5784 = vmatprep.subr.mxu0 0.0
    %5785 = vmatpush1.msra.mxu0 0.0
    %5786 = vmatprep.subr.mxu0 0.0
    %5787 = vmatpush1.msra.mxu0 0.0
    %5788 = vmatprep.subr.mxu0 0.0
    %5789 = vmatpush1.msra.mxu0 0.0
    %5790 = vmatprep.subr.mxu0 0.0
    %5791 = vmatpush1.msra.mxu0 0.0
    %5792 = vmatprep.subr.mxu0 0.0
    %5793 = vmatpush1.msra.mxu0 0.0
    %5794 = vmatprep.subr.mxu0 0.0
    %5795 = vmatpush1.msra.mxu0 0.0
    %5796 = vmatprep.subr.mxu0 0.0
    %5797 = vmatpush1.msra.mxu0 0.0
    %5798 = vmatprep.subr.mxu0 0.0
    %5799 = vmatpush1.msra.mxu0 0.0
    %5800 = vmatprep.mubr.f32.mxu0 0.0
    %5801 = vmatmul.mubr.f32.gmra.mrb[0].mxu0 %v3619
    %v5802 = vpop.f32.mrb[0].mxu0
    %v5803 = vadd.f32 0.0, %v5802
    %v5804 = vpop.f32.mrb[0].mxu0
    %5805 = vmatprep.mubr.f32.mxu0 0.0
    %5806 = vmatmul.mubr.f32.gmra.mrb[0].mxu0 %v3622
    %v5807 = vpop.f32.mrb[0].mxu0
    %v5808 = vadd.f32 0.0, %v5807
    %v5809 = vpop.f32.mrb[0].mxu0
    %5810 = vmatprep.mubr.f32.mxu0 0.0
    %5811 = vmatmul.mubr.f32.gmra.mrb[0].mxu0 %v3625
    %v5812 = vpop.f32.mrb[0].mxu0
    %v5813 = vadd.f32 0.0, %v5812
    %v5814 = vpop.f32.mrb[0].mxu0
    %5815 = vdwg.mxu0
    %v5816 = vld [vmem:[#allocation70] sm:$0xff]
    %v5817 = vld [vmem:[#allocation70 + $0x8] sm:$0xff]
    %v5818 = vld [vmem:[#allocation70 + $0x10] sm:$0xff]
    %v5819 = vld [vmem:[#allocation70 + $0x18] sm:$0xff]
    %v5820 = vld [vmem:[#allocation70 + $0x20] sm:$0xff]
    %v5822 = vsel %vm3437, %v5803, 0
    %v5825 = vsel %vm3437, %v5808, 0
    %v5828 = vsel %vm3437, %v5813, 0
    %5830 = vmatprep.subr.mxu0 0.0
    %5831 = vmatpush1.msra.mxu0 %v5816
    %5832 = vmatprep.subr.mxu0 0.0
    %5833 = vmatpush1.msra.mxu0 %v5817
    %5834 = vmatprep.subr.mxu0 0.0
    %5835 = vmatpush1.msra.mxu0 %v5818
    %5836 = vmatprep.subr.mxu0 0.0
    %5837 = vmatpush1.msra.mxu0 %v5819
    %5838 = vmatprep.subr.mxu0 0.0
    %5839 = vmatpush1.msra.mxu0 %v5820
    %5840 = vmatprep.subr.mxu0 0.0
    %5841 = vmatpush1.msra.mxu0 0.0
    %5842 = vmatprep.subr.mxu0 0.0
    %5843 = vmatpush1.msra.mxu0 0.0
    %5844 = vmatprep.subr.mxu0 0.0
    %5845 = vmatpush1.msra.mxu0 0.0
    %5846 = vmatprep.subr.mxu0 0.0
    %5847 = vmatpush1.msra.mxu0 0.0
    %5848 = vmatprep.subr.mxu0 0.0
    %5849 = vmatpush1.msra.mxu0 0.0
    %5850 = vmatprep.subr.mxu0 0.0
    %5851 = vmatpush1.msra.mxu0 0.0
    %5852 = vmatprep.subr.mxu0 0.0
    %5853 = vmatpush1.msra.mxu0 0.0
    %5854 = vmatprep.subr.mxu0 0.0
    %5855 = vmatpush1.msra.mxu0 0.0
    %5856 = vmatprep.subr.mxu0 0.0
    %5857 = vmatpush1.msra.mxu0 0.0
    %5858 = vmatprep.subr.mxu0 0.0
    %5859 = vmatpush1.msra.mxu0 0.0
    %5860 = vmatprep.subr.mxu0 0.0
    %5861 = vmatpush1.msra.mxu0 0.0
    %5862 = vmatprep.subr.mxu0 0.0
    %5863 = vmatpush1.msra.mxu0 0.0
    %5864 = vmatprep.subr.mxu0 0.0
    %5865 = vmatpush1.msra.mxu0 0.0
    %5866 = vmatprep.subr.mxu0 0.0
    %5867 = vmatpush1.msra.mxu0 0.0
    %5868 = vmatprep.subr.mxu0 0.0
    %5869 = vmatpush1.msra.mxu0 0.0
    %5870 = vmatprep.subr.mxu0 0.0
    %5871 = vmatpush1.msra.mxu0 0.0
    %5872 = vmatprep.subr.mxu0 0.0
    %5873 = vmatpush1.msra.mxu0 0.0
    %5874 = vmatprep.subr.mxu0 0.0
    %5875 = vmatpush1.msra.mxu0 0.0
    %5876 = vmatprep.subr.mxu0 0.0
    %5877 = vmatpush1.msra.mxu0 0.0
    %5878 = vmatprep.subr.mxu0 0.0
    %5879 = vmatpush1.msra.mxu0 0.0
    %5880 = vmatprep.subr.mxu0 0.0
    %5881 = vmatpush1.msra.mxu0 0.0
    %5882 = vmatprep.subr.mxu0 0.0
    %5883 = vmatpush1.msra.mxu0 0.0
    %5884 = vmatprep.subr.mxu0 0.0
    %5885 = vmatpush1.msra.mxu0 0.0
    %5886 = vmatprep.subr.mxu0 0.0
    %5887 = vmatpush1.msra.mxu0 0.0
    %5888 = vmatprep.subr.mxu0 0.0
    %5889 = vmatpush1.msra.mxu0 0.0
    %5890 = vmatprep.subr.mxu0 0.0
    %5891 = vmatpush1.msra.mxu0 0.0
    %5892 = vmatprep.subr.mxu0 0.0
    %5893 = vmatpush1.msra.mxu0 0.0
    %5894 = vmatprep.mubr.f32.mxu0 0.0
    %5895 = vmatmul.mubr.f32.gmra.mrb[0].mxu0 %v5822
    %v5896 = vpop.f32.mrb[0].mxu0
    %v5897 = vadd.f32 0.0, %v5896
    %v5898 = vpop.f32.mrb[0].mxu0
    %5899 = vmatprep.mubr.f32.mxu0 0.0
    %5900 = vmatmul.mubr.f32.gmra.mrb[0].mxu0 %v5825
    %v5901 = vpop.f32.mrb[0].mxu0
    %v5902 = vadd.f32 0.0, %v5901
    %v5903 = vpop.f32.mrb[0].mxu0
    %5904 = vmatprep.mubr.f32.mxu0 0.0
    %5905 = vmatmul.mubr.f32.gmra.mrb[0].mxu0 %v5828
    %v5906 = vpop.f32.mrb[0].mxu0
    %v5907 = vadd.f32 0.0, %v5906
    %v5908 = vpop.f32.mrb[0].mxu0
    %5909 = vdwg.mxu0
    %v5910 = vadd.f32 %v5723, %v5897
    %v5911 = vadd.f32 %v5728, %v5902
    %v5912 = vadd.f32 %v5733, %v5907
    %v5913 = vld [vmem:[#allocation71] sm:$0xff]
    %v5914 = vld [vmem:[#allocation71 + $0x8] sm:$0xff]
    %v5915 = vld [vmem:[#allocation71 + $0x10] sm:$0xf]
    %v5916 = vadd.f32 %v5910, %v5913
    %v5917 = vadd.f32 %v5911, %v5914
    %v5918 = vadd.f32 %v5912, %v5915
    %v5919 = vmax.f32 %v5916, 0.0
    %v5920 = vmax.f32 %v5917, 0.0
    %v5921 = vmax.f32 %v5918, 0.0
    %v5922 = vadd.f32 %v5919, %v5007
    %v5923 = vadd.f32 %v5920, %v5008
    %v5924 = vadd.f32 %v5921, %v5009
    %vm5925 = vcmp.ge.f32.partialorder %v5922, 0.0
    %vm5926 = vcmp.ge.f32.partialorder %v5923, 0.0
    %vm5927 = vcmp.ge.f32.partialorder %v5924, 0.0
    %v5928 = vmul.f32 %v5922, 0.01
    %v5929 = vmul.f32 %v5923, 0.01
    %v5930 = vmul.f32 %v5924, 0.01
    %v5931 = vsel %vm5925, %v5922, %v5928
    %v5932 = vsel %vm5926, %v5923, %v5929
    %v5933 = vsel %vm5927, %v5924, %v5930
    %v5934 = vld [vmem:[%s123] sm:$0xff]
    %v5935 = vld [vmem:[%s123 + $0x8] sm:$0xff]
    %v5936 = vld [vmem:[%s123 + $0x10] sm:$0xff]
    %v5937 = vld [vmem:[%s123 + $0x18] sm:$0xff]
    %v5938 = vld [vmem:[%s123 + $0x20] sm:$0xf]
    %v5939 = vld [vmem:[#allocation77] sm:$0xff]
    %v5940 = vld [vmem:[#allocation77 + $0x8] sm:$0xff]
    %v5941 = vld [vmem:[#allocation77 + $0x10] sm:$0xff]
    %v5942 = vld [vmem:[#allocation77 + $0x18] sm:$0xff]
    %v5943 = vld [vmem:[#allocation77 + $0x20] sm:$0xff]
    %v5945 = vsel %vm3437, %v5931, 0
    %v5948 = vsel %vm3437, %v5932, 0
    %v5951 = vsel %vm3437, %v5933, 0
    %5953 = vmatprep.subr.mxu0 0.0
    %5954 = vmatpush1.msra.mxu0 %v5939
    %5955 = vmatprep.subr.mxu0 0.0
    %5956 = vmatpush1.msra.mxu0 %v5940
    %5957 = vmatprep.subr.mxu0 0.0
    %5958 = vmatpush1.msra.mxu0 %v5941
    %5959 = vmatprep.subr.mxu0 0.0
    %5960 = vmatpush1.msra.mxu0 %v5942
    %5961 = vmatprep.subr.mxu0 0.0
    %5962 = vmatpush1.msra.mxu0 %v5943
    %5963 = vmatprep.subr.mxu0 0.0
    %5964 = vmatpush1.msra.mxu0 0.0
    %5965 = vmatprep.subr.mxu0 0.0
    %5966 = vmatpush1.msra.mxu0 0.0
    %5967 = vmatprep.subr.mxu0 0.0
    %5968 = vmatpush1.msra.mxu0 0.0
    %5969 = vmatprep.subr.mxu0 0.0
    %5970 = vmatpush1.msra.mxu0 0.0
    %5971 = vmatprep.subr.mxu0 0.0
    %5972 = vmatpush1.msra.mxu0 0.0
    %5973 = vmatprep.subr.mxu0 0.0
    %5974 = vmatpush1.msra.mxu0 0.0
    %5975 = vmatprep.subr.mxu0 0.0
    %5976 = vmatpush1.msra.mxu0 0.0
    %5977 = vmatprep.subr.mxu0 0.0
    %5978 = vmatpush1.msra.mxu0 0.0
    %5979 = vmatprep.subr.mxu0 0.0
    %5980 = vmatpush1.msra.mxu0 0.0
    %5981 = vmatprep.subr.mxu0 0.0
    %5982 = vmatpush1.msra.mxu0 0.0
    %5983 = vmatprep.subr.mxu0 0.0
    %5984 = vmatpush1.msra.mxu0 0.0
    %5985 = vmatprep.subr.mxu0 0.0
    %5986 = vmatpush1.msra.mxu0 0.0
    %5987 = vmatprep.subr.mxu0 0.0
    %5988 = vmatpush1.msra.mxu0 0.0
    %5989 = vmatprep.subr.mxu0 0.0
    %5990 = vmatpush1.msra.mxu0 0.0
    %5991 = vmatprep.subr.mxu0 0.0
    %5992 = vmatpush1.msra.mxu0 0.0
    %5993 = vmatprep.subr.mxu0 0.0
    %5994 = vmatpush1.msra.mxu0 0.0
    %5995 = vmatprep.subr.mxu0 0.0
    %5996 = vmatpush1.msra.mxu0 0.0
    %5997 = vmatprep.subr.mxu0 0.0
    %5998 = vmatpush1.msra.mxu0 0.0
    %5999 = vmatprep.subr.mxu0 0.0
    %6000 = vmatpush1.msra.mxu0 0.0
    %6001 = vmatprep.subr.mxu0 0.0
    %6002 = vmatpush1.msra.mxu0 0.0
    %6003 = vmatprep.subr.mxu0 0.0
    %6004 = vmatpush1.msra.mxu0 0.0
    %6005 = vmatprep.subr.mxu0 0.0
    %6006 = vmatpush1.msra.mxu0 0.0
    %6007 = vmatprep.subr.mxu0 0.0
    %6008 = vmatpush1.msra.mxu0 0.0
    %6009 = vmatprep.subr.mxu0 0.0
    %6010 = vmatpush1.msra.mxu0 0.0
    %6011 = vmatprep.subr.mxu0 0.0
    %6012 = vmatpush1.msra.mxu0 0.0
    %6013 = vmatprep.subr.mxu0 0.0
    %6014 = vmatpush1.msra.mxu0 0.0
    %6015 = vmatprep.subr.mxu0 0.0
    %6016 = vmatpush1.msra.mxu0 0.0
    %6017 = vmatprep.mubr.f32.mxu0 0.0
    %6018 = vmatmul.mubr.f32.gmra.mrb[0].mxu0 %v5945
    %v6019 = vpop.f32.mrb[0].mxu0
    %v6020 = vadd.f32 0.0, %v6019
    %v6021 = vpop.f32.mrb[0].mxu0
    %6022 = vmatprep.mubr.f32.mxu0 0.0
    %6023 = vmatmul.mubr.f32.gmra.mrb[0].mxu0 %v5948
    %v6024 = vpop.f32.mrb[0].mxu0
    %v6025 = vadd.f32 0.0, %v6024
    %v6026 = vpop.f32.mrb[0].mxu0
    %6027 = vmatprep.mubr.f32.mxu0 0.0
    %6028 = vmatmul.mubr.f32.gmra.mrb[0].mxu0 %v5951
    %v6029 = vpop.f32.mrb[0].mxu0
    %v6030 = vadd.f32 0.0, %v6029
    %v6031 = vpop.f32.mrb[0].mxu0
    %6032 = vdwg.mxu0
    %v6033 = vld [vmem:[%s121] sm:$0xff]
    %v6034 = vld [vmem:[%s121 + $0x8] sm:$0xff]
    %v6035 = vld [vmem:[%s121 + $0x10] sm:$0xff]
    %v6036 = vld [vmem:[%s121 + $0x18] sm:$0xff]
    %v6037 = vld [vmem:[%s121 + $0x20] sm:$0xf]
    %v6039 = vsel %vm3339, %v5934, 0
    %v6042 = vsel %vm3339, %v5935, 0
    %v6045 = vsel %vm3339, %v5936, 0
    %v6048 = vsel %vm3339, %v5937, 0
    %v6051 = vsel %vm3339, %v5938, 0
    %v6054 = vsel %vm1130, %v6030, 0
    %6056 = vmatprep.subr.mxu0 0.0
    %6057 = vmatpush1.msra.mxu0 %v6020
    %6058 = vmatprep.subr.mxu0 0.0
    %6059 = vmatpush1.msra.mxu0 %v6025
    %6060 = vmatprep.subr.mxu0 0.0
    %6061 = vmatpush1.msra.mxu0 %v6054
    %6062 = vmatprep.subr.mxu0 0.0
    %6063 = vmatpush1.msra.mxu0 0.0
    %6064 = vmatprep.subr.mxu0 0.0
    %6065 = vmatpush1.msra.mxu0 0.0
    %6066 = vmatprep.subr.mxu0 0.0
    %6067 = vmatpush1.msra.mxu0 0.0
    %6068 = vmatprep.subr.mxu0 0.0
    %6069 = vmatpush1.msra.mxu0 0.0
    %6070 = vmatprep.subr.mxu0 0.0
    %6071 = vmatpush1.msra.mxu0 0.0
    %6072 = vmatprep.subr.mxu0 0.0
    %6073 = vmatpush1.msra.mxu0 0.0
    %6074 = vmatprep.subr.mxu0 0.0
    %6075 = vmatpush1.msra.mxu0 0.0
    %6076 = vmatprep.subr.mxu0 0.0
    %6077 = vmatpush1.msra.mxu0 0.0
    %6078 = vmatprep.subr.mxu0 0.0
    %6079 = vmatpush1.msra.mxu0 0.0
    %6080 = vmatprep.subr.mxu0 0.0
    %6081 = vmatpush1.msra.mxu0 0.0
    %6082 = vmatprep.subr.mxu0 0.0
    %6083 = vmatpush1.msra.mxu0 0.0
    %6084 = vmatprep.subr.mxu0 0.0
    %6085 = vmatpush1.msra.mxu0 0.0
    %6086 = vmatprep.subr.mxu0 0.0
    %6087 = vmatpush1.msra.mxu0 0.0
    %6088 = vmatprep.subr.mxu0 0.0
    %6089 = vmatpush1.msra.mxu0 0.0
    %6090 = vmatprep.subr.mxu0 0.0
    %6091 = vmatpush1.msra.mxu0 0.0
    %6092 = vmatprep.subr.mxu0 0.0
    %6093 = vmatpush1.msra.mxu0 0.0
    %6094 = vmatprep.subr.mxu0 0.0
    %6095 = vmatpush1.msra.mxu0 0.0
    %6096 = vmatprep.subr.mxu0 0.0
    %6097 = vmatpush1.msra.mxu0 0.0
    %6098 = vmatprep.subr.mxu0 0.0
    %6099 = vmatpush1.msra.mxu0 0.0
    %6100 = vmatprep.subr.mxu0 0.0
    %6101 = vmatpush1.msra.mxu0 0.0
    %6102 = vmatprep.subr.mxu0 0.0
    %6103 = vmatpush1.msra.mxu0 0.0
    %6104 = vmatprep.subr.mxu0 0.0
    %6105 = vmatpush1.msra.mxu0 0.0
    %6106 = vmatprep.subr.mxu0 0.0
    %6107 = vmatpush1.msra.mxu0 0.0
    %6108 = vmatprep.subr.mxu0 0.0
    %6109 = vmatpush1.msra.mxu0 0.0
    %6110 = vmatprep.subr.mxu0 0.0
    %6111 = vmatpush1.msra.mxu0 0.0
    %6112 = vmatprep.subr.mxu0 0.0
    %6113 = vmatpush1.msra.mxu0 0.0
    %6114 = vmatprep.subr.mxu0 0.0
    %6115 = vmatpush1.msra.mxu0 0.0
    %6116 = vmatprep.subr.mxu0 0.0
    %6117 = vmatpush1.msra.mxu0 0.0
    %6118 = vmatprep.subr.mxu0 0.0
    %6119 = vmatpush1.msra.mxu0 0.0
    %6120 = vmatprep.mubr.f32.mxu0 0.0
    %6121 = vmatmul.mubr.f32.gmra.mrb[0].mxu0 %v6039
    %v6122 = vpop.f32.mrb[0].mxu0
    %v6123 = vadd.f32 %v6033, %v6122
    %v6124 = vpop.f32.mrb[0].mxu0
    %6125 = vmatprep.mubr.f32.mxu0 0.0
    %6126 = vmatmul.mubr.f32.gmra.mrb[0].mxu0 %v6042
    %v6127 = vpop.f32.mrb[0].mxu0
    %v6128 = vadd.f32 %v6034, %v6127
    %v6129 = vpop.f32.mrb[0].mxu0
    %6130 = vmatprep.mubr.f32.mxu0 0.0
    %6131 = vmatmul.mubr.f32.gmra.mrb[0].mxu0 %v6045
    %v6132 = vpop.f32.mrb[0].mxu0
    %v6133 = vadd.f32 %v6035, %v6132
    %v6134 = vpop.f32.mrb[0].mxu0
    %6135 = vmatprep.mubr.f32.mxu0 0.0
    %6136 = vmatmul.mubr.f32.gmra.mrb[0].mxu0 %v6048
    %v6137 = vpop.f32.mrb[0].mxu0
    %v6138 = vadd.f32 %v6036, %v6137
    %v6139 = vpop.f32.mrb[0].mxu0
    %6140 = vmatprep.mubr.f32.mxu0 0.0
    %6141 = vmatmul.mubr.f32.gmra.mrb[0].mxu0 %v6051
    %v6142 = vpop.f32.mrb[0].mxu0
    %v6143 = vadd.f32 %v6037, %v6142
    %v6144 = vpop.f32.mrb[0].mxu0
    %6145 = vdwg.mxu0
    %v6146 = vld [vmem:[%s111] sm:$0xff]
    %v6147 = vld [vmem:[%s111 + $0x8] sm:$0xff]
    %v6148 = vld [vmem:[%s111 + $0x10] sm:$0xff]
    %v6149 = vld [vmem:[%s111 + $0x18] sm:$0xff]
    %v6150 = vld [vmem:[%s111 + $0x20] sm:$0xf]
    %v6151 = vld [vmem:[#allocation73] sm:$0xff]
    %v6152 = vld [vmem:[#allocation73 + $0x8] sm:$0xff]
    %v6153 = vld [vmem:[#allocation73 + $0x10] sm:$0xff]
    %v6154 = vld [vmem:[#allocation73 + $0x18] sm:$0xff]
    %v6155 = vld [vmem:[#allocation73 + $0x20] sm:$0xff]
    %6156 = vmatprep.subr.mxu0 0.0
    %6157 = vmatpush1.msra.mxu0 %v6151
    %6158 = vmatprep.subr.mxu0 0.0
    %6159 = vmatpush1.msra.mxu0 %v6152
    %6160 = vmatprep.subr.mxu0 0.0
    %6161 = vmatpush1.msra.mxu0 %v6153
    %6162 = vmatprep.subr.mxu0 0.0
    %6163 = vmatpush1.msra.mxu0 %v6154
    %6164 = vmatprep.subr.mxu0 0.0
    %6165 = vmatpush1.msra.mxu0 %v6155
    %6166 = vmatprep.subr.mxu0 0.0
    %6167 = vmatpush1.msra.mxu0 0.0
    %6168 = vmatprep.subr.mxu0 0.0
    %6169 = vmatpush1.msra.mxu0 0.0
    %6170 = vmatprep.subr.mxu0 0.0
    %6171 = vmatpush1.msra.mxu0 0.0
    %6172 = vmatprep.subr.mxu0 0.0
    %6173 = vmatpush1.msra.mxu0 0.0
    %6174 = vmatprep.subr.mxu0 0.0
    %6175 = vmatpush1.msra.mxu0 0.0
    %6176 = vmatprep.subr.mxu0 0.0
    %6177 = vmatpush1.msra.mxu0 0.0
    %6178 = vmatprep.subr.mxu0 0.0
    %6179 = vmatpush1.msra.mxu0 0.0
    %6180 = vmatprep.subr.mxu0 0.0
    %6181 = vmatpush1.msra.mxu0 0.0
    %6182 = vmatprep.subr.mxu0 0.0
    %6183 = vmatpush1.msra.mxu0 0.0
    %6184 = vmatprep.subr.mxu0 0.0
    %6185 = vmatpush1.msra.mxu0 0.0
    %6186 = vmatprep.subr.mxu0 0.0
    %6187 = vmatpush1.msra.mxu0 0.0
    %6188 = vmatprep.subr.mxu0 0.0
    %6189 = vmatpush1.msra.mxu0 0.0
    %6190 = vmatprep.subr.mxu0 0.0
    %6191 = vmatpush1.msra.mxu0 0.0
    %6192 = vmatprep.subr.mxu0 0.0
    %6193 = vmatpush1.msra.mxu0 0.0
    %6194 = vmatprep.subr.mxu0 0.0
    %6195 = vmatpush1.msra.mxu0 0.0
    %6196 = vmatprep.subr.mxu0 0.0
    %6197 = vmatpush1.msra.mxu0 0.0
    %6198 = vmatprep.subr.mxu0 0.0
    %6199 = vmatpush1.msra.mxu0 0.0
    %6200 = vmatprep.subr.mxu0 0.0
    %6201 = vmatpush1.msra.mxu0 0.0
    %6202 = vmatprep.subr.mxu0 0.0
    %6203 = vmatpush1.msra.mxu0 0.0
    %6204 = vmatprep.subr.mxu0 0.0
    %6205 = vmatpush1.msra.mxu0 0.0
    %6206 = vmatprep.subr.mxu0 0.0
    %6207 = vmatpush1.msra.mxu0 0.0
    %6208 = vmatprep.subr.mxu0 0.0
    %6209 = vmatpush1.msra.mxu0 0.0
    %6210 = vmatprep.subr.mxu0 0.0
    %6211 = vmatpush1.msra.mxu0 0.0
    %6212 = vmatprep.subr.mxu0 0.0
    %6213 = vmatpush1.msra.mxu0 0.0
    %6214 = vmatprep.subr.mxu0 0.0
    %6215 = vmatpush1.msra.mxu0 0.0
    %6216 = vmatprep.subr.mxu0 0.0
    %6217 = vmatpush1.msra.mxu0 0.0
    %6218 = vmatprep.subr.mxu0 0.0
    %6219 = vmatpush1.msra.mxu0 0.0
    %6220 = vmatprep.mubr.f32.mxu0 0.0
    %6221 = vmatmul.mubr.f32.gmra.mrb[0].mxu0 %v5945
    %v6222 = vpop.f32.mrb[0].mxu0
    %v6223 = vadd.f32 0.0, %v6222
    %v6224 = vpop.f32.mrb[0].mxu0
    %6225 = vmatprep.mubr.f32.mxu0 0.0
    %6226 = vmatmul.mubr.f32.gmra.mrb[0].mxu0 %v5948
    %v6227 = vpop.f32.mrb[0].mxu0
    %v6228 = vadd.f32 0.0, %v6227
    %v6229 = vpop.f32.mrb[0].mxu0
    %6230 = vmatprep.mubr.f32.mxu0 0.0
    %6231 = vmatmul.mubr.f32.gmra.mrb[0].mxu0 %v5951
    %v6232 = vpop.f32.mrb[0].mxu0
    %v6233 = vadd.f32 0.0, %v6232
    %v6234 = vpop.f32.mrb[0].mxu0
    %6235 = vdwg.mxu0
    %v6236 = vld [vmem:[%s115] sm:$0xff]
    %v6237 = vld [vmem:[%s115 + $0x8] sm:$0xff]
    %v6238 = vld [vmem:[%s115 + $0x10] sm:$0xff]
    %v6239 = vld [vmem:[%s115 + $0x18] sm:$0xff]
    %v6240 = vld [vmem:[%s115 + $0x20] sm:$0xf]
    %v6241 = vld [vmem:[#allocation74] sm:$0xff]
    %v6242 = vld [vmem:[#allocation74 + $0x8] sm:$0xff]
    %v6243 = vld [vmem:[#allocation74 + $0x10] sm:$0xff]
    %v6244 = vld [vmem:[#allocation74 + $0x18] sm:$0xff]
    %v6245 = vld [vmem:[#allocation74 + $0x20] sm:$0xff]
    %6246 = vmatprep.subr.mxu0 0.0
    %6247 = vmatpush1.msra.mxu0 %v6241
    %6248 = vmatprep.subr.mxu0 0.0
    %6249 = vmatpush1.msra.mxu0 %v6242
    %6250 = vmatprep.subr.mxu0 0.0
    %6251 = vmatpush1.msra.mxu0 %v6243
    %6252 = vmatprep.subr.mxu0 0.0
    %6253 = vmatpush1.msra.mxu0 %v6244
    %6254 = vmatprep.subr.mxu0 0.0
    %6255 = vmatpush1.msra.mxu0 %v6245
    %6256 = vmatprep.subr.mxu0 0.0
    %6257 = vmatpush1.msra.mxu0 0.0
    %6258 = vmatprep.subr.mxu0 0.0
    %6259 = vmatpush1.msra.mxu0 0.0
    %6260 = vmatprep.subr.mxu0 0.0
    %6261 = vmatpush1.msra.mxu0 0.0
    %6262 = vmatprep.subr.mxu0 0.0
    %6263 = vmatpush1.msra.mxu0 0.0
    %6264 = vmatprep.subr.mxu0 0.0
    %6265 = vmatpush1.msra.mxu0 0.0
    %6266 = vmatprep.subr.mxu0 0.0
    %6267 = vmatpush1.msra.mxu0 0.0
    %6268 = vmatprep.subr.mxu0 0.0
    %6269 = vmatpush1.msra.mxu0 0.0
    %6270 = vmatprep.subr.mxu0 0.0
    %6271 = vmatpush1.msra.mxu0 0.0
    %6272 = vmatprep.subr.mxu0 0.0
    %6273 = vmatpush1.msra.mxu0 0.0
    %6274 = vmatprep.subr.mxu0 0.0
    %6275 = vmatpush1.msra.mxu0 0.0
    %6276 = vmatprep.subr.mxu0 0.0
    %6277 = vmatpush1.msra.mxu0 0.0
    %6278 = vmatprep.subr.mxu0 0.0
    %6279 = vmatpush1.msra.mxu0 0.0
    %6280 = vmatprep.subr.mxu0 0.0
    %6281 = vmatpush1.msra.mxu0 0.0
    %6282 = vmatprep.subr.mxu0 0.0
    %6283 = vmatpush1.msra.mxu0 0.0
    %6284 = vmatprep.subr.mxu0 0.0
    %6285 = vmatpush1.msra.mxu0 0.0
    %6286 = vmatprep.subr.mxu0 0.0
    %6287 = vmatpush1.msra.mxu0 0.0
    %6288 = vmatprep.subr.mxu0 0.0
    %6289 = vmatpush1.msra.mxu0 0.0
    %6290 = vmatprep.subr.mxu0 0.0
    %6291 = vmatpush1.msra.mxu0 0.0
    %6292 = vmatprep.subr.mxu0 0.0
    %6293 = vmatpush1.msra.mxu0 0.0
    %6294 = vmatprep.subr.mxu0 0.0
    %6295 = vmatpush1.msra.mxu0 0.0
    %6296 = vmatprep.subr.mxu0 0.0
    %6297 = vmatpush1.msra.mxu0 0.0
    %6298 = vmatprep.subr.mxu0 0.0
    %6299 = vmatpush1.msra.mxu0 0.0
    %6300 = vmatprep.subr.mxu0 0.0
    %6301 = vmatpush1.msra.mxu0 0.0
    %6302 = vmatprep.subr.mxu0 0.0
    %6303 = vmatpush1.msra.mxu0 0.0
    %6304 = vmatprep.subr.mxu0 0.0
    %6305 = vmatpush1.msra.mxu0 0.0
    %6306 = vmatprep.subr.mxu0 0.0
    %6307 = vmatpush1.msra.mxu0 0.0
    %6308 = vmatprep.subr.mxu0 0.0
    %6309 = vmatpush1.msra.mxu0 0.0
    %6310 = vmatprep.mubr.f32.mxu0 0.0
    %6311 = vmatmul.mubr.f32.gmra.mrb[0].mxu0 %v5945
    %v6312 = vpop.f32.mrb[0].mxu0
    %v6313 = vadd.f32 0.0, %v6312
    %v6314 = vpop.f32.mrb[0].mxu0
    %6315 = vmatprep.mubr.f32.mxu0 0.0
    %6316 = vmatmul.mubr.f32.gmra.mrb[0].mxu0 %v5948
    %v6317 = vpop.f32.mrb[0].mxu0
    %v6318 = vadd.f32 0.0, %v6317
    %v6319 = vpop.f32.mrb[0].mxu0
    %6320 = vmatprep.mubr.f32.mxu0 0.0
    %6321 = vmatmul.mubr.f32.gmra.mrb[0].mxu0 %v5951
    %v6322 = vpop.f32.mrb[0].mxu0
    %v6323 = vadd.f32 0.0, %v6322
    %v6324 = vpop.f32.mrb[0].mxu0
    %6325 = vdwg.mxu0
    %v6327 = vsel %vm3339, %v6236, 0
    %v6330 = vsel %vm3339, %v6237, 0
    %v6333 = vsel %vm3339, %v6238, 0
    %v6336 = vsel %vm3339, %v6239, 0
    %v6339 = vsel %vm3339, %v6240, 0
    %v6342 = vsel %vm1130, %v6323, 0
    %6344 = vmatprep.subr.mxu0 0.0
    %6345 = vmatpush1.msra.mxu0 %v6313
    %6346 = vmatprep.subr.mxu0 0.0
    %6347 = vmatpush1.msra.mxu0 %v6318
    %6348 = vmatprep.subr.mxu0 0.0
    %6349 = vmatpush1.msra.mxu0 %v6342
    %6350 = vmatprep.subr.mxu0 0.0
    %6351 = vmatpush1.msra.mxu0 0.0
    %6352 = vmatprep.subr.mxu0 0.0
    %6353 = vmatpush1.msra.mxu0 0.0
    %6354 = vmatprep.subr.mxu0 0.0
    %6355 = vmatpush1.msra.mxu0 0.0
    %6356 = vmatprep.subr.mxu0 0.0
    %6357 = vmatpush1.msra.mxu0 0.0
    %6358 = vmatprep.subr.mxu0 0.0
    %6359 = vmatpush1.msra.mxu0 0.0
    %6360 = vmatprep.subr.mxu0 0.0
    %6361 = vmatpush1.msra.mxu0 0.0
    %6362 = vmatprep.subr.mxu0 0.0
    %6363 = vmatpush1.msra.mxu0 0.0
    %6364 = vmatprep.subr.mxu0 0.0
    %6365 = vmatpush1.msra.mxu0 0.0
    %6366 = vmatprep.subr.mxu0 0.0
    %6367 = vmatpush1.msra.mxu0 0.0
    %6368 = vmatprep.subr.mxu0 0.0
    %6369 = vmatpush1.msra.mxu0 0.0
    %6370 = vmatprep.subr.mxu0 0.0
    %6371 = vmatpush1.msra.mxu0 0.0
    %6372 = vmatprep.subr.mxu0 0.0
    %6373 = vmatpush1.msra.mxu0 0.0
    %6374 = vmatprep.subr.mxu0 0.0
    %6375 = vmatpush1.msra.mxu0 0.0
    %6376 = vmatprep.subr.mxu0 0.0
    %6377 = vmatpush1.msra.mxu0 0.0
    %6378 = vmatprep.subr.mxu0 0.0
    %6379 = vmatpush1.msra.mxu0 0.0
    %6380 = vmatprep.subr.mxu0 0.0
    %6381 = vmatpush1.msra.mxu0 0.0
    %6382 = vmatprep.subr.mxu0 0.0
    %6383 = vmatpush1.msra.mxu0 0.0
    %6384 = vmatprep.subr.mxu0 0.0
    %6385 = vmatpush1.msra.mxu0 0.0
    %6386 = vmatprep.subr.mxu0 0.0
    %6387 = vmatpush1.msra.mxu0 0.0
    %6388 = vmatprep.subr.mxu0 0.0
    %6389 = vmatpush1.msra.mxu0 0.0
    %6390 = vmatprep.subr.mxu0 0.0
    %6391 = vmatpush1.msra.mxu0 0.0
    %6392 = vmatprep.subr.mxu0 0.0
    %6393 = vmatpush1.msra.mxu0 0.0
    %6394 = vmatprep.subr.mxu0 0.0
    %6395 = vmatpush1.msra.mxu0 0.0
    %6396 = vmatprep.subr.mxu0 0.0
    %6397 = vmatpush1.msra.mxu0 0.0
    %6398 = vmatprep.subr.mxu0 0.0
    %6399 = vmatpush1.msra.mxu0 0.0
    %6400 = vmatprep.subr.mxu0 0.0
    %6401 = vmatpush1.msra.mxu0 0.0
    %6402 = vmatprep.subr.mxu0 0.0
    %6403 = vmatpush1.msra.mxu0 0.0
    %6404 = vmatprep.subr.mxu0 0.0
    %6405 = vmatpush1.msra.mxu0 0.0
    %6406 = vmatprep.subr.mxu0 0.0
    %6407 = vmatpush1.msra.mxu0 0.0
    %6408 = vmatprep.mubr.f32.mxu0 0.0
    %6409 = vmatmul.mubr.f32.gmra.mrb[0].mxu0 %v6327
    %v6410 = vpop.f32.mrb[0].mxu0
    %v6411 = vadd.f32 0.0, %v6410
    %v6412 = vpop.f32.mrb[0].mxu0
    %6413 = vmatprep.mubr.f32.mxu0 0.0
    %6414 = vmatmul.mubr.f32.gmra.mrb[0].mxu0 %v6330
    %v6415 = vpop.f32.mrb[0].mxu0
    %v6416 = vadd.f32 0.0, %v6415
    %v6417 = vpop.f32.mrb[0].mxu0
    %6418 = vmatprep.mubr.f32.mxu0 0.0
    %6419 = vmatmul.mubr.f32.gmra.mrb[0].mxu0 %v6333
    %v6420 = vpop.f32.mrb[0].mxu0
    %v6421 = vadd.f32 0.0, %v6420
    %v6422 = vpop.f32.mrb[0].mxu0
    %6423 = vmatprep.mubr.f32.mxu0 0.0
    %6424 = vmatmul.mubr.f32.gmra.mrb[0].mxu0 %v6336
    %v6425 = vpop.f32.mrb[0].mxu0
    %v6426 = vadd.f32 0.0, %v6425
    %v6427 = vpop.f32.mrb[0].mxu0
    %6428 = vmatprep.mubr.f32.mxu0 0.0
    %6429 = vmatmul.mubr.f32.gmra.mrb[0].mxu0 %v6339
    %v6430 = vpop.f32.mrb[0].mxu0
    %v6431 = vadd.f32 0.0, %v6430
    %v6432 = vpop.f32.mrb[0].mxu0
    %6433 = vdwg.mxu0
    %v6435 = vsel %vm3339, %v6146, 0
    %v6438 = vsel %vm3339, %v6147, 0
    %v6441 = vsel %vm3339, %v6148, 0
    %v6444 = vsel %vm3339, %v6149, 0
    %v6447 = vsel %vm3339, %v6150, 0
    %v6450 = vsel %vm1130, %v6233, 0
    %6452 = vmatprep.subr.mxu0 0.0
    %6453 = vmatpush1.msra.mxu0 %v6223
    %6454 = vmatprep.subr.mxu0 0.0
    %6455 = vmatpush1.msra.mxu0 %v6228
    %6456 = vmatprep.subr.mxu0 0.0
    %6457 = vmatpush1.msra.mxu0 %v6450
    %6458 = vmatprep.subr.mxu0 0.0
    %6459 = vmatpush1.msra.mxu0 0.0
    %6460 = vmatprep.subr.mxu0 0.0
    %6461 = vmatpush1.msra.mxu0 0.0
    %6462 = vmatprep.subr.mxu0 0.0
    %6463 = vmatpush1.msra.mxu0 0.0
    %6464 = vmatprep.subr.mxu0 0.0
    %6465 = vmatpush1.msra.mxu0 0.0
    %6466 = vmatprep.subr.mxu0 0.0
    %6467 = vmatpush1.msra.mxu0 0.0
    %6468 = vmatprep.subr.mxu0 0.0
    %6469 = vmatpush1.msra.mxu0 0.0
    %6470 = vmatprep.subr.mxu0 0.0
    %6471 = vmatpush1.msra.mxu0 0.0
    %6472 = vmatprep.subr.mxu0 0.0
    %6473 = vmatpush1.msra.mxu0 0.0
    %6474 = vmatprep.subr.mxu0 0.0
    %6475 = vmatpush1.msra.mxu0 0.0
    %6476 = vmatprep.subr.mxu0 0.0
    %6477 = vmatpush1.msra.mxu0 0.0
    %6478 = vmatprep.subr.mxu0 0.0
    %6479 = vmatpush1.msra.mxu0 0.0
    %6480 = vmatprep.subr.mxu0 0.0
    %6481 = vmatpush1.msra.mxu0 0.0
    %6482 = vmatprep.subr.mxu0 0.0
    %6483 = vmatpush1.msra.mxu0 0.0
    %6484 = vmatprep.subr.mxu0 0.0
    %6485 = vmatpush1.msra.mxu0 0.0
    %6486 = vmatprep.subr.mxu0 0.0
    %6487 = vmatpush1.msra.mxu0 0.0
    %6488 = vmatprep.subr.mxu0 0.0
    %6489 = vmatpush1.msra.mxu0 0.0
    %6490 = vmatprep.subr.mxu0 0.0
    %6491 = vmatpush1.msra.mxu0 0.0
    %6492 = vmatprep.subr.mxu0 0.0
    %6493 = vmatpush1.msra.mxu0 0.0
    %6494 = vmatprep.subr.mxu0 0.0
    %6495 = vmatpush1.msra.mxu0 0.0
    %6496 = vmatprep.subr.mxu0 0.0
    %6497 = vmatpush1.msra.mxu0 0.0
    %6498 = vmatprep.subr.mxu0 0.0
    %6499 = vmatpush1.msra.mxu0 0.0
    %6500 = vmatprep.subr.mxu0 0.0
    %6501 = vmatpush1.msra.mxu0 0.0
    %6502 = vmatprep.subr.mxu0 0.0
    %6503 = vmatpush1.msra.mxu0 0.0
    %6504 = vmatprep.subr.mxu0 0.0
    %6505 = vmatpush1.msra.mxu0 0.0
    %6506 = vmatprep.subr.mxu0 0.0
    %6507 = vmatpush1.msra.mxu0 0.0
    %6508 = vmatprep.subr.mxu0 0.0
    %6509 = vmatpush1.msra.mxu0 0.0
    %6510 = vmatprep.subr.mxu0 0.0
    %6511 = vmatpush1.msra.mxu0 0.0
    %6512 = vmatprep.subr.mxu0 0.0
    %6513 = vmatpush1.msra.mxu0 0.0
    %6514 = vmatprep.subr.mxu0 0.0
    %6515 = vmatpush1.msra.mxu0 0.0
    %6516 = vmatprep.mubr.f32.mxu0 0.0
    %6517 = vmatmul.mubr.f32.gmra.mrb[0].mxu0 %v6435
    %v6518 = vpop.f32.mrb[0].mxu0
    %v6519 = vadd.f32 %v6411, %v6518
    %v6520 = vpop.f32.mrb[0].mxu0
    %6521 = vmatprep.mubr.f32.mxu0 0.0
    %6522 = vmatmul.mubr.f32.gmra.mrb[0].mxu0 %v6438
    %v6523 = vpop.f32.mrb[0].mxu0
    %v6524 = vadd.f32 %v6416, %v6523
    %v6525 = vpop.f32.mrb[0].mxu0
    %6526 = vmatprep.mubr.f32.mxu0 0.0
    %6527 = vmatmul.mubr.f32.gmra.mrb[0].mxu0 %v6441
    %v6528 = vpop.f32.mrb[0].mxu0
    %v6529 = vadd.f32 %v6421, %v6528
    %v6530 = vpop.f32.mrb[0].mxu0
    %6531 = vmatprep.mubr.f32.mxu0 0.0
    %6532 = vmatmul.mubr.f32.gmra.mrb[0].mxu0 %v6444
    %v6533 = vpop.f32.mrb[0].mxu0
    %v6534 = vadd.f32 %v6426, %v6533
    %v6535 = vpop.f32.mrb[0].mxu0
    %6536 = vmatprep.mubr.f32.mxu0 0.0
    %6537 = vmatmul.mubr.f32.gmra.mrb[0].mxu0 %v6447
    %v6538 = vpop.f32.mrb[0].mxu0
    %v6539 = vadd.f32 %v6431, %v6538
    %v6540 = vpop.f32.mrb[0].mxu0
    %6541 = vdwg.mxu0
    %v6542 = vld [vmem:[#allocation76] sm:$0xff]
    %v6543 = vld [vmem:[#allocation76 + $0x8] sm:$0xff]
    %v6544 = vld [vmem:[#allocation76 + $0x10] sm:$0xff]
    %v6545 = vld [vmem:[#allocation76 + $0x18] sm:$0xff]
    %v6546 = vld [vmem:[#allocation76 + $0x20] sm:$0xf]
    %v6547 = vadd.f32 %v6519, %v6542
    %v6548 = vadd.f32 %v6524, %v6543
    %v6549 = vadd.f32 %v6529, %v6544
    %v6550 = vadd.f32 %v6534, %v6545
    %v6551 = vadd.f32 %v6539, %v6546
    %v6552 = vmax.f32 %v6547, 0.0
    %v6553 = vmax.f32 %v6548, 0.0
    %v6554 = vmax.f32 %v6549, 0.0
    %v6555 = vmax.f32 %v6550, 0.0
    %v6556 = vmax.f32 %v6551, 0.0
    %v6557 = vld [vmem:[%s127] sm:$0xff]
    %v6558 = vld [vmem:[%s127 + $0x8] sm:$0xff]
    %v6559 = vld [vmem:[%s127 + $0x10] sm:$0xff]
    %v6560 = vld [vmem:[%s127 + $0x18] sm:$0xff]
    %v6561 = vld [vmem:[%s127 + $0x20] sm:$0xff]
    %v6562 = vld [vmem:[%s127 + $0x28] sm:$0xff]
    %v6563 = vld [vmem:[%s127 + $0x30] sm:$0xff]
    %v6564 = vld [vmem:[%s127 + $0x38] sm:$0xff]
    %v6565 = vld [vmem:[%s127 + $0x40] sm:$0xff]
    %v6566 = vld [vmem:[#allocation80] sm:$0xff]
    %v6567 = vld [vmem:[#allocation80 + $0x8] sm:$0xff]
    %v6568 = vld [vmem:[#allocation80 + $0x10] sm:$0xff]
    %v6569 = vld [vmem:[#allocation80 + $0x18] sm:$0xff]
    %v6570 = vld [vmem:[#allocation80 + $0x20] sm:$0xf]
    %v6572 = vsel %vm3927, %v6566, 0
    %v6575 = vsel %vm3927, %v6567, 0
    %v6578 = vsel %vm3927, %v6568, 0
    %v6581 = vsel %vm3927, %v6569, 0
    %v6584 = vsel %vm3927, %v6570, 0
    %v6587 = vsel %vm1130, %v6556, 0
    %6589 = vmatprep.subr.mxu0 0.0
    %6590 = vmatpush1.msra.mxu0 %v6552
    %6591 = vmatprep.subr.mxu0 0.0
    %6592 = vmatpush1.msra.mxu0 %v6553
    %6593 = vmatprep.subr.mxu0 0.0
    %6594 = vmatpush1.msra.mxu0 %v6554
    %6595 = vmatprep.subr.mxu0 0.0
    %6596 = vmatpush1.msra.mxu0 %v6555
    %6597 = vmatprep.subr.mxu0 0.0
    %6598 = vmatpush1.msra.mxu0 %v6587
    %6599 = vmatprep.subr.mxu0 0.0
    %6600 = vmatpush1.msra.mxu0 0.0
    %6601 = vmatprep.subr.mxu0 0.0
    %6602 = vmatpush1.msra.mxu0 0.0
    %6603 = vmatprep.subr.mxu0 0.0
    %6604 = vmatpush1.msra.mxu0 0.0
    %6605 = vmatprep.subr.mxu0 0.0
    %6606 = vmatpush1.msra.mxu0 0.0
    %6607 = vmatprep.subr.mxu0 0.0
    %6608 = vmatpush1.msra.mxu0 0.0
    %6609 = vmatprep.subr.mxu0 0.0
    %6610 = vmatpush1.msra.mxu0 0.0
    %6611 = vmatprep.subr.mxu0 0.0
    %6612 = vmatpush1.msra.mxu0 0.0
    %6613 = vmatprep.subr.mxu0 0.0
    %6614 = vmatpush1.msra.mxu0 0.0
    %6615 = vmatprep.subr.mxu0 0.0
    %6616 = vmatpush1.msra.mxu0 0.0
    %6617 = vmatprep.subr.mxu0 0.0
    %6618 = vmatpush1.msra.mxu0 0.0
    %6619 = vmatprep.subr.mxu0 0.0
    %6620 = vmatpush1.msra.mxu0 0.0
    %6621 = vmatprep.subr.mxu0 0.0
    %6622 = vmatpush1.msra.mxu0 0.0
    %6623 = vmatprep.subr.mxu0 0.0
    %6624 = vmatpush1.msra.mxu0 0.0
    %6625 = vmatprep.subr.mxu0 0.0
    %6626 = vmatpush1.msra.mxu0 0.0
    %6627 = vmatprep.subr.mxu0 0.0
    %6628 = vmatpush1.msra.mxu0 0.0
    %6629 = vmatprep.subr.mxu0 0.0
    %6630 = vmatpush1.msra.mxu0 0.0
    %6631 = vmatprep.subr.mxu0 0.0
    %6632 = vmatpush1.msra.mxu0 0.0
    %6633 = vmatprep.subr.mxu0 0.0
    %6634 = vmatpush1.msra.mxu0 0.0
    %6635 = vmatprep.subr.mxu0 0.0
    %6636 = vmatpush1.msra.mxu0 0.0
    %6637 = vmatprep.subr.mxu0 0.0
    %6638 = vmatpush1.msra.mxu0 0.0
    %6639 = vmatprep.subr.mxu0 0.0
    %6640 = vmatpush1.msra.mxu0 0.0
    %6641 = vmatprep.subr.mxu0 0.0
    %6642 = vmatpush1.msra.mxu0 0.0
    %6643 = vmatprep.subr.mxu0 0.0
    %6644 = vmatpush1.msra.mxu0 0.0
    %6645 = vmatprep.subr.mxu0 0.0
    %6646 = vmatpush1.msra.mxu0 0.0
    %6647 = vmatprep.subr.mxu0 0.0
    %6648 = vmatpush1.msra.mxu0 0.0
    %6649 = vmatprep.subr.mxu0 0.0
    %6650 = vmatpush1.msra.mxu0 0.0
    %6651 = vmatprep.subr.mxu0 0.0
    %6652 = vmatpush1.msra.mxu0 0.0
    %6653 = vmatprep.mubr.f32.mxu0 0.0
    %6654 = vmatmul.mubr.f32.gmra.mrb[0].mxu0 %v6572
    %v6655 = vpop.f32.mrb[0].mxu0
    %v6656 = vadd.f32 0.0, %v6655
    %v6657 = vpop.f32.mrb[0].mxu0
    %6658 = vmatprep.mubr.f32.mxu0 0.0
    %6659 = vmatmul.mubr.f32.gmra.mrb[0].mxu0 %v6575
    %v6660 = vpop.f32.mrb[0].mxu0
    %v6661 = vadd.f32 0.0, %v6660
    %v6662 = vpop.f32.mrb[0].mxu0
    %6663 = vmatprep.mubr.f32.mxu0 0.0
    %6664 = vmatmul.mubr.f32.gmra.mrb[0].mxu0 %v6578
    %v6665 = vpop.f32.mrb[0].mxu0
    %v6666 = vadd.f32 0.0, %v6665
    %v6667 = vpop.f32.mrb[0].mxu0
    %6668 = vmatprep.mubr.f32.mxu0 0.0
    %6669 = vmatmul.mubr.f32.gmra.mrb[0].mxu0 %v6581
    %v6670 = vpop.f32.mrb[0].mxu0
    %v6671 = vadd.f32 0.0, %v6670
    %v6672 = vpop.f32.mrb[0].mxu0
    %6673 = vmatprep.mubr.f32.mxu0 0.0
    %6674 = vmatmul.mubr.f32.gmra.mrb[0].mxu0 %v6584
    %v6675 = vpop.f32.mrb[0].mxu0
    %v6676 = vadd.f32 0.0, %v6675
    %v6677 = vpop.f32.mrb[0].mxu0
    %6678 = vdwg.mxu0
    %v6679 = vld [vmem:[%s125] sm:$0xff]
    %v6680 = vld [vmem:[%s125 + $0x8] sm:$0xff]
    %v6681 = vld [vmem:[%s125 + $0x10] sm:$0xff]
    %v6682 = vld [vmem:[%s125 + $0x18] sm:$0xff]
    %v6683 = vld [vmem:[%s125 + $0x20] sm:$0xff]
    %v6684 = vld [vmem:[%s125 + $0x28] sm:$0xff]
    %v6685 = vld [vmem:[%s125 + $0x30] sm:$0xff]
    %v6686 = vld [vmem:[%s125 + $0x38] sm:$0xff]
    %v6687 = vld [vmem:[%s125 + $0x40] sm:$0xff]
    %vm6688 = vcmask 588800
    %v6690 = vsel %vm6688, %v6656, 0
    %v6693 = vsel %vm6688, %v6661, 0
    %v6696 = vsel %vm6688, %v6666, 0
    %v6699 = vsel %vm6688, %v6671, 0
    %v6702 = vsel %vm6688, %v6676, 0
    %6704 = vmatprep.subr.mxu0 0.0
    %6705 = vmatpush1.msra.mxu0 %v6679
    %6706 = vmatprep.subr.mxu0 0.0
    %6707 = vmatpush1.msra.mxu0 %v6680
    %6708 = vmatprep.subr.mxu0 0.0
    %6709 = vmatpush1.msra.mxu0 %v6681
    %6710 = vmatprep.subr.mxu0 0.0
    %6711 = vmatpush1.msra.mxu0 %v6682
    %6712 = vmatprep.subr.mxu0 0.0
    %6713 = vmatpush1.msra.mxu0 %v6683
    %6714 = vmatprep.subr.mxu0 0.0
    %6715 = vmatpush1.msra.mxu0 %v6684
    %6716 = vmatprep.subr.mxu0 0.0
    %6717 = vmatpush1.msra.mxu0 %v6685
    %6718 = vmatprep.subr.mxu0 0.0
    %6719 = vmatpush1.msra.mxu0 %v6686
    %6720 = vmatprep.subr.mxu0 0.0
    %6721 = vmatpush1.msra.mxu0 %v6687
    %6722 = vmatprep.subr.mxu0 0.0
    %6723 = vmatpush1.msra.mxu0 0.0
    %6724 = vmatprep.subr.mxu0 0.0
    %6725 = vmatpush1.msra.mxu0 0.0
    %6726 = vmatprep.subr.mxu0 0.0
    %6727 = vmatpush1.msra.mxu0 0.0
    %6728 = vmatprep.subr.mxu0 0.0
    %6729 = vmatpush1.msra.mxu0 0.0
    %6730 = vmatprep.subr.mxu0 0.0
    %6731 = vmatpush1.msra.mxu0 0.0
    %6732 = vmatprep.subr.mxu0 0.0
    %6733 = vmatpush1.msra.mxu0 0.0
    %6734 = vmatprep.subr.mxu0 0.0
    %6735 = vmatpush1.msra.mxu0 0.0
    %6736 = vmatprep.subr.mxu0 0.0
    %6737 = vmatpush1.msra.mxu0 0.0
    %6738 = vmatprep.subr.mxu0 0.0
    %6739 = vmatpush1.msra.mxu0 0.0
    %6740 = vmatprep.subr.mxu0 0.0
    %6741 = vmatpush1.msra.mxu0 0.0
    %6742 = vmatprep.subr.mxu0 0.0
    %6743 = vmatpush1.msra.mxu0 0.0
    %6744 = vmatprep.subr.mxu0 0.0
    %6745 = vmatpush1.msra.mxu0 0.0
    %6746 = vmatprep.subr.mxu0 0.0
    %6747 = vmatpush1.msra.mxu0 0.0
    %6748 = vmatprep.subr.mxu0 0.0
    %6749 = vmatpush1.msra.mxu0 0.0
    %6750 = vmatprep.subr.mxu0 0.0
    %6751 = vmatpush1.msra.mxu0 0.0
    %6752 = vmatprep.subr.mxu0 0.0
    %6753 = vmatpush1.msra.mxu0 0.0
    %6754 = vmatprep.subr.mxu0 0.0
    %6755 = vmatpush1.msra.mxu0 0.0
    %6756 = vmatprep.subr.mxu0 0.0
    %6757 = vmatpush1.msra.mxu0 0.0
    %6758 = vmatprep.subr.mxu0 0.0
    %6759 = vmatpush1.msra.mxu0 0.0
    %6760 = vmatprep.subr.mxu0 0.0
    %6761 = vmatpush1.msra.mxu0 0.0
    %6762 = vmatprep.subr.mxu0 0.0
    %6763 = vmatpush1.msra.mxu0 0.0
    %6764 = vmatprep.subr.mxu0 0.0
    %6765 = vmatpush1.msra.mxu0 0.0
    %6766 = vmatprep.subr.mxu0 0.0
    %6767 = vmatpush1.msra.mxu0 0.0
    %6768 = vmatprep.mubr.f32.mxu0 0.0
    %6769 = vmatmul.mubr.f32.gmra.mrb[0].mxu0 %v6690
    %v6770 = vpop.f32.mrb[0].mxu0
    %v6771 = vadd.f32 0.0, %v6770
    %v6772 = vpop.f32.mrb[0].mxu0
    %6773 = vmatprep.mubr.f32.mxu0 0.0
    %6774 = vmatmul.mubr.f32.gmra.mrb[0].mxu0 %v6693
    %v6775 = vpop.f32.mrb[0].mxu0
    %v6776 = vadd.f32 0.0, %v6775
    %v6777 = vpop.f32.mrb[0].mxu0
    %6778 = vmatprep.mubr.f32.mxu0 0.0
    %6779 = vmatmul.mubr.f32.gmra.mrb[0].mxu0 %v6696
    %v6780 = vpop.f32.mrb[0].mxu0
    %v6781 = vadd.f32 0.0, %v6780
    %v6782 = vpop.f32.mrb[0].mxu0
    %6783 = vmatprep.mubr.f32.mxu0 0.0
    %6784 = vmatmul.mubr.f32.gmra.mrb[0].mxu0 %v6699
    %v6785 = vpop.f32.mrb[0].mxu0
    %v6786 = vadd.f32 0.0, %v6785
    %v6787 = vpop.f32.mrb[0].mxu0
    %6788 = vmatprep.mubr.f32.mxu0 0.0
    %6789 = vmatmul.mubr.f32.gmra.mrb[0].mxu0 %v6702
    %v6790 = vpop.f32.mrb[0].mxu0
    %v6791 = vadd.f32 0.0, %v6790
    %v6792 = vpop.f32.mrb[0].mxu0
    %6793 = vdwg.mxu0
    %v6795 = vsel %vm6688, %v6552, 0
    %v6798 = vsel %vm6688, %v6553, 0
    %v6801 = vsel %vm6688, %v6554, 0
    %v6804 = vsel %vm6688, %v6555, 0
    %v6806 = vsel %vm6688, %v6556, 0
    %6808 = vmatprep.subr.mxu0 0.0
    %6809 = vmatpush1.msra.mxu0 %v6557
    %6810 = vmatprep.subr.mxu0 0.0
    %6811 = vmatpush1.msra.mxu0 %v6558
    %6812 = vmatprep.subr.mxu0 0.0
    %6813 = vmatpush1.msra.mxu0 %v6559
    %6814 = vmatprep.subr.mxu0 0.0
    %6815 = vmatpush1.msra.mxu0 %v6560
    %6816 = vmatprep.subr.mxu0 0.0
    %6817 = vmatpush1.msra.mxu0 %v6561
    %6818 = vmatprep.subr.mxu0 0.0
    %6819 = vmatpush1.msra.mxu0 %v6562
    %6820 = vmatprep.subr.mxu0 0.0
    %6821 = vmatpush1.msra.mxu0 %v6563
    %6822 = vmatprep.subr.mxu0 0.0
    %6823 = vmatpush1.msra.mxu0 %v6564
    %6824 = vmatprep.subr.mxu0 0.0
    %6825 = vmatpush1.msra.mxu0 %v6565
    %6826 = vmatprep.subr.mxu0 0.0
    %6827 = vmatpush1.msra.mxu0 0.0
    %6828 = vmatprep.subr.mxu0 0.0
    %6829 = vmatpush1.msra.mxu0 0.0
    %6830 = vmatprep.subr.mxu0 0.0
    %6831 = vmatpush1.msra.mxu0 0.0
    %6832 = vmatprep.subr.mxu0 0.0
    %6833 = vmatpush1.msra.mxu0 0.0
    %6834 = vmatprep.subr.mxu0 0.0
    %6835 = vmatpush1.msra.mxu0 0.0
    %6836 = vmatprep.subr.mxu0 0.0
    %6837 = vmatpush1.msra.mxu0 0.0
    %6838 = vmatprep.subr.mxu0 0.0
    %6839 = vmatpush1.msra.mxu0 0.0
    %6840 = vmatprep.subr.mxu0 0.0
    %6841 = vmatpush1.msra.mxu0 0.0
    %6842 = vmatprep.subr.mxu0 0.0
    %6843 = vmatpush1.msra.mxu0 0.0
    %6844 = vmatprep.subr.mxu0 0.0
    %6845 = vmatpush1.msra.mxu0 0.0
    %6846 = vmatprep.subr.mxu0 0.0
    %6847 = vmatpush1.msra.mxu0 0.0
    %6848 = vmatprep.subr.mxu0 0.0
    %6849 = vmatpush1.msra.mxu0 0.0
    %6850 = vmatprep.subr.mxu0 0.0
    %6851 = vmatpush1.msra.mxu0 0.0
    %6852 = vmatprep.subr.mxu0 0.0
    %6853 = vmatpush1.msra.mxu0 0.0
    %6854 = vmatprep.subr.mxu0 0.0
    %6855 = vmatpush1.msra.mxu0 0.0
    %6856 = vmatprep.subr.mxu0 0.0
    %6857 = vmatpush1.msra.mxu0 0.0
    %6858 = vmatprep.subr.mxu0 0.0
    %6859 = vmatpush1.msra.mxu0 0.0
    %6860 = vmatprep.subr.mxu0 0.0
    %6861 = vmatpush1.msra.mxu0 0.0
    %6862 = vmatprep.subr.mxu0 0.0
    %6863 = vmatpush1.msra.mxu0 0.0
    %6864 = vmatprep.subr.mxu0 0.0
    %6865 = vmatpush1.msra.mxu0 0.0
    %6866 = vmatprep.subr.mxu0 0.0
    %6867 = vmatpush1.msra.mxu0 0.0
    %6868 = vmatprep.subr.mxu0 0.0
    %6869 = vmatpush1.msra.mxu0 0.0
    %6870 = vmatprep.subr.mxu0 0.0
    %6871 = vmatpush1.msra.mxu0 0.0
    %6872 = vmatprep.mubr.f32.mxu0 0.0
    %6873 = vmatmul.mubr.f32.gmra.mrb[0].mxu0 %v6795
    %v6874 = vpop.f32.mrb[0].mxu0
    %v6875 = vadd.f32 %v6771, %v6874
    %v6876 = vpop.f32.mrb[0].mxu0
    %6877 = vmatprep.mubr.f32.mxu0 0.0
    %6878 = vmatmul.mubr.f32.gmra.mrb[0].mxu0 %v6798
    %v6879 = vpop.f32.mrb[0].mxu0
    %v6880 = vadd.f32 %v6776, %v6879
    %v6881 = vpop.f32.mrb[0].mxu0
    %6882 = vmatprep.mubr.f32.mxu0 0.0
    %6883 = vmatmul.mubr.f32.gmra.mrb[0].mxu0 %v6801
    %v6884 = vpop.f32.mrb[0].mxu0
    %v6885 = vadd.f32 %v6781, %v6884
    %v6886 = vpop.f32.mrb[0].mxu0
    %6887 = vmatprep.mubr.f32.mxu0 0.0
    %6888 = vmatmul.mubr.f32.gmra.mrb[0].mxu0 %v6804
    %v6889 = vpop.f32.mrb[0].mxu0
    %v6890 = vadd.f32 %v6786, %v6889
    %v6891 = vpop.f32.mrb[0].mxu0
    %6892 = vmatprep.mubr.f32.mxu0 0.0
    %6893 = vmatmul.mubr.f32.gmra.mrb[0].mxu0 %v6806
    %v6894 = vpop.f32.mrb[0].mxu0
    %v6895 = vadd.f32 %v6791, %v6894
    %v6896 = vpop.f32.mrb[0].mxu0
    %6897 = vdwg.mxu0
    %v6898 = vld [vmem:[#allocation82] sm:$0xff]
    %v6899 = vld [vmem:[#allocation82 + $0x8] sm:$0xff]
    %v6900 = vld [vmem:[#allocation82 + $0x10] sm:$0xff]
    %v6901 = vld [vmem:[#allocation82 + $0x18] sm:$0xff]
    %v6902 = vld [vmem:[#allocation82 + $0x20] sm:$0xf]
    %v6904 = vsel %vm3927, %v6898, 0
    %v6907 = vsel %vm3927, %v6899, 0
    %v6910 = vsel %vm3927, %v6900, 0
    %v6913 = vsel %vm3927, %v6901, 0
    %v6916 = vsel %vm3927, %v6902, 0
    %6918 = vmatprep.subr.mxu0 0.0
    %6919 = vmatpush1.msra.mxu0 %v6552
    %6920 = vmatprep.subr.mxu0 0.0
    %6921 = vmatpush1.msra.mxu0 %v6553
    %6922 = vmatprep.subr.mxu0 0.0
    %6923 = vmatpush1.msra.mxu0 %v6554
    %6924 = vmatprep.subr.mxu0 0.0
    %6925 = vmatpush1.msra.mxu0 %v6555
    %6926 = vmatprep.subr.mxu0 0.0
    %6927 = vmatpush1.msra.mxu0 %v6587
    %6928 = vmatprep.subr.mxu0 0.0
    %6929 = vmatpush1.msra.mxu0 0.0
    %6930 = vmatprep.subr.mxu0 0.0
    %6931 = vmatpush1.msra.mxu0 0.0
    %6932 = vmatprep.subr.mxu0 0.0
    %6933 = vmatpush1.msra.mxu0 0.0
    %6934 = vmatprep.subr.mxu0 0.0
    %6935 = vmatpush1.msra.mxu0 0.0
    %6936 = vmatprep.subr.mxu0 0.0
    %6937 = vmatpush1.msra.mxu0 0.0
    %6938 = vmatprep.subr.mxu0 0.0
    %6939 = vmatpush1.msra.mxu0 0.0
    %6940 = vmatprep.subr.mxu0 0.0
    %6941 = vmatpush1.msra.mxu0 0.0
    %6942 = vmatprep.subr.mxu0 0.0
    %6943 = vmatpush1.msra.mxu0 0.0
    %6944 = vmatprep.subr.mxu0 0.0
    %6945 = vmatpush1.msra.mxu0 0.0
    %6946 = vmatprep.subr.mxu0 0.0
    %6947 = vmatpush1.msra.mxu0 0.0
    %6948 = vmatprep.subr.mxu0 0.0
    %6949 = vmatpush1.msra.mxu0 0.0
    %6950 = vmatprep.subr.mxu0 0.0
    %6951 = vmatpush1.msra.mxu0 0.0
    %6952 = vmatprep.subr.mxu0 0.0
    %6953 = vmatpush1.msra.mxu0 0.0
    %6954 = vmatprep.subr.mxu0 0.0
    %6955 = vmatpush1.msra.mxu0 0.0
    %6956 = vmatprep.subr.mxu0 0.0
    %6957 = vmatpush1.msra.mxu0 0.0
    %6958 = vmatprep.subr.mxu0 0.0
    %6959 = vmatpush1.msra.mxu0 0.0
    %6960 = vmatprep.subr.mxu0 0.0
    %6961 = vmatpush1.msra.mxu0 0.0
    %6962 = vmatprep.subr.mxu0 0.0
    %6963 = vmatpush1.msra.mxu0 0.0
    %6964 = vmatprep.subr.mxu0 0.0
    %6965 = vmatpush1.msra.mxu0 0.0
    %6966 = vmatprep.subr.mxu0 0.0
    %6967 = vmatpush1.msra.mxu0 0.0
    %6968 = vmatprep.subr.mxu0 0.0
    %6969 = vmatpush1.msra.mxu0 0.0
    %6970 = vmatprep.subr.mxu0 0.0
    %6971 = vmatpush1.msra.mxu0 0.0
    %6972 = vmatprep.subr.mxu0 0.0
    %6973 = vmatpush1.msra.mxu0 0.0
    %6974 = vmatprep.subr.mxu0 0.0
    %6975 = vmatpush1.msra.mxu0 0.0
    %6976 = vmatprep.subr.mxu0 0.0
    %6977 = vmatpush1.msra.mxu0 0.0
    %6978 = vmatprep.subr.mxu0 0.0
    %6979 = vmatpush1.msra.mxu0 0.0
    %6980 = vmatprep.subr.mxu0 0.0
    %6981 = vmatpush1.msra.mxu0 0.0
    %6982 = vmatprep.mubr.f32.mxu0 0.0
    %6983 = vmatmul.mubr.f32.gmra.mrb[0].mxu0 %v6904
    %v6984 = vpop.f32.mrb[0].mxu0
    %v6985 = vadd.f32 0.0, %v6984
    %v6986 = vpop.f32.mrb[0].mxu0
    %6987 = vmatprep.mubr.f32.mxu0 0.0
    %6988 = vmatmul.mubr.f32.gmra.mrb[0].mxu0 %v6907
    %v6989 = vpop.f32.mrb[0].mxu0
    %v6990 = vadd.f32 0.0, %v6989
    %v6991 = vpop.f32.mrb[0].mxu0
    %6992 = vmatprep.mubr.f32.mxu0 0.0
    %6993 = vmatmul.mubr.f32.gmra.mrb[0].mxu0 %v6910
    %v6994 = vpop.f32.mrb[0].mxu0
    %v6995 = vadd.f32 0.0, %v6994
    %v6996 = vpop.f32.mrb[0].mxu0
    %6997 = vmatprep.mubr.f32.mxu0 0.0
    %6998 = vmatmul.mubr.f32.gmra.mrb[0].mxu0 %v6913
    %v6999 = vpop.f32.mrb[0].mxu0
    %v7000 = vadd.f32 0.0, %v6999
    %v7001 = vpop.f32.mrb[0].mxu0
    %7002 = vmatprep.mubr.f32.mxu0 0.0
    %7003 = vmatmul.mubr.f32.gmra.mrb[0].mxu0 %v6916
    %v7004 = vpop.f32.mrb[0].mxu0
    %v7005 = vadd.f32 0.0, %v7004
    %v7006 = vpop.f32.mrb[0].mxu0
    %7007 = vdwg.mxu0
    %v7008 = vld [vmem:[%s129] sm:$0xff]
    %v7009 = vld [vmem:[%s129 + $0x8] sm:$0xff]
    %v7010 = vld [vmem:[%s129 + $0x10] sm:$0xff]
    %v7011 = vld [vmem:[%s129 + $0x18] sm:$0xff]
    %v7012 = vld [vmem:[%s129 + $0x20] sm:$0xff]
    %v7013 = vld [vmem:[%s129 + $0x28] sm:$0xff]
    %v7014 = vld [vmem:[%s129 + $0x30] sm:$0xff]
    %v7015 = vld [vmem:[%s129 + $0x38] sm:$0xff]
    %v7016 = vld [vmem:[%s129 + $0x40] sm:$0xff]
    %v7018 = vsel %vm6688, %v6985, 0
    %v7021 = vsel %vm6688, %v6990, 0
    %v7024 = vsel %vm6688, %v6995, 0
    %v7027 = vsel %vm6688, %v7000, 0
    %v7030 = vsel %vm6688, %v7005, 0
    %7032 = vmatprep.subr.mxu0 0.0
    %7033 = vmatpush1.msra.mxu0 %v7008
    %7034 = vmatprep.subr.mxu0 0.0
    %7035 = vmatpush1.msra.mxu0 %v7009
    %7036 = vmatprep.subr.mxu0 0.0
    %7037 = vmatpush1.msra.mxu0 %v7010
    %7038 = vmatprep.subr.mxu0 0.0
    %7039 = vmatpush1.msra.mxu0 %v7011
    %7040 = vmatprep.subr.mxu0 0.0
    %7041 = vmatpush1.msra.mxu0 %v7012
    %7042 = vmatprep.subr.mxu0 0.0
    %7043 = vmatpush1.msra.mxu0 %v7013
    %7044 = vmatprep.subr.mxu0 0.0
    %7045 = vmatpush1.msra.mxu0 %v7014
    %7046 = vmatprep.subr.mxu0 0.0
    %7047 = vmatpush1.msra.mxu0 %v7015
    %7048 = vmatprep.subr.mxu0 0.0
    %7049 = vmatpush1.msra.mxu0 %v7016
    %7050 = vmatprep.subr.mxu0 0.0
    %7051 = vmatpush1.msra.mxu0 0.0
    %7052 = vmatprep.subr.mxu0 0.0
    %7053 = vmatpush1.msra.mxu0 0.0
    %7054 = vmatprep.subr.mxu0 0.0
    %7055 = vmatpush1.msra.mxu0 0.0
    %7056 = vmatprep.subr.mxu0 0.0
    %7057 = vmatpush1.msra.mxu0 0.0
    %7058 = vmatprep.subr.mxu0 0.0
    %7059 = vmatpush1.msra.mxu0 0.0
    %7060 = vmatprep.subr.mxu0 0.0
    %7061 = vmatpush1.msra.mxu0 0.0
    %7062 = vmatprep.subr.mxu0 0.0
    %7063 = vmatpush1.msra.mxu0 0.0
    %7064 = vmatprep.subr.mxu0 0.0
    %7065 = vmatpush1.msra.mxu0 0.0
    %7066 = vmatprep.subr.mxu0 0.0
    %7067 = vmatpush1.msra.mxu0 0.0
    %7068 = vmatprep.subr.mxu0 0.0
    %7069 = vmatpush1.msra.mxu0 0.0
    %7070 = vmatprep.subr.mxu0 0.0
    %7071 = vmatpush1.msra.mxu0 0.0
    %7072 = vmatprep.subr.mxu0 0.0
    %7073 = vmatpush1.msra.mxu0 0.0
    %7074 = vmatprep.subr.mxu0 0.0
    %7075 = vmatpush1.msra.mxu0 0.0
    %7076 = vmatprep.subr.mxu0 0.0
    %7077 = vmatpush1.msra.mxu0 0.0
    %7078 = vmatprep.subr.mxu0 0.0
    %7079 = vmatpush1.msra.mxu0 0.0
    %7080 = vmatprep.subr.mxu0 0.0
    %7081 = vmatpush1.msra.mxu0 0.0
    %7082 = vmatprep.subr.mxu0 0.0
    %7083 = vmatpush1.msra.mxu0 0.0
    %7084 = vmatprep.subr.mxu0 0.0
    %7085 = vmatpush1.msra.mxu0 0.0
    %7086 = vmatprep.subr.mxu0 0.0
    %7087 = vmatpush1.msra.mxu0 0.0
    %7088 = vmatprep.subr.mxu0 0.0
    %7089 = vmatpush1.msra.mxu0 0.0
    %7090 = vmatprep.subr.mxu0 0.0
    %7091 = vmatpush1.msra.mxu0 0.0
    %7092 = vmatprep.subr.mxu0 0.0
    %7093 = vmatpush1.msra.mxu0 0.0
    %7094 = vmatprep.subr.mxu0 0.0
    %7095 = vmatpush1.msra.mxu0 0.0
    %7096 = vmatprep.mubr.f32.mxu0 0.0
    %7097 = vmatmul.mubr.f32.gmra.mrb[0].mxu0 %v7018
    %v7098 = vpop.f32.mrb[0].mxu0
    %v7099 = vadd.f32 0.0, %v7098
    %v7100 = vpop.f32.mrb[0].mxu0
    %7101 = vmatprep.mubr.f32.mxu0 0.0
    %7102 = vmatmul.mubr.f32.gmra.mrb[0].mxu0 %v7021
    %v7103 = vpop.f32.mrb[0].mxu0
    %v7104 = vadd.f32 0.0, %v7103
    %v7105 = vpop.f32.mrb[0].mxu0
    %7106 = vmatprep.mubr.f32.mxu0 0.0
    %7107 = vmatmul.mubr.f32.gmra.mrb[0].mxu0 %v7024
    %v7108 = vpop.f32.mrb[0].mxu0
    %v7109 = vadd.f32 0.0, %v7108
    %v7110 = vpop.f32.mrb[0].mxu0
    %7111 = vmatprep.mubr.f32.mxu0 0.0
    %7112 = vmatmul.mubr.f32.gmra.mrb[0].mxu0 %v7027
    %v7113 = vpop.f32.mrb[0].mxu0
    %v7114 = vadd.f32 0.0, %v7113
    %v7115 = vpop.f32.mrb[0].mxu0
    %7116 = vmatprep.mubr.f32.mxu0 0.0
    %7117 = vmatmul.mubr.f32.gmra.mrb[0].mxu0 %v7030
    %v7118 = vpop.f32.mrb[0].mxu0
    %v7119 = vadd.f32 0.0, %v7118
    %v7120 = vpop.f32.mrb[0].mxu0
    %7121 = vdwg.mxu0
    %v7122 = vadd.f32 %v6875, %v7099
    %v7123 = vadd.f32 %v6880, %v7104
    %v7124 = vadd.f32 %v6885, %v7109
    %v7125 = vadd.f32 %v6890, %v7114
    %v7126 = vadd.f32 %v6895, %v7119
    %v7127 = vld [vmem:[#allocation79] sm:$0xff]
    %v7128 = vld [vmem:[#allocation79 + $0x8] sm:$0xff]
    %v7129 = vld [vmem:[#allocation79 + $0x10] sm:$0xff]
    %v7130 = vld [vmem:[#allocation79 + $0x18] sm:$0xff]
    %v7131 = vld [vmem:[#allocation79 + $0x20] sm:$0xf]
    %v7132 = vadd.f32 %v7122, %v7127
    %v7133 = vadd.f32 %v7123, %v7128
    %v7134 = vadd.f32 %v7124, %v7129
    %v7135 = vadd.f32 %v7125, %v7130
    %v7136 = vadd.f32 %v7126, %v7131
    %v7137 = vmax.f32 %v7132, 0.0
    %v7138 = vmax.f32 %v7133, 0.0
    %v7139 = vmax.f32 %v7134, 0.0
    %v7140 = vmax.f32 %v7135, 0.0
    %v7141 = vmax.f32 %v7136, 0.0
    %v7142 = vadd.f32 %v7137, %v6123
    %v7143 = vadd.f32 %v7138, %v6128
    %v7144 = vadd.f32 %v7139, %v6133
    %v7145 = vadd.f32 %v7140, %v6138
    %v7146 = vadd.f32 %v7141, %v6143
    %vm7147 = vcmp.ge.f32.partialorder %v7142, 0.0
    %vm7148 = vcmp.ge.f32.partialorder %v7143, 0.0
    %vm7149 = vcmp.ge.f32.partialorder %v7144, 0.0
    %vm7150 = vcmp.ge.f32.partialorder %v7145, 0.0
    %vm7151 = vcmp.ge.f32.partialorder %v7146, 0.0
    %v7152 = vmul.f32 %v7142, 0.01
    %v7153 = vmul.f32 %v7143, 0.01
    %v7154 = vmul.f32 %v7144, 0.01
    %v7155 = vmul.f32 %v7145, 0.01
    %v7156 = vmul.f32 %v7146, 0.01
    %v7157 = vsel %vm7147, %v7142, %v7152
    %v7158 = vsel %vm7148, %v7143, %v7153
    %v7159 = vsel %vm7149, %v7144, %v7154
    %v7160 = vsel %vm7150, %v7145, %v7155
    %v7161 = vsel %vm7151, %v7146, %v7156
    %v7162 = vld [vmem:[%s137] sm:$0xff]
    %v7163 = vld [vmem:[%s137 + $0x8] sm:$0xff]
    %v7164 = vld [vmem:[%s137 + $0x10] sm:$0xff]
    %v7165 = vld [vmem:[%s137 + $0x18] sm:$0xff]
    %v7166 = vld [vmem:[%s137 + $0x20] sm:$0xff]
    %v7167 = vld [vmem:[%s137 + $0x28] sm:$0xff]
    %v7168 = vld [vmem:[%s137 + $0x30] sm:$0xff]
    %v7169 = vld [vmem:[%s137 + $0x38] sm:$0xff]
    %v7170 = vld [vmem:[%s137 + $0x40] sm:$0xff]
    %v7171 = vld [vmem:[#allocation83] sm:$0xff]
    %v7172 = vld [vmem:[#allocation83 + $0x8] sm:$0xff]
    %v7173 = vld [vmem:[#allocation83 + $0x10] sm:$0xff]
    %v7174 = vld [vmem:[#allocation83 + $0x18] sm:$0xff]
    %v7175 = vld [vmem:[#allocation83 + $0x20] sm:$0xf]
    %v7177 = vsel %vm6688, %v7157, 0
    %v7180 = vsel %vm6688, %v7158, 0
    %v7183 = vsel %vm6688, %v7159, 0
    %v7186 = vsel %vm6688, %v7160, 0
    %v7189 = vsel %vm6688, %v7161, 0
    %7191 = vmatprep.subr.mxu0 0.0
    %7192 = vmatpush1.msra.mxu0 %v7162
    %7193 = vmatprep.subr.mxu0 0.0
    %7194 = vmatpush1.msra.mxu0 %v7163
    %7195 = vmatprep.subr.mxu0 0.0
    %7196 = vmatpush1.msra.mxu0 %v7164
    %7197 = vmatprep.subr.mxu0 0.0
    %7198 = vmatpush1.msra.mxu0 %v7165
    %7199 = vmatprep.subr.mxu0 0.0
    %7200 = vmatpush1.msra.mxu0 %v7166
    %7201 = vmatprep.subr.mxu0 0.0
    %7202 = vmatpush1.msra.mxu0 %v7167
    %7203 = vmatprep.subr.mxu0 0.0
    %7204 = vmatpush1.msra.mxu0 %v7168
    %7205 = vmatprep.subr.mxu0 0.0
    %7206 = vmatpush1.msra.mxu0 %v7169
    %7207 = vmatprep.subr.mxu0 0.0
    %7208 = vmatpush1.msra.mxu0 %v7170
    %7209 = vmatprep.subr.mxu0 0.0
    %7210 = vmatpush1.msra.mxu0 0.0
    %7211 = vmatprep.subr.mxu0 0.0
    %7212 = vmatpush1.msra.mxu0 0.0
    %7213 = vmatprep.subr.mxu0 0.0
    %7214 = vmatpush1.msra.mxu0 0.0
    %7215 = vmatprep.subr.mxu0 0.0
    %7216 = vmatpush1.msra.mxu0 0.0
    %7217 = vmatprep.subr.mxu0 0.0
    %7218 = vmatpush1.msra.mxu0 0.0
    %7219 = vmatprep.subr.mxu0 0.0
    %7220 = vmatpush1.msra.mxu0 0.0
    %7221 = vmatprep.subr.mxu0 0.0
    %7222 = vmatpush1.msra.mxu0 0.0
    %7223 = vmatprep.subr.mxu0 0.0
    %7224 = vmatpush1.msra.mxu0 0.0
    %7225 = vmatprep.subr.mxu0 0.0
    %7226 = vmatpush1.msra.mxu0 0.0
    %7227 = vmatprep.subr.mxu0 0.0
    %7228 = vmatpush1.msra.mxu0 0.0
    %7229 = vmatprep.subr.mxu0 0.0
    %7230 = vmatpush1.msra.mxu0 0.0
    %7231 = vmatprep.subr.mxu0 0.0
    %7232 = vmatpush1.msra.mxu0 0.0
    %7233 = vmatprep.subr.mxu0 0.0
    %7234 = vmatpush1.msra.mxu0 0.0
    %7235 = vmatprep.subr.mxu0 0.0
    %7236 = vmatpush1.msra.mxu0 0.0
    %7237 = vmatprep.subr.mxu0 0.0
    %7238 = vmatpush1.msra.mxu0 0.0
    %7239 = vmatprep.subr.mxu0 0.0
    %7240 = vmatpush1.msra.mxu0 0.0
    %7241 = vmatprep.subr.mxu0 0.0
    %7242 = vmatpush1.msra.mxu0 0.0
    %7243 = vmatprep.subr.mxu0 0.0
    %7244 = vmatpush1.msra.mxu0 0.0
    %7245 = vmatprep.subr.mxu0 0.0
    %7246 = vmatpush1.msra.mxu0 0.0
    %7247 = vmatprep.subr.mxu0 0.0
    %7248 = vmatpush1.msra.mxu0 0.0
    %7249 = vmatprep.subr.mxu0 0.0
    %7250 = vmatpush1.msra.mxu0 0.0
    %7251 = vmatprep.subr.mxu0 0.0
    %7252 = vmatpush1.msra.mxu0 0.0
    %7253 = vmatprep.subr.mxu0 0.0
    %7254 = vmatpush1.msra.mxu0 0.0
    %7255 = vmatprep.mubr.f32.mxu0 0.0
    %7256 = vmatmul.mubr.f32.gmra.mrb[0].mxu0 %v7177
    %v7257 = vpop.f32.mrb[0].mxu0
    %v7258 = vadd.f32 %v7171, %v7257
    %v7259 = vpop.f32.mrb[0].mxu0
    %7260 = vmatprep.mubr.f32.mxu0 0.0
    %7261 = vmatmul.mubr.f32.gmra.mrb[0].mxu0 %v7180
    %v7262 = vpop.f32.mrb[0].mxu0
    %v7263 = vadd.f32 %v7172, %v7262
    %v7264 = vpop.f32.mrb[0].mxu0
    %7265 = vmatprep.mubr.f32.mxu0 0.0
    %7266 = vmatmul.mubr.f32.gmra.mrb[0].mxu0 %v7183
    %v7267 = vpop.f32.mrb[0].mxu0
    %v7268 = vadd.f32 %v7173, %v7267
    %v7269 = vpop.f32.mrb[0].mxu0
    %7270 = vmatprep.mubr.f32.mxu0 0.0
    %7271 = vmatmul.mubr.f32.gmra.mrb[0].mxu0 %v7186
    %v7272 = vpop.f32.mrb[0].mxu0
    %v7273 = vadd.f32 %v7174, %v7272
    %v7274 = vpop.f32.mrb[0].mxu0
    %7275 = vmatprep.mubr.f32.mxu0 0.0
    %7276 = vmatmul.mubr.f32.gmra.mrb[0].mxu0 %v7189
    %v7277 = vpop.f32.mrb[0].mxu0
    %v7278 = vadd.f32 %v7175, %v7277
    %v7279 = vpop.f32.mrb[0].mxu0
    %7280 = vdwg.mxu0
    %v7281 = vld [vmem:[%s141] sm:$0xff]
    %v7282 = vld [vmem:[%s141 + $0x8] sm:$0xff]
    %v7283 = vld [vmem:[%s141 + $0x10] sm:$0xff]
    %v7284 = vld [vmem:[%s141 + $0x18] sm:$0xff]
    %v7285 = vld [vmem:[%s141 + $0x20] sm:$0xff]
    %v7286 = vld [vmem:[%s141 + $0x28] sm:$0xff]
    %v7287 = vld [vmem:[%s141 + $0x30] sm:$0xff]
    %v7288 = vld [vmem:[%s141 + $0x38] sm:$0xf]
    %vm7289 = vcmask 490496
    %v7291 = vsel %vm7289, %v4082, 0
    %v7294 = vsel %vm7289, %v4087, 0
    %v7297 = vsel %vm7289, %v4092, 0
    %v7300 = vsel %vm1130, %v7288, 0
    %7302 = vmatprep.subr.mxu0 0.0
    %7303 = vmatpush1.msra.mxu0 %v7281
    %7304 = vmatprep.subr.mxu0 0.0
    %7305 = vmatpush1.msra.mxu0 %v7282
    %7306 = vmatprep.subr.mxu0 0.0
    %7307 = vmatpush1.msra.mxu0 %v7283
    %7308 = vmatprep.subr.mxu0 0.0
    %7309 = vmatpush1.msra.mxu0 %v7284
    %7310 = vmatprep.subr.mxu0 0.0
    %7311 = vmatpush1.msra.mxu0 %v7285
    %7312 = vmatprep.subr.mxu0 0.0
    %7313 = vmatpush1.msra.mxu0 %v7286
    %7314 = vmatprep.subr.mxu0 0.0
    %7315 = vmatpush1.msra.mxu0 %v7287
    %7316 = vmatprep.subr.mxu0 0.0
    %7317 = vmatpush1.msra.mxu0 %v7300
    %7318 = vmatprep.subr.mxu0 0.0
    %7319 = vmatpush1.msra.mxu0 0.0
    %7320 = vmatprep.subr.mxu0 0.0
    %7321 = vmatpush1.msra.mxu0 0.0
    %7322 = vmatprep.subr.mxu0 0.0
    %7323 = vmatpush1.msra.mxu0 0.0
    %7324 = vmatprep.subr.mxu0 0.0
    %7325 = vmatpush1.msra.mxu0 0.0
    %7326 = vmatprep.subr.mxu0 0.0
    %7327 = vmatpush1.msra.mxu0 0.0
    %7328 = vmatprep.subr.mxu0 0.0
    %7329 = vmatpush1.msra.mxu0 0.0
    %7330 = vmatprep.subr.mxu0 0.0
    %7331 = vmatpush1.msra.mxu0 0.0
    %7332 = vmatprep.subr.mxu0 0.0
    %7333 = vmatpush1.msra.mxu0 0.0
    %7334 = vmatprep.subr.mxu0 0.0
    %7335 = vmatpush1.msra.mxu0 0.0
    %7336 = vmatprep.subr.mxu0 0.0
    %7337 = vmatpush1.msra.mxu0 0.0
    %7338 = vmatprep.subr.mxu0 0.0
    %7339 = vmatpush1.msra.mxu0 0.0
    %7340 = vmatprep.subr.mxu0 0.0
    %7341 = vmatpush1.msra.mxu0 0.0
    %7342 = vmatprep.subr.mxu0 0.0
    %7343 = vmatpush1.msra.mxu0 0.0
    %7344 = vmatprep.subr.mxu0 0.0
    %7345 = vmatpush1.msra.mxu0 0.0
    %7346 = vmatprep.subr.mxu0 0.0
    %7347 = vmatpush1.msra.mxu0 0.0
    %7348 = vmatprep.subr.mxu0 0.0
    %7349 = vmatpush1.msra.mxu0 0.0
    %7350 = vmatprep.subr.mxu0 0.0
    %7351 = vmatpush1.msra.mxu0 0.0
    %7352 = vmatprep.subr.mxu0 0.0
    %7353 = vmatpush1.msra.mxu0 0.0
    %7354 = vmatprep.subr.mxu0 0.0
    %7355 = vmatpush1.msra.mxu0 0.0
    %7356 = vmatprep.subr.mxu0 0.0
    %7357 = vmatpush1.msra.mxu0 0.0
    %7358 = vmatprep.subr.mxu0 0.0
    %7359 = vmatpush1.msra.mxu0 0.0
    %7360 = vmatprep.subr.mxu0 0.0
    %7361 = vmatpush1.msra.mxu0 0.0
    %7362 = vmatprep.subr.mxu0 0.0
    %7363 = vmatpush1.msra.mxu0 0.0
    %7364 = vmatprep.subr.mxu0 0.0
    %7365 = vmatpush1.msra.mxu0 0.0
    %7366 = vmatprep.mubr.f32.mxu0 0.0
    %7367 = vmatmul.mubr.f32.gmra.mrb[0].mxu0 %v7291
    %v7368 = vpop.f32.mrb[0].mxu0
    %v7369 = vadd.f32 0.0, %v7368
    %v7370 = vpop.f32.mrb[0].mxu0
    %7371 = vmatprep.mubr.f32.mxu0 0.0
    %7372 = vmatmul.mubr.f32.gmra.mrb[0].mxu0 %v7294
    %v7373 = vpop.f32.mrb[0].mxu0
    %v7374 = vadd.f32 0.0, %v7373
    %v7375 = vpop.f32.mrb[0].mxu0
    %7376 = vmatprep.mubr.f32.mxu0 0.0
    %7377 = vmatmul.mubr.f32.gmra.mrb[0].mxu0 %v7297
    %v7378 = vpop.f32.mrb[0].mxu0
    %v7379 = vadd.f32 0.0, %v7378
    %v7380 = vpop.f32.mrb[0].mxu0
    %7381 = vdwg.mxu0
    %v7383 = vsel %vm1130, %v7379, 0
    %7385 = vmatprep.subr.mxu0 0.0
    %7386 = vmatpush1.msra.mxu0 %v7369
    %7387 = vmatprep.subr.mxu0 0.0
    %7388 = vmatpush1.msra.mxu0 %v7374
    %7389 = vmatprep.subr.mxu0 0.0
    %7390 = vmatpush1.msra.mxu0 %v7383
    %7391 = vmatprep.subr.mxu0 0.0
    %7392 = vmatpush1.msra.mxu0 0.0
    %7393 = vmatprep.subr.mxu0 0.0
    %7394 = vmatpush1.msra.mxu0 0.0
    %7395 = vmatprep.subr.mxu0 0.0
    %7396 = vmatpush1.msra.mxu0 0.0
    %7397 = vmatprep.subr.mxu0 0.0
    %7398 = vmatpush1.msra.mxu0 0.0
    %7399 = vmatprep.subr.mxu0 0.0
    %7400 = vmatpush1.msra.mxu0 0.0
    %7401 = vmatprep.subr.mxu0 0.0
    %7402 = vmatpush1.msra.mxu0 0.0
    %7403 = vmatprep.subr.mxu0 0.0
    %7404 = vmatpush1.msra.mxu0 0.0
    %7405 = vmatprep.subr.mxu0 0.0
    %7406 = vmatpush1.msra.mxu0 0.0
    %7407 = vmatprep.subr.mxu0 0.0
    %7408 = vmatpush1.msra.mxu0 0.0
    %7409 = vmatprep.subr.mxu0 0.0
    %7410 = vmatpush1.msra.mxu0 0.0
    %7411 = vmatprep.subr.mxu0 0.0
    %7412 = vmatpush1.msra.mxu0 0.0
    %7413 = vmatprep.subr.mxu0 0.0
    %7414 = vmatpush1.msra.mxu0 0.0
    %7415 = vmatprep.subr.mxu0 0.0
    %7416 = vmatpush1.msra.mxu0 0.0
    %7417 = vmatprep.subr.mxu0 0.0
    %7418 = vmatpush1.msra.mxu0 0.0
    %7419 = vmatprep.subr.mxu0 0.0
    %7420 = vmatpush1.msra.mxu0 0.0
    %7421 = vmatprep.subr.mxu0 0.0
    %7422 = vmatpush1.msra.mxu0 0.0
    %7423 = vmatprep.subr.mxu0 0.0
    %7424 = vmatpush1.msra.mxu0 0.0
    %7425 = vmatprep.subr.mxu0 0.0
    %7426 = vmatpush1.msra.mxu0 0.0
    %7427 = vmatprep.subr.mxu0 0.0
    %7428 = vmatpush1.msra.mxu0 0.0
    %7429 = vmatprep.subr.mxu0 0.0
    %7430 = vmatpush1.msra.mxu0 0.0
    %7431 = vmatprep.subr.mxu0 0.0
    %7432 = vmatpush1.msra.mxu0 0.0
    %7433 = vmatprep.subr.mxu0 0.0
    %7434 = vmatpush1.msra.mxu0 0.0
    %7435 = vmatprep.subr.mxu0 0.0
    %7436 = vmatpush1.msra.mxu0 0.0
    %7437 = vmatprep.subr.mxu0 0.0
    %7438 = vmatpush1.msra.mxu0 0.0
    %7439 = vmatprep.subr.mxu0 0.0
    %7440 = vmatpush1.msra.mxu0 0.0
    %7441 = vmatprep.subr.mxu0 0.0
    %7442 = vmatpush1.msra.mxu0 0.0
    %7443 = vmatprep.subr.mxu0 0.0
    %7444 = vmatpush1.msra.mxu0 0.0
    %7445 = vmatprep.subr.mxu0 0.0
    %7446 = vmatpush1.msra.mxu0 0.0
    %7447 = vmatprep.subr.mxu0 0.0
    %7448 = vmatpush1.msra.mxu0 0.0
    %7449 = vmatprep.mubr.f32.mxu0 0.0
    %7450 = vmatmul.mubr.f32.gmra.mrb[0].mxu0 %v6039
    %v7451 = vpop.f32.mrb[0].mxu0
    %v7452 = vadd.f32 %v7258, %v7451
    %v7453 = vpop.f32.mrb[0].mxu0
    %7454 = vmatprep.mubr.f32.mxu0 0.0
    %7455 = vmatmul.mubr.f32.gmra.mrb[0].mxu0 %v6042
    %v7456 = vpop.f32.mrb[0].mxu0
    %v7457 = vadd.f32 %v7263, %v7456
    %v7458 = vpop.f32.mrb[0].mxu0
    %7459 = vmatprep.mubr.f32.mxu0 0.0
    %7460 = vmatmul.mubr.f32.gmra.mrb[0].mxu0 %v6045
    %v7461 = vpop.f32.mrb[0].mxu0
    %v7462 = vadd.f32 %v7268, %v7461
    %v7463 = vpop.f32.mrb[0].mxu0
    %7464 = vmatprep.mubr.f32.mxu0 0.0
    %7465 = vmatmul.mubr.f32.gmra.mrb[0].mxu0 %v6048
    %v7466 = vpop.f32.mrb[0].mxu0
    %v7467 = vadd.f32 %v7273, %v7466
    %v7468 = vpop.f32.mrb[0].mxu0
    %7469 = vmatprep.mubr.f32.mxu0 0.0
    %7470 = vmatmul.mubr.f32.gmra.mrb[0].mxu0 %v6051
    %v7471 = vpop.f32.mrb[0].mxu0
    %v7472 = vadd.f32 %v7278, %v7471
    %v7473 = vpop.f32.mrb[0].mxu0
    %7474 = vdwg.mxu0
    %v7475 = vld [vmem:[%s143] sm:$0xff]
    %v7476 = vld [vmem:[%s143 + $0x8] sm:$0xff]
    %v7477 = vld [vmem:[%s143 + $0x10] sm:$0xff]
    %v7478 = vld [vmem:[%s143 + $0x18] sm:$0xff]
    %v7479 = vld [vmem:[%s143 + $0x20] sm:$0xf]
    %v7480 = vld [vmem:[%s145] sm:$0xff]
    %v7481 = vld [vmem:[%s145 + $0x8] sm:$0xff]
    %v7482 = vld [vmem:[%s145 + $0x10] sm:$0xff]
    %v7483 = vld [vmem:[%s145 + $0x18] sm:$0xff]
    %v7484 = vld [vmem:[%s145 + $0x20] sm:$0xf]
    %v7486 = vsel %vm1130, %v7484, 0
    %7488 = vmatprep.subr.mxu0 0.0
    %7489 = vmatpush1.msra.mxu0 %v7480
    %7490 = vmatprep.subr.mxu0 0.0
    %7491 = vmatpush1.msra.mxu0 %v7481
    %7492 = vmatprep.subr.mxu0 0.0
    %7493 = vmatpush1.msra.mxu0 %v7482
    %7494 = vmatprep.subr.mxu0 0.0
    %7495 = vmatpush1.msra.mxu0 %v7483
    %7496 = vmatprep.subr.mxu0 0.0
    %7497 = vmatpush1.msra.mxu0 %v7486
    %7498 = vmatprep.subr.mxu0 0.0
    %7499 = vmatpush1.msra.mxu0 0.0
    %7500 = vmatprep.subr.mxu0 0.0
    %7501 = vmatpush1.msra.mxu0 0.0
    %7502 = vmatprep.subr.mxu0 0.0
    %7503 = vmatpush1.msra.mxu0 0.0
    %7504 = vmatprep.subr.mxu0 0.0
    %7505 = vmatpush1.msra.mxu0 0.0
    %7506 = vmatprep.subr.mxu0 0.0
    %7507 = vmatpush1.msra.mxu0 0.0
    %7508 = vmatprep.subr.mxu0 0.0
    %7509 = vmatpush1.msra.mxu0 0.0
    %7510 = vmatprep.subr.mxu0 0.0
    %7511 = vmatpush1.msra.mxu0 0.0
    %7512 = vmatprep.subr.mxu0 0.0
    %7513 = vmatpush1.msra.mxu0 0.0
    %7514 = vmatprep.subr.mxu0 0.0
    %7515 = vmatpush1.msra.mxu0 0.0
    %7516 = vmatprep.subr.mxu0 0.0
    %7517 = vmatpush1.msra.mxu0 0.0
    %7518 = vmatprep.subr.mxu0 0.0
    %7519 = vmatpush1.msra.mxu0 0.0
    %7520 = vmatprep.subr.mxu0 0.0
    %7521 = vmatpush1.msra.mxu0 0.0
    %7522 = vmatprep.subr.mxu0 0.0
    %7523 = vmatpush1.msra.mxu0 0.0
    %7524 = vmatprep.subr.mxu0 0.0
    %7525 = vmatpush1.msra.mxu0 0.0
    %7526 = vmatprep.subr.mxu0 0.0
    %7527 = vmatpush1.msra.mxu0 0.0
    %7528 = vmatprep.subr.mxu0 0.0
    %7529 = vmatpush1.msra.mxu0 0.0
    %7530 = vmatprep.subr.mxu0 0.0
    %7531 = vmatpush1.msra.mxu0 0.0
    %7532 = vmatprep.subr.mxu0 0.0
    %7533 = vmatpush1.msra.mxu0 0.0
    %7534 = vmatprep.subr.mxu0 0.0
    %7535 = vmatpush1.msra.mxu0 0.0
    %7536 = vmatprep.subr.mxu0 0.0
    %7537 = vmatpush1.msra.mxu0 0.0
    %7538 = vmatprep.subr.mxu0 0.0
    %7539 = vmatpush1.msra.mxu0 0.0
    %7540 = vmatprep.subr.mxu0 0.0
    %7541 = vmatpush1.msra.mxu0 0.0
    %7542 = vmatprep.subr.mxu0 0.0
    %7543 = vmatpush1.msra.mxu0 0.0
    %7544 = vmatprep.subr.mxu0 0.0
    %7545 = vmatpush1.msra.mxu0 0.0
    %7546 = vmatprep.subr.mxu0 0.0
    %7547 = vmatpush1.msra.mxu0 0.0
    %7548 = vmatprep.subr.mxu0 0.0
    %7549 = vmatpush1.msra.mxu0 0.0
    %7550 = vmatprep.subr.mxu0 0.0
    %7551 = vmatpush1.msra.mxu0 0.0
    %7552 = vmatprep.mubr.f32.mxu0 0.0
    %7553 = vmatmul.mubr.f32.gmra.mrb[0].mxu0 %v3929
    %v7554 = vpop.f32.mrb[0].mxu0
    %v7555 = vadd.f32 0.0, %v7554
    %v7556 = vpop.f32.mrb[0].mxu0
    %7557 = vmatprep.mubr.f32.mxu0 0.0
    %7558 = vmatmul.mubr.f32.gmra.mrb[0].mxu0 %v3932
    %v7559 = vpop.f32.mrb[0].mxu0
    %v7560 = vadd.f32 0.0, %v7559
    %v7561 = vpop.f32.mrb[0].mxu0
    %7562 = vdwg.mxu0
    %v7564 = vsel %vm1123, %v7475, 0
    %v7567 = vsel %vm1123, %v7476, 0
    %v7570 = vsel %vm1123, %v7477, 0
    %v7573 = vsel %vm1123, %v7478, 0
    %v7576 = vsel %vm1123, %v7479, 0
    %v7579 = vsel %vm1130, %v7560, 0
    %7581 = vmatprep.subr.mxu0 0.0
    %7582 = vmatpush1.msra.mxu0 %v7555
    %7583 = vmatprep.subr.mxu0 0.0
    %7584 = vmatpush1.msra.mxu0 %v7579
    %7585 = vmatprep.subr.mxu0 0.0
    %7586 = vmatpush1.msra.mxu0 0.0
    %7587 = vmatprep.subr.mxu0 0.0
    %7588 = vmatpush1.msra.mxu0 0.0
    %7589 = vmatprep.subr.mxu0 0.0
    %7590 = vmatpush1.msra.mxu0 0.0
    %7591 = vmatprep.subr.mxu0 0.0
    %7592 = vmatpush1.msra.mxu0 0.0
    %7593 = vmatprep.subr.mxu0 0.0
    %7594 = vmatpush1.msra.mxu0 0.0
    %7595 = vmatprep.subr.mxu0 0.0
    %7596 = vmatpush1.msra.mxu0 0.0
    %7597 = vmatprep.subr.mxu0 0.0
    %7598 = vmatpush1.msra.mxu0 0.0
    %7599 = vmatprep.subr.mxu0 0.0
    %7600 = vmatpush1.msra.mxu0 0.0
    %7601 = vmatprep.subr.mxu0 0.0
    %7602 = vmatpush1.msra.mxu0 0.0
    %7603 = vmatprep.subr.mxu0 0.0
    %7604 = vmatpush1.msra.mxu0 0.0
    %7605 = vmatprep.subr.mxu0 0.0
    %7606 = vmatpush1.msra.mxu0 0.0
    %7607 = vmatprep.subr.mxu0 0.0
    %7608 = vmatpush1.msra.mxu0 0.0
    %7609 = vmatprep.subr.mxu0 0.0
    %7610 = vmatpush1.msra.mxu0 0.0
    %7611 = vmatprep.subr.mxu0 0.0
    %7612 = vmatpush1.msra.mxu0 0.0
    %7613 = vmatprep.subr.mxu0 0.0
    %7614 = vmatpush1.msra.mxu0 0.0
    %7615 = vmatprep.subr.mxu0 0.0
    %7616 = vmatpush1.msra.mxu0 0.0
    %7617 = vmatprep.subr.mxu0 0.0
    %7618 = vmatpush1.msra.mxu0 0.0
    %7619 = vmatprep.subr.mxu0 0.0
    %7620 = vmatpush1.msra.mxu0 0.0
    %7621 = vmatprep.subr.mxu0 0.0
    %7622 = vmatpush1.msra.mxu0 0.0
    %7623 = vmatprep.subr.mxu0 0.0
    %7624 = vmatpush1.msra.mxu0 0.0
    %7625 = vmatprep.subr.mxu0 0.0
    %7626 = vmatpush1.msra.mxu0 0.0
    %7627 = vmatprep.subr.mxu0 0.0
    %7628 = vmatpush1.msra.mxu0 0.0
    %7629 = vmatprep.subr.mxu0 0.0
    %7630 = vmatpush1.msra.mxu0 0.0
    %7631 = vmatprep.subr.mxu0 0.0
    %7632 = vmatpush1.msra.mxu0 0.0
    %7633 = vmatprep.subr.mxu0 0.0
    %7634 = vmatpush1.msra.mxu0 0.0
    %7635 = vmatprep.subr.mxu0 0.0
    %7636 = vmatpush1.msra.mxu0 0.0
    %7637 = vmatprep.subr.mxu0 0.0
    %7638 = vmatpush1.msra.mxu0 0.0
    %7639 = vmatprep.subr.mxu0 0.0
    %7640 = vmatpush1.msra.mxu0 0.0
    %7641 = vmatprep.subr.mxu0 0.0
    %7642 = vmatpush1.msra.mxu0 0.0
    %7643 = vmatprep.subr.mxu0 0.0
    %7644 = vmatpush1.msra.mxu0 0.0
    %7645 = vmatprep.mubr.f32.mxu0 0.0
    %7646 = vmatmul.mubr.f32.gmra.mrb[0].mxu0 %v7564
    %v7647 = vpop.f32.mrb[0].mxu0
    %v7648 = vadd.f32 0.0, %v7647
    %v7649 = vpop.f32.mrb[0].mxu0
    %7650 = vmatprep.mubr.f32.mxu0 0.0
    %7651 = vmatmul.mubr.f32.gmra.mrb[0].mxu0 %v7567
    %v7652 = vpop.f32.mrb[0].mxu0
    %v7653 = vadd.f32 0.0, %v7652
    %v7654 = vpop.f32.mrb[0].mxu0
    %7655 = vmatprep.mubr.f32.mxu0 0.0
    %7656 = vmatmul.mubr.f32.gmra.mrb[0].mxu0 %v7570
    %v7657 = vpop.f32.mrb[0].mxu0
    %v7658 = vadd.f32 0.0, %v7657
    %v7659 = vpop.f32.mrb[0].mxu0
    %7660 = vmatprep.mubr.f32.mxu0 0.0
    %7661 = vmatmul.mubr.f32.gmra.mrb[0].mxu0 %v7573
    %v7662 = vpop.f32.mrb[0].mxu0
    %v7663 = vadd.f32 0.0, %v7662
    %v7664 = vpop.f32.mrb[0].mxu0
    %7665 = vmatprep.mubr.f32.mxu0 0.0
    %7666 = vmatmul.mubr.f32.gmra.mrb[0].mxu0 %v7576
    %v7667 = vpop.f32.mrb[0].mxu0
    %v7668 = vadd.f32 0.0, %v7667
    %v7669 = vpop.f32.mrb[0].mxu0
    %7670 = vdwg.mxu0
    %vm7671 = vcmask 883712
    %7672 = vst.msk [vmem:[#allocation85] sm:$0xff] %vm7671, %v7648
    %7673 = vst.msk [vmem:[#allocation85 + $0x8] sm:$0xff] %vm7671, %v7653
    %7674 = vst.msk [vmem:[#allocation85 + $0x10] sm:$0xff] %vm7671, %v7658
    %7675 = vst.msk [vmem:[#allocation85 + $0x18] sm:$0xff] %vm7671, %v7663
    %vm7676 = vcmask 879616
    %7677 = vst.msk [vmem:[#allocation85 + $0x20] sm:$0xf] %vm7676, %v7668
    %7678 = vmatprep.subr.mxu0 0.0
    %7679 = vmatpush1.msra.mxu0 %v7369
    %7680 = vmatprep.subr.mxu0 0.0
    %7681 = vmatpush1.msra.mxu0 %v7374
    %7682 = vmatprep.subr.mxu0 0.0
    %7683 = vmatpush1.msra.mxu0 %v7383
    %7684 = vmatprep.subr.mxu0 0.0
    %7685 = vmatpush1.msra.mxu0 0.0
    %7686 = vmatprep.subr.mxu0 0.0
    %7687 = vmatpush1.msra.mxu0 0.0
    %7688 = vmatprep.subr.mxu0 0.0
    %7689 = vmatpush1.msra.mxu0 0.0
    %7690 = vmatprep.subr.mxu0 0.0
    %7691 = vmatpush1.msra.mxu0 0.0
    %7692 = vmatprep.subr.mxu0 0.0
    %7693 = vmatpush1.msra.mxu0 0.0
    %7694 = vmatprep.subr.mxu0 0.0
    %7695 = vmatpush1.msra.mxu0 0.0
    %7696 = vmatprep.subr.mxu0 0.0
    %7697 = vmatpush1.msra.mxu0 0.0
    %7698 = vmatprep.subr.mxu0 0.0
    %7699 = vmatpush1.msra.mxu0 0.0
    %7700 = vmatprep.subr.mxu0 0.0
    %7701 = vmatpush1.msra.mxu0 0.0
    %7702 = vmatprep.subr.mxu0 0.0
    %7703 = vmatpush1.msra.mxu0 0.0
    %7704 = vmatprep.subr.mxu0 0.0
    %7705 = vmatpush1.msra.mxu0 0.0
    %7706 = vmatprep.subr.mxu0 0.0
    %7707 = vmatpush1.msra.mxu0 0.0
    %7708 = vmatprep.subr.mxu0 0.0
    %7709 = vmatpush1.msra.mxu0 0.0
    %7710 = vmatprep.subr.mxu0 0.0
    %7711 = vmatpush1.msra.mxu0 0.0
    %7712 = vmatprep.subr.mxu0 0.0
    %7713 = vmatpush1.msra.mxu0 0.0
    %7714 = vmatprep.subr.mxu0 0.0
    %7715 = vmatpush1.msra.mxu0 0.0
    %7716 = vmatprep.subr.mxu0 0.0
    %7717 = vmatpush1.msra.mxu0 0.0
    %7718 = vmatprep.subr.mxu0 0.0
    %7719 = vmatpush1.msra.mxu0 0.0
    %7720 = vmatprep.subr.mxu0 0.0
    %7721 = vmatpush1.msra.mxu0 0.0
    %7722 = vmatprep.subr.mxu0 0.0
    %7723 = vmatpush1.msra.mxu0 0.0
    %7724 = vmatprep.subr.mxu0 0.0
    %7725 = vmatpush1.msra.mxu0 0.0
    %7726 = vmatprep.subr.mxu0 0.0
    %7727 = vmatpush1.msra.mxu0 0.0
    %7728 = vmatprep.subr.mxu0 0.0
    %7729 = vmatpush1.msra.mxu0 0.0
    %7730 = vmatprep.subr.mxu0 0.0
    %7731 = vmatpush1.msra.mxu0 0.0
    %7732 = vmatprep.subr.mxu0 0.0
    %7733 = vmatpush1.msra.mxu0 0.0
    %7734 = vmatprep.subr.mxu0 0.0
    %7735 = vmatpush1.msra.mxu0 0.0
    %7736 = vmatprep.subr.mxu0 0.0
    %7737 = vmatpush1.msra.mxu0 0.0
    %7738 = vmatprep.subr.mxu0 0.0
    %7739 = vmatpush1.msra.mxu0 0.0
    %7740 = vmatprep.subr.mxu0 0.0
    %7741 = vmatpush1.msra.mxu0 0.0
    %7742 = vmatprep.mubr.f32.mxu0 0.0
    %7743 = vmatmul.mubr.f32.gmra.mrb[0].mxu0 %v6039
    %v7744 = vpop.f32.mrb[0].mxu0
    %v7745 = vadd.f32 0.0, %v7744
    %v7746 = vpop.f32.mrb[0].mxu0
    %7747 = vmatprep.mubr.f32.mxu0 0.0
    %7748 = vmatmul.mubr.f32.gmra.mrb[0].mxu0 %v6042
    %v7749 = vpop.f32.mrb[0].mxu0
    %v7750 = vadd.f32 0.0, %v7749
    %v7751 = vpop.f32.mrb[0].mxu0
    %7752 = vmatprep.mubr.f32.mxu0 0.0
    %7753 = vmatmul.mubr.f32.gmra.mrb[0].mxu0 %v6045
    %v7754 = vpop.f32.mrb[0].mxu0
    %v7755 = vadd.f32 0.0, %v7754
    %v7756 = vpop.f32.mrb[0].mxu0
    %7757 = vmatprep.mubr.f32.mxu0 0.0
    %7758 = vmatmul.mubr.f32.gmra.mrb[0].mxu0 %v6048
    %v7759 = vpop.f32.mrb[0].mxu0
    %v7760 = vadd.f32 0.0, %v7759
    %v7761 = vpop.f32.mrb[0].mxu0
    %7762 = vmatprep.mubr.f32.mxu0 0.0
    %7763 = vmatmul.mubr.f32.gmra.mrb[0].mxu0 %v6051
    %v7764 = vpop.f32.mrb[0].mxu0
    %v7765 = vadd.f32 0.0, %v7764
    %v7766 = vpop.f32.mrb[0].mxu0
    %7767 = vdwg.mxu0
    %s7768 = scalar_lea.vmem [#allocation85], 40
    %7769 = vst.msk [vmem:[%s7768] sm:$0xff] %vm7671, %v7745
    %7770 = vst.msk [vmem:[%s7768 + $0x8] sm:$0xff] %vm7671, %v7750
    %7771 = vst.msk [vmem:[%s7768 + $0x10] sm:$0xff] %vm7671, %v7755
    %7772 = vst.msk [vmem:[%s7768 + $0x18] sm:$0xff] %vm7671, %v7760
    %7773 = vst.msk [vmem:[%s7768 + $0x20] sm:$0xf] %vm7676, %v7765
    %s7774 = scalar_lea.vmem [#allocation85], 80
    %7775 = vst.msk [vmem:[%s7774] sm:$0xff] %vm7671, %v7452
    %7776 = vst.msk [vmem:[%s7774 + $0x8] sm:$0xff] %vm7671, %v7457
    %7777 = vst.msk [vmem:[%s7774 + $0x10] sm:$0xff] %vm7671, %v7462
    %7778 = vst.msk [vmem:[%s7774 + $0x18] sm:$0xff] %vm7671, %v7467
    %7779 = vst.msk [vmem:[%s7774 + $0x20] sm:$0xf] %vm7676, %v7472
    // Predicated region
    $region510: #{tpu_custom_call.1} parent=1 // pred_check
      _
    $region511: #{tpu_custom_call.1} parent=1 // pred_check_branch
      %7781 = sbr.rel (0) target = $region513
    $region512: #{tpu_custom_call.1} parent=1 // pred_region
      %s7783 = ssub.s32 1920, 1920
      %7784 = vsyncadd [#allocation4], %s7783
      %s7785 = sshll.u32 [#allocation85], 4
      %s7786 = int_to_ptr.vmem [resolvable:$true] %s7785
      %7791 = dma.vmem_to_hbm [thread:$0]  %s7786, 1920, %s147, [#allocation4], 128, 128, 8
    $region513: #{tpu_custom_call.1} parent=1 // pred_fallthru
      _
    // Predicated region
    $region514: #{tpu_custom_call.1} parent=1 // pred_check
      _
    $region515: #{tpu_custom_call.1} parent=1 // pred_check_branch
      %7793 = sbr.rel (0) target = $region517
    $region516: #{tpu_custom_call.1} parent=1 // pred_region
      %7794 = dma.done [#allocation4], 1920
    $region517: #{tpu_custom_call.1} parent=1 // pred_fallthru
      _
    %7795 = vsyncpa [#allocation3], 1
    %7796 = vsyncpa [#allocation6], 1
    %7797 = vsyncpa [#allocation9], 1
    %7798 = vsyncpa [#allocation12], 1
    %7799 = vsyncpa [#allocation15], 1
    %7800 = vsyncpa [#allocation18], 1
    %7801 = vsyncpa [#allocation21], 1
    %7802 = vsyncpa [#allocation24], 1
    %7803 = vsyncpa [#allocation27], 1
    %7804 = vsyncpa [#allocation30], 1
    %7805 = vsyncpa [#allocation33], 1
    %7806 = vsyncpa [#allocation36], 1
    %7807 = vsyncpa [#allocation39], 1
    %7808 = vsyncpa [#allocation42], 1
    %7809 = vsyncpa [#allocation45], 1
    %7810 = vsyncpa [#allocation48], 1
    %7811 = vsyncpa [#allocation51], 1
    %7812 = vsyncpa [#allocation54], 1
    %7813 = vsyncpa [#allocation57], 1
    %7814 = vsyncpa [#allocation60], 1
    %7815 = vsyncpa [#allocation63], 1
    %7816 = vsyncpa [#allocation66], 1
    %7817 = vsyncpa [#allocation69], 1
    %7818 = vsyncpa [#allocation72], 1
    %7819 = vsyncpa [#allocation75], 1
    %7820 = vsyncpa [#allocation78], 1
    %7821 = vsyncpa [#allocation81], 1
    %7822 = vsyncpa [#allocation84], 1
    %7823 = vsyncpa [#allocation4], 1

</llo_original>
